<compile_context>
chip_gen: v7x
topology: tpu7x:2x2x1
jax: 0.10.0
libtpu: 0.0.40
codegen_flags: <defaults>
</compile_context>

<pallas_src>
import functools

import jax
import jax.numpy as jnp
from jax.experimental import pallas as pl
from jax.experimental.pallas import tpu as pltpu


def _encoder_kernel(xcat_ref, w1_ref, w2_ref, b1_ref, b2_ref, gamma_ref,
                    beta_ref, mask_ref, y_ref, p_ref, h_scr,
                    *, n, h, w, cout, g, eps):
    """Fused conv3x3+ReLU -> conv3x3+ReLU -> BatchNorm -> 2x2 max-pool."""
    hp, wp = h + 2, w + 2
    rows = n * hp * wp
    taps = [(dy - 1) * wp + (dx - 1) for dy in range(3) for dx in range(3)]

    # Interior-pixel mask, broadcast ONCE to (rows, cout) and reused.
    maskb = jnp.broadcast_to(mask_ref[...], (rows, cout))

    # ---- conv1 + ReLU: one K=9*Cin bf16 MXU dot (im2col built in wrapper) --
    acc1 = jnp.dot(xcat_ref[...], w1_ref[...],
                   preferred_element_type=jnp.float32)
    hid = jnp.maximum(acc1 + b1_ref[...], 0.0) * maskb  # zero the padding ring

    # Stage conv1 output in VMEM with zeroed guard bands (>= wp+1 rows) so
    # conv2's 9 taps are plain offset reads.  Only the guard rows are cleared
    # -- no full-slab zero fill.
    h_scr[0:g, :] = jnp.zeros((g, cout), jnp.float32)
    h_scr[g + rows:g + rows + g, :] = jnp.zeros((g, cout), jnp.float32)
    h_scr[g:g + rows, :] = hid

    # ---- conv2 + ReLU -------------------------------------------------------
    acc2 = jnp.zeros((rows, cout), jnp.float32)
    for t, off in enumerate(taps):
        lhs = h_scr[g + off:g + off + rows, :].astype(jnp.bfloat16)
        acc2 = acc2 + jnp.dot(lhs, w2_ref[t],
                              preferred_element_type=jnp.float32)
    z = jnp.maximum(acc2 + b2_ref[...], 0.0)

    # ---- BatchNorm2d (training-mode batch stats), single masked pass --------
    count = float(n * h * w)
    zm = z * maskb
    s1 = jnp.sum(zm, axis=0, keepdims=True)
    s2 = jnp.sum(zm * z, axis=0, keepdims=True)
    mean = s1 * (1.0 / count)
    var = jnp.maximum(s2 * (1.0 / count) - mean * mean, 0.0)
    scale = gamma_ref[...] * jax.lax.rsqrt(var + eps)
    shift = beta_ref[...] - mean * scale
    y = z * scale + shift
    y_ref[...] = y                        # single dense store, no guard rows

    # ---- fused 2x2 / stride-2 max-pool -> compact (n*h/2*w/2, cout) ---------
    # Strided row reads straight out of the VMEM-resident y output; only the
    # real pooled pixels are ever written back to HBM.
    for ni in range(n):
        for io in range(h // 2):
            base = ni * hp * wp + (1 + 2 * io) * wp + 1
            a = y_ref[pl.ds(base, w // 2, stride=2), :]
            b = y_ref[pl.ds(base + 1, w // 2, stride=2), :]
            c = y_ref[pl.ds(base + wp, w // 2, stride=2), :]
            d = y_ref[pl.ds(base + wp + 1, w // 2, stride=2), :]
            r0 = (ni * (h // 2) + io) * (w // 2)
            p_ref[r0:r0 + w // 2, :] = jnp.maximum(jnp.maximum(a, b),
                                                   jnp.maximum(c, d))


def encoder_forward(x_nchw, params, *, eps=1e-5):
    """Encoder.forward: returns (x, p) = (Conv2D_block(x), MaxPool2d(2)(x))."""
    n, cin, h, w = x_nchw.shape
    cout = params["w1"].shape[-1]
    assert h % 2 == 0 and w % 2 == 0
    hp, wp = h + 2, w + 2
    rows = n * hp * wp
    g = max(8, ((wp + 1 + 7) // 8) * 8)     # guard rows (>= wp+1, 8-aligned)

    # NCHW -> NHWC, then build the 3x3 im2col over the *padded* grid so the
    # kernel's conv1 is one (rows, 9*cin) x (9*cin, cout) dot.  The double pad
    # (by 2) gives every padded-grid location a full 3x3 patch.
    x = jnp.transpose(x_nchw, (0, 2, 3, 1))
    xpp = jnp.pad(x, ((0, 0), (2, 2), (2, 2), (0, 0)))
    cols = [xpp[:, dy:dy + hp, dx:dx + wp, :]
            for dy in range(3) for dx in range(3)]
    xcat = jnp.concatenate(cols, axis=-1).reshape(rows, 9 * cin)
    xcat = xcat.astype(jnp.bfloat16)                 # cast once, in the wrapper

    # 1.0 at real (interior) pixel rows, 0.0 on the zero-padding ring.
    ri = jnp.arange(hp)
    rj = jnp.arange(wp)
    interior = ((ri[:, None] >= 1) & (ri[:, None] <= h)
                & (rj[None, :] >= 1) & (rj[None, :] <= w))
    mask = jnp.tile(interior.reshape(-1), n).astype(jnp.float32).reshape(rows, 1)

    # Weights: conv1 tap-major (9*cin, cout), conv2 per-tap (9, cout, cout).
    w1 = params["w1"].reshape(9 * cin, cout).astype(jnp.bfloat16)
    w2 = params["w2"].reshape(9, cout, cout).astype(jnp.bfloat16)
    b1 = params["b1"].reshape(1, cout)
    b2 = params["b2"].reshape(1, cout)
    gamma = params["gamma"].reshape(1, cout)
    beta = params["beta"].reshape(1, cout)

    vmem = pl.BlockSpec(memory_space=pltpu.MemorySpace.VMEM)
    npool = n * (h // 2) * (w // 2)
    y_full, p_flat = pl.pallas_call(
        functools.partial(_encoder_kernel, n=n, h=h, w=w, cout=cout, g=g,
                          eps=eps),
        out_shape=(jax.ShapeDtypeStruct((rows, cout), jnp.float32),
                   jax.ShapeDtypeStruct((npool, cout), jnp.float32)),
        in_specs=[vmem] * 8,
        out_specs=(vmem, vmem),
        scratch_shapes=[pltpu.VMEM((rows + 2 * g, cout), jnp.float32)],
        # 32 MiB scoped VMEM is v7x-safe; this kernel uses well under 1 MiB.
        compiler_params=pltpu.CompilerParams(vmem_limit_bytes=32 * 1024 * 1024),
    )(xcat, w1, w2, b1, b2, gamma, beta, mask)

    y = y_full.reshape(n, hp, wp, cout)[:, 1:1 + h, 1:1 + w, :]
    p = p_flat.reshape(n, h // 2, w // 2, cout)
    return (jnp.transpose(y, (0, 3, 1, 2)),          # x: (N, Cout, H, W)
            jnp.transpose(p, (0, 3, 1, 2)))          # p: (N, Cout, H/2, W/2)


# ----------------------------------------------------------------------------
# Deterministic synthetic parameters (matches PyTorch default BN init).
# ----------------------------------------------------------------------------
def init_encoder(key, cin, cout):
    k1, k2, k3, k4 = jax.random.split(key, 4)
    return dict(
        w1=jax.random.normal(k1, (3, 3, cin, cout), jnp.float32)
        * (2.0 / (9 * cin)) ** 0.5,
        b1=jax.random.normal(k2, (cout,), jnp.float32) * 0.01,
        w2=jax.random.normal(k3, (3, 3, cout, cout), jnp.float32)
        * (2.0 / (9 * cout)) ** 0.5,
        b2=jax.random.normal(k4, (cout,), jnp.float32) * 0.01,
        gamma=jnp.ones((cout,), jnp.float32),
        beta=jnp.zeros((cout,), jnp.float32),
    )


def _bf16_round(a):
    return a.astype(jnp.bfloat16).astype(jnp.float32)


# Pure-XLA reference (conv inputs/weights rounded to bf16 to mirror the MXU
# input rounding, f32 accumulation) for a tightened numerical check.
def _reference_forward(x_nchw, params, *, eps=1e-5):
    x = jnp.transpose(x_nchw, (0, 2, 3, 1))
    dn = ("NHWC", "HWIO", "NHWC")
    c1 = jax.lax.conv_general_dilated(
        _bf16_round(x), _bf16_round(params["w1"]), (1, 1), ((1, 1), (1, 1)),
        dimension_numbers=dn, preferred_element_type=jnp.float32)
    c1 = jnp.maximum(c1 + params["b1"], 0.0)
    c2 = jax.lax.conv_general_dilated(
        _bf16_round(c1), _bf16_round(params["w2"]), (1, 1), ((1, 1), (1, 1)),
        dimension_numbers=dn, preferred_element_type=jnp.float32)
    c2 = jnp.maximum(c2 + params["b2"], 0.0)
    mean = jnp.mean(c2, axis=(0, 1, 2))
    var = jnp.mean((c2 - mean) ** 2, axis=(0, 1, 2))
    y = (c2 - mean) * jax.lax.rsqrt(var + eps) * params["gamma"] + params["beta"]
    nb, hh, ww, cc = y.shape
    p = y.reshape(nb, hh // 2, 2, ww // 2, 2, cc).max(axis=(2, 4))
    return jnp.transpose(y, (0, 3, 1, 2)), jnp.transpose(p, (0, 3, 1, 2))


if __name__ == "__main__":
    key = jax.random.PRNGKey(0)
    kx, kp = jax.random.split(key)
    # PyTorch NCHW convention: Encoder(in_channel=4, out_channel=32), 16x16.
    x = jax.random.normal(kx, (2, 4, 16, 16), jnp.float32)
    params = init_encoder(kp, cin=4, cout=32)

    fwd = jax.jit(encoder_forward)
    x_out, p_out = fwd(x, params)
    jax.block_until_ready((x_out, p_out))

    assert x_out.shape == (2, 32, 16, 16) and x_out.dtype == jnp.float32
    assert p_out.shape == (2, 32, 8, 8) and p_out.dtype == jnp.float32

    xr, pr = _reference_forward(x, params)
    assert bool(jnp.allclose(x_out, xr, atol=5e-2, rtol=5e-2)), (
        float(jnp.max(jnp.abs(x_out - xr))))
    assert bool(jnp.allclose(p_out, pr, atol=5e-2, rtol=5e-2)), (
        float(jnp.max(jnp.abs(p_out - pr))))
    print("KERNEL_OK")
</pallas_src>

<mosaic_0001>
module attributes {stable_mosaic.version = 11 : i64} {
  func.func @_encoder_kernel(%arg0: memref<648x36xbf16, #tpu.memory_space<vmem>>, %arg1: memref<36x32xbf16, #tpu.memory_space<vmem>>, %arg2: memref<9x32x32xbf16, #tpu.memory_space<vmem>>, %arg3: memref<1x32xf32, #tpu.memory_space<vmem>>, %arg4: memref<1x32xf32, #tpu.memory_space<vmem>>, %arg5: memref<1x32xf32, #tpu.memory_space<vmem>>, %arg6: memref<1x32xf32, #tpu.memory_space<vmem>>, %arg7: memref<648x1xf32, #tpu.memory_space<vmem>>, %arg8: memref<648x32xf32, #tpu.memory_space<vmem>>, %arg9: memref<128x32xf32, #tpu.memory_space<vmem>>, %arg10: memref<696x32xf32, #tpu.memory_space<vmem>>) attributes {dimension_semantics = [], scalar_prefetch = 0 : i64, scratch_operands = 1 : i64, tpu.core_type = #tpu.core_type<tc>} {
    %c0 = arith.constant 0 : index
    %c0_0 = arith.constant 0 : index
    %0 = vector.load %arg7[%c0, %c0_0] : memref<648x1xf32, #tpu.memory_space<vmem>>, vector<648x1xf32>
    %1 = vector.shape_cast %0 : vector<648x1xf32> to vector<648x1xf32>
    %2 = vector.broadcast %1 : vector<648x1xf32> to vector<648x32xf32>
    %c0_1 = arith.constant 0 : index
    %c0_2 = arith.constant 0 : index
    %3 = vector.load %arg0[%c0_1, %c0_2] : memref<648x36xbf16, #tpu.memory_space<vmem>>, vector<648x36xbf16>
    %c0_3 = arith.constant 0 : index
    %c0_4 = arith.constant 0 : index
    %4 = vector.load %arg1[%c0_3, %c0_4] : memref<36x32xbf16, #tpu.memory_space<vmem>>, vector<36x32xbf16>
    %cst = arith.constant dense<0.000000e+00> : vector<648x32xf32>
    %5 = tpu.matmul %3, %4, %cst {dimension_numbers = #tpu.dot_dimension_numbers<[1], [0], [0], [1], [0, 0, 1, 1], [], []>} : vector<648x36xbf16>, vector<36x32xbf16>, vector<648x32xf32> -> vector<648x32xf32>
    %c0_5 = arith.constant 0 : index
    %c0_6 = arith.constant 0 : index
    %6 = vector.load %arg3[%c0_5, %c0_6] : memref<1x32xf32, #tpu.memory_space<vmem>>, vector<1x32xf32>
    %7 = vector.broadcast %6 : vector<1x32xf32> to vector<648x32xf32>
    %8 = arith.addf %5, %7 : vector<648x32xf32>
    %cst_7 = arith.constant 0.000000e+00 : f32
    %9 = vector.broadcast %cst_7 : f32 to vector<648x32xf32>
    %10 = arith.maximumf %8, %9 : vector<648x32xf32>
    %11 = arith.mulf %10, %2 : vector<648x32xf32>
    %cst_8 = arith.constant 0.000000e+00 : f32
    %12 = vector.broadcast %cst_8 : f32 to vector<24x32xf32>
    %c0_9 = arith.constant 0 : index
    %c0_10 = arith.constant 0 : index
    %13 = vector.load %arg10[%c0_9, %c0_10] : memref<696x32xf32, #tpu.memory_space<vmem>>, vector<24x32xf32>
    tpu.vector_store %arg10[%c0_9, %c0_10], %12 {strides = array<i32>} : memref<696x32xf32, #tpu.memory_space<vmem>>, vector<24x32xf32>,
    %cst_11 = arith.constant 0.000000e+00 : f32
    %14 = vector.broadcast %cst_11 : f32 to vector<24x32xf32>
    %c672 = arith.constant 672 : index
    %c0_12 = arith.constant 0 : index
    %15 = vector.load %arg10[%c672, %c0_12] : memref<696x32xf32, #tpu.memory_space<vmem>>, vector<24x32xf32>
    tpu.vector_store %arg10[%c672, %c0_12], %14 {strides = array<i32>} : memref<696x32xf32, #tpu.memory_space<vmem>>, vector<24x32xf32>,
    %c24 = arith.constant 24 : index
    %c0_13 = arith.constant 0 : index
    %16 = vector.load %arg10[%c24, %c0_13] : memref<696x32xf32, #tpu.memory_space<vmem>>, vector<648x32xf32>
    tpu.vector_store %arg10[%c24, %c0_13], %11 {strides = array<i32>} : memref<696x32xf32, #tpu.memory_space<vmem>>, vector<648x32xf32>,
    %cst_14 = arith.constant 0.000000e+00 : f32
    %17 = vector.broadcast %cst_14 : f32 to vector<648x32xf32>
    %c5 = arith.constant 5 : index
    %c0_15 = arith.constant 0 : index
    %18 = vector.load %arg10[%c5, %c0_15] : memref<696x32xf32, #tpu.memory_space<vmem>>, vector<648x32xf32>
    %19 = arith.truncf %18 : vector<648x32xf32> to vector<648x32xbf16>
    %c0_16 = arith.constant 0 : index
    %c0_17 = arith.constant 0 : index
    %c0_18 = arith.constant 0 : index
    %20 = vector.load %arg2[%c0_16, %c0_17, %c0_18] : memref<9x32x32xbf16, #tpu.memory_space<vmem>>, vector<1x32x32xbf16>
    %21 = vector.shape_cast %20 : vector<1x32x32xbf16> to vector<32x32xbf16>
    %cst_19 = arith.constant dense<0.000000e+00> : vector<648x32xf32>
    %22 = tpu.matmul %19, %21, %cst_19 {dimension_numbers = #tpu.dot_dimension_numbers<[1], [0], [0], [1], [0, 0, 1, 1], [], []>} : vector<648x32xbf16>, vector<32x32xbf16>, vector<648x32xf32> -> vector<648x32xf32>
    %23 = arith.addf %17, %22 : vector<648x32xf32>
    %c6 = arith.constant 6 : index
    %c0_20 = arith.constant 0 : index
    %24 = vector.load %arg10[%c6, %c0_20] : memref<696x32xf32, #tpu.memory_space<vmem>>, vector<648x32xf32>
    %25 = arith.truncf %24 : vector<648x32xf32> to vector<648x32xbf16>
    %c1 = arith.constant 1 : index
    %c0_21 = arith.constant 0 : index
    %c0_22 = arith.constant 0 : index
    %26 = vector.load %arg2[%c1, %c0_21, %c0_22] : memref<9x32x32xbf16, #tpu.memory_space<vmem>>, vector<1x32x32xbf16>
    %27 = vector.shape_cast %26 : vector<1x32x32xbf16> to vector<32x32xbf16>
    %cst_23 = arith.constant dense<0.000000e+00> : vector<648x32xf32>
    %28 = tpu.matmul %25, %27, %cst_23 {dimension_numbers = #tpu.dot_dimension_numbers<[1], [0], [0], [1], [0, 0, 1, 1], [], []>} : vector<648x32xbf16>, vector<32x32xbf16>, vector<648x32xf32> -> vector<648x32xf32>
    %29 = arith.addf %23, %28 : vector<648x32xf32>
    %c7 = arith.constant 7 : index
    %c0_24 = arith.constant 0 : index
    %30 = vector.load %arg10[%c7, %c0_24] : memref<696x32xf32, #tpu.memory_space<vmem>>, vector<648x32xf32>
    %31 = arith.truncf %30 : vector<648x32xf32> to vector<648x32xbf16>
    %c2 = arith.constant 2 : index
    %c0_25 = arith.constant 0 : index
    %c0_26 = arith.constant 0 : index
    %32 = vector.load %arg2[%c2, %c0_25, %c0_26] : memref<9x32x32xbf16, #tpu.memory_space<vmem>>, vector<1x32x32xbf16>
    %33 = vector.shape_cast %32 : vector<1x32x32xbf16> to vector<32x32xbf16>
    %cst_27 = arith.constant dense<0.000000e+00> : vector<648x32xf32>
    %34 = tpu.matmul %31, %33, %cst_27 {dimension_numbers = #tpu.dot_dimension_numbers<[1], [0], [0], [1], [0, 0, 1, 1], [], []>} : vector<648x32xbf16>, vector<32x32xbf16>, vector<648x32xf32> -> vector<648x32xf32>
    %35 = arith.addf %29, %34 : vector<648x32xf32>
    %c23 = arith.constant 23 : index
    %c0_28 = arith.constant 0 : index
    %36 = vector.load %arg10[%c23, %c0_28] : memref<696x32xf32, #tpu.memory_space<vmem>>, vector<648x32xf32>
    %37 = arith.truncf %36 : vector<648x32xf32> to vector<648x32xbf16>
    %c3 = arith.constant 3 : index
    %c0_29 = arith.constant 0 : index
    %c0_30 = arith.constant 0 : index
    %38 = vector.load %arg2[%c3, %c0_29, %c0_30] : memref<9x32x32xbf16, #tpu.memory_space<vmem>>, vector<1x32x32xbf16>
    %39 = vector.shape_cast %38 : vector<1x32x32xbf16> to vector<32x32xbf16>
    %cst_31 = arith.constant dense<0.000000e+00> : vector<648x32xf32>
    %40 = tpu.matmul %37, %39, %cst_31 {dimension_numbers = #tpu.dot_dimension_numbers<[1], [0], [0], [1], [0, 0, 1, 1], [], []>} : vector<648x32xbf16>, vector<32x32xbf16>, vector<648x32xf32> -> vector<648x32xf32>
    %41 = arith.addf %35, %40 : vector<648x32xf32>
    %c24_32 = arith.constant 24 : index
    %c0_33 = arith.constant 0 : index
    %42 = vector.load %arg10[%c24_32, %c0_33] : memref<696x32xf32, #tpu.memory_space<vmem>>, vector<648x32xf32>
    %43 = arith.truncf %42 : vector<648x32xf32> to vector<648x32xbf16>
    %c4 = arith.constant 4 : index
    %c0_34 = arith.constant 0 : index
    %c0_35 = arith.constant 0 : index
    %44 = vector.load %arg2[%c4, %c0_34, %c0_35] : memref<9x32x32xbf16, #tpu.memory_space<vmem>>, vector<1x32x32xbf16>
    %45 = vector.shape_cast %44 : vector<1x32x32xbf16> to vector<32x32xbf16>
    %cst_36 = arith.constant dense<0.000000e+00> : vector<648x32xf32>
    %46 = tpu.matmul %43, %45, %cst_36 {dimension_numbers = #tpu.dot_dimension_numbers<[1], [0], [0], [1], [0, 0, 1, 1], [], []>} : vector<648x32xbf16>, vector<32x32xbf16>, vector<648x32xf32> -> vector<648x32xf32>
    %47 = arith.addf %41, %46 : vector<648x32xf32>
    %c25 = arith.constant 25 : index
    %c0_37 = arith.constant 0 : index
    %48 = vector.load %arg10[%c25, %c0_37] : memref<696x32xf32, #tpu.memory_space<vmem>>, vector<648x32xf32>
    %49 = arith.truncf %48 : vector<648x32xf32> to vector<648x32xbf16>
    %c5_38 = arith.constant 5 : index
    %c0_39 = arith.constant 0 : index
    %c0_40 = arith.constant 0 : index
    %50 = vector.load %arg2[%c5_38, %c0_39, %c0_40] : memref<9x32x32xbf16, #tpu.memory_space<vmem>>, vector<1x32x32xbf16>
    %51 = vector.shape_cast %50 : vector<1x32x32xbf16> to vector<32x32xbf16>
    %cst_41 = arith.constant dense<0.000000e+00> : vector<648x32xf32>
    %52 = tpu.matmul %49, %51, %cst_41 {dimension_numbers = #tpu.dot_dimension_numbers<[1], [0], [0], [1], [0, 0, 1, 1], [], []>} : vector<648x32xbf16>, vector<32x32xbf16>, vector<648x32xf32> -> vector<648x32xf32>
    %53 = arith.addf %47, %52 : vector<648x32xf32>
    %c41 = arith.constant 41 : index
    %c0_42 = arith.constant 0 : index
    %54 = vector.load %arg10[%c41, %c0_42] : memref<696x32xf32, #tpu.memory_space<vmem>>, vector<648x32xf32>
    %55 = arith.truncf %54 : vector<648x32xf32> to vector<648x32xbf16>
    %c6_43 = arith.constant 6 : index
    %c0_44 = arith.constant 0 : index
    %c0_45 = arith.constant 0 : index
    %56 = vector.load %arg2[%c6_43, %c0_44, %c0_45] : memref<9x32x32xbf16, #tpu.memory_space<vmem>>, vector<1x32x32xbf16>
    %57 = vector.shape_cast %56 : vector<1x32x32xbf16> to vector<32x32xbf16>
    %cst_46 = arith.constant dense<0.000000e+00> : vector<648x32xf32>
    %58 = tpu.matmul %55, %57, %cst_46 {dimension_numbers = #tpu.dot_dimension_numbers<[1], [0], [0], [1], [0, 0, 1, 1], [], []>} : vector<648x32xbf16>, vector<32x32xbf16>, vector<648x32xf32> -> vector<648x32xf32>
    %59 = arith.addf %53, %58 : vector<648x32xf32>
    %c42 = arith.constant 42 : index
    %c0_47 = arith.constant 0 : index
    %60 = vector.load %arg10[%c42, %c0_47] : memref<696x32xf32, #tpu.memory_space<vmem>>, vector<648x32xf32>
    %61 = arith.truncf %60 : vector<648x32xf32> to vector<648x32xbf16>
    %c7_48 = arith.constant 7 : index
    %c0_49 = arith.constant 0 : index
    %c0_50 = arith.constant 0 : index
    %62 = vector.load %arg2[%c7_48, %c0_49, %c0_50] : memref<9x32x32xbf16, #tpu.memory_space<vmem>>, vector<1x32x32xbf16>
    %63 = vector.shape_cast %62 : vector<1x32x32xbf16> to vector<32x32xbf16>
    %cst_51 = arith.constant dense<0.000000e+00> : vector<648x32xf32>
    %64 = tpu.matmul %61, %63, %cst_51 {dimension_numbers = #tpu.dot_dimension_numbers<[1], [0], [0], [1], [0, 0, 1, 1], [], []>} : vector<648x32xbf16>, vector<32x32xbf16>, vector<648x32xf32> -> vector<648x32xf32>
    %65 = arith.addf %59, %64 : vector<648x32xf32>
    %c43 = arith.constant 43 : index
    %c0_52 = arith.constant 0 : index
    %66 = vector.load %arg10[%c43, %c0_52] : memref<696x32xf32, #tpu.memory_space<vmem>>, vector<648x32xf32>
    %67 = arith.truncf %66 : vector<648x32xf32> to vector<648x32xbf16>
    %c8 = arith.constant 8 : index
    %c0_53 = arith.constant 0 : index
    %c0_54 = arith.constant 0 : index
    %68 = vector.load %arg2[%c8, %c0_53, %c0_54] : memref<9x32x32xbf16, #tpu.memory_space<vmem>>, vector<1x32x32xbf16>
    %69 = vector.shape_cast %68 : vector<1x32x32xbf16> to vector<32x32xbf16>
    %cst_55 = arith.constant dense<0.000000e+00> : vector<648x32xf32>
    %70 = tpu.matmul %67, %69, %cst_55 {dimension_numbers = #tpu.dot_dimension_numbers<[1], [0], [0], [1], [0, 0, 1, 1], [], []>} : vector<648x32xbf16>, vector<32x32xbf16>, vector<648x32xf32> -> vector<648x32xf32>
    %71 = arith.addf %65, %70 : vector<648x32xf32>
    %c0_56 = arith.constant 0 : index
    %c0_57 = arith.constant 0 : index
    %72 = vector.load %arg4[%c0_56, %c0_57] : memref<1x32xf32, #tpu.memory_space<vmem>>, vector<1x32xf32>
    %73 = vector.broadcast %72 : vector<1x32xf32> to vector<648x32xf32>
    %74 = arith.addf %71, %73 : vector<648x32xf32>
    %cst_58 = arith.constant 0.000000e+00 : f32
    %75 = vector.broadcast %cst_58 : f32 to vector<648x32xf32>
    %76 = arith.maximumf %74, %75 : vector<648x32xf32>
    %77 = arith.mulf %76, %2 : vector<648x32xf32>
    %cst_59 = arith.constant dense<0.000000e+00> : vector<32xf32>
    %78 = vector.multi_reduction <add>, %77, %cst_59 [0] : vector<648x32xf32> to vector<32xf32>
    %79 = vector.shape_cast %78 : vector<32xf32> to vector<1x32xf32>
    %80 = arith.mulf %77, %76 : vector<648x32xf32>
    %cst_60 = arith.constant dense<0.000000e+00> : vector<32xf32>
    %81 = vector.multi_reduction <add>, %80, %cst_60 [0] : vector<648x32xf32> to vector<32xf32>
    %82 = vector.shape_cast %81 : vector<32xf32> to vector<1x32xf32>
    %cst_61 = arith.constant 0.001953125 : f32
    %83 = vector.broadcast %cst_61 : f32 to vector<1x32xf32>
    %84 = arith.mulf %79, %83 : vector<1x32xf32>
    %cst_62 = arith.constant 0.001953125 : f32
    %85 = vector.broadcast %cst_62 : f32 to vector<1x32xf32>
    %86 = arith.mulf %82, %85 : vector<1x32xf32>
    %87 = arith.mulf %84, %84 : vector<1x32xf32>
    %88 = arith.subf %86, %87 : vector<1x32xf32>
    %cst_63 = arith.constant 0.000000e+00 : f32
    %89 = vector.broadcast %cst_63 : f32 to vector<1x32xf32>
    %90 = arith.maximumf %88, %89 : vector<1x32xf32>
    %c0_64 = arith.constant 0 : index
    %c0_65 = arith.constant 0 : index
    %91 = vector.load %arg5[%c0_64, %c0_65] : memref<1x32xf32, #tpu.memory_space<vmem>>, vector<1x32xf32>
    %cst_66 = arith.constant 9.99999974E-6 : f32
    %92 = vector.broadcast %cst_66 : f32 to vector<1x32xf32>
    %93 = arith.addf %90, %92 : vector<1x32xf32>
    %94 = math.rsqrt %93 : vector<1x32xf32>
    %95 = arith.mulf %91, %94 : vector<1x32xf32>
    %c0_67 = arith.constant 0 : index
    %c0_68 = arith.constant 0 : index
    %96 = vector.load %arg6[%c0_67, %c0_68] : memref<1x32xf32, #tpu.memory_space<vmem>>, vector<1x32xf32>
    %97 = arith.mulf %84, %95 : vector<1x32xf32>
    %98 = arith.subf %96, %97 : vector<1x32xf32>
    %99 = vector.broadcast %95 : vector<1x32xf32> to vector<648x32xf32>
    %100 = arith.mulf %76, %99 : vector<648x32xf32>
    %101 = vector.broadcast %98 : vector<1x32xf32> to vector<648x32xf32>
    %102 = arith.addf %100, %101 : vector<648x32xf32>
    %c0_69 = arith.constant 0 : index
    %c0_70 = arith.constant 0 : index
    %103 = vector.load %arg8[%c0_69, %c0_70] : memref<648x32xf32, #tpu.memory_space<vmem>>, vector<648x32xf32>
    tpu.vector_store %arg8[%c0_69, %c0_70], %102 {strides = array<i32>} : memref<648x32xf32, #tpu.memory_space<vmem>>, vector<648x32xf32>,
    %c19 = arith.constant 19 : index
    %c0_71 = arith.constant 0 : index
    %104 = tpu.strided_load %arg8[%c19, %c0_71] {strides = array<i32: 2, 1>} : memref<648x32xf32, #tpu.memory_space<vmem>>, vector<8x32xf32>
    %c20 = arith.constant 20 : index
    %c0_72 = arith.constant 0 : index
    %105 = tpu.strided_load %arg8[%c20, %c0_72] {strides = array<i32: 2, 1>} : memref<648x32xf32, #tpu.memory_space<vmem>>, vector<8x32xf32>
    %c37 = arith.constant 37 : index
    %c0_73 = arith.constant 0 : index
    %106 = tpu.strided_load %arg8[%c37, %c0_73] {strides = array<i32: 2, 1>} : memref<648x32xf32, #tpu.memory_space<vmem>>, vector<8x32xf32>
    %c38 = arith.constant 38 : index
    %c0_74 = arith.constant 0 : index
    %107 = tpu.strided_load %arg8[%c38, %c0_74] {strides = array<i32: 2, 1>} : memref<648x32xf32, #tpu.memory_space<vmem>>, vector<8x32xf32>
    %108 = arith.maximumf %104, %105 : vector<8x32xf32>
    %109 = arith.maximumf %106, %107 : vector<8x32xf32>
    %110 = arith.maximumf %108, %109 : vector<8x32xf32>
    %c0_75 = arith.constant 0 : index
    %c0_76 = arith.constant 0 : index
    %111 = vector.load %arg9[%c0_75, %c0_76] : memref<128x32xf32, #tpu.memory_space<vmem>>, vector<8x32xf32>
    tpu.vector_store %arg9[%c0_75, %c0_76], %110 {strides = array<i32>} : memref<128x32xf32, #tpu.memory_space<vmem>>, vector<8x32xf32>,
    %c55 = arith.constant 55 : index
    %c0_77 = arith.constant 0 : index
    %112 = tpu.strided_load %arg8[%c55, %c0_77] {strides = array<i32: 2, 1>} : memref<648x32xf32, #tpu.memory_space<vmem>>, vector<8x32xf32>
    %c56 = arith.constant 56 : index
    %c0_78 = arith.constant 0 : index
    %113 = tpu.strided_load %arg8[%c56, %c0_78] {strides = array<i32: 2, 1>} : memref<648x32xf32, #tpu.memory_space<vmem>>, vector<8x32xf32>
    %c73 = arith.constant 73 : index
    %c0_79 = arith.constant 0 : index
    %114 = tpu.strided_load %arg8[%c73, %c0_79] {strides = array<i32: 2, 1>} : memref<648x32xf32, #tpu.memory_space<vmem>>, vector<8x32xf32>
    %c74 = arith.constant 74 : index
    %c0_80 = arith.constant 0 : index
    %115 = tpu.strided_load %arg8[%c74, %c0_80] {strides = array<i32: 2, 1>} : memref<648x32xf32, #tpu.memory_space<vmem>>, vector<8x32xf32>
    %116 = arith.maximumf %112, %113 : vector<8x32xf32>
    %117 = arith.maximumf %114, %115 : vector<8x32xf32>
    %118 = arith.maximumf %116, %117 : vector<8x32xf32>
    %c8_81 = arith.constant 8 : index
    %c0_82 = arith.constant 0 : index
    %119 = vector.load %arg9[%c8_81, %c0_82] : memref<128x32xf32, #tpu.memory_space<vmem>>, vector<8x32xf32>
    tpu.vector_store %arg9[%c8_81, %c0_82], %118 {strides = array<i32>} : memref<128x32xf32, #tpu.memory_space<vmem>>, vector<8x32xf32>,
    %c91 = arith.constant 91 : index
    %c0_83 = arith.constant 0 : index
    %120 = tpu.strided_load %arg8[%c91, %c0_83] {strides = array<i32: 2, 1>} : memref<648x32xf32, #tpu.memory_space<vmem>>, vector<8x32xf32>
    %c92 = arith.constant 92 : index
    %c0_84 = arith.constant 0 : index
    %121 = tpu.strided_load %arg8[%c92, %c0_84] {strides = array<i32: 2, 1>} : memref<648x32xf32, #tpu.memory_space<vmem>>, vector<8x32xf32>
    %c109 = arith.constant 109 : index
    %c0_85 = arith.constant 0 : index
    %122 = tpu.strided_load %arg8[%c109, %c0_85] {strides = array<i32: 2, 1>} : memref<648x32xf32, #tpu.memory_space<vmem>>, vector<8x32xf32>
    %c110 = arith.constant 110 : index
    %c0_86 = arith.constant 0 : index
    %123 = tpu.strided_load %arg8[%c110, %c0_86] {strides = array<i32: 2, 1>} : memref<648x32xf32, #tpu.memory_space<vmem>>, vector<8x32xf32>
    %124 = arith.maximumf %120, %121 : vector<8x32xf32>
    %125 = arith.maximumf %122, %123 : vector<8x32xf32>
    %126 = arith.maximumf %124, %125 : vector<8x32xf32>
    %c16 = arith.constant 16 : index
    %c0_87 = arith.constant 0 : index
    %127 = vector.load %arg9[%c16, %c0_87] : memref<128x32xf32, #tpu.memory_space<vmem>>, vector<8x32xf32>
    tpu.vector_store %arg9[%c16, %c0_87], %126 {strides = array<i32>} : memref<128x32xf32, #tpu.memory_space<vmem>>, vector<8x32xf32>,
    %c127 = arith.constant 127 : index
    %c0_88 = arith.constant 0 : index
    %128 = tpu.strided_load %arg8[%c127, %c0_88] {strides = array<i32: 2, 1>} : memref<648x32xf32, #tpu.memory_space<vmem>>, vector<8x32xf32>
    %c128 = arith.constant 128 : index
    %c0_89 = arith.constant 0 : index
    %129 = tpu.strided_load %arg8[%c128, %c0_89] {strides = array<i32: 2, 1>} : memref<648x32xf32, #tpu.memory_space<vmem>>, vector<8x32xf32>
    %c145 = arith.constant 145 : index
    %c0_90 = arith.constant 0 : index
    %130 = tpu.strided_load %arg8[%c145, %c0_90] {strides = array<i32: 2, 1>} : memref<648x32xf32, #tpu.memory_space<vmem>>, vector<8x32xf32>
    %c146 = arith.constant 146 : index
    %c0_91 = arith.constant 0 : index
    %131 = tpu.strided_load %arg8[%c146, %c0_91] {strides = array<i32: 2, 1>} : memref<648x32xf32, #tpu.memory_space<vmem>>, vector<8x32xf32>
    %132 = arith.maximumf %128, %129 : vector<8x32xf32>
    %133 = arith.maximumf %130, %131 : vector<8x32xf32>
    %134 = arith.maximumf %132, %133 : vector<8x32xf32>
    %c24_92 = arith.constant 24 : index
    %c0_93 = arith.constant 0 : index
    %135 = vector.load %arg9[%c24_92, %c0_93] : memref<128x32xf32, #tpu.memory_space<vmem>>, vector<8x32xf32>
    tpu.vector_store %arg9[%c24_92, %c0_93], %134 {strides = array<i32>} : memref<128x32xf32, #tpu.memory_space<vmem>>, vector<8x32xf32>,
    %c163 = arith.constant 163 : index
    %c0_94 = arith.constant 0 : index
    %136 = tpu.strided_load %arg8[%c163, %c0_94] {strides = array<i32: 2, 1>} : memref<648x32xf32, #tpu.memory_space<vmem>>, vector<8x32xf32>
    %c164 = arith.constant 164 : index
    %c0_95 = arith.constant 0 : index
    %137 = tpu.strided_load %arg8[%c164, %c0_95] {strides = array<i32: 2, 1>} : memref<648x32xf32, #tpu.memory_space<vmem>>, vector<8x32xf32>
    %c181 = arith.constant 181 : index
    %c0_96 = arith.constant 0 : index
    %138 = tpu.strided_load %arg8[%c181, %c0_96] {strides = array<i32: 2, 1>} : memref<648x32xf32, #tpu.memory_space<vmem>>, vector<8x32xf32>
    %c182 = arith.constant 182 : index
    %c0_97 = arith.constant 0 : index
    %139 = tpu.strided_load %arg8[%c182, %c0_97] {strides = array<i32: 2, 1>} : memref<648x32xf32, #tpu.memory_space<vmem>>, vector<8x32xf32>
    %140 = arith.maximumf %136, %137 : vector<8x32xf32>
    %141 = arith.maximumf %138, %139 : vector<8x32xf32>
    %142 = arith.maximumf %140, %141 : vector<8x32xf32>
    %c32 = arith.constant 32 : index
    %c0_98 = arith.constant 0 : index
    %143 = vector.load %arg9[%c32, %c0_98] : memref<128x32xf32, #tpu.memory_space<vmem>>, vector<8x32xf32>
    tpu.vector_store %arg9[%c32, %c0_98], %142 {strides = array<i32>} : memref<128x32xf32, #tpu.memory_space<vmem>>, vector<8x32xf32>,
    %c199 = arith.constant 199 : index
    %c0_99 = arith.constant 0 : index
    %144 = tpu.strided_load %arg8[%c199, %c0_99] {strides = array<i32: 2, 1>} : memref<648x32xf32, #tpu.memory_space<vmem>>, vector<8x32xf32>
    %c200 = arith.constant 200 : index
    %c0_100 = arith.constant 0 : index
    %145 = tpu.strided_load %arg8[%c200, %c0_100] {strides = array<i32: 2, 1>} : memref<648x32xf32, #tpu.memory_space<vmem>>, vector<8x32xf32>
    %c217 = arith.constant 217 : index
    %c0_101 = arith.constant 0 : index
    %146 = tpu.strided_load %arg8[%c217, %c0_101] {strides = array<i32: 2, 1>} : memref<648x32xf32, #tpu.memory_space<vmem>>, vector<8x32xf32>
    %c218 = arith.constant 218 : index
    %c0_102 = arith.constant 0 : index
    %147 = tpu.strided_load %arg8[%c218, %c0_102] {strides = array<i32: 2, 1>} : memref<648x32xf32, #tpu.memory_space<vmem>>, vector<8x32xf32>
    %148 = arith.maximumf %144, %145 : vector<8x32xf32>
    %149 = arith.maximumf %146, %147 : vector<8x32xf32>
    %150 = arith.maximumf %148, %149 : vector<8x32xf32>
    %c40 = arith.constant 40 : index
    %c0_103 = arith.constant 0 : index
    %151 = vector.load %arg9[%c40, %c0_103] : memref<128x32xf32, #tpu.memory_space<vmem>>, vector<8x32xf32>
    tpu.vector_store %arg9[%c40, %c0_103], %150 {strides = array<i32>} : memref<128x32xf32, #tpu.memory_space<vmem>>, vector<8x32xf32>,
    %c235 = arith.constant 235 : index
    %c0_104 = arith.constant 0 : index
    %152 = tpu.strided_load %arg8[%c235, %c0_104] {strides = array<i32: 2, 1>} : memref<648x32xf32, #tpu.memory_space<vmem>>, vector<8x32xf32>
    %c236 = arith.constant 236 : index
    %c0_105 = arith.constant 0 : index
    %153 = tpu.strided_load %arg8[%c236, %c0_105] {strides = array<i32: 2, 1>} : memref<648x32xf32, #tpu.memory_space<vmem>>, vector<8x32xf32>
    %c253 = arith.constant 253 : index
    %c0_106 = arith.constant 0 : index
    %154 = tpu.strided_load %arg8[%c253, %c0_106] {strides = array<i32: 2, 1>} : memref<648x32xf32, #tpu.memory_space<vmem>>, vector<8x32xf32>
    %c254 = arith.constant 254 : index
    %c0_107 = arith.constant 0 : index
    %155 = tpu.strided_load %arg8[%c254, %c0_107] {strides = array<i32: 2, 1>} : memref<648x32xf32, #tpu.memory_space<vmem>>, vector<8x32xf32>
    %156 = arith.maximumf %152, %153 : vector<8x32xf32>
    %157 = arith.maximumf %154, %155 : vector<8x32xf32>
    %158 = arith.maximumf %156, %157 : vector<8x32xf32>
    %c48 = arith.constant 48 : index
    %c0_108 = arith.constant 0 : index
    %159 = vector.load %arg9[%c48, %c0_108] : memref<128x32xf32, #tpu.memory_space<vmem>>, vector<8x32xf32>
    tpu.vector_store %arg9[%c48, %c0_108], %158 {strides = array<i32>} : memref<128x32xf32, #tpu.memory_space<vmem>>, vector<8x32xf32>,
    %c271 = arith.constant 271 : index
    %c0_109 = arith.constant 0 : index
    %160 = tpu.strided_load %arg8[%c271, %c0_109] {strides = array<i32: 2, 1>} : memref<648x32xf32, #tpu.memory_space<vmem>>, vector<8x32xf32>
    %c272 = arith.constant 272 : index
    %c0_110 = arith.constant 0 : index
    %161 = tpu.strided_load %arg8[%c272, %c0_110] {strides = array<i32: 2, 1>} : memref<648x32xf32, #tpu.memory_space<vmem>>, vector<8x32xf32>
    %c289 = arith.constant 289 : index
    %c0_111 = arith.constant 0 : index
    %162 = tpu.strided_load %arg8[%c289, %c0_111] {strides = array<i32: 2, 1>} : memref<648x32xf32, #tpu.memory_space<vmem>>, vector<8x32xf32>
    %c290 = arith.constant 290 : index
    %c0_112 = arith.constant 0 : index
    %163 = tpu.strided_load %arg8[%c290, %c0_112] {strides = array<i32: 2, 1>} : memref<648x32xf32, #tpu.memory_space<vmem>>, vector<8x32xf32>
    %164 = arith.maximumf %160, %161 : vector<8x32xf32>
    %165 = arith.maximumf %162, %163 : vector<8x32xf32>
    %166 = arith.maximumf %164, %165 : vector<8x32xf32>
    %c56_113 = arith.constant 56 : index
    %c0_114 = arith.constant 0 : index
    %167 = vector.load %arg9[%c56_113, %c0_114] : memref<128x32xf32, #tpu.memory_space<vmem>>, vector<8x32xf32>
    tpu.vector_store %arg9[%c56_113, %c0_114], %166 {strides = array<i32>} : memref<128x32xf32, #tpu.memory_space<vmem>>, vector<8x32xf32>,
    %c343 = arith.constant 343 : index
    %c0_115 = arith.constant 0 : index
    %168 = tpu.strided_load %arg8[%c343, %c0_115] {strides = array<i32: 2, 1>} : memref<648x32xf32, #tpu.memory_space<vmem>>, vector<8x32xf32>
    %c344 = arith.constant 344 : index
    %c0_116 = arith.constant 0 : index
    %169 = tpu.strided_load %arg8[%c344, %c0_116] {strides = array<i32: 2, 1>} : memref<648x32xf32, #tpu.memory_space<vmem>>, vector<8x32xf32>
    %c361 = arith.constant 361 : index
    %c0_117 = arith.constant 0 : index
    %170 = tpu.strided_load %arg8[%c361, %c0_117] {strides = array<i32: 2, 1>} : memref<648x32xf32, #tpu.memory_space<vmem>>, vector<8x32xf32>
    %c362 = arith.constant 362 : index
    %c0_118 = arith.constant 0 : index
    %171 = tpu.strided_load %arg8[%c362, %c0_118] {strides = array<i32: 2, 1>} : memref<648x32xf32, #tpu.memory_space<vmem>>, vector<8x32xf32>
    %172 = arith.maximumf %168, %169 : vector<8x32xf32>
    %173 = arith.maximumf %170, %171 : vector<8x32xf32>
    %174 = arith.maximumf %172, %173 : vector<8x32xf32>
    %c64 = arith.constant 64 : index
    %c0_119 = arith.constant 0 : index
    %175 = vector.load %arg9[%c64, %c0_119] : memref<128x32xf32, #tpu.memory_space<vmem>>, vector<8x32xf32>
    tpu.vector_store %arg9[%c64, %c0_119], %174 {strides = array<i32>} : memref<128x32xf32, #tpu.memory_space<vmem>>, vector<8x32xf32>,
    %c379 = arith.constant 379 : index
    %c0_120 = arith.constant 0 : index
    %176 = tpu.strided_load %arg8[%c379, %c0_120] {strides = array<i32: 2, 1>} : memref<648x32xf32, #tpu.memory_space<vmem>>, vector<8x32xf32>
    %c380 = arith.constant 380 : index
    %c0_121 = arith.constant 0 : index
    %177 = tpu.strided_load %arg8[%c380, %c0_121] {strides = array<i32: 2, 1>} : memref<648x32xf32, #tpu.memory_space<vmem>>, vector<8x32xf32>
    %c397 = arith.constant 397 : index
    %c0_122 = arith.constant 0 : index
    %178 = tpu.strided_load %arg8[%c397, %c0_122] {strides = array<i32: 2, 1>} : memref<648x32xf32, #tpu.memory_space<vmem>>, vector<8x32xf32>
    %c398 = arith.constant 398 : index
    %c0_123 = arith.constant 0 : index
    %179 = tpu.strided_load %arg8[%c398, %c0_123] {strides = array<i32: 2, 1>} : memref<648x32xf32, #tpu.memory_space<vmem>>, vector<8x32xf32>
    %180 = arith.maximumf %176, %177 : vector<8x32xf32>
    %181 = arith.maximumf %178, %179 : vector<8x32xf32>
    %182 = arith.maximumf %180, %181 : vector<8x32xf32>
    %c72 = arith.constant 72 : index
    %c0_124 = arith.constant 0 : index
    %183 = vector.load %arg9[%c72, %c0_124] : memref<128x32xf32, #tpu.memory_space<vmem>>, vector<8x32xf32>
    tpu.vector_store %arg9[%c72, %c0_124], %182 {strides = array<i32>} : memref<128x32xf32, #tpu.memory_space<vmem>>, vector<8x32xf32>,
    %c415 = arith.constant 415 : index
    %c0_125 = arith.constant 0 : index
    %184 = tpu.strided_load %arg8[%c415, %c0_125] {strides = array<i32: 2, 1>} : memref<648x32xf32, #tpu.memory_space<vmem>>, vector<8x32xf32>
    %c416 = arith.constant 416 : index
    %c0_126 = arith.constant 0 : index
    %185 = tpu.strided_load %arg8[%c416, %c0_126] {strides = array<i32: 2, 1>} : memref<648x32xf32, #tpu.memory_space<vmem>>, vector<8x32xf32>
    %c433 = arith.constant 433 : index
    %c0_127 = arith.constant 0 : index
    %186 = tpu.strided_load %arg8[%c433, %c0_127] {strides = array<i32: 2, 1>} : memref<648x32xf32, #tpu.memory_space<vmem>>, vector<8x32xf32>
    %c434 = arith.constant 434 : index
    %c0_128 = arith.constant 0 : index
    %187 = tpu.strided_load %arg8[%c434, %c0_128] {strides = array<i32: 2, 1>} : memref<648x32xf32, #tpu.memory_space<vmem>>, vector<8x32xf32>
    %188 = arith.maximumf %184, %185 : vector<8x32xf32>
    %189 = arith.maximumf %186, %187 : vector<8x32xf32>
    %190 = arith.maximumf %188, %189 : vector<8x32xf32>
    %c80 = arith.constant 80 : index
    %c0_129 = arith.constant 0 : index
    %191 = vector.load %arg9[%c80, %c0_129] : memref<128x32xf32, #tpu.memory_space<vmem>>, vector<8x32xf32>
    tpu.vector_store %arg9[%c80, %c0_129], %190 {strides = array<i32>} : memref<128x32xf32, #tpu.memory_space<vmem>>, vector<8x32xf32>,
    %c451 = arith.constant 451 : index
    %c0_130 = arith.constant 0 : index
    %192 = tpu.strided_load %arg8[%c451, %c0_130] {strides = array<i32: 2, 1>} : memref<648x32xf32, #tpu.memory_space<vmem>>, vector<8x32xf32>
    %c452 = arith.constant 452 : index
    %c0_131 = arith.constant 0 : index
    %193 = tpu.strided_load %arg8[%c452, %c0_131] {strides = array<i32: 2, 1>} : memref<648x32xf32, #tpu.memory_space<vmem>>, vector<8x32xf32>
    %c469 = arith.constant 469 : index
    %c0_132 = arith.constant 0 : index
    %194 = tpu.strided_load %arg8[%c469, %c0_132] {strides = array<i32: 2, 1>} : memref<648x32xf32, #tpu.memory_space<vmem>>, vector<8x32xf32>
    %c470 = arith.constant 470 : index
    %c0_133 = arith.constant 0 : index
    %195 = tpu.strided_load %arg8[%c470, %c0_133] {strides = array<i32: 2, 1>} : memref<648x32xf32, #tpu.memory_space<vmem>>, vector<8x32xf32>
    %196 = arith.maximumf %192, %193 : vector<8x32xf32>
    %197 = arith.maximumf %194, %195 : vector<8x32xf32>
    %198 = arith.maximumf %196, %197 : vector<8x32xf32>
    %c88 = arith.constant 88 : index
    %c0_134 = arith.constant 0 : index
    %199 = vector.load %arg9[%c88, %c0_134] : memref<128x32xf32, #tpu.memory_space<vmem>>, vector<8x32xf32>
    tpu.vector_store %arg9[%c88, %c0_134], %198 {strides = array<i32>} : memref<128x32xf32, #tpu.memory_space<vmem>>, vector<8x32xf32>,
    %c487 = arith.constant 487 : index
    %c0_135 = arith.constant 0 : index
    %200 = tpu.strided_load %arg8[%c487, %c0_135] {strides = array<i32: 2, 1>} : memref<648x32xf32, #tpu.memory_space<vmem>>, vector<8x32xf32>
    %c488 = arith.constant 488 : index
    %c0_136 = arith.constant 0 : index
    %201 = tpu.strided_load %arg8[%c488, %c0_136] {strides = array<i32: 2, 1>} : memref<648x32xf32, #tpu.memory_space<vmem>>, vector<8x32xf32>
    %c505 = arith.constant 505 : index
    %c0_137 = arith.constant 0 : index
    %202 = tpu.strided_load %arg8[%c505, %c0_137] {strides = array<i32: 2, 1>} : memref<648x32xf32, #tpu.memory_space<vmem>>, vector<8x32xf32>
    %c506 = arith.constant 506 : index
    %c0_138 = arith.constant 0 : index
    %203 = tpu.strided_load %arg8[%c506, %c0_138] {strides = array<i32: 2, 1>} : memref<648x32xf32, #tpu.memory_space<vmem>>, vector<8x32xf32>
    %204 = arith.maximumf %200, %201 : vector<8x32xf32>
    %205 = arith.maximumf %202, %203 : vector<8x32xf32>
    %206 = arith.maximumf %204, %205 : vector<8x32xf32>
    %c96 = arith.constant 96 : index
    %c0_139 = arith.constant 0 : index
    %207 = vector.load %arg9[%c96, %c0_139] : memref<128x32xf32, #tpu.memory_space<vmem>>, vector<8x32xf32>
    tpu.vector_store %arg9[%c96, %c0_139], %206 {strides = array<i32>} : memref<128x32xf32, #tpu.memory_space<vmem>>, vector<8x32xf32>,
    %c523 = arith.constant 523 : index
    %c0_140 = arith.constant 0 : index
    %208 = tpu.strided_load %arg8[%c523, %c0_140] {strides = array<i32: 2, 1>} : memref<648x32xf32, #tpu.memory_space<vmem>>, vector<8x32xf32>
    %c524 = arith.constant 524 : index
    %c0_141 = arith.constant 0 : index
    %209 = tpu.strided_load %arg8[%c524, %c0_141] {strides = array<i32: 2, 1>} : memref<648x32xf32, #tpu.memory_space<vmem>>, vector<8x32xf32>
    %c541 = arith.constant 541 : index
    %c0_142 = arith.constant 0 : index
    %210 = tpu.strided_load %arg8[%c541, %c0_142] {strides = array<i32: 2, 1>} : memref<648x32xf32, #tpu.memory_space<vmem>>, vector<8x32xf32>
    %c542 = arith.constant 542 : index
    %c0_143 = arith.constant 0 : index
    %211 = tpu.strided_load %arg8[%c542, %c0_143] {strides = array<i32: 2, 1>} : memref<648x32xf32, #tpu.memory_space<vmem>>, vector<8x32xf32>
    %212 = arith.maximumf %208, %209 : vector<8x32xf32>
    %213 = arith.maximumf %210, %211 : vector<8x32xf32>
    %214 = arith.maximumf %212, %213 : vector<8x32xf32>
    %c104 = arith.constant 104 : index
    %c0_144 = arith.constant 0 : index
    %215 = vector.load %arg9[%c104, %c0_144] : memref<128x32xf32, #tpu.memory_space<vmem>>, vector<8x32xf32>
    tpu.vector_store %arg9[%c104, %c0_144], %214 {strides = array<i32>} : memref<128x32xf32, #tpu.memory_space<vmem>>, vector<8x32xf32>,
    %c559 = arith.constant 559 : index
    %c0_145 = arith.constant 0 : index
    %216 = tpu.strided_load %arg8[%c559, %c0_145] {strides = array<i32: 2, 1>} : memref<648x32xf32, #tpu.memory_space<vmem>>, vector<8x32xf32>
    %c560 = arith.constant 560 : index
    %c0_146 = arith.constant 0 : index
    %217 = tpu.strided_load %arg8[%c560, %c0_146] {strides = array<i32: 2, 1>} : memref<648x32xf32, #tpu.memory_space<vmem>>, vector<8x32xf32>
    %c577 = arith.constant 577 : index
    %c0_147 = arith.constant 0 : index
    %218 = tpu.strided_load %arg8[%c577, %c0_147] {strides = array<i32: 2, 1>} : memref<648x32xf32, #tpu.memory_space<vmem>>, vector<8x32xf32>
    %c578 = arith.constant 578 : index
    %c0_148 = arith.constant 0 : index
    %219 = tpu.strided_load %arg8[%c578, %c0_148] {strides = array<i32: 2, 1>} : memref<648x32xf32, #tpu.memory_space<vmem>>, vector<8x32xf32>
    %220 = arith.maximumf %216, %217 : vector<8x32xf32>
    %221 = arith.maximumf %218, %219 : vector<8x32xf32>
    %222 = arith.maximumf %220, %221 : vector<8x32xf32>
    %c112 = arith.constant 112 : index
    %c0_149 = arith.constant 0 : index
    %223 = vector.load %arg9[%c112, %c0_149] : memref<128x32xf32, #tpu.memory_space<vmem>>, vector<8x32xf32>
    tpu.vector_store %arg9[%c112, %c0_149], %222 {strides = array<i32>} : memref<128x32xf32, #tpu.memory_space<vmem>>, vector<8x32xf32>,
    %c595 = arith.constant 595 : index
    %c0_150 = arith.constant 0 : index
    %224 = tpu.strided_load %arg8[%c595, %c0_150] {strides = array<i32: 2, 1>} : memref<648x32xf32, #tpu.memory_space<vmem>>, vector<8x32xf32>
    %c596 = arith.constant 596 : index
    %c0_151 = arith.constant 0 : index
    %225 = tpu.strided_load %arg8[%c596, %c0_151] {strides = array<i32: 2, 1>} : memref<648x32xf32, #tpu.memory_space<vmem>>, vector<8x32xf32>
    %c613 = arith.constant 613 : index
    %c0_152 = arith.constant 0 : index
    %226 = tpu.strided_load %arg8[%c613, %c0_152] {strides = array<i32: 2, 1>} : memref<648x32xf32, #tpu.memory_space<vmem>>, vector<8x32xf32>
    %c614 = arith.constant 614 : index
    %c0_153 = arith.constant 0 : index
    %227 = tpu.strided_load %arg8[%c614, %c0_153] {strides = array<i32: 2, 1>} : memref<648x32xf32, #tpu.memory_space<vmem>>, vector<8x32xf32>
    %228 = arith.maximumf %224, %225 : vector<8x32xf32>
    %229 = arith.maximumf %226, %227 : vector<8x32xf32>
    %230 = arith.maximumf %228, %229 : vector<8x32xf32>
    %c120 = arith.constant 120 : index
    %c0_154 = arith.constant 0 : index
    %231 = vector.load %arg9[%c120, %c0_154] : memref<128x32xf32, #tpu.memory_space<vmem>>, vector<8x32xf32>
    tpu.vector_store %arg9[%c120, %c0_154], %230 {strides = array<i32>} : memref<128x32xf32, #tpu.memory_space<vmem>>, vector<8x32xf32>,
    return
  }
}

</mosaic_0001>

<llo_original>
// kernel: encoder_forward.1
$region0: #{encoder_forward.1}
  #allocation0 [shape = 'u32[]', space=smem, size = 0x4, offset = 0x4, fixed_abs, tag = 'smem constant byte address 0x4 - core index']
  #allocation1 [shape = 'u32[144,128]{1,0:T(1,128)}', space=vmem, size = 0x12000, scoped, tag = 'internal scratch']
  #allocation2 [shape = 'f32[696,32]{1,0:T(8,128)}', space=vmem, size = 0x57000, scoped, tag = 'scratch operand']
  %s0 = inlined_call_operand.vmem [shape: bf16[648,36], index: 0, kind: input, shape index: {}]
  %s1 = inlined_call_operand.vmem [shape: bf16[36,32], index: 1, kind: input, shape index: {}]
  %s2 = inlined_call_operand.vmem [shape: bf16[9,32,32], index: 2, kind: input, shape index: {}]
  %s3 = inlined_call_operand.vmem [shape: f32[1,32], index: 3, kind: input, shape index: {}]
  %s4 = inlined_call_operand.vmem [shape: f32[1,32], index: 4, kind: input, shape index: {}]
  %s5 = inlined_call_operand.vmem [shape: f32[1,32], index: 5, kind: input, shape index: {}]
  %s6 = inlined_call_operand.vmem [shape: f32[1,32], index: 6, kind: input, shape index: {}]
  %s7 = inlined_call_operand.vmem [shape: f32[648,1], index: 7, kind: input, shape index: {}]
  %s8 = inlined_call_operand.vmem [shape: f32[648,32], index: 8, kind: output, shape index: {0}]
  %s9 = inlined_call_operand.hbm [shape: f32[128,32], index: 9, kind: output, shape index: {1}]
  %10 = xla_tuple %s8, %s9
  %s11 = sld [smem:[#allocation0]]
  $region50: #{encoder_forward.1} parent=0
    _
  %s13 = ssub.s32 1, %s11
  %s14 = scalar_select 0, %s13, %s11
  $region1: #{encoder_forward.1} parent=0
    #allocation3 [shape = 'u8[65536]{0}', space=vmem, size = 0x10000, scoped, tag = 'output window, operand 1, single buffered']
    #allocation4 [shape = 's32[1]{0}', space=sflag, size = 0x4, scoped, tag = 'scoped memory for encoder_forward.1']
    %15 = vsyncpa [#allocation4], 0
    // Predicated region
    $region2: #{encoder_forward.1} parent=1 // pred_check
      _
    $region3: #{encoder_forward.1} parent=1 // pred_check_branch
      %17 = sbr.rel (0) target = $region5
    $region4: #{encoder_forward.1} parent=1 // pred_region
      _
    $region5: #{encoder_forward.1} parent=1 // pred_fallthru
      _
    // Predicated region
    $region6: #{encoder_forward.1} parent=1 // pred_check
      _
    $region7: #{encoder_forward.1} parent=1 // pred_check_branch
      %19 = sbr.rel (0) target = $region9
    $region8: #{encoder_forward.1} parent=1 // pred_region
      _
    $region9: #{encoder_forward.1} parent=1 // pred_fallthru
      _
    // Predicated region
    $region10: #{encoder_forward.1} parent=1 // pred_check
      _
    $region11: #{encoder_forward.1} parent=1 // pred_check_branch
      %21 = sbr.rel (0) target = $region13
    $region12: #{encoder_forward.1} parent=1 // pred_region
      _
    $region13: #{encoder_forward.1} parent=1 // pred_fallthru
      _
    // Predicated region
    $region14: #{encoder_forward.1} parent=1 // pred_check
      _
    $region15: #{encoder_forward.1} parent=1 // pred_check_branch
      %23 = sbr.rel (0) target = $region17
    $region16: #{encoder_forward.1} parent=1 // pred_region
      _
    $region17: #{encoder_forward.1} parent=1 // pred_fallthru
      _
    // Predicated region
    $region18: #{encoder_forward.1} parent=1 // pred_check
      _
    $region19: #{encoder_forward.1} parent=1 // pred_check_branch
      %25 = sbr.rel (0) target = $region21
    $region20: #{encoder_forward.1} parent=1 // pred_region
      _
    $region21: #{encoder_forward.1} parent=1 // pred_fallthru
      _
    // Predicated region
    $region22: #{encoder_forward.1} parent=1 // pred_check
      _
    $region23: #{encoder_forward.1} parent=1 // pred_check_branch
      %27 = sbr.rel (0) target = $region25
    $region24: #{encoder_forward.1} parent=1 // pred_region
      _
    $region25: #{encoder_forward.1} parent=1 // pred_fallthru
      _
    // Predicated region
    $region26: #{encoder_forward.1} parent=1 // pred_check
      _
    $region27: #{encoder_forward.1} parent=1 // pred_check_branch
      %29 = sbr.rel (0) target = $region29
    $region28: #{encoder_forward.1} parent=1 // pred_region
      _
    $region29: #{encoder_forward.1} parent=1 // pred_fallthru
      _
    // Predicated region
    $region30: #{encoder_forward.1} parent=1 // pred_check
      _
    $region31: #{encoder_forward.1} parent=1 // pred_check_branch
      %31 = sbr.rel (0) target = $region33
    $region32: #{encoder_forward.1} parent=1 // pred_region
      _
    $region33: #{encoder_forward.1} parent=1 // pred_fallthru
      _
    %v33 = vld [vmem:[%s7] sm:$0xff]
    %v34 = vld [vmem:[%s7 + $0x8] sm:$0xff]
    %v35 = vld [vmem:[%s7 + $0x10] sm:$0xff]
    %v36 = vld [vmem:[%s7 + $0x18] sm:$0xff]
    %v37 = vld [vmem:[%s7 + $0x20] sm:$0xff]
    %v38 = vld [vmem:[%s7 + $0x28] sm:$0xff]
    %v39 = vld [vmem:[%s7 + $0x30] sm:$0xff]
    %v40 = vld [vmem:[%s7 + $0x38] sm:$0xff]
    %v41 = vld [vmem:[%s7 + $0x40] sm:$0xff]
    %v42 = vld [vmem:[%s7 + $0x48] sm:$0xff]
    %v43 = vld [vmem:[%s7 + $0x50] sm:$0xff]
    %v44 = vld [vmem:[%s7 + $0x58] sm:$0xff]
    %v45 = vld [vmem:[%s7 + $0x60] sm:$0xff]
    %v46 = vld [vmem:[%s7 + $0x68] sm:$0xff]
    %v47 = vld [vmem:[%s7 + $0x70] sm:$0xff]
    %v48 = vld [vmem:[%s7 + $0x78] sm:$0xff]
    %v49 = vld [vmem:[%s7 + $0x80] sm:$0xff]
    %v50 = vld [vmem:[%s7 + $0x88] sm:$0xff]
    %v51 = vld [vmem:[%s7 + $0x90] sm:$0xff]
    %v52 = vld [vmem:[%s7 + $0x98] sm:$0xff]
    %v53 = vld [vmem:[%s7 + $0xa0] sm:$0xff]
    %v54 = vld [vmem:[%s7 + $0xa8] sm:$0xff]
    %v55 = vld [vmem:[%s7 + $0xb0] sm:$0xff]
    %v56 = vld [vmem:[%s7 + $0xb8] sm:$0xff]
    %v57 = vld [vmem:[%s7 + $0xc0] sm:$0xff]
    %v58 = vld [vmem:[%s7 + $0xc8] sm:$0xff]
    %v59 = vld [vmem:[%s7 + $0xd0] sm:$0xff]
    %v60 = vld [vmem:[%s7 + $0xd8] sm:$0xff]
    %v61 = vld [vmem:[%s7 + $0xe0] sm:$0xff]
    %v62 = vld [vmem:[%s7 + $0xe8] sm:$0xff]
    %v63 = vld [vmem:[%s7 + $0xf0] sm:$0xff]
    %v64 = vld [vmem:[%s7 + $0xf8] sm:$0xff]
    %v65 = vld [vmem:[%s7 + $0x100] sm:$0xff]
    %v66 = vld [vmem:[%s7 + $0x108] sm:$0xff]
    %v67 = vld [vmem:[%s7 + $0x110] sm:$0xff]
    %v68 = vld [vmem:[%s7 + $0x118] sm:$0xff]
    %v69 = vld [vmem:[%s7 + $0x120] sm:$0xff]
    %v70 = vld [vmem:[%s7 + $0x128] sm:$0xff]
    %v71 = vld [vmem:[%s7 + $0x130] sm:$0xff]
    %v72 = vld [vmem:[%s7 + $0x138] sm:$0xff]
    %v73 = vld [vmem:[%s7 + $0x140] sm:$0xff]
    %v74 = vld [vmem:[%s7 + $0x148] sm:$0xff]
    %v75 = vld [vmem:[%s7 + $0x150] sm:$0xff]
    %v76 = vld [vmem:[%s7 + $0x158] sm:$0xff]
    %v77 = vld [vmem:[%s7 + $0x160] sm:$0xff]
    %v78 = vld [vmem:[%s7 + $0x168] sm:$0xff]
    %v79 = vld [vmem:[%s7 + $0x170] sm:$0xff]
    %v80 = vld [vmem:[%s7 + $0x178] sm:$0xff]
    %v81 = vld [vmem:[%s7 + $0x180] sm:$0xff]
    %v82 = vld [vmem:[%s7 + $0x188] sm:$0xff]
    %v83 = vld [vmem:[%s7 + $0x190] sm:$0xff]
    %v84 = vld [vmem:[%s7 + $0x198] sm:$0xff]
    %v85 = vld [vmem:[%s7 + $0x1a0] sm:$0xff]
    %v86 = vld [vmem:[%s7 + $0x1a8] sm:$0xff]
    %v87 = vld [vmem:[%s7 + $0x1b0] sm:$0xff]
    %v88 = vld [vmem:[%s7 + $0x1b8] sm:$0xff]
    %v89 = vld [vmem:[%s7 + $0x1c0] sm:$0xff]
    %v90 = vld [vmem:[%s7 + $0x1c8] sm:$0xff]
    %v91 = vld [vmem:[%s7 + $0x1d0] sm:$0xff]
    %v92 = vld [vmem:[%s7 + $0x1d8] sm:$0xff]
    %v93 = vld [vmem:[%s7 + $0x1e0] sm:$0xff]
    %v94 = vld [vmem:[%s7 + $0x1e8] sm:$0xff]
    %v95 = vld [vmem:[%s7 + $0x1f0] sm:$0xff]
    %v96 = vld [vmem:[%s7 + $0x1f8] sm:$0xff]
    %v97 = vld [vmem:[%s7 + $0x200] sm:$0xff]
    %v98 = vld [vmem:[%s7 + $0x208] sm:$0xff]
    %v99 = vld [vmem:[%s7 + $0x210] sm:$0xff]
    %v100 = vld [vmem:[%s7 + $0x218] sm:$0xff]
    %v101 = vld [vmem:[%s7 + $0x220] sm:$0xff]
    %v102 = vld [vmem:[%s7 + $0x228] sm:$0xff]
    %v103 = vld [vmem:[%s7 + $0x230] sm:$0xff]
    %v104 = vld [vmem:[%s7 + $0x238] sm:$0xff]
    %v105 = vld [vmem:[%s7 + $0x240] sm:$0xff]
    %v106 = vld [vmem:[%s7 + $0x248] sm:$0xff]
    %v107 = vld [vmem:[%s7 + $0x250] sm:$0xff]
    %v108 = vld [vmem:[%s7 + $0x258] sm:$0xff]
    %v109 = vld [vmem:[%s7 + $0x260] sm:$0xff]
    %v110 = vld [vmem:[%s7 + $0x268] sm:$0xff]
    %v111 = vld [vmem:[%s7 + $0x270] sm:$0xff]
    %v112 = vld [vmem:[%s7 + $0x278] sm:$0xff]
    %v113 = vld [vmem:[%s7 + $0x280] sm:$0xff]
    %115 = vset.pattern.permute.xlu0 0
    %116 = vperm.xlu0 %115, %v33
    %v117 = vpop.permute.xlu0 %116
    %120 = vset.pattern.permute.xlu0 0
    %121 = vperm.xlu0 %120, %v34
    %v122 = vpop.permute.xlu0 %121
    %125 = vset.pattern.permute.xlu0 0
    %126 = vperm.xlu0 %125, %v35
    %v127 = vpop.permute.xlu0 %126
    %130 = vset.pattern.permute.xlu0 0
    %131 = vperm.xlu0 %130, %v36
    %v132 = vpop.permute.xlu0 %131
    %135 = vset.pattern.permute.xlu0 0
    %136 = vperm.xlu0 %135, %v37
    %v137 = vpop.permute.xlu0 %136
    %140 = vset.pattern.permute.xlu0 0
    %141 = vperm.xlu0 %140, %v38
    %v142 = vpop.permute.xlu0 %141
    %145 = vset.pattern.permute.xlu0 0
    %146 = vperm.xlu0 %145, %v39
    %v147 = vpop.permute.xlu0 %146
    %150 = vset.pattern.permute.xlu0 0
    %151 = vperm.xlu0 %150, %v40
    %v152 = vpop.permute.xlu0 %151
    %155 = vset.pattern.permute.xlu0 0
    %156 = vperm.xlu0 %155, %v41
    %v157 = vpop.permute.xlu0 %156
    %160 = vset.pattern.permute.xlu0 0
    %161 = vperm.xlu0 %160, %v42
    %v162 = vpop.permute.xlu0 %161
    %165 = vset.pattern.permute.xlu0 0
    %166 = vperm.xlu0 %165, %v43
    %v167 = vpop.permute.xlu0 %166
    %170 = vset.pattern.permute.xlu0 0
    %171 = vperm.xlu0 %170, %v44
    %v172 = vpop.permute.xlu0 %171
    %175 = vset.pattern.permute.xlu0 0
    %176 = vperm.xlu0 %175, %v45
    %v177 = vpop.permute.xlu0 %176
    %180 = vset.pattern.permute.xlu0 0
    %181 = vperm.xlu0 %180, %v46
    %v182 = vpop.permute.xlu0 %181
    %185 = vset.pattern.permute.xlu0 0
    %186 = vperm.xlu0 %185, %v47
    %v187 = vpop.permute.xlu0 %186
    %190 = vset.pattern.permute.xlu0 0
    %191 = vperm.xlu0 %190, %v48
    %v192 = vpop.permute.xlu0 %191
    %195 = vset.pattern.permute.xlu0 0
    %196 = vperm.xlu0 %195, %v49
    %v197 = vpop.permute.xlu0 %196
    %200 = vset.pattern.permute.xlu0 0
    %201 = vperm.xlu0 %200, %v50
    %v202 = vpop.permute.xlu0 %201
    %205 = vset.pattern.permute.xlu0 0
    %206 = vperm.xlu0 %205, %v51
    %v207 = vpop.permute.xlu0 %206
    %210 = vset.pattern.permute.xlu0 0
    %211 = vperm.xlu0 %210, %v52
    %v212 = vpop.permute.xlu0 %211
    %215 = vset.pattern.permute.xlu0 0
    %216 = vperm.xlu0 %215, %v53
    %v217 = vpop.permute.xlu0 %216
    %220 = vset.pattern.permute.xlu0 0
    %221 = vperm.xlu0 %220, %v54
    %v222 = vpop.permute.xlu0 %221
    %225 = vset.pattern.permute.xlu0 0
    %226 = vperm.xlu0 %225, %v55
    %v227 = vpop.permute.xlu0 %226
    %230 = vset.pattern.permute.xlu0 0
    %231 = vperm.xlu0 %230, %v56
    %v232 = vpop.permute.xlu0 %231
    %235 = vset.pattern.permute.xlu0 0
    %236 = vperm.xlu0 %235, %v57
    %v237 = vpop.permute.xlu0 %236
    %240 = vset.pattern.permute.xlu0 0
    %241 = vperm.xlu0 %240, %v58
    %v242 = vpop.permute.xlu0 %241
    %245 = vset.pattern.permute.xlu0 0
    %246 = vperm.xlu0 %245, %v59
    %v247 = vpop.permute.xlu0 %246
    %250 = vset.pattern.permute.xlu0 0
    %251 = vperm.xlu0 %250, %v60
    %v252 = vpop.permute.xlu0 %251
    %255 = vset.pattern.permute.xlu0 0
    %256 = vperm.xlu0 %255, %v61
    %v257 = vpop.permute.xlu0 %256
    %260 = vset.pattern.permute.xlu0 0
    %261 = vperm.xlu0 %260, %v62
    %v262 = vpop.permute.xlu0 %261
    %265 = vset.pattern.permute.xlu0 0
    %266 = vperm.xlu0 %265, %v63
    %v267 = vpop.permute.xlu0 %266
    %270 = vset.pattern.permute.xlu0 0
    %271 = vperm.xlu0 %270, %v64
    %v272 = vpop.permute.xlu0 %271
    %275 = vset.pattern.permute.xlu0 0
    %276 = vperm.xlu0 %275, %v65
    %v277 = vpop.permute.xlu0 %276
    %280 = vset.pattern.permute.xlu0 0
    %281 = vperm.xlu0 %280, %v66
    %v282 = vpop.permute.xlu0 %281
    %285 = vset.pattern.permute.xlu0 0
    %286 = vperm.xlu0 %285, %v67
    %v287 = vpop.permute.xlu0 %286
    %290 = vset.pattern.permute.xlu0 0
    %291 = vperm.xlu0 %290, %v68
    %v292 = vpop.permute.xlu0 %291
    %295 = vset.pattern.permute.xlu0 0
    %296 = vperm.xlu0 %295, %v69
    %v297 = vpop.permute.xlu0 %296
    %300 = vset.pattern.permute.xlu0 0
    %301 = vperm.xlu0 %300, %v70
    %v302 = vpop.permute.xlu0 %301
    %305 = vset.pattern.permute.xlu0 0
    %306 = vperm.xlu0 %305, %v71
    %v307 = vpop.permute.xlu0 %306
    %310 = vset.pattern.permute.xlu0 0
    %311 = vperm.xlu0 %310, %v72
    %v312 = vpop.permute.xlu0 %311
    %315 = vset.pattern.permute.xlu0 0
    %316 = vperm.xlu0 %315, %v73
    %v317 = vpop.permute.xlu0 %316
    %320 = vset.pattern.permute.xlu0 0
    %321 = vperm.xlu0 %320, %v74
    %v322 = vpop.permute.xlu0 %321
    %325 = vset.pattern.permute.xlu0 0
    %326 = vperm.xlu0 %325, %v75
    %v327 = vpop.permute.xlu0 %326
    %330 = vset.pattern.permute.xlu0 0
    %331 = vperm.xlu0 %330, %v76
    %v332 = vpop.permute.xlu0 %331
    %335 = vset.pattern.permute.xlu0 0
    %336 = vperm.xlu0 %335, %v77
    %v337 = vpop.permute.xlu0 %336
    %340 = vset.pattern.permute.xlu0 0
    %341 = vperm.xlu0 %340, %v78
    %v342 = vpop.permute.xlu0 %341
    %345 = vset.pattern.permute.xlu0 0
    %346 = vperm.xlu0 %345, %v79
    %v347 = vpop.permute.xlu0 %346
    %350 = vset.pattern.permute.xlu0 0
    %351 = vperm.xlu0 %350, %v80
    %v352 = vpop.permute.xlu0 %351
    %355 = vset.pattern.permute.xlu0 0
    %356 = vperm.xlu0 %355, %v81
    %v357 = vpop.permute.xlu0 %356
    %360 = vset.pattern.permute.xlu0 0
    %361 = vperm.xlu0 %360, %v82
    %v362 = vpop.permute.xlu0 %361
    %365 = vset.pattern.permute.xlu0 0
    %366 = vperm.xlu0 %365, %v83
    %v367 = vpop.permute.xlu0 %366
    %370 = vset.pattern.permute.xlu0 0
    %371 = vperm.xlu0 %370, %v84
    %v372 = vpop.permute.xlu0 %371
    %375 = vset.pattern.permute.xlu0 0
    %376 = vperm.xlu0 %375, %v85
    %v377 = vpop.permute.xlu0 %376
    %380 = vset.pattern.permute.xlu0 0
    %381 = vperm.xlu0 %380, %v86
    %v382 = vpop.permute.xlu0 %381
    %385 = vset.pattern.permute.xlu0 0
    %386 = vperm.xlu0 %385, %v87
    %v387 = vpop.permute.xlu0 %386
    %390 = vset.pattern.permute.xlu0 0
    %391 = vperm.xlu0 %390, %v88
    %v392 = vpop.permute.xlu0 %391
    %395 = vset.pattern.permute.xlu0 0
    %396 = vperm.xlu0 %395, %v89
    %v397 = vpop.permute.xlu0 %396
    %400 = vset.pattern.permute.xlu0 0
    %401 = vperm.xlu0 %400, %v90
    %v402 = vpop.permute.xlu0 %401
    %405 = vset.pattern.permute.xlu0 0
    %406 = vperm.xlu0 %405, %v91
    %v407 = vpop.permute.xlu0 %406
    %410 = vset.pattern.permute.xlu0 0
    %411 = vperm.xlu0 %410, %v92
    %v412 = vpop.permute.xlu0 %411
    %415 = vset.pattern.permute.xlu0 0
    %416 = vperm.xlu0 %415, %v93
    %v417 = vpop.permute.xlu0 %416
    %420 = vset.pattern.permute.xlu0 0
    %421 = vperm.xlu0 %420, %v94
    %v422 = vpop.permute.xlu0 %421
    %425 = vset.pattern.permute.xlu0 0
    %426 = vperm.xlu0 %425, %v95
    %v427 = vpop.permute.xlu0 %426
    %430 = vset.pattern.permute.xlu0 0
    %431 = vperm.xlu0 %430, %v96
    %v432 = vpop.permute.xlu0 %431
    %435 = vset.pattern.permute.xlu0 0
    %436 = vperm.xlu0 %435, %v97
    %v437 = vpop.permute.xlu0 %436
    %440 = vset.pattern.permute.xlu0 0
    %441 = vperm.xlu0 %440, %v98
    %v442 = vpop.permute.xlu0 %441
    %445 = vset.pattern.permute.xlu0 0
    %446 = vperm.xlu0 %445, %v99
    %v447 = vpop.permute.xlu0 %446
    %450 = vset.pattern.permute.xlu0 0
    %451 = vperm.xlu0 %450, %v100
    %v452 = vpop.permute.xlu0 %451
    %455 = vset.pattern.permute.xlu0 0
    %456 = vperm.xlu0 %455, %v101
    %v457 = vpop.permute.xlu0 %456
    %460 = vset.pattern.permute.xlu0 0
    %461 = vperm.xlu0 %460, %v102
    %v462 = vpop.permute.xlu0 %461
    %465 = vset.pattern.permute.xlu0 0
    %466 = vperm.xlu0 %465, %v103
    %v467 = vpop.permute.xlu0 %466
    %470 = vset.pattern.permute.xlu0 0
    %471 = vperm.xlu0 %470, %v104
    %v472 = vpop.permute.xlu0 %471
    %475 = vset.pattern.permute.xlu0 0
    %476 = vperm.xlu0 %475, %v105
    %v477 = vpop.permute.xlu0 %476
    %480 = vset.pattern.permute.xlu0 0
    %481 = vperm.xlu0 %480, %v106
    %v482 = vpop.permute.xlu0 %481
    %485 = vset.pattern.permute.xlu0 0
    %486 = vperm.xlu0 %485, %v107
    %v487 = vpop.permute.xlu0 %486
    %490 = vset.pattern.permute.xlu0 0
    %491 = vperm.xlu0 %490, %v108
    %v492 = vpop.permute.xlu0 %491
    %495 = vset.pattern.permute.xlu0 0
    %496 = vperm.xlu0 %495, %v109
    %v497 = vpop.permute.xlu0 %496
    %500 = vset.pattern.permute.xlu0 0
    %501 = vperm.xlu0 %500, %v110
    %v502 = vpop.permute.xlu0 %501
    %505 = vset.pattern.permute.xlu0 0
    %506 = vperm.xlu0 %505, %v111
    %v507 = vpop.permute.xlu0 %506
    %510 = vset.pattern.permute.xlu0 0
    %511 = vperm.xlu0 %510, %v112
    %v512 = vpop.permute.xlu0 %511
    %515 = vset.pattern.permute.xlu0 0
    %516 = vperm.xlu0 %515, %v113
    %v517 = vpop.permute.xlu0 %516
    %v519 = vld [vmem:[%s0] sm:$0xf]
    %v520 = vld [vmem:[%s0 + $0x4] sm:$0xf]
    %v521 = vld [vmem:[%s0 + $0x8] sm:$0xf]
    %v522 = vld [vmem:[%s0 + $0xc] sm:$0xf]
    %v523 = vld [vmem:[%s0 + $0x10] sm:$0xf]
    %v524 = vld [vmem:[%s0 + $0x14] sm:$0xf]
    %v525 = vld [vmem:[%s0 + $0x18] sm:$0xf]
    %v526 = vld [vmem:[%s0 + $0x1c] sm:$0xf]
    %v527 = vld [vmem:[%s0 + $0x20] sm:$0xf]
    %v528 = vld [vmem:[%s0 + $0x24] sm:$0xf]
    %v529 = vld [vmem:[%s0 + $0x28] sm:$0xf]
    %v530 = vld [vmem:[%s0 + $0x2c] sm:$0xf]
    %v531 = vld [vmem:[%s0 + $0x30] sm:$0xf]
    %v532 = vld [vmem:[%s0 + $0x34] sm:$0xf]
    %v533 = vld [vmem:[%s0 + $0x38] sm:$0xf]
    %v534 = vld [vmem:[%s0 + $0x3c] sm:$0xf]
    %v535 = vld [vmem:[%s0 + $0x40] sm:$0xf]
    %v536 = vld [vmem:[%s0 + $0x44] sm:$0xf]
    %v537 = vld [vmem:[%s0 + $0x48] sm:$0xf]
    %v538 = vld [vmem:[%s0 + $0x4c] sm:$0xf]
    %v539 = vld [vmem:[%s0 + $0x50] sm:$0xf]
    %v540 = vld [vmem:[%s0 + $0x54] sm:$0xf]
    %v541 = vld [vmem:[%s0 + $0x58] sm:$0xf]
    %v542 = vld [vmem:[%s0 + $0x5c] sm:$0xf]
    %v543 = vld [vmem:[%s0 + $0x60] sm:$0xf]
    %v544 = vld [vmem:[%s0 + $0x64] sm:$0xf]
    %v545 = vld [vmem:[%s0 + $0x68] sm:$0xf]
    %v546 = vld [vmem:[%s0 + $0x6c] sm:$0xf]
    %v547 = vld [vmem:[%s0 + $0x70] sm:$0xf]
    %v548 = vld [vmem:[%s0 + $0x74] sm:$0xf]
    %v549 = vld [vmem:[%s0 + $0x78] sm:$0xf]
    %v550 = vld [vmem:[%s0 + $0x7c] sm:$0xf]
    %v551 = vld [vmem:[%s0 + $0x80] sm:$0xf]
    %v552 = vld [vmem:[%s0 + $0x84] sm:$0xf]
    %v553 = vld [vmem:[%s0 + $0x88] sm:$0xf]
    %v554 = vld [vmem:[%s0 + $0x8c] sm:$0xf]
    %v555 = vld [vmem:[%s0 + $0x90] sm:$0xf]
    %v556 = vld [vmem:[%s0 + $0x94] sm:$0xf]
    %v557 = vld [vmem:[%s0 + $0x98] sm:$0xf]
    %v558 = vld [vmem:[%s0 + $0x9c] sm:$0xf]
    %v559 = vld [vmem:[%s0 + $0xa0] sm:$0xf]
    %v560 = vld [vmem:[%s0 + $0xa4] sm:$0xf]
    %v561 = vld [vmem:[%s0 + $0xa8] sm:$0xf]
    %v562 = vld [vmem:[%s0 + $0xac] sm:$0xf]
    %v563 = vld [vmem:[%s0 + $0xb0] sm:$0xf]
    %v564 = vld [vmem:[%s0 + $0xb4] sm:$0xf]
    %v565 = vld [vmem:[%s0 + $0xb8] sm:$0xf]
    %v566 = vld [vmem:[%s0 + $0xbc] sm:$0xf]
    %v567 = vld [vmem:[%s0 + $0xc0] sm:$0xf]
    %v568 = vld [vmem:[%s0 + $0xc4] sm:$0xf]
    %v569 = vld [vmem:[%s0 + $0xc8] sm:$0xf]
    %v570 = vld [vmem:[%s0 + $0xcc] sm:$0xf]
    %v571 = vld [vmem:[%s0 + $0xd0] sm:$0xf]
    %v572 = vld [vmem:[%s0 + $0xd4] sm:$0xf]
    %v573 = vld [vmem:[%s0 + $0xd8] sm:$0xf]
    %v574 = vld [vmem:[%s0 + $0xdc] sm:$0xf]
    %v575 = vld [vmem:[%s0 + $0xe0] sm:$0xf]
    %v576 = vld [vmem:[%s0 + $0xe4] sm:$0xf]
    %v577 = vld [vmem:[%s0 + $0xe8] sm:$0xf]
    %v578 = vld [vmem:[%s0 + $0xec] sm:$0xf]
    %v579 = vld [vmem:[%s0 + $0xf0] sm:$0xf]
    %v580 = vld [vmem:[%s0 + $0xf4] sm:$0xf]
    %v581 = vld [vmem:[%s0 + $0xf8] sm:$0xf]
    %v582 = vld [vmem:[%s0 + $0xfc] sm:$0xf]
    %v583 = vld [vmem:[%s0 + $0x100] sm:$0xf]
    %v584 = vld [vmem:[%s0 + $0x104] sm:$0xf]
    %v585 = vld [vmem:[%s0 + $0x108] sm:$0xf]
    %v586 = vld [vmem:[%s0 + $0x10c] sm:$0xf]
    %v587 = vld [vmem:[%s0 + $0x110] sm:$0xf]
    %v588 = vld [vmem:[%s0 + $0x114] sm:$0xf]
    %v589 = vld [vmem:[%s0 + $0x118] sm:$0xf]
    %v590 = vld [vmem:[%s0 + $0x11c] sm:$0xf]
    %v591 = vld [vmem:[%s0 + $0x120] sm:$0xf]
    %v592 = vld [vmem:[%s0 + $0x124] sm:$0xf]
    %v593 = vld [vmem:[%s0 + $0x128] sm:$0xf]
    %v594 = vld [vmem:[%s0 + $0x12c] sm:$0xf]
    %v595 = vld [vmem:[%s0 + $0x130] sm:$0xf]
    %v596 = vld [vmem:[%s0 + $0x134] sm:$0xf]
    %v597 = vld [vmem:[%s0 + $0x138] sm:$0xf]
    %v598 = vld [vmem:[%s0 + $0x13c] sm:$0xf]
    %v599 = vld [vmem:[%s0 + $0x140] sm:$0xf]
    %v600 = vld [vmem:[%s1] sm:$0xf]
    %v601 = vld [vmem:[%s1 + $0x4] sm:$0xf]
    %v602 = vld [vmem:[%s1 + $0x8] sm:$0xf]
    %v603 = vld [vmem:[%s1 + $0xc] sm:$0xf]
    %v604 = vld [vmem:[%s1 + $0x10] sm:$0x3]
    %v605 = vld [vmem:[%s3] sm:$0x1]
    %v607 = vlaneseq
    %v608 = vshrl.u32 %v607, 7
    %v609 = vsub.s32 0, %v608
    %v610 = vrot.slane %v605, %v609
    %v693 = vunpack.c.l.b16 %v519
    %v694 = vunpack.c.l.b16 %v520
    %v695 = vunpack.c.l.b16 %v521
    %v696 = vunpack.c.l.b16 %v522
    %v697 = vunpack.c.l.b16 %v523
    %v698 = vunpack.c.l.b16 %v524
    %v699 = vunpack.c.l.b16 %v525
    %v700 = vunpack.c.l.b16 %v526
    %v701 = vunpack.c.l.b16 %v527
    %v702 = vunpack.c.l.b16 %v528
    %v703 = vunpack.c.l.b16 %v529
    %v704 = vunpack.c.l.b16 %v530
    %v705 = vunpack.c.l.b16 %v531
    %v706 = vunpack.c.l.b16 %v532
    %v707 = vunpack.c.l.b16 %v533
    %v708 = vunpack.c.l.b16 %v534
    %v709 = vunpack.c.l.b16 %v535
    %v710 = vunpack.c.l.b16 %v536
    %v711 = vunpack.c.l.b16 %v537
    %v712 = vunpack.c.l.b16 %v538
    %v713 = vunpack.c.l.b16 %v539
    %v714 = vunpack.c.l.b16 %v540
    %v715 = vunpack.c.l.b16 %v541
    %v716 = vunpack.c.l.b16 %v542
    %v717 = vunpack.c.l.b16 %v543
    %v718 = vunpack.c.l.b16 %v544
    %v719 = vunpack.c.l.b16 %v545
    %v720 = vunpack.c.l.b16 %v546
    %v721 = vunpack.c.l.b16 %v547
    %v722 = vunpack.c.l.b16 %v548
    %v723 = vunpack.c.l.b16 %v549
    %v724 = vunpack.c.l.b16 %v550
    %v725 = vunpack.c.l.b16 %v551
    %v726 = vunpack.c.l.b16 %v552
    %v727 = vunpack.c.l.b16 %v553
    %v728 = vunpack.c.l.b16 %v554
    %v729 = vunpack.c.l.b16 %v555
    %v730 = vunpack.c.l.b16 %v556
    %v731 = vunpack.c.l.b16 %v557
    %v732 = vunpack.c.l.b16 %v558
    %v733 = vunpack.c.l.b16 %v559
    %v734 = vunpack.c.l.b16 %v560
    %v735 = vunpack.c.l.b16 %v561
    %v736 = vunpack.c.l.b16 %v562
    %v737 = vunpack.c.l.b16 %v563
    %v738 = vunpack.c.l.b16 %v564
    %v739 = vunpack.c.l.b16 %v565
    %v740 = vunpack.c.l.b16 %v566
    %v741 = vunpack.c.l.b16 %v567
    %v742 = vunpack.c.l.b16 %v568
    %v743 = vunpack.c.l.b16 %v569
    %v744 = vunpack.c.l.b16 %v570
    %v745 = vunpack.c.l.b16 %v571
    %v746 = vunpack.c.l.b16 %v572
    %v747 = vunpack.c.l.b16 %v573
    %v748 = vunpack.c.l.b16 %v574
    %v749 = vunpack.c.l.b16 %v575
    %v750 = vunpack.c.l.b16 %v576
    %v751 = vunpack.c.l.b16 %v577
    %v752 = vunpack.c.l.b16 %v578
    %v753 = vunpack.c.l.b16 %v579
    %v754 = vunpack.c.l.b16 %v580
    %v755 = vunpack.c.l.b16 %v581
    %v756 = vunpack.c.l.b16 %v582
    %v757 = vunpack.c.l.b16 %v583
    %v758 = vunpack.c.l.b16 %v584
    %v759 = vunpack.c.l.b16 %v585
    %v760 = vunpack.c.l.b16 %v586
    %v761 = vunpack.c.l.b16 %v587
    %v762 = vunpack.c.l.b16 %v588
    %v763 = vunpack.c.l.b16 %v589
    %v764 = vunpack.c.l.b16 %v590
    %v765 = vunpack.c.l.b16 %v591
    %v766 = vunpack.c.l.b16 %v592
    %v767 = vunpack.c.l.b16 %v593
    %v768 = vunpack.c.l.b16 %v594
    %v769 = vunpack.c.l.b16 %v595
    %v770 = vunpack.c.l.b16 %v596
    %v771 = vunpack.c.l.b16 %v597
    %v772 = vunpack.c.l.b16 %v598
    %v773 = vunpack.c.l.b16 %v599
    %v774 = vpack.c.b16 %v694, %v693
    %v775 = vpack.c.b16 %v696, %v695
    %v776 = vpack.c.b16 %v698, %v697
    %v777 = vpack.c.b16 %v700, %v699
    %v778 = vpack.c.b16 %v702, %v701
    %v779 = vpack.c.b16 %v704, %v703
    %v780 = vpack.c.b16 %v706, %v705
    %v781 = vpack.c.b16 %v708, %v707
    %v782 = vpack.c.b16 %v710, %v709
    %v783 = vpack.c.b16 %v712, %v711
    %v784 = vpack.c.b16 %v714, %v713
    %v785 = vpack.c.b16 %v716, %v715
    %v786 = vpack.c.b16 %v718, %v717
    %v787 = vpack.c.b16 %v720, %v719
    %v788 = vpack.c.b16 %v722, %v721
    %v789 = vpack.c.b16 %v724, %v723
    %v790 = vpack.c.b16 %v726, %v725
    %v791 = vpack.c.b16 %v728, %v727
    %v792 = vpack.c.b16 %v730, %v729
    %v793 = vpack.c.b16 %v732, %v731
    %v794 = vpack.c.b16 %v734, %v733
    %v795 = vpack.c.b16 %v736, %v735
    %v796 = vpack.c.b16 %v738, %v737
    %v797 = vpack.c.b16 %v740, %v739
    %v798 = vpack.c.b16 %v742, %v741
    %v799 = vpack.c.b16 %v744, %v743
    %v800 = vpack.c.b16 %v746, %v745
    %v801 = vpack.c.b16 %v748, %v747
    %v802 = vpack.c.b16 %v750, %v749
    %v803 = vpack.c.b16 %v752, %v751
    %v804 = vpack.c.b16 %v754, %v753
    %v805 = vpack.c.b16 %v756, %v755
    %v806 = vpack.c.b16 %v758, %v757
    %v807 = vpack.c.b16 %v760, %v759
    %v808 = vpack.c.b16 %v762, %v761
    %v809 = vpack.c.b16 %v764, %v763
    %v810 = vpack.c.b16 %v766, %v765
    %v811 = vpack.c.b16 %v768, %v767
    %v812 = vpack.c.b16 %v770, %v769
    %v813 = vpack.c.b16 %v772, %v771
    %v814 = vpack.c.b16 %v773, %v773
    %v820 = vunpack.c.l.b16 %v600
    %v821 = vunpack.c.l.b16 %v601
    %v822 = vunpack.c.l.b16 %v602
    %v823 = vunpack.c.l.b16 %v603
    %v824 = vunpack.c.l.b16 %v604
    %v825 = vpack.c.b16 %v821, %v820
    %v826 = vpack.c.b16 %v823, %v822
    %v827 = vpack.c.b16 %v824, %v824
    %vm830 = vcmask 293888
    %v832 = vsel %vm830, %v774, 0
    %v835 = vsel %vm830, %v775, 0
    %v838 = vsel %vm830, %v776, 0
    %v841 = vsel %vm830, %v777, 0
    %v844 = vsel %vm830, %v778, 0
    %v847 = vsel %vm830, %v779, 0
    %v850 = vsel %vm830, %v780, 0
    %v853 = vsel %vm830, %v781, 0
    %v856 = vsel %vm830, %v782, 0
    %v859 = vsel %vm830, %v783, 0
    %v862 = vsel %vm830, %v784, 0
    %v865 = vsel %vm830, %v785, 0
    %v868 = vsel %vm830, %v786, 0
    %v871 = vsel %vm830, %v787, 0
    %v874 = vsel %vm830, %v788, 0
    %v877 = vsel %vm830, %v789, 0
    %v880 = vsel %vm830, %v790, 0
    %v883 = vsel %vm830, %v791, 0
    %v886 = vsel %vm830, %v792, 0
    %v889 = vsel %vm830, %v793, 0
    %v892 = vsel %vm830, %v794, 0
    %v895 = vsel %vm830, %v795, 0
    %v898 = vsel %vm830, %v796, 0
    %v901 = vsel %vm830, %v797, 0
    %v904 = vsel %vm830, %v798, 0
    %v907 = vsel %vm830, %v799, 0
    %v910 = vsel %vm830, %v800, 0
    %v913 = vsel %vm830, %v801, 0
    %v916 = vsel %vm830, %v802, 0
    %v919 = vsel %vm830, %v803, 0
    %v922 = vsel %vm830, %v804, 0
    %v925 = vsel %vm830, %v805, 0
    %v928 = vsel %vm830, %v806, 0
    %v931 = vsel %vm830, %v807, 0
    %v934 = vsel %vm830, %v808, 0
    %v937 = vsel %vm830, %v809, 0
    %v940 = vsel %vm830, %v810, 0
    %v943 = vsel %vm830, %v811, 0
    %v946 = vsel %vm830, %v812, 0
    %v949 = vsel %vm830, %v813, 0
    %v952 = vsel %vm830, %v814, 0
    %vm954 = vcmask 1041408
    %v956 = vsel %vm954, %v827, 0
    %958 = vmatprep.subr.bf16.mxu0 0
    %959 = vmatpush1.bf16.msra.mxu0 %v825
    %960 = vmatprep.subr.bf16.mxu0 0
    %961 = vmatpush1.bf16.msra.mxu0 %v826
    %962 = vmatprep.subr.bf16.mxu0 0
    %963 = vmatpush1.bf16.msra.mxu0 %v956
    %964 = vmatprep.subr.bf16.mxu0 0
    %965 = vmatpush1.bf16.msra.mxu0 0
    %966 = vmatprep.subr.bf16.mxu0 0
    %967 = vmatpush1.bf16.msra.mxu0 0
    %968 = vmatprep.subr.bf16.mxu0 0
    %969 = vmatpush1.bf16.msra.mxu0 0
    %970 = vmatprep.subr.bf16.mxu0 0
    %971 = vmatpush1.bf16.msra.mxu0 0
    %972 = vmatprep.subr.bf16.mxu0 0
    %973 = vmatpush1.bf16.msra.mxu0 0
    %974 = vmatprep.subr.bf16.mxu0 0
    %975 = vmatpush1.bf16.msra.mxu0 0
    %976 = vmatprep.subr.bf16.mxu0 0
    %977 = vmatpush1.bf16.msra.mxu0 0
    %978 = vmatprep.subr.bf16.mxu0 0
    %979 = vmatpush1.bf16.msra.mxu0 0
    %980 = vmatprep.subr.bf16.mxu0 0
    %981 = vmatpush1.bf16.msra.mxu0 0
    %982 = vmatprep.subr.bf16.mxu0 0
    %983 = vmatpush1.bf16.msra.mxu0 0
    %984 = vmatprep.subr.bf16.mxu0 0
    %985 = vmatpush1.bf16.msra.mxu0 0
    %986 = vmatprep.subr.bf16.mxu0 0
    %987 = vmatpush1.bf16.msra.mxu0 0
    %988 = vmatprep.subr.bf16.mxu0 0
    %989 = vmatpush1.bf16.msra.mxu0 0
    %990 = vmatprep.mubr.bf16.mxu0 0
    %991 = vmatmul.mubr.bf16.gmra.mrb[0].mxu0 %v832
    %v992 = vpop.f32.mrb[0].mxu0
    %v993 = vadd.f32 %v610, %v992
    %v994 = vpop.f32.mrb[0].mxu0
    %v995 = vpop.f32.mrb[0].mxu0
    %v996 = vadd.f32 %v610, %v995
    %v997 = vpop.f32.mrb[0].mxu0
    %998 = vmatprep.mubr.bf16.mxu0 0
    %999 = vmatmul.mubr.bf16.gmra.mrb[0].mxu0 %v835
    %v1000 = vpop.f32.mrb[0].mxu0
    %v1001 = vadd.f32 %v610, %v1000
    %v1002 = vpop.f32.mrb[0].mxu0
    %v1003 = vpop.f32.mrb[0].mxu0
    %v1004 = vadd.f32 %v610, %v1003
    %v1005 = vpop.f32.mrb[0].mxu0
    %1006 = vmatprep.mubr.bf16.mxu0 0
    %1007 = vmatmul.mubr.bf16.gmra.mrb[0].mxu0 %v838
    %v1008 = vpop.f32.mrb[0].mxu0
    %v1009 = vadd.f32 %v610, %v1008
    %v1010 = vpop.f32.mrb[0].mxu0
    %v1011 = vpop.f32.mrb[0].mxu0
    %v1012 = vadd.f32 %v610, %v1011
    %v1013 = vpop.f32.mrb[0].mxu0
    %1014 = vmatprep.mubr.bf16.mxu0 0
    %1015 = vmatmul.mubr.bf16.gmra.mrb[0].mxu0 %v841
    %v1016 = vpop.f32.mrb[0].mxu0
    %v1017 = vadd.f32 %v610, %v1016
    %v1018 = vpop.f32.mrb[0].mxu0
    %v1019 = vpop.f32.mrb[0].mxu0
    %v1020 = vadd.f32 %v610, %v1019
    %v1021 = vpop.f32.mrb[0].mxu0
    %1022 = vmatprep.mubr.bf16.mxu0 0
    %1023 = vmatmul.mubr.bf16.gmra.mrb[0].mxu0 %v844
    %v1024 = vpop.f32.mrb[0].mxu0
    %v1025 = vadd.f32 %v610, %v1024
    %v1026 = vpop.f32.mrb[0].mxu0
    %v1027 = vpop.f32.mrb[0].mxu0
    %v1028 = vadd.f32 %v610, %v1027
    %v1029 = vpop.f32.mrb[0].mxu0
    %1030 = vmatprep.mubr.bf16.mxu0 0
    %1031 = vmatmul.mubr.bf16.gmra.mrb[0].mxu0 %v847
    %v1032 = vpop.f32.mrb[0].mxu0
    %v1033 = vadd.f32 %v610, %v1032
    %v1034 = vpop.f32.mrb[0].mxu0
    %v1035 = vpop.f32.mrb[0].mxu0
    %v1036 = vadd.f32 %v610, %v1035
    %v1037 = vpop.f32.mrb[0].mxu0
    %1038 = vmatprep.mubr.bf16.mxu0 0
    %1039 = vmatmul.mubr.bf16.gmra.mrb[0].mxu0 %v850
    %v1040 = vpop.f32.mrb[0].mxu0
    %v1041 = vadd.f32 %v610, %v1040
    %v1042 = vpop.f32.mrb[0].mxu0
    %v1043 = vpop.f32.mrb[0].mxu0
    %v1044 = vadd.f32 %v610, %v1043
    %v1045 = vpop.f32.mrb[0].mxu0
    %1046 = vmatprep.mubr.bf16.mxu0 0
    %1047 = vmatmul.mubr.bf16.gmra.mrb[0].mxu0 %v853
    %v1048 = vpop.f32.mrb[0].mxu0
    %v1049 = vadd.f32 %v610, %v1048
    %v1050 = vpop.f32.mrb[0].mxu0
    %v1051 = vpop.f32.mrb[0].mxu0
    %v1052 = vadd.f32 %v610, %v1051
    %v1053 = vpop.f32.mrb[0].mxu0
    %1054 = vmatprep.mubr.bf16.mxu0 0
    %1055 = vmatmul.mubr.bf16.gmra.mrb[0].mxu0 %v856
    %v1056 = vpop.f32.mrb[0].mxu0
    %v1057 = vadd.f32 %v610, %v1056
    %v1058 = vpop.f32.mrb[0].mxu0
    %v1059 = vpop.f32.mrb[0].mxu0
    %v1060 = vadd.f32 %v610, %v1059
    %v1061 = vpop.f32.mrb[0].mxu0
    %1062 = vmatprep.mubr.bf16.mxu0 0
    %1063 = vmatmul.mubr.bf16.gmra.mrb[0].mxu0 %v859
    %v1064 = vpop.f32.mrb[0].mxu0
    %v1065 = vadd.f32 %v610, %v1064
    %v1066 = vpop.f32.mrb[0].mxu0
    %v1067 = vpop.f32.mrb[0].mxu0
    %v1068 = vadd.f32 %v610, %v1067
    %v1069 = vpop.f32.mrb[0].mxu0
    %1070 = vmatprep.mubr.bf16.mxu0 0
    %1071 = vmatmul.mubr.bf16.gmra.mrb[0].mxu0 %v862
    %v1072 = vpop.f32.mrb[0].mxu0
    %v1073 = vadd.f32 %v610, %v1072
    %v1074 = vpop.f32.mrb[0].mxu0
    %v1075 = vpop.f32.mrb[0].mxu0
    %v1076 = vadd.f32 %v610, %v1075
    %v1077 = vpop.f32.mrb[0].mxu0
    %1078 = vmatprep.mubr.bf16.mxu0 0
    %1079 = vmatmul.mubr.bf16.gmra.mrb[0].mxu0 %v865
    %v1080 = vpop.f32.mrb[0].mxu0
    %v1081 = vadd.f32 %v610, %v1080
    %v1082 = vpop.f32.mrb[0].mxu0
    %v1083 = vpop.f32.mrb[0].mxu0
    %v1084 = vadd.f32 %v610, %v1083
    %v1085 = vpop.f32.mrb[0].mxu0
    %1086 = vmatprep.mubr.bf16.mxu0 0
    %1087 = vmatmul.mubr.bf16.gmra.mrb[0].mxu0 %v868
    %v1088 = vpop.f32.mrb[0].mxu0
    %v1089 = vadd.f32 %v610, %v1088
    %v1090 = vpop.f32.mrb[0].mxu0
    %v1091 = vpop.f32.mrb[0].mxu0
    %v1092 = vadd.f32 %v610, %v1091
    %v1093 = vpop.f32.mrb[0].mxu0
    %1094 = vmatprep.mubr.bf16.mxu0 0
    %1095 = vmatmul.mubr.bf16.gmra.mrb[0].mxu0 %v871
    %v1096 = vpop.f32.mrb[0].mxu0
    %v1097 = vadd.f32 %v610, %v1096
    %v1098 = vpop.f32.mrb[0].mxu0
    %v1099 = vpop.f32.mrb[0].mxu0
    %v1100 = vadd.f32 %v610, %v1099
    %v1101 = vpop.f32.mrb[0].mxu0
    %1102 = vmatprep.mubr.bf16.mxu0 0
    %1103 = vmatmul.mubr.bf16.gmra.mrb[0].mxu0 %v874
    %v1104 = vpop.f32.mrb[0].mxu0
    %v1105 = vadd.f32 %v610, %v1104
    %v1106 = vpop.f32.mrb[0].mxu0
    %v1107 = vpop.f32.mrb[0].mxu0
    %v1108 = vadd.f32 %v610, %v1107
    %v1109 = vpop.f32.mrb[0].mxu0
    %1110 = vmatprep.mubr.bf16.mxu0 0
    %1111 = vmatmul.mubr.bf16.gmra.mrb[0].mxu0 %v877
    %v1112 = vpop.f32.mrb[0].mxu0
    %v1113 = vadd.f32 %v610, %v1112
    %v1114 = vpop.f32.mrb[0].mxu0
    %v1115 = vpop.f32.mrb[0].mxu0
    %v1116 = vadd.f32 %v610, %v1115
    %v1117 = vpop.f32.mrb[0].mxu0
    %1118 = vmatprep.mubr.bf16.mxu0 0
    %1119 = vmatmul.mubr.bf16.gmra.mrb[0].mxu0 %v880
    %v1120 = vpop.f32.mrb[0].mxu0
    %v1121 = vadd.f32 %v610, %v1120
    %v1122 = vpop.f32.mrb[0].mxu0
    %v1123 = vpop.f32.mrb[0].mxu0
    %v1124 = vadd.f32 %v610, %v1123
    %v1125 = vpop.f32.mrb[0].mxu0
    %1126 = vmatprep.mubr.bf16.mxu0 0
    %1127 = vmatmul.mubr.bf16.gmra.mrb[0].mxu0 %v883
    %v1128 = vpop.f32.mrb[0].mxu0
    %v1129 = vadd.f32 %v610, %v1128
    %v1130 = vpop.f32.mrb[0].mxu0
    %v1131 = vpop.f32.mrb[0].mxu0
    %v1132 = vadd.f32 %v610, %v1131
    %v1133 = vpop.f32.mrb[0].mxu0
    %1134 = vmatprep.mubr.bf16.mxu0 0
    %1135 = vmatmul.mubr.bf16.gmra.mrb[0].mxu0 %v886
    %v1136 = vpop.f32.mrb[0].mxu0
    %v1137 = vadd.f32 %v610, %v1136
    %v1138 = vpop.f32.mrb[0].mxu0
    %v1139 = vpop.f32.mrb[0].mxu0
    %v1140 = vadd.f32 %v610, %v1139
    %v1141 = vpop.f32.mrb[0].mxu0
    %1142 = vmatprep.mubr.bf16.mxu0 0
    %1143 = vmatmul.mubr.bf16.gmra.mrb[0].mxu0 %v889
    %v1144 = vpop.f32.mrb[0].mxu0
    %v1145 = vadd.f32 %v610, %v1144
    %v1146 = vpop.f32.mrb[0].mxu0
    %v1147 = vpop.f32.mrb[0].mxu0
    %v1148 = vadd.f32 %v610, %v1147
    %v1149 = vpop.f32.mrb[0].mxu0
    %1150 = vmatprep.mubr.bf16.mxu0 0
    %1151 = vmatmul.mubr.bf16.gmra.mrb[0].mxu0 %v892
    %v1152 = vpop.f32.mrb[0].mxu0
    %v1153 = vadd.f32 %v610, %v1152
    %v1154 = vpop.f32.mrb[0].mxu0
    %v1155 = vpop.f32.mrb[0].mxu0
    %v1156 = vadd.f32 %v610, %v1155
    %v1157 = vpop.f32.mrb[0].mxu0
    %1158 = vmatprep.mubr.bf16.mxu0 0
    %1159 = vmatmul.mubr.bf16.gmra.mrb[0].mxu0 %v895
    %v1160 = vpop.f32.mrb[0].mxu0
    %v1161 = vadd.f32 %v610, %v1160
    %v1162 = vpop.f32.mrb[0].mxu0
    %v1163 = vpop.f32.mrb[0].mxu0
    %v1164 = vadd.f32 %v610, %v1163
    %v1165 = vpop.f32.mrb[0].mxu0
    %1166 = vmatprep.mubr.bf16.mxu0 0
    %1167 = vmatmul.mubr.bf16.gmra.mrb[0].mxu0 %v898
    %v1168 = vpop.f32.mrb[0].mxu0
    %v1169 = vadd.f32 %v610, %v1168
    %v1170 = vpop.f32.mrb[0].mxu0
    %v1171 = vpop.f32.mrb[0].mxu0
    %v1172 = vadd.f32 %v610, %v1171
    %v1173 = vpop.f32.mrb[0].mxu0
    %1174 = vmatprep.mubr.bf16.mxu0 0
    %1175 = vmatmul.mubr.bf16.gmra.mrb[0].mxu0 %v901
    %v1176 = vpop.f32.mrb[0].mxu0
    %v1177 = vadd.f32 %v610, %v1176
    %v1178 = vpop.f32.mrb[0].mxu0
    %v1179 = vpop.f32.mrb[0].mxu0
    %v1180 = vadd.f32 %v610, %v1179
    %v1181 = vpop.f32.mrb[0].mxu0
    %1182 = vmatprep.mubr.bf16.mxu0 0
    %1183 = vmatmul.mubr.bf16.gmra.mrb[0].mxu0 %v904
    %v1184 = vpop.f32.mrb[0].mxu0
    %v1185 = vadd.f32 %v610, %v1184
    %v1186 = vpop.f32.mrb[0].mxu0
    %v1187 = vpop.f32.mrb[0].mxu0
    %v1188 = vadd.f32 %v610, %v1187
    %v1189 = vpop.f32.mrb[0].mxu0
    %1190 = vmatprep.mubr.bf16.mxu0 0
    %1191 = vmatmul.mubr.bf16.gmra.mrb[0].mxu0 %v907
    %v1192 = vpop.f32.mrb[0].mxu0
    %v1193 = vadd.f32 %v610, %v1192
    %v1194 = vpop.f32.mrb[0].mxu0
    %v1195 = vpop.f32.mrb[0].mxu0
    %v1196 = vadd.f32 %v610, %v1195
    %v1197 = vpop.f32.mrb[0].mxu0
    %1198 = vmatprep.mubr.bf16.mxu0 0
    %1199 = vmatmul.mubr.bf16.gmra.mrb[0].mxu0 %v910
    %v1200 = vpop.f32.mrb[0].mxu0
    %v1201 = vadd.f32 %v610, %v1200
    %v1202 = vpop.f32.mrb[0].mxu0
    %v1203 = vpop.f32.mrb[0].mxu0
    %v1204 = vadd.f32 %v610, %v1203
    %v1205 = vpop.f32.mrb[0].mxu0
    %1206 = vmatprep.mubr.bf16.mxu0 0
    %1207 = vmatmul.mubr.bf16.gmra.mrb[0].mxu0 %v913
    %v1208 = vpop.f32.mrb[0].mxu0
    %v1209 = vadd.f32 %v610, %v1208
    %v1210 = vpop.f32.mrb[0].mxu0
    %v1211 = vpop.f32.mrb[0].mxu0
    %v1212 = vadd.f32 %v610, %v1211
    %v1213 = vpop.f32.mrb[0].mxu0
    %1214 = vmatprep.mubr.bf16.mxu0 0
    %1215 = vmatmul.mubr.bf16.gmra.mrb[0].mxu0 %v916
    %v1216 = vpop.f32.mrb[0].mxu0
    %v1217 = vadd.f32 %v610, %v1216
    %v1218 = vpop.f32.mrb[0].mxu0
    %v1219 = vpop.f32.mrb[0].mxu0
    %v1220 = vadd.f32 %v610, %v1219
    %v1221 = vpop.f32.mrb[0].mxu0
    %1222 = vmatprep.mubr.bf16.mxu0 0
    %1223 = vmatmul.mubr.bf16.gmra.mrb[0].mxu0 %v919
    %v1224 = vpop.f32.mrb[0].mxu0
    %v1225 = vadd.f32 %v610, %v1224
    %v1226 = vpop.f32.mrb[0].mxu0
    %v1227 = vpop.f32.mrb[0].mxu0
    %v1228 = vadd.f32 %v610, %v1227
    %v1229 = vpop.f32.mrb[0].mxu0
    %1230 = vmatprep.mubr.bf16.mxu0 0
    %1231 = vmatmul.mubr.bf16.gmra.mrb[0].mxu0 %v922
    %v1232 = vpop.f32.mrb[0].mxu0
    %v1233 = vadd.f32 %v610, %v1232
    %v1234 = vpop.f32.mrb[0].mxu0
    %v1235 = vpop.f32.mrb[0].mxu0
    %v1236 = vadd.f32 %v610, %v1235
    %v1237 = vpop.f32.mrb[0].mxu0
    %1238 = vmatprep.mubr.bf16.mxu0 0
    %1239 = vmatmul.mubr.bf16.gmra.mrb[0].mxu0 %v925
    %v1240 = vpop.f32.mrb[0].mxu0
    %v1241 = vadd.f32 %v610, %v1240
    %v1242 = vpop.f32.mrb[0].mxu0
    %v1243 = vpop.f32.mrb[0].mxu0
    %v1244 = vadd.f32 %v610, %v1243
    %v1245 = vpop.f32.mrb[0].mxu0
    %1246 = vmatprep.mubr.bf16.mxu0 0
    %1247 = vmatmul.mubr.bf16.gmra.mrb[0].mxu0 %v928
    %v1248 = vpop.f32.mrb[0].mxu0
    %v1249 = vadd.f32 %v610, %v1248
    %v1250 = vpop.f32.mrb[0].mxu0
    %v1251 = vpop.f32.mrb[0].mxu0
    %v1252 = vadd.f32 %v610, %v1251
    %v1253 = vpop.f32.mrb[0].mxu0
    %1254 = vmatprep.mubr.bf16.mxu0 0
    %1255 = vmatmul.mubr.bf16.gmra.mrb[0].mxu0 %v931
    %v1256 = vpop.f32.mrb[0].mxu0
    %v1257 = vadd.f32 %v610, %v1256
    %v1258 = vpop.f32.mrb[0].mxu0
    %v1259 = vpop.f32.mrb[0].mxu0
    %v1260 = vadd.f32 %v610, %v1259
    %v1261 = vpop.f32.mrb[0].mxu0
    %1262 = vmatprep.mubr.bf16.mxu0 0
    %1263 = vmatmul.mubr.bf16.gmra.mrb[0].mxu0 %v934
    %v1264 = vpop.f32.mrb[0].mxu0
    %v1265 = vadd.f32 %v610, %v1264
    %v1266 = vpop.f32.mrb[0].mxu0
    %v1267 = vpop.f32.mrb[0].mxu0
    %v1268 = vadd.f32 %v610, %v1267
    %v1269 = vpop.f32.mrb[0].mxu0
    %1270 = vmatprep.mubr.bf16.mxu0 0
    %1271 = vmatmul.mubr.bf16.gmra.mrb[0].mxu0 %v937
    %v1272 = vpop.f32.mrb[0].mxu0
    %v1273 = vadd.f32 %v610, %v1272
    %v1274 = vpop.f32.mrb[0].mxu0
    %v1275 = vpop.f32.mrb[0].mxu0
    %v1276 = vadd.f32 %v610, %v1275
    %v1277 = vpop.f32.mrb[0].mxu0
    %1278 = vmatprep.mubr.bf16.mxu0 0
    %1279 = vmatmul.mubr.bf16.gmra.mrb[0].mxu0 %v940
    %v1280 = vpop.f32.mrb[0].mxu0
    %v1281 = vadd.f32 %v610, %v1280
    %v1282 = vpop.f32.mrb[0].mxu0
    %v1283 = vpop.f32.mrb[0].mxu0
    %v1284 = vadd.f32 %v610, %v1283
    %v1285 = vpop.f32.mrb[0].mxu0
    %1286 = vmatprep.mubr.bf16.mxu0 0
    %1287 = vmatmul.mubr.bf16.gmra.mrb[0].mxu0 %v943
    %v1288 = vpop.f32.mrb[0].mxu0
    %v1289 = vadd.f32 %v610, %v1288
    %v1290 = vpop.f32.mrb[0].mxu0
    %v1291 = vpop.f32.mrb[0].mxu0
    %v1292 = vadd.f32 %v610, %v1291
    %v1293 = vpop.f32.mrb[0].mxu0
    %1294 = vmatprep.mubr.bf16.mxu0 0
    %1295 = vmatmul.mubr.bf16.gmra.mrb[0].mxu0 %v946
    %v1296 = vpop.f32.mrb[0].mxu0
    %v1297 = vadd.f32 %v610, %v1296
    %v1298 = vpop.f32.mrb[0].mxu0
    %v1299 = vpop.f32.mrb[0].mxu0
    %v1300 = vadd.f32 %v610, %v1299
    %v1301 = vpop.f32.mrb[0].mxu0
    %1302 = vmatprep.mubr.bf16.mxu0 0
    %1303 = vmatmul.mubr.bf16.gmra.mrb[0].mxu0 %v949
    %v1304 = vpop.f32.mrb[0].mxu0
    %v1305 = vadd.f32 %v610, %v1304
    %v1306 = vpop.f32.mrb[0].mxu0
    %v1307 = vpop.f32.mrb[0].mxu0
    %v1308 = vadd.f32 %v610, %v1307
    %v1309 = vpop.f32.mrb[0].mxu0
    %1310 = vmatprep.mubr.bf16.mxu0 0
    %1311 = vmatmul.mubr.bf16.gmra.mrb[0].mxu0 %v952
    %v1312 = vpop.f32.mrb[0].mxu0
    %v1313 = vadd.f32 %v610, %v1312
    %v1314 = vpop.f32.mrb[0].mxu0
    %v1315 = vpop.f32.mrb[0].mxu0
    %v1316 = vpop.f32.mrb[0].mxu0
    %1317 = vdwg.mxu0
    %v1318 = vmax.f32 %v993, 0.0
    %v1319 = vmax.f32 %v996, 0.0
    %v1320 = vmax.f32 %v1001, 0.0
    %v1321 = vmax.f32 %v1004, 0.0
    %v1322 = vmax.f32 %v1009, 0.0
    %v1323 = vmax.f32 %v1012, 0.0
    %v1324 = vmax.f32 %v1017, 0.0
    %v1325 = vmax.f32 %v1020, 0.0
    %v1326 = vmax.f32 %v1025, 0.0
    %v1327 = vmax.f32 %v1028, 0.0
    %v1328 = vmax.f32 %v1033, 0.0
    %v1329 = vmax.f32 %v1036, 0.0
    %v1330 = vmax.f32 %v1041, 0.0
    %v1331 = vmax.f32 %v1044, 0.0
    %v1332 = vmax.f32 %v1049, 0.0
    %v1333 = vmax.f32 %v1052, 0.0
    %v1334 = vmax.f32 %v1057, 0.0
    %v1335 = vmax.f32 %v1060, 0.0
    %v1336 = vmax.f32 %v1065, 0.0
    %v1337 = vmax.f32 %v1068, 0.0
    %v1338 = vmax.f32 %v1073, 0.0
    %v1339 = vmax.f32 %v1076, 0.0
    %v1340 = vmax.f32 %v1081, 0.0
    %v1341 = vmax.f32 %v1084, 0.0
    %v1342 = vmax.f32 %v1089, 0.0
    %v1343 = vmax.f32 %v1092, 0.0
    %v1344 = vmax.f32 %v1097, 0.0
    %v1345 = vmax.f32 %v1100, 0.0
    %v1346 = vmax.f32 %v1105, 0.0
    %v1347 = vmax.f32 %v1108, 0.0
    %v1348 = vmax.f32 %v1113, 0.0
    %v1349 = vmax.f32 %v1116, 0.0
    %v1350 = vmax.f32 %v1121, 0.0
    %v1351 = vmax.f32 %v1124, 0.0
    %v1352 = vmax.f32 %v1129, 0.0
    %v1353 = vmax.f32 %v1132, 0.0
    %v1354 = vmax.f32 %v1137, 0.0
    %v1355 = vmax.f32 %v1140, 0.0
    %v1356 = vmax.f32 %v1145, 0.0
    %v1357 = vmax.f32 %v1148, 0.0
    %v1358 = vmax.f32 %v1153, 0.0
    %v1359 = vmax.f32 %v1156, 0.0
    %v1360 = vmax.f32 %v1161, 0.0
    %v1361 = vmax.f32 %v1164, 0.0
    %v1362 = vmax.f32 %v1169, 0.0
    %v1363 = vmax.f32 %v1172, 0.0
    %v1364 = vmax.f32 %v1177, 0.0
    %v1365 = vmax.f32 %v1180, 0.0
    %v1366 = vmax.f32 %v1185, 0.0
    %v1367 = vmax.f32 %v1188, 0.0
    %v1368 = vmax.f32 %v1193, 0.0
    %v1369 = vmax.f32 %v1196, 0.0
    %v1370 = vmax.f32 %v1201, 0.0
    %v1371 = vmax.f32 %v1204, 0.0
    %v1372 = vmax.f32 %v1209, 0.0
    %v1373 = vmax.f32 %v1212, 0.0
    %v1374 = vmax.f32 %v1217, 0.0
    %v1375 = vmax.f32 %v1220, 0.0
    %v1376 = vmax.f32 %v1225, 0.0
    %v1377 = vmax.f32 %v1228, 0.0
    %v1378 = vmax.f32 %v1233, 0.0
    %v1379 = vmax.f32 %v1236, 0.0
    %v1380 = vmax.f32 %v1241, 0.0
    %v1381 = vmax.f32 %v1244, 0.0
    %v1382 = vmax.f32 %v1249, 0.0
    %v1383 = vmax.f32 %v1252, 0.0
    %v1384 = vmax.f32 %v1257, 0.0
    %v1385 = vmax.f32 %v1260, 0.0
    %v1386 = vmax.f32 %v1265, 0.0
    %v1387 = vmax.f32 %v1268, 0.0
    %v1388 = vmax.f32 %v1273, 0.0
    %v1389 = vmax.f32 %v1276, 0.0
    %v1390 = vmax.f32 %v1281, 0.0
    %v1391 = vmax.f32 %v1284, 0.0
    %v1392 = vmax.f32 %v1289, 0.0
    %v1393 = vmax.f32 %v1292, 0.0
    %v1394 = vmax.f32 %v1297, 0.0
    %v1395 = vmax.f32 %v1300, 0.0
    %v1396 = vmax.f32 %v1305, 0.0
    %v1397 = vmax.f32 %v1308, 0.0
    %v1398 = vmax.f32 %v1313, 0.0
    %v1399 = vmul.f32 %v1318, %v117
    %v1400 = vmul.f32 %v1319, %v122
    %v1401 = vmul.f32 %v1320, %v127
    %v1402 = vmul.f32 %v1321, %v132
    %v1403 = vmul.f32 %v1322, %v137
    %v1404 = vmul.f32 %v1323, %v142
    %v1405 = vmul.f32 %v1324, %v147
    %v1406 = vmul.f32 %v1325, %v152
    %v1407 = vmul.f32 %v1326, %v157
    %v1408 = vmul.f32 %v1327, %v162
    %v1409 = vmul.f32 %v1328, %v167
    %v1410 = vmul.f32 %v1329, %v172
    %v1411 = vmul.f32 %v1330, %v177
    %v1412 = vmul.f32 %v1331, %v182
    %v1413 = vmul.f32 %v1332, %v187
    %v1414 = vmul.f32 %v1333, %v192
    %v1415 = vmul.f32 %v1334, %v197
    %v1416 = vmul.f32 %v1335, %v202
    %v1417 = vmul.f32 %v1336, %v207
    %v1418 = vmul.f32 %v1337, %v212
    %v1419 = vmul.f32 %v1338, %v217
    %v1420 = vmul.f32 %v1339, %v222
    %v1421 = vmul.f32 %v1340, %v227
    %v1422 = vmul.f32 %v1341, %v232
    %v1423 = vmul.f32 %v1342, %v237
    %v1424 = vmul.f32 %v1343, %v242
    %v1425 = vmul.f32 %v1344, %v247
    %v1426 = vmul.f32 %v1345, %v252
    %v1427 = vmul.f32 %v1346, %v257
    %v1428 = vmul.f32 %v1347, %v262
    %v1429 = vmul.f32 %v1348, %v267
    %v1430 = vmul.f32 %v1349, %v272
    %v1431 = vmul.f32 %v1350, %v277
    %v1432 = vmul.f32 %v1351, %v282
    %v1433 = vmul.f32 %v1352, %v287
    %v1434 = vmul.f32 %v1353, %v292
    %v1435 = vmul.f32 %v1354, %v297
    %v1436 = vmul.f32 %v1355, %v302
    %v1437 = vmul.f32 %v1356, %v307
    %v1438 = vmul.f32 %v1357, %v312
    %v1439 = vmul.f32 %v1358, %v317
    %v1440 = vmul.f32 %v1359, %v322
    %v1441 = vmul.f32 %v1360, %v327
    %v1442 = vmul.f32 %v1361, %v332
    %v1443 = vmul.f32 %v1362, %v337
    %v1444 = vmul.f32 %v1363, %v342
    %v1445 = vmul.f32 %v1364, %v347
    %v1446 = vmul.f32 %v1365, %v352
    %v1447 = vmul.f32 %v1366, %v357
    %v1448 = vmul.f32 %v1367, %v362
    %v1449 = vmul.f32 %v1368, %v367
    %v1450 = vmul.f32 %v1369, %v372
    %v1451 = vmul.f32 %v1370, %v377
    %v1452 = vmul.f32 %v1371, %v382
    %v1453 = vmul.f32 %v1372, %v387
    %v1454 = vmul.f32 %v1373, %v392
    %v1455 = vmul.f32 %v1374, %v397
    %v1456 = vmul.f32 %v1375, %v402
    %v1457 = vmul.f32 %v1376, %v407
    %v1458 = vmul.f32 %v1377, %v412
    %v1459 = vmul.f32 %v1378, %v417
    %v1460 = vmul.f32 %v1379, %v422
    %v1461 = vmul.f32 %v1380, %v427
    %v1462 = vmul.f32 %v1381, %v432
    %v1463 = vmul.f32 %v1382, %v437
    %v1464 = vmul.f32 %v1383, %v442
    %v1465 = vmul.f32 %v1384, %v447
    %v1466 = vmul.f32 %v1385, %v452
    %v1467 = vmul.f32 %v1386, %v457
    %v1468 = vmul.f32 %v1387, %v462
    %v1469 = vmul.f32 %v1388, %v467
    %v1470 = vmul.f32 %v1389, %v472
    %v1471 = vmul.f32 %v1390, %v477
    %v1472 = vmul.f32 %v1391, %v482
    %v1473 = vmul.f32 %v1392, %v487
    %v1474 = vmul.f32 %v1393, %v492
    %v1475 = vmul.f32 %v1394, %v497
    %v1476 = vmul.f32 %v1395, %v502
    %v1477 = vmul.f32 %v1396, %v507
    %v1478 = vmul.f32 %v1397, %v512
    %v1479 = vmul.f32 %v1398, %v517
    %vm1480 = vcmask 261120
    %1481 = vst.msk [vmem:[#allocation2] sm:$0xff] %vm1480, 0.0
    %1482 = vst.msk [vmem:[#allocation2 + $0x8] sm:$0xff] %vm1480, 0.0
    %1483 = vst.msk [vmem:[#allocation2 + $0x10] sm:$0xff] %vm1480, 0.0
    %1484 = vst.msk [vmem:[#allocation2 + $0x2a0] sm:$0xff] %vm1480, 0.0
    %1485 = vst.msk [vmem:[#allocation2 + $0x2a8] sm:$0xff] %vm1480, 0.0
    %1486 = vst.msk [vmem:[#allocation2 + $0x2b0] sm:$0xff] %vm1480, 0.0
    %1487 = vst.msk [vmem:[#allocation2 + $0x18] sm:$0xff] %vm1480, %v1399
    %1488 = vst.msk [vmem:[#allocation2 + $0x20] sm:$0xff] %vm1480, %v1400
    %1489 = vst.msk [vmem:[#allocation2 + $0x28] sm:$0xff] %vm1480, %v1401
    %1490 = vst.msk [vmem:[#allocation2 + $0x30] sm:$0xff] %vm1480, %v1402
    %1491 = vst.msk [vmem:[#allocation2 + $0x38] sm:$0xff] %vm1480, %v1403
    %1492 = vst.msk [vmem:[#allocation2 + $0x40] sm:$0xff] %vm1480, %v1404
    %1493 = vst.msk [vmem:[#allocation2 + $0x48] sm:$0xff] %vm1480, %v1405
    %1494 = vst.msk [vmem:[#allocation2 + $0x50] sm:$0xff] %vm1480, %v1406
    %1495 = vst.msk [vmem:[#allocation2 + $0x58] sm:$0xff] %vm1480, %v1407
    %1496 = vst.msk [vmem:[#allocation2 + $0x60] sm:$0xff] %vm1480, %v1408
    %1497 = vst.msk [vmem:[#allocation2 + $0x68] sm:$0xff] %vm1480, %v1409
    %1498 = vst.msk [vmem:[#allocation2 + $0x70] sm:$0xff] %vm1480, %v1410
    %1499 = vst.msk [vmem:[#allocation2 + $0x78] sm:$0xff] %vm1480, %v1411
    %1500 = vst.msk [vmem:[#allocation2 + $0x80] sm:$0xff] %vm1480, %v1412
    %1501 = vst.msk [vmem:[#allocation2 + $0x88] sm:$0xff] %vm1480, %v1413
    %1502 = vst.msk [vmem:[#allocation2 + $0x90] sm:$0xff] %vm1480, %v1414
    %1503 = vst.msk [vmem:[#allocation2 + $0x98] sm:$0xff] %vm1480, %v1415
    %1504 = vst.msk [vmem:[#allocation2 + $0xa0] sm:$0xff] %vm1480, %v1416
    %1505 = vst.msk [vmem:[#allocation2 + $0xa8] sm:$0xff] %vm1480, %v1417
    %1506 = vst.msk [vmem:[#allocation2 + $0xb0] sm:$0xff] %vm1480, %v1418
    %1507 = vst.msk [vmem:[#allocation2 + $0xb8] sm:$0xff] %vm1480, %v1419
    %1508 = vst.msk [vmem:[#allocation2 + $0xc0] sm:$0xff] %vm1480, %v1420
    %1509 = vst.msk [vmem:[#allocation2 + $0xc8] sm:$0xff] %vm1480, %v1421
    %1510 = vst.msk [vmem:[#allocation2 + $0xd0] sm:$0xff] %vm1480, %v1422
    %1511 = vst.msk [vmem:[#allocation2 + $0xd8] sm:$0xff] %vm1480, %v1423
    %1512 = vst.msk [vmem:[#allocation2 + $0xe0] sm:$0xff] %vm1480, %v1424
    %1513 = vst.msk [vmem:[#allocation2 + $0xe8] sm:$0xff] %vm1480, %v1425
    %1514 = vst.msk [vmem:[#allocation2 + $0xf0] sm:$0xff] %vm1480, %v1426
    %1515 = vst.msk [vmem:[#allocation2 + $0xf8] sm:$0xff] %vm1480, %v1427
    %1516 = vst.msk [vmem:[#allocation2 + $0x100] sm:$0xff] %vm1480, %v1428
    %1517 = vst.msk [vmem:[#allocation2 + $0x108] sm:$0xff] %vm1480, %v1429
    %1518 = vst.msk [vmem:[#allocation2 + $0x110] sm:$0xff] %vm1480, %v1430
    %1519 = vst.msk [vmem:[#allocation2 + $0x118] sm:$0xff] %vm1480, %v1431
    %1520 = vst.msk [vmem:[#allocation2 + $0x120] sm:$0xff] %vm1480, %v1432
    %1521 = vst.msk [vmem:[#allocation2 + $0x128] sm:$0xff] %vm1480, %v1433
    %1522 = vst.msk [vmem:[#allocation2 + $0x130] sm:$0xff] %vm1480, %v1434
    %1523 = vst.msk [vmem:[#allocation2 + $0x138] sm:$0xff] %vm1480, %v1435
    %1524 = vst.msk [vmem:[#allocation2 + $0x140] sm:$0xff] %vm1480, %v1436
    %1525 = vst.msk [vmem:[#allocation2 + $0x148] sm:$0xff] %vm1480, %v1437
    %1526 = vst.msk [vmem:[#allocation2 + $0x150] sm:$0xff] %vm1480, %v1438
    %1527 = vst.msk [vmem:[#allocation2 + $0x158] sm:$0xff] %vm1480, %v1439
    %1528 = vst.msk [vmem:[#allocation2 + $0x160] sm:$0xff] %vm1480, %v1440
    %1529 = vst.msk [vmem:[#allocation2 + $0x168] sm:$0xff] %vm1480, %v1441
    %1530 = vst.msk [vmem:[#allocation2 + $0x170] sm:$0xff] %vm1480, %v1442
    %1531 = vst.msk [vmem:[#allocation2 + $0x178] sm:$0xff] %vm1480, %v1443
    %1532 = vst.msk [vmem:[#allocation2 + $0x180] sm:$0xff] %vm1480, %v1444
    %1533 = vst.msk [vmem:[#allocation2 + $0x188] sm:$0xff] %vm1480, %v1445
    %1534 = vst.msk [vmem:[#allocation2 + $0x190] sm:$0xff] %vm1480, %v1446
    %1535 = vst.msk [vmem:[#allocation2 + $0x198] sm:$0xff] %vm1480, %v1447
    %1536 = vst.msk [vmem:[#allocation2 + $0x1a0] sm:$0xff] %vm1480, %v1448
    %1537 = vst.msk [vmem:[#allocation2 + $0x1a8] sm:$0xff] %vm1480, %v1449
    %1538 = vst.msk [vmem:[#allocation2 + $0x1b0] sm:$0xff] %vm1480, %v1450
    %1539 = vst.msk [vmem:[#allocation2 + $0x1b8] sm:$0xff] %vm1480, %v1451
    %1540 = vst.msk [vmem:[#allocation2 + $0x1c0] sm:$0xff] %vm1480, %v1452
    %1541 = vst.msk [vmem:[#allocation2 + $0x1c8] sm:$0xff] %vm1480, %v1453
    %1542 = vst.msk [vmem:[#allocation2 + $0x1d0] sm:$0xff] %vm1480, %v1454
    %1543 = vst.msk [vmem:[#allocation2 + $0x1d8] sm:$0xff] %vm1480, %v1455
    %1544 = vst.msk [vmem:[#allocation2 + $0x1e0] sm:$0xff] %vm1480, %v1456
    %1545 = vst.msk [vmem:[#allocation2 + $0x1e8] sm:$0xff] %vm1480, %v1457
    %1546 = vst.msk [vmem:[#allocation2 + $0x1f0] sm:$0xff] %vm1480, %v1458
    %1547 = vst.msk [vmem:[#allocation2 + $0x1f8] sm:$0xff] %vm1480, %v1459
    %1548 = vst.msk [vmem:[#allocation2 + $0x200] sm:$0xff] %vm1480, %v1460
    %1549 = vst.msk [vmem:[#allocation2 + $0x208] sm:$0xff] %vm1480, %v1461
    %1550 = vst.msk [vmem:[#allocation2 + $0x210] sm:$0xff] %vm1480, %v1462
    %1551 = vst.msk [vmem:[#allocation2 + $0x218] sm:$0xff] %vm1480, %v1463
    %1552 = vst.msk [vmem:[#allocation2 + $0x220] sm:$0xff] %vm1480, %v1464
    %1553 = vst.msk [vmem:[#allocation2 + $0x228] sm:$0xff] %vm1480, %v1465
    %1554 = vst.msk [vmem:[#allocation2 + $0x230] sm:$0xff] %vm1480, %v1466
    %1555 = vst.msk [vmem:[#allocation2 + $0x238] sm:$0xff] %vm1480, %v1467
    %1556 = vst.msk [vmem:[#allocation2 + $0x240] sm:$0xff] %vm1480, %v1468
    %1557 = vst.msk [vmem:[#allocation2 + $0x248] sm:$0xff] %vm1480, %v1469
    %1558 = vst.msk [vmem:[#allocation2 + $0x250] sm:$0xff] %vm1480, %v1470
    %1559 = vst.msk [vmem:[#allocation2 + $0x258] sm:$0xff] %vm1480, %v1471
    %1560 = vst.msk [vmem:[#allocation2 + $0x260] sm:$0xff] %vm1480, %v1472
    %1561 = vst.msk [vmem:[#allocation2 + $0x268] sm:$0xff] %vm1480, %v1473
    %1562 = vst.msk [vmem:[#allocation2 + $0x270] sm:$0xff] %vm1480, %v1474
    %1563 = vst.msk [vmem:[#allocation2 + $0x278] sm:$0xff] %vm1480, %v1475
    %1564 = vst.msk [vmem:[#allocation2 + $0x280] sm:$0xff] %vm1480, %v1476
    %1565 = vst.msk [vmem:[#allocation2 + $0x288] sm:$0xff] %vm1480, %v1477
    %1566 = vst.msk [vmem:[#allocation2 + $0x290] sm:$0xff] %vm1480, %v1478
    %1567 = vst.msk [vmem:[#allocation2 + $0x298] sm:$0xff] %vm1480, %v1479
    %v1568 = vld [vmem:[#allocation2 + $0x5] sm:$0xff]
    %v1569 = vld [vmem:[#allocation2 + $0xd] sm:$0xff]
    %v1570 = vld [vmem:[#allocation2 + $0x15] sm:$0xff]
    %v1571 = vld [vmem:[#allocation2 + $0x1d] sm:$0xff]
    %v1572 = vld [vmem:[#allocation2 + $0x25] sm:$0xff]
    %v1573 = vld [vmem:[#allocation2 + $0x2d] sm:$0xff]
    %v1574 = vld [vmem:[#allocation2 + $0x35] sm:$0xff]
    %v1575 = vld [vmem:[#allocation2 + $0x3d] sm:$0xff]
    %v1576 = vld [vmem:[#allocation2 + $0x45] sm:$0xff]
    %v1577 = vld [vmem:[#allocation2 + $0x4d] sm:$0xff]
    %v1578 = vld [vmem:[#allocation2 + $0x55] sm:$0xff]
    %v1579 = vld [vmem:[#allocation2 + $0x5d] sm:$0xff]
    %v1580 = vld [vmem:[#allocation2 + $0x65] sm:$0xff]
    %v1581 = vld [vmem:[#allocation2 + $0x6d] sm:$0xff]
    %v1582 = vld [vmem:[#allocation2 + $0x75] sm:$0xff]
    %v1583 = vld [vmem:[#allocation2 + $0x7d] sm:$0xff]
    %v1584 = vld [vmem:[#allocation2 + $0x85] sm:$0xff]
    %v1585 = vld [vmem:[#allocation2 + $0x8d] sm:$0xff]
    %v1586 = vld [vmem:[#allocation2 + $0x95] sm:$0xff]
    %v1587 = vld [vmem:[#allocation2 + $0x9d] sm:$0xff]
    %v1588 = vld [vmem:[#allocation2 + $0xa5] sm:$0xff]
    %v1589 = vld [vmem:[#allocation2 + $0xad] sm:$0xff]
    %v1590 = vld [vmem:[#allocation2 + $0xb5] sm:$0xff]
    %v1591 = vld [vmem:[#allocation2 + $0xbd] sm:$0xff]
    %v1592 = vld [vmem:[#allocation2 + $0xc5] sm:$0xff]
    %v1593 = vld [vmem:[#allocation2 + $0xcd] sm:$0xff]
    %v1594 = vld [vmem:[#allocation2 + $0xd5] sm:$0xff]
    %v1595 = vld [vmem:[#allocation2 + $0xdd] sm:$0xff]
    %v1596 = vld [vmem:[#allocation2 + $0xe5] sm:$0xff]
    %v1597 = vld [vmem:[#allocation2 + $0xed] sm:$0xff]
    %v1598 = vld [vmem:[#allocation2 + $0xf5] sm:$0xff]
    %v1599 = vld [vmem:[#allocation2 + $0xfd] sm:$0xff]
    %v1600 = vld [vmem:[#allocation2 + $0x105] sm:$0xff]
    %v1601 = vld [vmem:[#allocation2 + $0x10d] sm:$0xff]
    %v1602 = vld [vmem:[#allocation2 + $0x115] sm:$0xff]
    %v1603 = vld [vmem:[#allocation2 + $0x11d] sm:$0xff]
    %v1604 = vld [vmem:[#allocation2 + $0x125] sm:$0xff]
    %v1605 = vld [vmem:[#allocation2 + $0x12d] sm:$0xff]
    %v1606 = vld [vmem:[#allocation2 + $0x135] sm:$0xff]
    %v1607 = vld [vmem:[#allocation2 + $0x13d] sm:$0xff]
    %v1608 = vld [vmem:[#allocation2 + $0x145] sm:$0xff]
    %v1609 = vld [vmem:[#allocation2 + $0x14d] sm:$0xff]
    %v1610 = vld [vmem:[#allocation2 + $0x155] sm:$0xff]
    %v1611 = vld [vmem:[#allocation2 + $0x15d] sm:$0xff]
    %v1612 = vld [vmem:[#allocation2 + $0x165] sm:$0xff]
    %v1613 = vld [vmem:[#allocation2 + $0x16d] sm:$0xff]
    %v1614 = vld [vmem:[#allocation2 + $0x175] sm:$0xff]
    %v1615 = vld [vmem:[#allocation2 + $0x17d] sm:$0xff]
    %v1616 = vld [vmem:[#allocation2 + $0x185] sm:$0xff]
    %v1617 = vld [vmem:[#allocation2 + $0x18d] sm:$0xff]
    %v1618 = vld [vmem:[#allocation2 + $0x195] sm:$0xff]
    %v1619 = vld [vmem:[#allocation2 + $0x19d] sm:$0xff]
    %v1620 = vld [vmem:[#allocation2 + $0x1a5] sm:$0xff]
    %v1621 = vld [vmem:[#allocation2 + $0x1ad] sm:$0xff]
    %v1622 = vld [vmem:[#allocation2 + $0x1b5] sm:$0xff]
    %v1623 = vld [vmem:[#allocation2 + $0x1bd] sm:$0xff]
    %v1624 = vld [vmem:[#allocation2 + $0x1c5] sm:$0xff]
    %v1625 = vld [vmem:[#allocation2 + $0x1cd] sm:$0xff]
    %v1626 = vld [vmem:[#allocation2 + $0x1d5] sm:$0xff]
    %v1627 = vld [vmem:[#allocation2 + $0x1dd] sm:$0xff]
    %v1628 = vld [vmem:[#allocation2 + $0x1e5] sm:$0xff]
    %v1629 = vld [vmem:[#allocation2 + $0x1ed] sm:$0xff]
    %v1630 = vld [vmem:[#allocation2 + $0x1f5] sm:$0xff]
    %v1631 = vld [vmem:[#allocation2 + $0x1fd] sm:$0xff]
    %v1632 = vld [vmem:[#allocation2 + $0x205] sm:$0xff]
    %v1633 = vld [vmem:[#allocation2 + $0x20d] sm:$0xff]
    %v1634 = vld [vmem:[#allocation2 + $0x215] sm:$0xff]
    %v1635 = vld [vmem:[#allocation2 + $0x21d] sm:$0xff]
    %v1636 = vld [vmem:[#allocation2 + $0x225] sm:$0xff]
    %v1637 = vld [vmem:[#allocation2 + $0x22d] sm:$0xff]
    %v1638 = vld [vmem:[#allocation2 + $0x235] sm:$0xff]
    %v1639 = vld [vmem:[#allocation2 + $0x23d] sm:$0xff]
    %v1640 = vld [vmem:[#allocation2 + $0x245] sm:$0xff]
    %v1641 = vld [vmem:[#allocation2 + $0x24d] sm:$0xff]
    %v1642 = vld [vmem:[#allocation2 + $0x255] sm:$0xff]
    %v1643 = vld [vmem:[#allocation2 + $0x25d] sm:$0xff]
    %v1644 = vld [vmem:[#allocation2 + $0x265] sm:$0xff]
    %v1645 = vld [vmem:[#allocation2 + $0x26d] sm:$0xff]
    %v1646 = vld [vmem:[#allocation2 + $0x275] sm:$0xff]
    %v1647 = vld [vmem:[#allocation2 + $0x27d] sm:$0xff]
    %v1648 = vld [vmem:[#allocation2 + $0x285] sm:$0xff]
    %v1649 = vpack.c.bf16 %v1569, %v1568
    %v1650 = vpack.c.bf16 %v1571, %v1570
    %v1651 = vpack.c.bf16 %v1573, %v1572
    %v1652 = vpack.c.bf16 %v1575, %v1574
    %v1653 = vpack.c.bf16 %v1577, %v1576
    %v1654 = vpack.c.bf16 %v1579, %v1578
    %v1655 = vpack.c.bf16 %v1581, %v1580
    %v1656 = vpack.c.bf16 %v1583, %v1582
    %v1657 = vpack.c.bf16 %v1585, %v1584
    %v1658 = vpack.c.bf16 %v1587, %v1586
    %v1659 = vpack.c.bf16 %v1589, %v1588
    %v1660 = vpack.c.bf16 %v1591, %v1590
    %v1661 = vpack.c.bf16 %v1593, %v1592
    %v1662 = vpack.c.bf16 %v1595, %v1594
    %v1663 = vpack.c.bf16 %v1597, %v1596
    %v1664 = vpack.c.bf16 %v1599, %v1598
    %v1665 = vpack.c.bf16 %v1601, %v1600
    %v1666 = vpack.c.bf16 %v1603, %v1602
    %v1667 = vpack.c.bf16 %v1605, %v1604
    %v1668 = vpack.c.bf16 %v1607, %v1606
    %v1669 = vpack.c.bf16 %v1609, %v1608
    %v1670 = vpack.c.bf16 %v1611, %v1610
    %v1671 = vpack.c.bf16 %v1613, %v1612
    %v1672 = vpack.c.bf16 %v1615, %v1614
    %v1673 = vpack.c.bf16 %v1617, %v1616
    %v1674 = vpack.c.bf16 %v1619, %v1618
    %v1675 = vpack.c.bf16 %v1621, %v1620
    %v1676 = vpack.c.bf16 %v1623, %v1622
    %v1677 = vpack.c.bf16 %v1625, %v1624
    %v1678 = vpack.c.bf16 %v1627, %v1626
    %v1679 = vpack.c.bf16 %v1629, %v1628
    %v1680 = vpack.c.bf16 %v1631, %v1630
    %v1681 = vpack.c.bf16 %v1633, %v1632
    %v1682 = vpack.c.bf16 %v1635, %v1634
    %v1683 = vpack.c.bf16 %v1637, %v1636
    %v1684 = vpack.c.bf16 %v1639, %v1638
    %v1685 = vpack.c.bf16 %v1641, %v1640
    %v1686 = vpack.c.bf16 %v1643, %v1642
    %v1687 = vpack.c.bf16 %v1645, %v1644
    %v1688 = vpack.c.bf16 %v1647, %v1646
    %v1689 = vpack.c.bf16 %v1648, %v1648
    %v1690 = vld [vmem:[%s2] sm:$0xf]
    %v1691 = vld [vmem:[%s2 + $0x4] sm:$0xf]
    %v1692 = vld [vmem:[%s2 + $0x8] sm:$0xf]
    %v1693 = vld [vmem:[%s2 + $0xc] sm:$0xf]
    %v1694 = vld [vmem:[#allocation2 + $0x6] sm:$0xff]
    %v1695 = vld [vmem:[#allocation2 + $0xe] sm:$0xff]
    %v1696 = vld [vmem:[#allocation2 + $0x16] sm:$0xff]
    %v1697 = vld [vmem:[#allocation2 + $0x1e] sm:$0xff]
    %v1698 = vld [vmem:[#allocation2 + $0x26] sm:$0xff]
    %v1699 = vld [vmem:[#allocation2 + $0x2e] sm:$0xff]
    %v1700 = vld [vmem:[#allocation2 + $0x36] sm:$0xff]
    %v1701 = vld [vmem:[#allocation2 + $0x3e] sm:$0xff]
    %v1702 = vld [vmem:[#allocation2 + $0x46] sm:$0xff]
    %v1703 = vld [vmem:[#allocation2 + $0x4e] sm:$0xff]
    %v1704 = vld [vmem:[#allocation2 + $0x56] sm:$0xff]
    %v1705 = vld [vmem:[#allocation2 + $0x5e] sm:$0xff]
    %v1706 = vld [vmem:[#allocation2 + $0x66] sm:$0xff]
    %v1707 = vld [vmem:[#allocation2 + $0x6e] sm:$0xff]
    %v1708 = vld [vmem:[#allocation2 + $0x76] sm:$0xff]
    %v1709 = vld [vmem:[#allocation2 + $0x7e] sm:$0xff]
    %v1710 = vld [vmem:[#allocation2 + $0x86] sm:$0xff]
    %v1711 = vld [vmem:[#allocation2 + $0x8e] sm:$0xff]
    %v1712 = vld [vmem:[#allocation2 + $0x96] sm:$0xff]
    %v1713 = vld [vmem:[#allocation2 + $0x9e] sm:$0xff]
    %v1714 = vld [vmem:[#allocation2 + $0xa6] sm:$0xff]
    %v1715 = vld [vmem:[#allocation2 + $0xae] sm:$0xff]
    %v1716 = vld [vmem:[#allocation2 + $0xb6] sm:$0xff]
    %v1717 = vld [vmem:[#allocation2 + $0xbe] sm:$0xff]
    %v1718 = vld [vmem:[#allocation2 + $0xc6] sm:$0xff]
    %v1719 = vld [vmem:[#allocation2 + $0xce] sm:$0xff]
    %v1720 = vld [vmem:[#allocation2 + $0xd6] sm:$0xff]
    %v1721 = vld [vmem:[#allocation2 + $0xde] sm:$0xff]
    %v1722 = vld [vmem:[#allocation2 + $0xe6] sm:$0xff]
    %v1723 = vld [vmem:[#allocation2 + $0xee] sm:$0xff]
    %v1724 = vld [vmem:[#allocation2 + $0xf6] sm:$0xff]
    %v1725 = vld [vmem:[#allocation2 + $0xfe] sm:$0xff]
    %v1726 = vld [vmem:[#allocation2 + $0x106] sm:$0xff]
    %v1727 = vld [vmem:[#allocation2 + $0x10e] sm:$0xff]
    %v1728 = vld [vmem:[#allocation2 + $0x116] sm:$0xff]
    %v1729 = vld [vmem:[#allocation2 + $0x11e] sm:$0xff]
    %v1730 = vld [vmem:[#allocation2 + $0x126] sm:$0xff]
    %v1731 = vld [vmem:[#allocation2 + $0x12e] sm:$0xff]
    %v1732 = vld [vmem:[#allocation2 + $0x136] sm:$0xff]
    %v1733 = vld [vmem:[#allocation2 + $0x13e] sm:$0xff]
    %v1734 = vld [vmem:[#allocation2 + $0x146] sm:$0xff]
    %v1735 = vld [vmem:[#allocation2 + $0x14e] sm:$0xff]
    %v1736 = vld [vmem:[#allocation2 + $0x156] sm:$0xff]
    %v1737 = vld [vmem:[#allocation2 + $0x15e] sm:$0xff]
    %v1738 = vld [vmem:[#allocation2 + $0x166] sm:$0xff]
    %v1739 = vld [vmem:[#allocation2 + $0x16e] sm:$0xff]
    %v1740 = vld [vmem:[#allocation2 + $0x176] sm:$0xff]
    %v1741 = vld [vmem:[#allocation2 + $0x17e] sm:$0xff]
    %v1742 = vld [vmem:[#allocation2 + $0x186] sm:$0xff]
    %v1743 = vld [vmem:[#allocation2 + $0x18e] sm:$0xff]
    %v1744 = vld [vmem:[#allocation2 + $0x196] sm:$0xff]
    %v1745 = vld [vmem:[#allocation2 + $0x19e] sm:$0xff]
    %v1746 = vld [vmem:[#allocation2 + $0x1a6] sm:$0xff]
    %v1747 = vld [vmem:[#allocation2 + $0x1ae] sm:$0xff]
    %v1748 = vld [vmem:[#allocation2 + $0x1b6] sm:$0xff]
    %v1749 = vld [vmem:[#allocation2 + $0x1be] sm:$0xff]
    %v1750 = vld [vmem:[#allocation2 + $0x1c6] sm:$0xff]
    %v1751 = vld [vmem:[#allocation2 + $0x1ce] sm:$0xff]
    %v1752 = vld [vmem:[#allocation2 + $0x1d6] sm:$0xff]
    %v1753 = vld [vmem:[#allocation2 + $0x1de] sm:$0xff]
    %v1754 = vld [vmem:[#allocation2 + $0x1e6] sm:$0xff]
    %v1755 = vld [vmem:[#allocation2 + $0x1ee] sm:$0xff]
    %v1756 = vld [vmem:[#allocation2 + $0x1f6] sm:$0xff]
    %v1757 = vld [vmem:[#allocation2 + $0x1fe] sm:$0xff]
    %v1758 = vld [vmem:[#allocation2 + $0x206] sm:$0xff]
    %v1759 = vld [vmem:[#allocation2 + $0x20e] sm:$0xff]
    %v1760 = vld [vmem:[#allocation2 + $0x216] sm:$0xff]
    %v1761 = vld [vmem:[#allocation2 + $0x21e] sm:$0xff]
    %v1762 = vld [vmem:[#allocation2 + $0x226] sm:$0xff]
    %v1763 = vld [vmem:[#allocation2 + $0x22e] sm:$0xff]
    %v1764 = vld [vmem:[#allocation2 + $0x236] sm:$0xff]
    %v1765 = vld [vmem:[#allocation2 + $0x23e] sm:$0xff]
    %v1766 = vld [vmem:[#allocation2 + $0x246] sm:$0xff]
    %v1767 = vld [vmem:[#allocation2 + $0x24e] sm:$0xff]
    %v1768 = vld [vmem:[#allocation2 + $0x256] sm:$0xff]
    %v1769 = vld [vmem:[#allocation2 + $0x25e] sm:$0xff]
    %v1770 = vld [vmem:[#allocation2 + $0x266] sm:$0xff]
    %v1771 = vld [vmem:[#allocation2 + $0x26e] sm:$0xff]
    %v1772 = vld [vmem:[#allocation2 + $0x276] sm:$0xff]
    %v1773 = vld [vmem:[#allocation2 + $0x27e] sm:$0xff]
    %v1774 = vld [vmem:[#allocation2 + $0x286] sm:$0xff]
    %v1775 = vpack.c.bf16 %v1695, %v1694
    %v1776 = vpack.c.bf16 %v1697, %v1696
    %v1777 = vpack.c.bf16 %v1699, %v1698
    %v1778 = vpack.c.bf16 %v1701, %v1700
    %v1779 = vpack.c.bf16 %v1703, %v1702
    %v1780 = vpack.c.bf16 %v1705, %v1704
    %v1781 = vpack.c.bf16 %v1707, %v1706
    %v1782 = vpack.c.bf16 %v1709, %v1708
    %v1783 = vpack.c.bf16 %v1711, %v1710
    %v1784 = vpack.c.bf16 %v1713, %v1712
    %v1785 = vpack.c.bf16 %v1715, %v1714
    %v1786 = vpack.c.bf16 %v1717, %v1716
    %v1787 = vpack.c.bf16 %v1719, %v1718
    %v1788 = vpack.c.bf16 %v1721, %v1720
    %v1789 = vpack.c.bf16 %v1723, %v1722
    %v1790 = vpack.c.bf16 %v1725, %v1724
    %v1791 = vpack.c.bf16 %v1727, %v1726
    %v1792 = vpack.c.bf16 %v1729, %v1728
    %v1793 = vpack.c.bf16 %v1731, %v1730
    %v1794 = vpack.c.bf16 %v1733, %v1732
    %v1795 = vpack.c.bf16 %v1735, %v1734
    %v1796 = vpack.c.bf16 %v1737, %v1736
    %v1797 = vpack.c.bf16 %v1739, %v1738
    %v1798 = vpack.c.bf16 %v1741, %v1740
    %v1799 = vpack.c.bf16 %v1743, %v1742
    %v1800 = vpack.c.bf16 %v1745, %v1744
    %v1801 = vpack.c.bf16 %v1747, %v1746
    %v1802 = vpack.c.bf16 %v1749, %v1748
    %v1803 = vpack.c.bf16 %v1751, %v1750
    %v1804 = vpack.c.bf16 %v1753, %v1752
    %v1805 = vpack.c.bf16 %v1755, %v1754
    %v1806 = vpack.c.bf16 %v1757, %v1756
    %v1807 = vpack.c.bf16 %v1759, %v1758
    %v1808 = vpack.c.bf16 %v1761, %v1760
    %v1809 = vpack.c.bf16 %v1763, %v1762
    %v1810 = vpack.c.bf16 %v1765, %v1764
    %v1811 = vpack.c.bf16 %v1767, %v1766
    %v1812 = vpack.c.bf16 %v1769, %v1768
    %v1813 = vpack.c.bf16 %v1771, %v1770
    %v1814 = vpack.c.bf16 %v1773, %v1772
    %v1815 = vpack.c.bf16 %v1774, %v1774
    %s1816 = scalar_lea.vmem %s2, 16
    %v1817 = vld [vmem:[%s1816] sm:$0xf]
    %v1818 = vld [vmem:[%s1816 + $0x4] sm:$0xf]
    %v1819 = vld [vmem:[%s1816 + $0x8] sm:$0xf]
    %v1820 = vld [vmem:[%s1816 + $0xc] sm:$0xf]
    %v1825 = vunpack.c.l.b16 %v1817
    %v1826 = vunpack.c.l.b16 %v1818
    %v1827 = vunpack.c.l.b16 %v1819
    %v1828 = vunpack.c.l.b16 %v1820
    %v1829 = vpack.c.b16 %v1826, %v1825
    %v1830 = vpack.c.b16 %v1828, %v1827
    %v1834 = vsel %vm1480, %v1775, 0
    %v1837 = vsel %vm1480, %v1776, 0
    %v1840 = vsel %vm1480, %v1777, 0
    %v1843 = vsel %vm1480, %v1778, 0
    %v1846 = vsel %vm1480, %v1779, 0
    %v1849 = vsel %vm1480, %v1780, 0
    %v1852 = vsel %vm1480, %v1781, 0
    %v1855 = vsel %vm1480, %v1782, 0
    %v1858 = vsel %vm1480, %v1783, 0
    %v1861 = vsel %vm1480, %v1784, 0
    %v1864 = vsel %vm1480, %v1785, 0
    %v1867 = vsel %vm1480, %v1786, 0
    %v1870 = vsel %vm1480, %v1787, 0
    %v1873 = vsel %vm1480, %v1788, 0
    %v1876 = vsel %vm1480, %v1789, 0
    %v1879 = vsel %vm1480, %v1790, 0
    %v1882 = vsel %vm1480, %v1791, 0
    %v1885 = vsel %vm1480, %v1792, 0
    %v1888 = vsel %vm1480, %v1793, 0
    %v1891 = vsel %vm1480, %v1794, 0
    %v1894 = vsel %vm1480, %v1795, 0
    %v1897 = vsel %vm1480, %v1796, 0
    %v1900 = vsel %vm1480, %v1797, 0
    %v1903 = vsel %vm1480, %v1798, 0
    %v1906 = vsel %vm1480, %v1799, 0
    %v1909 = vsel %vm1480, %v1800, 0
    %v1912 = vsel %vm1480, %v1801, 0
    %v1915 = vsel %vm1480, %v1802, 0
    %v1918 = vsel %vm1480, %v1803, 0
    %v1921 = vsel %vm1480, %v1804, 0
    %v1924 = vsel %vm1480, %v1805, 0
    %v1927 = vsel %vm1480, %v1806, 0
    %v1930 = vsel %vm1480, %v1807, 0
    %v1933 = vsel %vm1480, %v1808, 0
    %v1936 = vsel %vm1480, %v1809, 0
    %v1939 = vsel %vm1480, %v1810, 0
    %v1942 = vsel %vm1480, %v1811, 0
    %v1945 = vsel %vm1480, %v1812, 0
    %v1948 = vsel %vm1480, %v1813, 0
    %v1951 = vsel %vm1480, %v1814, 0
    %v1954 = vsel %vm1480, %v1815, 0
    %1956 = vmatprep.subr.bf16.mxu0 0
    %1957 = vmatpush1.bf16.msra.mxu0 %v1829
    %1958 = vmatprep.subr.bf16.mxu0 0
    %1959 = vmatpush1.bf16.msra.mxu0 %v1830
    %1960 = vmatprep.subr.bf16.mxu0 0
    %1961 = vmatpush1.bf16.msra.mxu0 0
    %1962 = vmatprep.subr.bf16.mxu0 0
    %1963 = vmatpush1.bf16.msra.mxu0 0
    %1964 = vmatprep.subr.bf16.mxu0 0
    %1965 = vmatpush1.bf16.msra.mxu0 0
    %1966 = vmatprep.subr.bf16.mxu0 0
    %1967 = vmatpush1.bf16.msra.mxu0 0
    %1968 = vmatprep.subr.bf16.mxu0 0
    %1969 = vmatpush1.bf16.msra.mxu0 0
    %1970 = vmatprep.subr.bf16.mxu0 0
    %1971 = vmatpush1.bf16.msra.mxu0 0
    %1972 = vmatprep.subr.bf16.mxu0 0
    %1973 = vmatpush1.bf16.msra.mxu0 0
    %1974 = vmatprep.subr.bf16.mxu0 0
    %1975 = vmatpush1.bf16.msra.mxu0 0
    %1976 = vmatprep.subr.bf16.mxu0 0
    %1977 = vmatpush1.bf16.msra.mxu0 0
    %1978 = vmatprep.subr.bf16.mxu0 0
    %1979 = vmatpush1.bf16.msra.mxu0 0
    %1980 = vmatprep.subr.bf16.mxu0 0
    %1981 = vmatpush1.bf16.msra.mxu0 0
    %1982 = vmatprep.subr.bf16.mxu0 0
    %1983 = vmatpush1.bf16.msra.mxu0 0
    %1984 = vmatprep.subr.bf16.mxu0 0
    %1985 = vmatpush1.bf16.msra.mxu0 0
    %1986 = vmatprep.subr.bf16.mxu0 0
    %1987 = vmatpush1.bf16.msra.mxu0 0
    %1988 = vmatprep.mubr.bf16.mxu0 0
    %1989 = vmatmul.mubr.bf16.gmra.mrb[0].mxu0 %v1834
    %v1990 = vpop.f32.mrb[0].mxu0
    %v1991 = vadd.f32 0.0, %v1990
    %v1992 = vpop.f32.mrb[0].mxu0
    %v1993 = vpop.f32.mrb[0].mxu0
    %v1994 = vadd.f32 0.0, %v1993
    %v1995 = vpop.f32.mrb[0].mxu0
    %1996 = vmatprep.mubr.bf16.mxu0 0
    %1997 = vmatmul.mubr.bf16.gmra.mrb[0].mxu0 %v1837
    %v1998 = vpop.f32.mrb[0].mxu0
    %v1999 = vadd.f32 0.0, %v1998
    %v2000 = vpop.f32.mrb[0].mxu0
    %v2001 = vpop.f32.mrb[0].mxu0
    %v2002 = vadd.f32 0.0, %v2001
    %v2003 = vpop.f32.mrb[0].mxu0
    %2004 = vmatprep.mubr.bf16.mxu0 0
    %2005 = vmatmul.mubr.bf16.gmra.mrb[0].mxu0 %v1840
    %v2006 = vpop.f32.mrb[0].mxu0
    %v2007 = vadd.f32 0.0, %v2006
    %v2008 = vpop.f32.mrb[0].mxu0
    %v2009 = vpop.f32.mrb[0].mxu0
    %v2010 = vadd.f32 0.0, %v2009
    %v2011 = vpop.f32.mrb[0].mxu0
    %2012 = vmatprep.mubr.bf16.mxu0 0
    %2013 = vmatmul.mubr.bf16.gmra.mrb[0].mxu0 %v1843
    %v2014 = vpop.f32.mrb[0].mxu0
    %v2015 = vadd.f32 0.0, %v2014
    %v2016 = vpop.f32.mrb[0].mxu0
    %v2017 = vpop.f32.mrb[0].mxu0
    %v2018 = vadd.f32 0.0, %v2017
    %v2019 = vpop.f32.mrb[0].mxu0
    %2020 = vmatprep.mubr.bf16.mxu0 0
    %2021 = vmatmul.mubr.bf16.gmra.mrb[0].mxu0 %v1846
    %v2022 = vpop.f32.mrb[0].mxu0
    %v2023 = vadd.f32 0.0, %v2022
    %v2024 = vpop.f32.mrb[0].mxu0
    %v2025 = vpop.f32.mrb[0].mxu0
    %v2026 = vadd.f32 0.0, %v2025
    %v2027 = vpop.f32.mrb[0].mxu0
    %2028 = vmatprep.mubr.bf16.mxu0 0
    %2029 = vmatmul.mubr.bf16.gmra.mrb[0].mxu0 %v1849
    %v2030 = vpop.f32.mrb[0].mxu0
    %v2031 = vadd.f32 0.0, %v2030
    %v2032 = vpop.f32.mrb[0].mxu0
    %v2033 = vpop.f32.mrb[0].mxu0
    %v2034 = vadd.f32 0.0, %v2033
    %v2035 = vpop.f32.mrb[0].mxu0
    %2036 = vmatprep.mubr.bf16.mxu0 0
    %2037 = vmatmul.mubr.bf16.gmra.mrb[0].mxu0 %v1852
    %v2038 = vpop.f32.mrb[0].mxu0
    %v2039 = vadd.f32 0.0, %v2038
    %v2040 = vpop.f32.mrb[0].mxu0
    %v2041 = vpop.f32.mrb[0].mxu0
    %v2042 = vadd.f32 0.0, %v2041
    %v2043 = vpop.f32.mrb[0].mxu0
    %2044 = vmatprep.mubr.bf16.mxu0 0
    %2045 = vmatmul.mubr.bf16.gmra.mrb[0].mxu0 %v1855
    %v2046 = vpop.f32.mrb[0].mxu0
    %v2047 = vadd.f32 0.0, %v2046
    %v2048 = vpop.f32.mrb[0].mxu0
    %v2049 = vpop.f32.mrb[0].mxu0
    %v2050 = vadd.f32 0.0, %v2049
    %v2051 = vpop.f32.mrb[0].mxu0
    %2052 = vmatprep.mubr.bf16.mxu0 0
    %2053 = vmatmul.mubr.bf16.gmra.mrb[0].mxu0 %v1858
    %v2054 = vpop.f32.mrb[0].mxu0
    %v2055 = vadd.f32 0.0, %v2054
    %v2056 = vpop.f32.mrb[0].mxu0
    %v2057 = vpop.f32.mrb[0].mxu0
    %v2058 = vadd.f32 0.0, %v2057
    %v2059 = vpop.f32.mrb[0].mxu0
    %2060 = vmatprep.mubr.bf16.mxu0 0
    %2061 = vmatmul.mubr.bf16.gmra.mrb[0].mxu0 %v1861
    %v2062 = vpop.f32.mrb[0].mxu0
    %v2063 = vadd.f32 0.0, %v2062
    %v2064 = vpop.f32.mrb[0].mxu0
    %v2065 = vpop.f32.mrb[0].mxu0
    %v2066 = vadd.f32 0.0, %v2065
    %v2067 = vpop.f32.mrb[0].mxu0
    %2068 = vmatprep.mubr.bf16.mxu0 0
    %2069 = vmatmul.mubr.bf16.gmra.mrb[0].mxu0 %v1864
    %v2070 = vpop.f32.mrb[0].mxu0
    %v2071 = vadd.f32 0.0, %v2070
    %v2072 = vpop.f32.mrb[0].mxu0
    %v2073 = vpop.f32.mrb[0].mxu0
    %v2074 = vadd.f32 0.0, %v2073
    %v2075 = vpop.f32.mrb[0].mxu0
    %2076 = vmatprep.mubr.bf16.mxu0 0
    %2077 = vmatmul.mubr.bf16.gmra.mrb[0].mxu0 %v1867
    %v2078 = vpop.f32.mrb[0].mxu0
    %v2079 = vadd.f32 0.0, %v2078
    %v2080 = vpop.f32.mrb[0].mxu0
    %v2081 = vpop.f32.mrb[0].mxu0
    %v2082 = vadd.f32 0.0, %v2081
    %v2083 = vpop.f32.mrb[0].mxu0
    %2084 = vmatprep.mubr.bf16.mxu0 0
    %2085 = vmatmul.mubr.bf16.gmra.mrb[0].mxu0 %v1870
    %v2086 = vpop.f32.mrb[0].mxu0
    %v2087 = vadd.f32 0.0, %v2086
    %v2088 = vpop.f32.mrb[0].mxu0
    %v2089 = vpop.f32.mrb[0].mxu0
    %v2090 = vadd.f32 0.0, %v2089
    %v2091 = vpop.f32.mrb[0].mxu0
    %2092 = vmatprep.mubr.bf16.mxu0 0
    %2093 = vmatmul.mubr.bf16.gmra.mrb[0].mxu0 %v1873
    %v2094 = vpop.f32.mrb[0].mxu0
    %v2095 = vadd.f32 0.0, %v2094
    %v2096 = vpop.f32.mrb[0].mxu0
    %v2097 = vpop.f32.mrb[0].mxu0
    %v2098 = vadd.f32 0.0, %v2097
    %v2099 = vpop.f32.mrb[0].mxu0
    %2100 = vmatprep.mubr.bf16.mxu0 0
    %2101 = vmatmul.mubr.bf16.gmra.mrb[0].mxu0 %v1876
    %v2102 = vpop.f32.mrb[0].mxu0
    %v2103 = vadd.f32 0.0, %v2102
    %v2104 = vpop.f32.mrb[0].mxu0
    %v2105 = vpop.f32.mrb[0].mxu0
    %v2106 = vadd.f32 0.0, %v2105
    %v2107 = vpop.f32.mrb[0].mxu0
    %2108 = vmatprep.mubr.bf16.mxu0 0
    %2109 = vmatmul.mubr.bf16.gmra.mrb[0].mxu0 %v1879
    %v2110 = vpop.f32.mrb[0].mxu0
    %v2111 = vadd.f32 0.0, %v2110
    %v2112 = vpop.f32.mrb[0].mxu0
    %v2113 = vpop.f32.mrb[0].mxu0
    %v2114 = vadd.f32 0.0, %v2113
    %v2115 = vpop.f32.mrb[0].mxu0
    %2116 = vmatprep.mubr.bf16.mxu0 0
    %2117 = vmatmul.mubr.bf16.gmra.mrb[0].mxu0 %v1882
    %v2118 = vpop.f32.mrb[0].mxu0
    %v2119 = vadd.f32 0.0, %v2118
    %v2120 = vpop.f32.mrb[0].mxu0
    %v2121 = vpop.f32.mrb[0].mxu0
    %v2122 = vadd.f32 0.0, %v2121
    %v2123 = vpop.f32.mrb[0].mxu0
    %2124 = vmatprep.mubr.bf16.mxu0 0
    %2125 = vmatmul.mubr.bf16.gmra.mrb[0].mxu0 %v1885
    %v2126 = vpop.f32.mrb[0].mxu0
    %v2127 = vadd.f32 0.0, %v2126
    %v2128 = vpop.f32.mrb[0].mxu0
    %v2129 = vpop.f32.mrb[0].mxu0
    %v2130 = vadd.f32 0.0, %v2129
    %v2131 = vpop.f32.mrb[0].mxu0
    %2132 = vmatprep.mubr.bf16.mxu0 0
    %2133 = vmatmul.mubr.bf16.gmra.mrb[0].mxu0 %v1888
    %v2134 = vpop.f32.mrb[0].mxu0
    %v2135 = vadd.f32 0.0, %v2134
    %v2136 = vpop.f32.mrb[0].mxu0
    %v2137 = vpop.f32.mrb[0].mxu0
    %v2138 = vadd.f32 0.0, %v2137
    %v2139 = vpop.f32.mrb[0].mxu0
    %2140 = vmatprep.mubr.bf16.mxu0 0
    %2141 = vmatmul.mubr.bf16.gmra.mrb[0].mxu0 %v1891
    %v2142 = vpop.f32.mrb[0].mxu0
    %v2143 = vadd.f32 0.0, %v2142
    %v2144 = vpop.f32.mrb[0].mxu0
    %v2145 = vpop.f32.mrb[0].mxu0
    %v2146 = vadd.f32 0.0, %v2145
    %v2147 = vpop.f32.mrb[0].mxu0
    %2148 = vmatprep.mubr.bf16.mxu0 0
    %2149 = vmatmul.mubr.bf16.gmra.mrb[0].mxu0 %v1894
    %v2150 = vpop.f32.mrb[0].mxu0
    %v2151 = vadd.f32 0.0, %v2150
    %v2152 = vpop.f32.mrb[0].mxu0
    %v2153 = vpop.f32.mrb[0].mxu0
    %v2154 = vadd.f32 0.0, %v2153
    %v2155 = vpop.f32.mrb[0].mxu0
    %2156 = vmatprep.mubr.bf16.mxu0 0
    %2157 = vmatmul.mubr.bf16.gmra.mrb[0].mxu0 %v1897
    %v2158 = vpop.f32.mrb[0].mxu0
    %v2159 = vadd.f32 0.0, %v2158
    %v2160 = vpop.f32.mrb[0].mxu0
    %v2161 = vpop.f32.mrb[0].mxu0
    %v2162 = vadd.f32 0.0, %v2161
    %v2163 = vpop.f32.mrb[0].mxu0
    %2164 = vmatprep.mubr.bf16.mxu0 0
    %2165 = vmatmul.mubr.bf16.gmra.mrb[0].mxu0 %v1900
    %v2166 = vpop.f32.mrb[0].mxu0
    %v2167 = vadd.f32 0.0, %v2166
    %v2168 = vpop.f32.mrb[0].mxu0
    %v2169 = vpop.f32.mrb[0].mxu0
    %v2170 = vadd.f32 0.0, %v2169
    %v2171 = vpop.f32.mrb[0].mxu0
    %2172 = vmatprep.mubr.bf16.mxu0 0
    %2173 = vmatmul.mubr.bf16.gmra.mrb[0].mxu0 %v1903
    %v2174 = vpop.f32.mrb[0].mxu0
    %v2175 = vadd.f32 0.0, %v2174
    %v2176 = vpop.f32.mrb[0].mxu0
    %v2177 = vpop.f32.mrb[0].mxu0
    %v2178 = vadd.f32 0.0, %v2177
    %v2179 = vpop.f32.mrb[0].mxu0
    %2180 = vmatprep.mubr.bf16.mxu0 0
    %2181 = vmatmul.mubr.bf16.gmra.mrb[0].mxu0 %v1906
    %v2182 = vpop.f32.mrb[0].mxu0
    %v2183 = vadd.f32 0.0, %v2182
    %v2184 = vpop.f32.mrb[0].mxu0
    %v2185 = vpop.f32.mrb[0].mxu0
    %v2186 = vadd.f32 0.0, %v2185
    %v2187 = vpop.f32.mrb[0].mxu0
    %2188 = vmatprep.mubr.bf16.mxu0 0
    %2189 = vmatmul.mubr.bf16.gmra.mrb[0].mxu0 %v1909
    %v2190 = vpop.f32.mrb[0].mxu0
    %v2191 = vadd.f32 0.0, %v2190
    %v2192 = vpop.f32.mrb[0].mxu0
    %v2193 = vpop.f32.mrb[0].mxu0
    %v2194 = vadd.f32 0.0, %v2193
    %v2195 = vpop.f32.mrb[0].mxu0
    %2196 = vmatprep.mubr.bf16.mxu0 0
    %2197 = vmatmul.mubr.bf16.gmra.mrb[0].mxu0 %v1912
    %v2198 = vpop.f32.mrb[0].mxu0
    %v2199 = vadd.f32 0.0, %v2198
    %v2200 = vpop.f32.mrb[0].mxu0
    %v2201 = vpop.f32.mrb[0].mxu0
    %v2202 = vadd.f32 0.0, %v2201
    %v2203 = vpop.f32.mrb[0].mxu0
    %2204 = vmatprep.mubr.bf16.mxu0 0
    %2205 = vmatmul.mubr.bf16.gmra.mrb[0].mxu0 %v1915
    %v2206 = vpop.f32.mrb[0].mxu0
    %v2207 = vadd.f32 0.0, %v2206
    %v2208 = vpop.f32.mrb[0].mxu0
    %v2209 = vpop.f32.mrb[0].mxu0
    %v2210 = vadd.f32 0.0, %v2209
    %v2211 = vpop.f32.mrb[0].mxu0
    %2212 = vmatprep.mubr.bf16.mxu0 0
    %2213 = vmatmul.mubr.bf16.gmra.mrb[0].mxu0 %v1918
    %v2214 = vpop.f32.mrb[0].mxu0
    %v2215 = vadd.f32 0.0, %v2214
    %v2216 = vpop.f32.mrb[0].mxu0
    %v2217 = vpop.f32.mrb[0].mxu0
    %v2218 = vadd.f32 0.0, %v2217
    %v2219 = vpop.f32.mrb[0].mxu0
    %2220 = vmatprep.mubr.bf16.mxu0 0
    %2221 = vmatmul.mubr.bf16.gmra.mrb[0].mxu0 %v1921
    %v2222 = vpop.f32.mrb[0].mxu0
    %v2223 = vadd.f32 0.0, %v2222
    %v2224 = vpop.f32.mrb[0].mxu0
    %v2225 = vpop.f32.mrb[0].mxu0
    %v2226 = vadd.f32 0.0, %v2225
    %v2227 = vpop.f32.mrb[0].mxu0
    %2228 = vmatprep.mubr.bf16.mxu0 0
    %2229 = vmatmul.mubr.bf16.gmra.mrb[0].mxu0 %v1924
    %v2230 = vpop.f32.mrb[0].mxu0
    %v2231 = vadd.f32 0.0, %v2230
    %v2232 = vpop.f32.mrb[0].mxu0
    %v2233 = vpop.f32.mrb[0].mxu0
    %v2234 = vadd.f32 0.0, %v2233
    %v2235 = vpop.f32.mrb[0].mxu0
    %2236 = vmatprep.mubr.bf16.mxu0 0
    %2237 = vmatmul.mubr.bf16.gmra.mrb[0].mxu0 %v1927
    %v2238 = vpop.f32.mrb[0].mxu0
    %v2239 = vadd.f32 0.0, %v2238
    %v2240 = vpop.f32.mrb[0].mxu0
    %v2241 = vpop.f32.mrb[0].mxu0
    %v2242 = vadd.f32 0.0, %v2241
    %v2243 = vpop.f32.mrb[0].mxu0
    %2244 = vmatprep.mubr.bf16.mxu0 0
    %2245 = vmatmul.mubr.bf16.gmra.mrb[0].mxu0 %v1930
    %v2246 = vpop.f32.mrb[0].mxu0
    %v2247 = vadd.f32 0.0, %v2246
    %v2248 = vpop.f32.mrb[0].mxu0
    %v2249 = vpop.f32.mrb[0].mxu0
    %v2250 = vadd.f32 0.0, %v2249
    %v2251 = vpop.f32.mrb[0].mxu0
    %2252 = vmatprep.mubr.bf16.mxu0 0
    %2253 = vmatmul.mubr.bf16.gmra.mrb[0].mxu0 %v1933
    %v2254 = vpop.f32.mrb[0].mxu0
    %v2255 = vadd.f32 0.0, %v2254
    %v2256 = vpop.f32.mrb[0].mxu0
    %v2257 = vpop.f32.mrb[0].mxu0
    %v2258 = vadd.f32 0.0, %v2257
    %v2259 = vpop.f32.mrb[0].mxu0
    %2260 = vmatprep.mubr.bf16.mxu0 0
    %2261 = vmatmul.mubr.bf16.gmra.mrb[0].mxu0 %v1936
    %v2262 = vpop.f32.mrb[0].mxu0
    %v2263 = vadd.f32 0.0, %v2262
    %v2264 = vpop.f32.mrb[0].mxu0
    %v2265 = vpop.f32.mrb[0].mxu0
    %v2266 = vadd.f32 0.0, %v2265
    %v2267 = vpop.f32.mrb[0].mxu0
    %2268 = vmatprep.mubr.bf16.mxu0 0
    %2269 = vmatmul.mubr.bf16.gmra.mrb[0].mxu0 %v1939
    %v2270 = vpop.f32.mrb[0].mxu0
    %v2271 = vadd.f32 0.0, %v2270
    %v2272 = vpop.f32.mrb[0].mxu0
    %v2273 = vpop.f32.mrb[0].mxu0
    %v2274 = vadd.f32 0.0, %v2273
    %v2275 = vpop.f32.mrb[0].mxu0
    %2276 = vmatprep.mubr.bf16.mxu0 0
    %2277 = vmatmul.mubr.bf16.gmra.mrb[0].mxu0 %v1942
    %v2278 = vpop.f32.mrb[0].mxu0
    %v2279 = vadd.f32 0.0, %v2278
    %v2280 = vpop.f32.mrb[0].mxu0
    %v2281 = vpop.f32.mrb[0].mxu0
    %v2282 = vadd.f32 0.0, %v2281
    %v2283 = vpop.f32.mrb[0].mxu0
    %2284 = vmatprep.mubr.bf16.mxu0 0
    %2285 = vmatmul.mubr.bf16.gmra.mrb[0].mxu0 %v1945
    %v2286 = vpop.f32.mrb[0].mxu0
    %v2287 = vadd.f32 0.0, %v2286
    %v2288 = vpop.f32.mrb[0].mxu0
    %v2289 = vpop.f32.mrb[0].mxu0
    %v2290 = vadd.f32 0.0, %v2289
    %v2291 = vpop.f32.mrb[0].mxu0
    %2292 = vmatprep.mubr.bf16.mxu0 0
    %2293 = vmatmul.mubr.bf16.gmra.mrb[0].mxu0 %v1948
    %v2294 = vpop.f32.mrb[0].mxu0
    %v2295 = vadd.f32 0.0, %v2294
    %v2296 = vpop.f32.mrb[0].mxu0
    %v2297 = vpop.f32.mrb[0].mxu0
    %v2298 = vadd.f32 0.0, %v2297
    %v2299 = vpop.f32.mrb[0].mxu0
    %2300 = vmatprep.mubr.bf16.mxu0 0
    %2301 = vmatmul.mubr.bf16.gmra.mrb[0].mxu0 %v1951
    %v2302 = vpop.f32.mrb[0].mxu0
    %v2303 = vadd.f32 0.0, %v2302
    %v2304 = vpop.f32.mrb[0].mxu0
    %v2305 = vpop.f32.mrb[0].mxu0
    %v2306 = vadd.f32 0.0, %v2305
    %v2307 = vpop.f32.mrb[0].mxu0
    %2308 = vmatprep.mubr.bf16.mxu0 0
    %2309 = vmatmul.mubr.bf16.gmra.mrb[0].mxu0 %v1954
    %v2310 = vpop.f32.mrb[0].mxu0
    %v2311 = vadd.f32 0.0, %v2310
    %v2312 = vpop.f32.mrb[0].mxu0
    %v2313 = vpop.f32.mrb[0].mxu0
    %v2314 = vpop.f32.mrb[0].mxu0
    %2315 = vdwg.mxu0
    %v2320 = vunpack.c.l.b16 %v1690
    %v2321 = vunpack.c.l.b16 %v1691
    %v2322 = vunpack.c.l.b16 %v1692
    %v2323 = vunpack.c.l.b16 %v1693
    %v2324 = vpack.c.b16 %v2321, %v2320
    %v2325 = vpack.c.b16 %v2323, %v2322
    %v2329 = vsel %vm1480, %v1649, 0
    %v2332 = vsel %vm1480, %v1650, 0
    %v2335 = vsel %vm1480, %v1651, 0
    %v2338 = vsel %vm1480, %v1652, 0
    %v2341 = vsel %vm1480, %v1653, 0
    %v2344 = vsel %vm1480, %v1654, 0
    %v2347 = vsel %vm1480, %v1655, 0
    %v2350 = vsel %vm1480, %v1656, 0
    %v2353 = vsel %vm1480, %v1657, 0
    %v2356 = vsel %vm1480, %v1658, 0
    %v2359 = vsel %vm1480, %v1659, 0
    %v2362 = vsel %vm1480, %v1660, 0
    %v2365 = vsel %vm1480, %v1661, 0
    %v2368 = vsel %vm1480, %v1662, 0
    %v2371 = vsel %vm1480, %v1663, 0
    %v2374 = vsel %vm1480, %v1664, 0
    %v2377 = vsel %vm1480, %v1665, 0
    %v2380 = vsel %vm1480, %v1666, 0
    %v2383 = vsel %vm1480, %v1667, 0
    %v2386 = vsel %vm1480, %v1668, 0
    %v2389 = vsel %vm1480, %v1669, 0
    %v2392 = vsel %vm1480, %v1670, 0
    %v2395 = vsel %vm1480, %v1671, 0
    %v2398 = vsel %vm1480, %v1672, 0
    %v2401 = vsel %vm1480, %v1673, 0
    %v2404 = vsel %vm1480, %v1674, 0
    %v2407 = vsel %vm1480, %v1675, 0
    %v2410 = vsel %vm1480, %v1676, 0
    %v2413 = vsel %vm1480, %v1677, 0
    %v2416 = vsel %vm1480, %v1678, 0
    %v2419 = vsel %vm1480, %v1679, 0
    %v2422 = vsel %vm1480, %v1680, 0
    %v2425 = vsel %vm1480, %v1681, 0
    %v2428 = vsel %vm1480, %v1682, 0
    %v2431 = vsel %vm1480, %v1683, 0
    %v2434 = vsel %vm1480, %v1684, 0
    %v2437 = vsel %vm1480, %v1685, 0
    %v2440 = vsel %vm1480, %v1686, 0
    %v2443 = vsel %vm1480, %v1687, 0
    %v2446 = vsel %vm1480, %v1688, 0
    %v2449 = vsel %vm1480, %v1689, 0
    %2451 = vmatprep.subr.bf16.mxu0 0
    %2452 = vmatpush1.bf16.msra.mxu0 %v2324
    %2453 = vmatprep.subr.bf16.mxu0 0
    %2454 = vmatpush1.bf16.msra.mxu0 %v2325
    %2455 = vmatprep.subr.bf16.mxu0 0
    %2456 = vmatpush1.bf16.msra.mxu0 0
    %2457 = vmatprep.subr.bf16.mxu0 0
    %2458 = vmatpush1.bf16.msra.mxu0 0
    %2459 = vmatprep.subr.bf16.mxu0 0
    %2460 = vmatpush1.bf16.msra.mxu0 0
    %2461 = vmatprep.subr.bf16.mxu0 0
    %2462 = vmatpush1.bf16.msra.mxu0 0
    %2463 = vmatprep.subr.bf16.mxu0 0
    %2464 = vmatpush1.bf16.msra.mxu0 0
    %2465 = vmatprep.subr.bf16.mxu0 0
    %2466 = vmatpush1.bf16.msra.mxu0 0
    %2467 = vmatprep.subr.bf16.mxu0 0
    %2468 = vmatpush1.bf16.msra.mxu0 0
    %2469 = vmatprep.subr.bf16.mxu0 0
    %2470 = vmatpush1.bf16.msra.mxu0 0
    %2471 = vmatprep.subr.bf16.mxu0 0
    %2472 = vmatpush1.bf16.msra.mxu0 0
    %2473 = vmatprep.subr.bf16.mxu0 0
    %2474 = vmatpush1.bf16.msra.mxu0 0
    %2475 = vmatprep.subr.bf16.mxu0 0
    %2476 = vmatpush1.bf16.msra.mxu0 0
    %2477 = vmatprep.subr.bf16.mxu0 0
    %2478 = vmatpush1.bf16.msra.mxu0 0
    %2479 = vmatprep.subr.bf16.mxu0 0
    %2480 = vmatpush1.bf16.msra.mxu0 0
    %2481 = vmatprep.subr.bf16.mxu0 0
    %2482 = vmatpush1.bf16.msra.mxu0 0
    %2483 = vmatprep.mubr.bf16.mxu0 0
    %2484 = vmatmul.mubr.bf16.gmra.mrb[0].mxu0 %v2329
    %v2485 = vpop.f32.mrb[0].mxu0
    %v2486 = vadd.f32 %v1991, %v2485
    %v2487 = vpop.f32.mrb[0].mxu0
    %v2488 = vpop.f32.mrb[0].mxu0
    %v2489 = vadd.f32 %v1994, %v2488
    %v2490 = vpop.f32.mrb[0].mxu0
    %2491 = vmatprep.mubr.bf16.mxu0 0
    %2492 = vmatmul.mubr.bf16.gmra.mrb[0].mxu0 %v2332
    %v2493 = vpop.f32.mrb[0].mxu0
    %v2494 = vadd.f32 %v1999, %v2493
    %v2495 = vpop.f32.mrb[0].mxu0
    %v2496 = vpop.f32.mrb[0].mxu0
    %v2497 = vadd.f32 %v2002, %v2496
    %v2498 = vpop.f32.mrb[0].mxu0
    %2499 = vmatprep.mubr.bf16.mxu0 0
    %2500 = vmatmul.mubr.bf16.gmra.mrb[0].mxu0 %v2335
    %v2501 = vpop.f32.mrb[0].mxu0
    %v2502 = vadd.f32 %v2007, %v2501
    %v2503 = vpop.f32.mrb[0].mxu0
    %v2504 = vpop.f32.mrb[0].mxu0
    %v2505 = vadd.f32 %v2010, %v2504
    %v2506 = vpop.f32.mrb[0].mxu0
    %2507 = vmatprep.mubr.bf16.mxu0 0
    %2508 = vmatmul.mubr.bf16.gmra.mrb[0].mxu0 %v2338
    %v2509 = vpop.f32.mrb[0].mxu0
    %v2510 = vadd.f32 %v2015, %v2509
    %v2511 = vpop.f32.mrb[0].mxu0
    %v2512 = vpop.f32.mrb[0].mxu0
    %v2513 = vadd.f32 %v2018, %v2512
    %v2514 = vpop.f32.mrb[0].mxu0
    %2515 = vmatprep.mubr.bf16.mxu0 0
    %2516 = vmatmul.mubr.bf16.gmra.mrb[0].mxu0 %v2341
    %v2517 = vpop.f32.mrb[0].mxu0
    %v2518 = vadd.f32 %v2023, %v2517
    %v2519 = vpop.f32.mrb[0].mxu0
    %v2520 = vpop.f32.mrb[0].mxu0
    %v2521 = vadd.f32 %v2026, %v2520
    %v2522 = vpop.f32.mrb[0].mxu0
    %2523 = vmatprep.mubr.bf16.mxu0 0
    %2524 = vmatmul.mubr.bf16.gmra.mrb[0].mxu0 %v2344
    %v2525 = vpop.f32.mrb[0].mxu0
    %v2526 = vadd.f32 %v2031, %v2525
    %v2527 = vpop.f32.mrb[0].mxu0
    %v2528 = vpop.f32.mrb[0].mxu0
    %v2529 = vadd.f32 %v2034, %v2528
    %v2530 = vpop.f32.mrb[0].mxu0
    %2531 = vmatprep.mubr.bf16.mxu0 0
    %2532 = vmatmul.mubr.bf16.gmra.mrb[0].mxu0 %v2347
    %v2533 = vpop.f32.mrb[0].mxu0
    %v2534 = vadd.f32 %v2039, %v2533
    %v2535 = vpop.f32.mrb[0].mxu0
    %v2536 = vpop.f32.mrb[0].mxu0
    %v2537 = vadd.f32 %v2042, %v2536
    %v2538 = vpop.f32.mrb[0].mxu0
    %2539 = vmatprep.mubr.bf16.mxu0 0
    %2540 = vmatmul.mubr.bf16.gmra.mrb[0].mxu0 %v2350
    %v2541 = vpop.f32.mrb[0].mxu0
    %v2542 = vadd.f32 %v2047, %v2541
    %v2543 = vpop.f32.mrb[0].mxu0
    %v2544 = vpop.f32.mrb[0].mxu0
    %v2545 = vadd.f32 %v2050, %v2544
    %v2546 = vpop.f32.mrb[0].mxu0
    %2547 = vmatprep.mubr.bf16.mxu0 0
    %2548 = vmatmul.mubr.bf16.gmra.mrb[0].mxu0 %v2353
    %v2549 = vpop.f32.mrb[0].mxu0
    %v2550 = vadd.f32 %v2055, %v2549
    %v2551 = vpop.f32.mrb[0].mxu0
    %v2552 = vpop.f32.mrb[0].mxu0
    %v2553 = vadd.f32 %v2058, %v2552
    %v2554 = vpop.f32.mrb[0].mxu0
    %2555 = vmatprep.mubr.bf16.mxu0 0
    %2556 = vmatmul.mubr.bf16.gmra.mrb[0].mxu0 %v2356
    %v2557 = vpop.f32.mrb[0].mxu0
    %v2558 = vadd.f32 %v2063, %v2557
    %v2559 = vpop.f32.mrb[0].mxu0
    %v2560 = vpop.f32.mrb[0].mxu0
    %v2561 = vadd.f32 %v2066, %v2560
    %v2562 = vpop.f32.mrb[0].mxu0
    %2563 = vmatprep.mubr.bf16.mxu0 0
    %2564 = vmatmul.mubr.bf16.gmra.mrb[0].mxu0 %v2359
    %v2565 = vpop.f32.mrb[0].mxu0
    %v2566 = vadd.f32 %v2071, %v2565
    %v2567 = vpop.f32.mrb[0].mxu0
    %v2568 = vpop.f32.mrb[0].mxu0
    %v2569 = vadd.f32 %v2074, %v2568
    %v2570 = vpop.f32.mrb[0].mxu0
    %2571 = vmatprep.mubr.bf16.mxu0 0
    %2572 = vmatmul.mubr.bf16.gmra.mrb[0].mxu0 %v2362
    %v2573 = vpop.f32.mrb[0].mxu0
    %v2574 = vadd.f32 %v2079, %v2573
    %v2575 = vpop.f32.mrb[0].mxu0
    %v2576 = vpop.f32.mrb[0].mxu0
    %v2577 = vadd.f32 %v2082, %v2576
    %v2578 = vpop.f32.mrb[0].mxu0
    %2579 = vmatprep.mubr.bf16.mxu0 0
    %2580 = vmatmul.mubr.bf16.gmra.mrb[0].mxu0 %v2365
    %v2581 = vpop.f32.mrb[0].mxu0
    %v2582 = vadd.f32 %v2087, %v2581
    %v2583 = vpop.f32.mrb[0].mxu0
    %v2584 = vpop.f32.mrb[0].mxu0
    %v2585 = vadd.f32 %v2090, %v2584
    %v2586 = vpop.f32.mrb[0].mxu0
    %2587 = vmatprep.mubr.bf16.mxu0 0
    %2588 = vmatmul.mubr.bf16.gmra.mrb[0].mxu0 %v2368
    %v2589 = vpop.f32.mrb[0].mxu0
    %v2590 = vadd.f32 %v2095, %v2589
    %v2591 = vpop.f32.mrb[0].mxu0
    %v2592 = vpop.f32.mrb[0].mxu0
    %v2593 = vadd.f32 %v2098, %v2592
    %v2594 = vpop.f32.mrb[0].mxu0
    %2595 = vmatprep.mubr.bf16.mxu0 0
    %2596 = vmatmul.mubr.bf16.gmra.mrb[0].mxu0 %v2371
    %v2597 = vpop.f32.mrb[0].mxu0
    %v2598 = vadd.f32 %v2103, %v2597
    %v2599 = vpop.f32.mrb[0].mxu0
    %v2600 = vpop.f32.mrb[0].mxu0
    %v2601 = vadd.f32 %v2106, %v2600
    %v2602 = vpop.f32.mrb[0].mxu0
    %2603 = vmatprep.mubr.bf16.mxu0 0
    %2604 = vmatmul.mubr.bf16.gmra.mrb[0].mxu0 %v2374
    %v2605 = vpop.f32.mrb[0].mxu0
    %v2606 = vadd.f32 %v2111, %v2605
    %v2607 = vpop.f32.mrb[0].mxu0
    %v2608 = vpop.f32.mrb[0].mxu0
    %v2609 = vadd.f32 %v2114, %v2608
    %v2610 = vpop.f32.mrb[0].mxu0
    %2611 = vmatprep.mubr.bf16.mxu0 0
    %2612 = vmatmul.mubr.bf16.gmra.mrb[0].mxu0 %v2377
    %v2613 = vpop.f32.mrb[0].mxu0
    %v2614 = vadd.f32 %v2119, %v2613
    %v2615 = vpop.f32.mrb[0].mxu0
    %v2616 = vpop.f32.mrb[0].mxu0
    %v2617 = vadd.f32 %v2122, %v2616
    %v2618 = vpop.f32.mrb[0].mxu0
    %2619 = vmatprep.mubr.bf16.mxu0 0
    %2620 = vmatmul.mubr.bf16.gmra.mrb[0].mxu0 %v2380
    %v2621 = vpop.f32.mrb[0].mxu0
    %v2622 = vadd.f32 %v2127, %v2621
    %v2623 = vpop.f32.mrb[0].mxu0
    %v2624 = vpop.f32.mrb[0].mxu0
    %v2625 = vadd.f32 %v2130, %v2624
    %v2626 = vpop.f32.mrb[0].mxu0
    %2627 = vmatprep.mubr.bf16.mxu0 0
    %2628 = vmatmul.mubr.bf16.gmra.mrb[0].mxu0 %v2383
    %v2629 = vpop.f32.mrb[0].mxu0
    %v2630 = vadd.f32 %v2135, %v2629
    %v2631 = vpop.f32.mrb[0].mxu0
    %v2632 = vpop.f32.mrb[0].mxu0
    %v2633 = vadd.f32 %v2138, %v2632
    %v2634 = vpop.f32.mrb[0].mxu0
    %2635 = vmatprep.mubr.bf16.mxu0 0
    %2636 = vmatmul.mubr.bf16.gmra.mrb[0].mxu0 %v2386
    %v2637 = vpop.f32.mrb[0].mxu0
    %v2638 = vadd.f32 %v2143, %v2637
    %v2639 = vpop.f32.mrb[0].mxu0
    %v2640 = vpop.f32.mrb[0].mxu0
    %v2641 = vadd.f32 %v2146, %v2640
    %v2642 = vpop.f32.mrb[0].mxu0
    %2643 = vmatprep.mubr.bf16.mxu0 0
    %2644 = vmatmul.mubr.bf16.gmra.mrb[0].mxu0 %v2389
    %v2645 = vpop.f32.mrb[0].mxu0
    %v2646 = vadd.f32 %v2151, %v2645
    %v2647 = vpop.f32.mrb[0].mxu0
    %v2648 = vpop.f32.mrb[0].mxu0
    %v2649 = vadd.f32 %v2154, %v2648
    %v2650 = vpop.f32.mrb[0].mxu0
    %2651 = vmatprep.mubr.bf16.mxu0 0
    %2652 = vmatmul.mubr.bf16.gmra.mrb[0].mxu0 %v2392
    %v2653 = vpop.f32.mrb[0].mxu0
    %v2654 = vadd.f32 %v2159, %v2653
    %v2655 = vpop.f32.mrb[0].mxu0
    %v2656 = vpop.f32.mrb[0].mxu0
    %v2657 = vadd.f32 %v2162, %v2656
    %v2658 = vpop.f32.mrb[0].mxu0
    %2659 = vmatprep.mubr.bf16.mxu0 0
    %2660 = vmatmul.mubr.bf16.gmra.mrb[0].mxu0 %v2395
    %v2661 = vpop.f32.mrb[0].mxu0
    %v2662 = vadd.f32 %v2167, %v2661
    %v2663 = vpop.f32.mrb[0].mxu0
    %v2664 = vpop.f32.mrb[0].mxu0
    %v2665 = vadd.f32 %v2170, %v2664
    %v2666 = vpop.f32.mrb[0].mxu0
    %2667 = vmatprep.mubr.bf16.mxu0 0
    %2668 = vmatmul.mubr.bf16.gmra.mrb[0].mxu0 %v2398
    %v2669 = vpop.f32.mrb[0].mxu0
    %v2670 = vadd.f32 %v2175, %v2669
    %v2671 = vpop.f32.mrb[0].mxu0
    %v2672 = vpop.f32.mrb[0].mxu0
    %v2673 = vadd.f32 %v2178, %v2672
    %v2674 = vpop.f32.mrb[0].mxu0
    %2675 = vmatprep.mubr.bf16.mxu0 0
    %2676 = vmatmul.mubr.bf16.gmra.mrb[0].mxu0 %v2401
    %v2677 = vpop.f32.mrb[0].mxu0
    %v2678 = vadd.f32 %v2183, %v2677
    %v2679 = vpop.f32.mrb[0].mxu0
    %v2680 = vpop.f32.mrb[0].mxu0
    %v2681 = vadd.f32 %v2186, %v2680
    %v2682 = vpop.f32.mrb[0].mxu0
    %2683 = vmatprep.mubr.bf16.mxu0 0
    %2684 = vmatmul.mubr.bf16.gmra.mrb[0].mxu0 %v2404
    %v2685 = vpop.f32.mrb[0].mxu0
    %v2686 = vadd.f32 %v2191, %v2685
    %v2687 = vpop.f32.mrb[0].mxu0
    %v2688 = vpop.f32.mrb[0].mxu0
    %v2689 = vadd.f32 %v2194, %v2688
    %v2690 = vpop.f32.mrb[0].mxu0
    %2691 = vmatprep.mubr.bf16.mxu0 0
    %2692 = vmatmul.mubr.bf16.gmra.mrb[0].mxu0 %v2407
    %v2693 = vpop.f32.mrb[0].mxu0
    %v2694 = vadd.f32 %v2199, %v2693
    %v2695 = vpop.f32.mrb[0].mxu0
    %v2696 = vpop.f32.mrb[0].mxu0
    %v2697 = vadd.f32 %v2202, %v2696
    %v2698 = vpop.f32.mrb[0].mxu0
    %2699 = vmatprep.mubr.bf16.mxu0 0
    %2700 = vmatmul.mubr.bf16.gmra.mrb[0].mxu0 %v2410
    %v2701 = vpop.f32.mrb[0].mxu0
    %v2702 = vadd.f32 %v2207, %v2701
    %v2703 = vpop.f32.mrb[0].mxu0
    %v2704 = vpop.f32.mrb[0].mxu0
    %v2705 = vadd.f32 %v2210, %v2704
    %v2706 = vpop.f32.mrb[0].mxu0
    %2707 = vmatprep.mubr.bf16.mxu0 0
    %2708 = vmatmul.mubr.bf16.gmra.mrb[0].mxu0 %v2413
    %v2709 = vpop.f32.mrb[0].mxu0
    %v2710 = vadd.f32 %v2215, %v2709
    %v2711 = vpop.f32.mrb[0].mxu0
    %v2712 = vpop.f32.mrb[0].mxu0
    %v2713 = vadd.f32 %v2218, %v2712
    %v2714 = vpop.f32.mrb[0].mxu0
    %2715 = vmatprep.mubr.bf16.mxu0 0
    %2716 = vmatmul.mubr.bf16.gmra.mrb[0].mxu0 %v2416
    %v2717 = vpop.f32.mrb[0].mxu0
    %v2718 = vadd.f32 %v2223, %v2717
    %v2719 = vpop.f32.mrb[0].mxu0
    %v2720 = vpop.f32.mrb[0].mxu0
    %v2721 = vadd.f32 %v2226, %v2720
    %v2722 = vpop.f32.mrb[0].mxu0
    %2723 = vmatprep.mubr.bf16.mxu0 0
    %2724 = vmatmul.mubr.bf16.gmra.mrb[0].mxu0 %v2419
    %v2725 = vpop.f32.mrb[0].mxu0
    %v2726 = vadd.f32 %v2231, %v2725
    %v2727 = vpop.f32.mrb[0].mxu0
    %v2728 = vpop.f32.mrb[0].mxu0
    %v2729 = vadd.f32 %v2234, %v2728
    %v2730 = vpop.f32.mrb[0].mxu0
    %2731 = vmatprep.mubr.bf16.mxu0 0
    %2732 = vmatmul.mubr.bf16.gmra.mrb[0].mxu0 %v2422
    %v2733 = vpop.f32.mrb[0].mxu0
    %v2734 = vadd.f32 %v2239, %v2733
    %v2735 = vpop.f32.mrb[0].mxu0
    %v2736 = vpop.f32.mrb[0].mxu0
    %v2737 = vadd.f32 %v2242, %v2736
    %v2738 = vpop.f32.mrb[0].mxu0
    %2739 = vmatprep.mubr.bf16.mxu0 0
    %2740 = vmatmul.mubr.bf16.gmra.mrb[0].mxu0 %v2425
    %v2741 = vpop.f32.mrb[0].mxu0
    %v2742 = vadd.f32 %v2247, %v2741
    %v2743 = vpop.f32.mrb[0].mxu0
    %v2744 = vpop.f32.mrb[0].mxu0
    %v2745 = vadd.f32 %v2250, %v2744
    %v2746 = vpop.f32.mrb[0].mxu0
    %2747 = vmatprep.mubr.bf16.mxu0 0
    %2748 = vmatmul.mubr.bf16.gmra.mrb[0].mxu0 %v2428
    %v2749 = vpop.f32.mrb[0].mxu0
    %v2750 = vadd.f32 %v2255, %v2749
    %v2751 = vpop.f32.mrb[0].mxu0
    %v2752 = vpop.f32.mrb[0].mxu0
    %v2753 = vadd.f32 %v2258, %v2752
    %v2754 = vpop.f32.mrb[0].mxu0
    %2755 = vmatprep.mubr.bf16.mxu0 0
    %2756 = vmatmul.mubr.bf16.gmra.mrb[0].mxu0 %v2431
    %v2757 = vpop.f32.mrb[0].mxu0
    %v2758 = vadd.f32 %v2263, %v2757
    %v2759 = vpop.f32.mrb[0].mxu0
    %v2760 = vpop.f32.mrb[0].mxu0
    %v2761 = vadd.f32 %v2266, %v2760
    %v2762 = vpop.f32.mrb[0].mxu0
    %2763 = vmatprep.mubr.bf16.mxu0 0
    %2764 = vmatmul.mubr.bf16.gmra.mrb[0].mxu0 %v2434
    %v2765 = vpop.f32.mrb[0].mxu0
    %v2766 = vadd.f32 %v2271, %v2765
    %v2767 = vpop.f32.mrb[0].mxu0
    %v2768 = vpop.f32.mrb[0].mxu0
    %v2769 = vadd.f32 %v2274, %v2768
    %v2770 = vpop.f32.mrb[0].mxu0
    %2771 = vmatprep.mubr.bf16.mxu0 0
    %2772 = vmatmul.mubr.bf16.gmra.mrb[0].mxu0 %v2437
    %v2773 = vpop.f32.mrb[0].mxu0
    %v2774 = vadd.f32 %v2279, %v2773
    %v2775 = vpop.f32.mrb[0].mxu0
    %v2776 = vpop.f32.mrb[0].mxu0
    %v2777 = vadd.f32 %v2282, %v2776
    %v2778 = vpop.f32.mrb[0].mxu0
    %2779 = vmatprep.mubr.bf16.mxu0 0
    %2780 = vmatmul.mubr.bf16.gmra.mrb[0].mxu0 %v2440
    %v2781 = vpop.f32.mrb[0].mxu0
    %v2782 = vadd.f32 %v2287, %v2781
    %v2783 = vpop.f32.mrb[0].mxu0
    %v2784 = vpop.f32.mrb[0].mxu0
    %v2785 = vadd.f32 %v2290, %v2784
    %v2786 = vpop.f32.mrb[0].mxu0
    %2787 = vmatprep.mubr.bf16.mxu0 0
    %2788 = vmatmul.mubr.bf16.gmra.mrb[0].mxu0 %v2443
    %v2789 = vpop.f32.mrb[0].mxu0
    %v2790 = vadd.f32 %v2295, %v2789
    %v2791 = vpop.f32.mrb[0].mxu0
    %v2792 = vpop.f32.mrb[0].mxu0
    %v2793 = vadd.f32 %v2298, %v2792
    %v2794 = vpop.f32.mrb[0].mxu0
    %2795 = vmatprep.mubr.bf16.mxu0 0
    %2796 = vmatmul.mubr.bf16.gmra.mrb[0].mxu0 %v2446
    %v2797 = vpop.f32.mrb[0].mxu0
    %v2798 = vadd.f32 %v2303, %v2797
    %v2799 = vpop.f32.mrb[0].mxu0
    %v2800 = vpop.f32.mrb[0].mxu0
    %v2801 = vadd.f32 %v2306, %v2800
    %v2802 = vpop.f32.mrb[0].mxu0
    %2803 = vmatprep.mubr.bf16.mxu0 0
    %2804 = vmatmul.mubr.bf16.gmra.mrb[0].mxu0 %v2449
    %v2805 = vpop.f32.mrb[0].mxu0
    %v2806 = vadd.f32 %v2311, %v2805
    %v2807 = vpop.f32.mrb[0].mxu0
    %v2808 = vpop.f32.mrb[0].mxu0
    %v2809 = vpop.f32.mrb[0].mxu0
    %2810 = vdwg.mxu0
    %v2811 = vld [vmem:[#allocation2 + $0x7] sm:$0xff]
    %v2812 = vld [vmem:[#allocation2 + $0xf] sm:$0xff]
    %v2813 = vld [vmem:[#allocation2 + $0x17] sm:$0xff]
    %v2814 = vld [vmem:[#allocation2 + $0x1f] sm:$0xff]
    %v2815 = vld [vmem:[#allocation2 + $0x27] sm:$0xff]
    %v2816 = vld [vmem:[#allocation2 + $0x2f] sm:$0xff]
    %v2817 = vld [vmem:[#allocation2 + $0x37] sm:$0xff]
    %v2818 = vld [vmem:[#allocation2 + $0x3f] sm:$0xff]
    %v2819 = vld [vmem:[#allocation2 + $0x47] sm:$0xff]
    %v2820 = vld [vmem:[#allocation2 + $0x4f] sm:$0xff]
    %v2821 = vld [vmem:[#allocation2 + $0x57] sm:$0xff]
    %v2822 = vld [vmem:[#allocation2 + $0x5f] sm:$0xff]
    %v2823 = vld [vmem:[#allocation2 + $0x67] sm:$0xff]
    %v2824 = vld [vmem:[#allocation2 + $0x6f] sm:$0xff]
    %v2825 = vld [vmem:[#allocation2 + $0x77] sm:$0xff]
    %v2826 = vld [vmem:[#allocation2 + $0x7f] sm:$0xff]
    %v2827 = vld [vmem:[#allocation2 + $0x87] sm:$0xff]
    %v2828 = vld [vmem:[#allocation2 + $0x8f] sm:$0xff]
    %v2829 = vld [vmem:[#allocation2 + $0x97] sm:$0xff]
    %v2830 = vld [vmem:[#allocation2 + $0x9f] sm:$0xff]
    %v2831 = vld [vmem:[#allocation2 + $0xa7] sm:$0xff]
    %v2832 = vld [vmem:[#allocation2 + $0xaf] sm:$0xff]
    %v2833 = vld [vmem:[#allocation2 + $0xb7] sm:$0xff]
    %v2834 = vld [vmem:[#allocation2 + $0xbf] sm:$0xff]
    %v2835 = vld [vmem:[#allocation2 + $0xc7] sm:$0xff]
    %v2836 = vld [vmem:[#allocation2 + $0xcf] sm:$0xff]
    %v2837 = vld [vmem:[#allocation2 + $0xd7] sm:$0xff]
    %v2838 = vld [vmem:[#allocation2 + $0xdf] sm:$0xff]
    %v2839 = vld [vmem:[#allocation2 + $0xe7] sm:$0xff]
    %v2840 = vld [vmem:[#allocation2 + $0xef] sm:$0xff]
    %v2841 = vld [vmem:[#allocation2 + $0xf7] sm:$0xff]
    %v2842 = vld [vmem:[#allocation2 + $0xff] sm:$0xff]
    %v2843 = vld [vmem:[#allocation2 + $0x107] sm:$0xff]
    %v2844 = vld [vmem:[#allocation2 + $0x10f] sm:$0xff]
    %v2845 = vld [vmem:[#allocation2 + $0x117] sm:$0xff]
    %v2846 = vld [vmem:[#allocation2 + $0x11f] sm:$0xff]
    %v2847 = vld [vmem:[#allocation2 + $0x127] sm:$0xff]
    %v2848 = vld [vmem:[#allocation2 + $0x12f] sm:$0xff]
    %v2849 = vld [vmem:[#allocation2 + $0x137] sm:$0xff]
    %v2850 = vld [vmem:[#allocation2 + $0x13f] sm:$0xff]
    %v2851 = vld [vmem:[#allocation2 + $0x147] sm:$0xff]
    %v2852 = vld [vmem:[#allocation2 + $0x14f] sm:$0xff]
    %v2853 = vld [vmem:[#allocation2 + $0x157] sm:$0xff]
    %v2854 = vld [vmem:[#allocation2 + $0x15f] sm:$0xff]
    %v2855 = vld [vmem:[#allocation2 + $0x167] sm:$0xff]
    %v2856 = vld [vmem:[#allocation2 + $0x16f] sm:$0xff]
    %v2857 = vld [vmem:[#allocation2 + $0x177] sm:$0xff]
    %v2858 = vld [vmem:[#allocation2 + $0x17f] sm:$0xff]
    %v2859 = vld [vmem:[#allocation2 + $0x187] sm:$0xff]
    %v2860 = vld [vmem:[#allocation2 + $0x18f] sm:$0xff]
    %v2861 = vld [vmem:[#allocation2 + $0x197] sm:$0xff]
    %v2862 = vld [vmem:[#allocation2 + $0x19f] sm:$0xff]
    %v2863 = vld [vmem:[#allocation2 + $0x1a7] sm:$0xff]
    %v2864 = vld [vmem:[#allocation2 + $0x1af] sm:$0xff]
    %v2865 = vld [vmem:[#allocation2 + $0x1b7] sm:$0xff]
    %v2866 = vld [vmem:[#allocation2 + $0x1bf] sm:$0xff]
    %v2867 = vld [vmem:[#allocation2 + $0x1c7] sm:$0xff]
    %v2868 = vld [vmem:[#allocation2 + $0x1cf] sm:$0xff]
    %v2869 = vld [vmem:[#allocation2 + $0x1d7] sm:$0xff]
    %v2870 = vld [vmem:[#allocation2 + $0x1df] sm:$0xff]
    %v2871 = vld [vmem:[#allocation2 + $0x1e7] sm:$0xff]
    %v2872 = vld [vmem:[#allocation2 + $0x1ef] sm:$0xff]
    %v2873 = vld [vmem:[#allocation2 + $0x1f7] sm:$0xff]
    %v2874 = vld [vmem:[#allocation2 + $0x1ff] sm:$0xff]
    %v2875 = vld [vmem:[#allocation2 + $0x207] sm:$0xff]
    %v2876 = vld [vmem:[#allocation2 + $0x20f] sm:$0xff]
    %v2877 = vld [vmem:[#allocation2 + $0x217] sm:$0xff]
    %v2878 = vld [vmem:[#allocation2 + $0x21f] sm:$0xff]
    %v2879 = vld [vmem:[#allocation2 + $0x227] sm:$0xff]
    %v2880 = vld [vmem:[#allocation2 + $0x22f] sm:$0xff]
    %v2881 = vld [vmem:[#allocation2 + $0x237] sm:$0xff]
    %v2882 = vld [vmem:[#allocation2 + $0x23f] sm:$0xff]
    %v2883 = vld [vmem:[#allocation2 + $0x247] sm:$0xff]
    %v2884 = vld [vmem:[#allocation2 + $0x24f] sm:$0xff]
    %v2885 = vld [vmem:[#allocation2 + $0x257] sm:$0xff]
    %v2886 = vld [vmem:[#allocation2 + $0x25f] sm:$0xff]
    %v2887 = vld [vmem:[#allocation2 + $0x267] sm:$0xff]
    %v2888 = vld [vmem:[#allocation2 + $0x26f] sm:$0xff]
    %v2889 = vld [vmem:[#allocation2 + $0x277] sm:$0xff]
    %v2890 = vld [vmem:[#allocation2 + $0x27f] sm:$0xff]
    %v2891 = vld [vmem:[#allocation2 + $0x287] sm:$0xff]
    %v2892 = vpack.c.bf16 %v2812, %v2811
    %v2893 = vpack.c.bf16 %v2814, %v2813
    %v2894 = vpack.c.bf16 %v2816, %v2815
    %v2895 = vpack.c.bf16 %v2818, %v2817
    %v2896 = vpack.c.bf16 %v2820, %v2819
    %v2897 = vpack.c.bf16 %v2822, %v2821
    %v2898 = vpack.c.bf16 %v2824, %v2823
    %v2899 = vpack.c.bf16 %v2826, %v2825
    %v2900 = vpack.c.bf16 %v2828, %v2827
    %v2901 = vpack.c.bf16 %v2830, %v2829
    %v2902 = vpack.c.bf16 %v2832, %v2831
    %v2903 = vpack.c.bf16 %v2834, %v2833
    %v2904 = vpack.c.bf16 %v2836, %v2835
    %v2905 = vpack.c.bf16 %v2838, %v2837
    %v2906 = vpack.c.bf16 %v2840, %v2839
    %v2907 = vpack.c.bf16 %v2842, %v2841
    %v2908 = vpack.c.bf16 %v2844, %v2843
    %v2909 = vpack.c.bf16 %v2846, %v2845
    %v2910 = vpack.c.bf16 %v2848, %v2847
    %v2911 = vpack.c.bf16 %v2850, %v2849
    %v2912 = vpack.c.bf16 %v2852, %v2851
    %v2913 = vpack.c.bf16 %v2854, %v2853
    %v2914 = vpack.c.bf16 %v2856, %v2855
    %v2915 = vpack.c.bf16 %v2858, %v2857
    %v2916 = vpack.c.bf16 %v2860, %v2859
    %v2917 = vpack.c.bf16 %v2862, %v2861
    %v2918 = vpack.c.bf16 %v2864, %v2863
    %v2919 = vpack.c.bf16 %v2866, %v2865
    %v2920 = vpack.c.bf16 %v2868, %v2867
    %v2921 = vpack.c.bf16 %v2870, %v2869
    %v2922 = vpack.c.bf16 %v2872, %v2871
    %v2923 = vpack.c.bf16 %v2874, %v2873
    %v2924 = vpack.c.bf16 %v2876, %v2875
    %v2925 = vpack.c.bf16 %v2878, %v2877
    %v2926 = vpack.c.bf16 %v2880, %v2879
    %v2927 = vpack.c.bf16 %v2882, %v2881
    %v2928 = vpack.c.bf16 %v2884, %v2883
    %v2929 = vpack.c.bf16 %v2886, %v2885
    %v2930 = vpack.c.bf16 %v2888, %v2887
    %v2931 = vpack.c.bf16 %v2890, %v2889
    %v2932 = vpack.c.bf16 %v2891, %v2891
    %s2933 = scalar_lea.vmem %s2, 32
    %v2934 = vld [vmem:[%s2933] sm:$0xf]
    %v2935 = vld [vmem:[%s2933 + $0x4] sm:$0xf]
    %v2936 = vld [vmem:[%s2933 + $0x8] sm:$0xf]
    %v2937 = vld [vmem:[%s2933 + $0xc] sm:$0xf]
    %v2942 = vunpack.c.l.b16 %v2934
    %v2943 = vunpack.c.l.b16 %v2935
    %v2944 = vunpack.c.l.b16 %v2936
    %v2945 = vunpack.c.l.b16 %v2937
    %v2946 = vpack.c.b16 %v2943, %v2942
    %v2947 = vpack.c.b16 %v2945, %v2944
    %v2951 = vsel %vm1480, %v2892, 0
    %v2954 = vsel %vm1480, %v2893, 0
    %v2957 = vsel %vm1480, %v2894, 0
    %v2960 = vsel %vm1480, %v2895, 0
    %v2963 = vsel %vm1480, %v2896, 0
    %v2966 = vsel %vm1480, %v2897, 0
    %v2969 = vsel %vm1480, %v2898, 0
    %v2972 = vsel %vm1480, %v2899, 0
    %v2975 = vsel %vm1480, %v2900, 0
    %v2978 = vsel %vm1480, %v2901, 0
    %v2981 = vsel %vm1480, %v2902, 0
    %v2984 = vsel %vm1480, %v2903, 0
    %v2987 = vsel %vm1480, %v2904, 0
    %v2990 = vsel %vm1480, %v2905, 0
    %v2993 = vsel %vm1480, %v2906, 0
    %v2996 = vsel %vm1480, %v2907, 0
    %v2999 = vsel %vm1480, %v2908, 0
    %v3002 = vsel %vm1480, %v2909, 0
    %v3005 = vsel %vm1480, %v2910, 0
    %v3008 = vsel %vm1480, %v2911, 0
    %v3011 = vsel %vm1480, %v2912, 0
    %v3014 = vsel %vm1480, %v2913, 0
    %v3017 = vsel %vm1480, %v2914, 0
    %v3020 = vsel %vm1480, %v2915, 0
    %v3023 = vsel %vm1480, %v2916, 0
    %v3026 = vsel %vm1480, %v2917, 0
    %v3029 = vsel %vm1480, %v2918, 0
    %v3032 = vsel %vm1480, %v2919, 0
    %v3035 = vsel %vm1480, %v2920, 0
    %v3038 = vsel %vm1480, %v2921, 0
    %v3041 = vsel %vm1480, %v2922, 0
    %v3044 = vsel %vm1480, %v2923, 0
    %v3047 = vsel %vm1480, %v2924, 0
    %v3050 = vsel %vm1480, %v2925, 0
    %v3053 = vsel %vm1480, %v2926, 0
    %v3056 = vsel %vm1480, %v2927, 0
    %v3059 = vsel %vm1480, %v2928, 0
    %v3062 = vsel %vm1480, %v2929, 0
    %v3065 = vsel %vm1480, %v2930, 0
    %v3068 = vsel %vm1480, %v2931, 0
    %v3071 = vsel %vm1480, %v2932, 0
    %3073 = vmatprep.subr.bf16.mxu0 0
    %3074 = vmatpush1.bf16.msra.mxu0 %v2946
    %3075 = vmatprep.subr.bf16.mxu0 0
    %3076 = vmatpush1.bf16.msra.mxu0 %v2947
    %3077 = vmatprep.subr.bf16.mxu0 0
    %3078 = vmatpush1.bf16.msra.mxu0 0
    %3079 = vmatprep.subr.bf16.mxu0 0
    %3080 = vmatpush1.bf16.msra.mxu0 0
    %3081 = vmatprep.subr.bf16.mxu0 0
    %3082 = vmatpush1.bf16.msra.mxu0 0
    %3083 = vmatprep.subr.bf16.mxu0 0
    %3084 = vmatpush1.bf16.msra.mxu0 0
    %3085 = vmatprep.subr.bf16.mxu0 0
    %3086 = vmatpush1.bf16.msra.mxu0 0
    %3087 = vmatprep.subr.bf16.mxu0 0
    %3088 = vmatpush1.bf16.msra.mxu0 0
    %3089 = vmatprep.subr.bf16.mxu0 0
    %3090 = vmatpush1.bf16.msra.mxu0 0
    %3091 = vmatprep.subr.bf16.mxu0 0
    %3092 = vmatpush1.bf16.msra.mxu0 0
    %3093 = vmatprep.subr.bf16.mxu0 0
    %3094 = vmatpush1.bf16.msra.mxu0 0
    %3095 = vmatprep.subr.bf16.mxu0 0
    %3096 = vmatpush1.bf16.msra.mxu0 0
    %3097 = vmatprep.subr.bf16.mxu0 0
    %3098 = vmatpush1.bf16.msra.mxu0 0
    %3099 = vmatprep.subr.bf16.mxu0 0
    %3100 = vmatpush1.bf16.msra.mxu0 0
    %3101 = vmatprep.subr.bf16.mxu0 0
    %3102 = vmatpush1.bf16.msra.mxu0 0
    %3103 = vmatprep.subr.bf16.mxu0 0
    %3104 = vmatpush1.bf16.msra.mxu0 0
    %3105 = vmatprep.mubr.bf16.mxu0 0
    %3106 = vmatmul.mubr.bf16.gmra.mrb[0].mxu0 %v2951
    %v3107 = vpop.f32.mrb[0].mxu0
    %v3108 = vadd.f32 0.0, %v3107
    %v3109 = vpop.f32.mrb[0].mxu0
    %v3110 = vpop.f32.mrb[0].mxu0
    %v3111 = vadd.f32 0.0, %v3110
    %v3112 = vpop.f32.mrb[0].mxu0
    %3113 = vmatprep.mubr.bf16.mxu0 0
    %3114 = vmatmul.mubr.bf16.gmra.mrb[0].mxu0 %v2954
    %v3115 = vpop.f32.mrb[0].mxu0
    %v3116 = vadd.f32 0.0, %v3115
    %v3117 = vpop.f32.mrb[0].mxu0
    %v3118 = vpop.f32.mrb[0].mxu0
    %v3119 = vadd.f32 0.0, %v3118
    %v3120 = vpop.f32.mrb[0].mxu0
    %3121 = vmatprep.mubr.bf16.mxu0 0
    %3122 = vmatmul.mubr.bf16.gmra.mrb[0].mxu0 %v2957
    %v3123 = vpop.f32.mrb[0].mxu0
    %v3124 = vadd.f32 0.0, %v3123
    %v3125 = vpop.f32.mrb[0].mxu0
    %v3126 = vpop.f32.mrb[0].mxu0
    %v3127 = vadd.f32 0.0, %v3126
    %v3128 = vpop.f32.mrb[0].mxu0
    %3129 = vmatprep.mubr.bf16.mxu0 0
    %3130 = vmatmul.mubr.bf16.gmra.mrb[0].mxu0 %v2960
    %v3131 = vpop.f32.mrb[0].mxu0
    %v3132 = vadd.f32 0.0, %v3131
    %v3133 = vpop.f32.mrb[0].mxu0
    %v3134 = vpop.f32.mrb[0].mxu0
    %v3135 = vadd.f32 0.0, %v3134
    %v3136 = vpop.f32.mrb[0].mxu0
    %3137 = vmatprep.mubr.bf16.mxu0 0
    %3138 = vmatmul.mubr.bf16.gmra.mrb[0].mxu0 %v2963
    %v3139 = vpop.f32.mrb[0].mxu0
    %v3140 = vadd.f32 0.0, %v3139
    %v3141 = vpop.f32.mrb[0].mxu0
    %v3142 = vpop.f32.mrb[0].mxu0
    %v3143 = vadd.f32 0.0, %v3142
    %v3144 = vpop.f32.mrb[0].mxu0
    %3145 = vmatprep.mubr.bf16.mxu0 0
    %3146 = vmatmul.mubr.bf16.gmra.mrb[0].mxu0 %v2966
    %v3147 = vpop.f32.mrb[0].mxu0
    %v3148 = vadd.f32 0.0, %v3147
    %v3149 = vpop.f32.mrb[0].mxu0
    %v3150 = vpop.f32.mrb[0].mxu0
    %v3151 = vadd.f32 0.0, %v3150
    %v3152 = vpop.f32.mrb[0].mxu0
    %3153 = vmatprep.mubr.bf16.mxu0 0
    %3154 = vmatmul.mubr.bf16.gmra.mrb[0].mxu0 %v2969
    %v3155 = vpop.f32.mrb[0].mxu0
    %v3156 = vadd.f32 0.0, %v3155
    %v3157 = vpop.f32.mrb[0].mxu0
    %v3158 = vpop.f32.mrb[0].mxu0
    %v3159 = vadd.f32 0.0, %v3158
    %v3160 = vpop.f32.mrb[0].mxu0
    %3161 = vmatprep.mubr.bf16.mxu0 0
    %3162 = vmatmul.mubr.bf16.gmra.mrb[0].mxu0 %v2972
    %v3163 = vpop.f32.mrb[0].mxu0
    %v3164 = vadd.f32 0.0, %v3163
    %v3165 = vpop.f32.mrb[0].mxu0
    %v3166 = vpop.f32.mrb[0].mxu0
    %v3167 = vadd.f32 0.0, %v3166
    %v3168 = vpop.f32.mrb[0].mxu0
    %3169 = vmatprep.mubr.bf16.mxu0 0
    %3170 = vmatmul.mubr.bf16.gmra.mrb[0].mxu0 %v2975
    %v3171 = vpop.f32.mrb[0].mxu0
    %v3172 = vadd.f32 0.0, %v3171
    %v3173 = vpop.f32.mrb[0].mxu0
    %v3174 = vpop.f32.mrb[0].mxu0
    %v3175 = vadd.f32 0.0, %v3174
    %v3176 = vpop.f32.mrb[0].mxu0
    %3177 = vmatprep.mubr.bf16.mxu0 0
    %3178 = vmatmul.mubr.bf16.gmra.mrb[0].mxu0 %v2978
    %v3179 = vpop.f32.mrb[0].mxu0
    %v3180 = vadd.f32 0.0, %v3179
    %v3181 = vpop.f32.mrb[0].mxu0
    %v3182 = vpop.f32.mrb[0].mxu0
    %v3183 = vadd.f32 0.0, %v3182
    %v3184 = vpop.f32.mrb[0].mxu0
    %3185 = vmatprep.mubr.bf16.mxu0 0
    %3186 = vmatmul.mubr.bf16.gmra.mrb[0].mxu0 %v2981
    %v3187 = vpop.f32.mrb[0].mxu0
    %v3188 = vadd.f32 0.0, %v3187
    %v3189 = vpop.f32.mrb[0].mxu0
    %v3190 = vpop.f32.mrb[0].mxu0
    %v3191 = vadd.f32 0.0, %v3190
    %v3192 = vpop.f32.mrb[0].mxu0
    %3193 = vmatprep.mubr.bf16.mxu0 0
    %3194 = vmatmul.mubr.bf16.gmra.mrb[0].mxu0 %v2984
    %v3195 = vpop.f32.mrb[0].mxu0
    %v3196 = vadd.f32 0.0, %v3195
    %v3197 = vpop.f32.mrb[0].mxu0
    %v3198 = vpop.f32.mrb[0].mxu0
    %v3199 = vadd.f32 0.0, %v3198
    %v3200 = vpop.f32.mrb[0].mxu0
    %3201 = vmatprep.mubr.bf16.mxu0 0
    %3202 = vmatmul.mubr.bf16.gmra.mrb[0].mxu0 %v2987
    %v3203 = vpop.f32.mrb[0].mxu0
    %v3204 = vadd.f32 0.0, %v3203
    %v3205 = vpop.f32.mrb[0].mxu0
    %v3206 = vpop.f32.mrb[0].mxu0
    %v3207 = vadd.f32 0.0, %v3206
    %v3208 = vpop.f32.mrb[0].mxu0
    %3209 = vmatprep.mubr.bf16.mxu0 0
    %3210 = vmatmul.mubr.bf16.gmra.mrb[0].mxu0 %v2990
    %v3211 = vpop.f32.mrb[0].mxu0
    %v3212 = vadd.f32 0.0, %v3211
    %v3213 = vpop.f32.mrb[0].mxu0
    %v3214 = vpop.f32.mrb[0].mxu0
    %v3215 = vadd.f32 0.0, %v3214
    %v3216 = vpop.f32.mrb[0].mxu0
    %3217 = vmatprep.mubr.bf16.mxu0 0
    %3218 = vmatmul.mubr.bf16.gmra.mrb[0].mxu0 %v2993
    %v3219 = vpop.f32.mrb[0].mxu0
    %v3220 = vadd.f32 0.0, %v3219
    %v3221 = vpop.f32.mrb[0].mxu0
    %v3222 = vpop.f32.mrb[0].mxu0
    %v3223 = vadd.f32 0.0, %v3222
    %v3224 = vpop.f32.mrb[0].mxu0
    %3225 = vmatprep.mubr.bf16.mxu0 0
    %3226 = vmatmul.mubr.bf16.gmra.mrb[0].mxu0 %v2996
    %v3227 = vpop.f32.mrb[0].mxu0
    %v3228 = vadd.f32 0.0, %v3227
    %v3229 = vpop.f32.mrb[0].mxu0
    %v3230 = vpop.f32.mrb[0].mxu0
    %v3231 = vadd.f32 0.0, %v3230
    %v3232 = vpop.f32.mrb[0].mxu0
    %3233 = vmatprep.mubr.bf16.mxu0 0
    %3234 = vmatmul.mubr.bf16.gmra.mrb[0].mxu0 %v2999
    %v3235 = vpop.f32.mrb[0].mxu0
    %v3236 = vadd.f32 0.0, %v3235
    %v3237 = vpop.f32.mrb[0].mxu0
    %v3238 = vpop.f32.mrb[0].mxu0
    %v3239 = vadd.f32 0.0, %v3238
    %v3240 = vpop.f32.mrb[0].mxu0
    %3241 = vmatprep.mubr.bf16.mxu0 0
    %3242 = vmatmul.mubr.bf16.gmra.mrb[0].mxu0 %v3002
    %v3243 = vpop.f32.mrb[0].mxu0
    %v3244 = vadd.f32 0.0, %v3243
    %v3245 = vpop.f32.mrb[0].mxu0
    %v3246 = vpop.f32.mrb[0].mxu0
    %v3247 = vadd.f32 0.0, %v3246
    %v3248 = vpop.f32.mrb[0].mxu0
    %3249 = vmatprep.mubr.bf16.mxu0 0
    %3250 = vmatmul.mubr.bf16.gmra.mrb[0].mxu0 %v3005
    %v3251 = vpop.f32.mrb[0].mxu0
    %v3252 = vadd.f32 0.0, %v3251
    %v3253 = vpop.f32.mrb[0].mxu0
    %v3254 = vpop.f32.mrb[0].mxu0
    %v3255 = vadd.f32 0.0, %v3254
    %v3256 = vpop.f32.mrb[0].mxu0
    %3257 = vmatprep.mubr.bf16.mxu0 0
    %3258 = vmatmul.mubr.bf16.gmra.mrb[0].mxu0 %v3008
    %v3259 = vpop.f32.mrb[0].mxu0
    %v3260 = vadd.f32 0.0, %v3259
    %v3261 = vpop.f32.mrb[0].mxu0
    %v3262 = vpop.f32.mrb[0].mxu0
    %v3263 = vadd.f32 0.0, %v3262
    %v3264 = vpop.f32.mrb[0].mxu0
    %3265 = vmatprep.mubr.bf16.mxu0 0
    %3266 = vmatmul.mubr.bf16.gmra.mrb[0].mxu0 %v3011
    %v3267 = vpop.f32.mrb[0].mxu0
    %v3268 = vadd.f32 0.0, %v3267
    %v3269 = vpop.f32.mrb[0].mxu0
    %v3270 = vpop.f32.mrb[0].mxu0
    %v3271 = vadd.f32 0.0, %v3270
    %v3272 = vpop.f32.mrb[0].mxu0
    %3273 = vmatprep.mubr.bf16.mxu0 0
    %3274 = vmatmul.mubr.bf16.gmra.mrb[0].mxu0 %v3014
    %v3275 = vpop.f32.mrb[0].mxu0
    %v3276 = vadd.f32 0.0, %v3275
    %v3277 = vpop.f32.mrb[0].mxu0
    %v3278 = vpop.f32.mrb[0].mxu0
    %v3279 = vadd.f32 0.0, %v3278
    %v3280 = vpop.f32.mrb[0].mxu0
    %3281 = vmatprep.mubr.bf16.mxu0 0
    %3282 = vmatmul.mubr.bf16.gmra.mrb[0].mxu0 %v3017
    %v3283 = vpop.f32.mrb[0].mxu0
    %v3284 = vadd.f32 0.0, %v3283
    %v3285 = vpop.f32.mrb[0].mxu0
    %v3286 = vpop.f32.mrb[0].mxu0
    %v3287 = vadd.f32 0.0, %v3286
    %v3288 = vpop.f32.mrb[0].mxu0
    %3289 = vmatprep.mubr.bf16.mxu0 0
    %3290 = vmatmul.mubr.bf16.gmra.mrb[0].mxu0 %v3020
    %v3291 = vpop.f32.mrb[0].mxu0
    %v3292 = vadd.f32 0.0, %v3291
    %v3293 = vpop.f32.mrb[0].mxu0
    %v3294 = vpop.f32.mrb[0].mxu0
    %v3295 = vadd.f32 0.0, %v3294
    %v3296 = vpop.f32.mrb[0].mxu0
    %3297 = vmatprep.mubr.bf16.mxu0 0
    %3298 = vmatmul.mubr.bf16.gmra.mrb[0].mxu0 %v3023
    %v3299 = vpop.f32.mrb[0].mxu0
    %v3300 = vadd.f32 0.0, %v3299
    %v3301 = vpop.f32.mrb[0].mxu0
    %v3302 = vpop.f32.mrb[0].mxu0
    %v3303 = vadd.f32 0.0, %v3302
    %v3304 = vpop.f32.mrb[0].mxu0
    %3305 = vmatprep.mubr.bf16.mxu0 0
    %3306 = vmatmul.mubr.bf16.gmra.mrb[0].mxu0 %v3026
    %v3307 = vpop.f32.mrb[0].mxu0
    %v3308 = vadd.f32 0.0, %v3307
    %v3309 = vpop.f32.mrb[0].mxu0
    %v3310 = vpop.f32.mrb[0].mxu0
    %v3311 = vadd.f32 0.0, %v3310
    %v3312 = vpop.f32.mrb[0].mxu0
    %3313 = vmatprep.mubr.bf16.mxu0 0
    %3314 = vmatmul.mubr.bf16.gmra.mrb[0].mxu0 %v3029
    %v3315 = vpop.f32.mrb[0].mxu0
    %v3316 = vadd.f32 0.0, %v3315
    %v3317 = vpop.f32.mrb[0].mxu0
    %v3318 = vpop.f32.mrb[0].mxu0
    %v3319 = vadd.f32 0.0, %v3318
    %v3320 = vpop.f32.mrb[0].mxu0
    %3321 = vmatprep.mubr.bf16.mxu0 0
    %3322 = vmatmul.mubr.bf16.gmra.mrb[0].mxu0 %v3032
    %v3323 = vpop.f32.mrb[0].mxu0
    %v3324 = vadd.f32 0.0, %v3323
    %v3325 = vpop.f32.mrb[0].mxu0
    %v3326 = vpop.f32.mrb[0].mxu0
    %v3327 = vadd.f32 0.0, %v3326
    %v3328 = vpop.f32.mrb[0].mxu0
    %3329 = vmatprep.mubr.bf16.mxu0 0
    %3330 = vmatmul.mubr.bf16.gmra.mrb[0].mxu0 %v3035
    %v3331 = vpop.f32.mrb[0].mxu0
    %v3332 = vadd.f32 0.0, %v3331
    %v3333 = vpop.f32.mrb[0].mxu0
    %v3334 = vpop.f32.mrb[0].mxu0
    %v3335 = vadd.f32 0.0, %v3334
    %v3336 = vpop.f32.mrb[0].mxu0
    %3337 = vmatprep.mubr.bf16.mxu0 0
    %3338 = vmatmul.mubr.bf16.gmra.mrb[0].mxu0 %v3038
    %v3339 = vpop.f32.mrb[0].mxu0
    %v3340 = vadd.f32 0.0, %v3339
    %v3341 = vpop.f32.mrb[0].mxu0
    %v3342 = vpop.f32.mrb[0].mxu0
    %v3343 = vadd.f32 0.0, %v3342
    %v3344 = vpop.f32.mrb[0].mxu0
    %3345 = vmatprep.mubr.bf16.mxu0 0
    %3346 = vmatmul.mubr.bf16.gmra.mrb[0].mxu0 %v3041
    %v3347 = vpop.f32.mrb[0].mxu0
    %v3348 = vadd.f32 0.0, %v3347
    %v3349 = vpop.f32.mrb[0].mxu0
    %v3350 = vpop.f32.mrb[0].mxu0
    %v3351 = vadd.f32 0.0, %v3350
    %v3352 = vpop.f32.mrb[0].mxu0
    %3353 = vmatprep.mubr.bf16.mxu0 0
    %3354 = vmatmul.mubr.bf16.gmra.mrb[0].mxu0 %v3044
    %v3355 = vpop.f32.mrb[0].mxu0
    %v3356 = vadd.f32 0.0, %v3355
    %v3357 = vpop.f32.mrb[0].mxu0
    %v3358 = vpop.f32.mrb[0].mxu0
    %v3359 = vadd.f32 0.0, %v3358
    %v3360 = vpop.f32.mrb[0].mxu0
    %3361 = vmatprep.mubr.bf16.mxu0 0
    %3362 = vmatmul.mubr.bf16.gmra.mrb[0].mxu0 %v3047
    %v3363 = vpop.f32.mrb[0].mxu0
    %v3364 = vadd.f32 0.0, %v3363
    %v3365 = vpop.f32.mrb[0].mxu0
    %v3366 = vpop.f32.mrb[0].mxu0
    %v3367 = vadd.f32 0.0, %v3366
    %v3368 = vpop.f32.mrb[0].mxu0
    %3369 = vmatprep.mubr.bf16.mxu0 0
    %3370 = vmatmul.mubr.bf16.gmra.mrb[0].mxu0 %v3050
    %v3371 = vpop.f32.mrb[0].mxu0
    %v3372 = vadd.f32 0.0, %v3371
    %v3373 = vpop.f32.mrb[0].mxu0
    %v3374 = vpop.f32.mrb[0].mxu0
    %v3375 = vadd.f32 0.0, %v3374
    %v3376 = vpop.f32.mrb[0].mxu0
    %3377 = vmatprep.mubr.bf16.mxu0 0
    %3378 = vmatmul.mubr.bf16.gmra.mrb[0].mxu0 %v3053
    %v3379 = vpop.f32.mrb[0].mxu0
    %v3380 = vadd.f32 0.0, %v3379
    %v3381 = vpop.f32.mrb[0].mxu0
    %v3382 = vpop.f32.mrb[0].mxu0
    %v3383 = vadd.f32 0.0, %v3382
    %v3384 = vpop.f32.mrb[0].mxu0
    %3385 = vmatprep.mubr.bf16.mxu0 0
    %3386 = vmatmul.mubr.bf16.gmra.mrb[0].mxu0 %v3056
    %v3387 = vpop.f32.mrb[0].mxu0
    %v3388 = vadd.f32 0.0, %v3387
    %v3389 = vpop.f32.mrb[0].mxu0
    %v3390 = vpop.f32.mrb[0].mxu0
    %v3391 = vadd.f32 0.0, %v3390
    %v3392 = vpop.f32.mrb[0].mxu0
    %3393 = vmatprep.mubr.bf16.mxu0 0
    %3394 = vmatmul.mubr.bf16.gmra.mrb[0].mxu0 %v3059
    %v3395 = vpop.f32.mrb[0].mxu0
    %v3396 = vadd.f32 0.0, %v3395
    %v3397 = vpop.f32.mrb[0].mxu0
    %v3398 = vpop.f32.mrb[0].mxu0
    %v3399 = vadd.f32 0.0, %v3398
    %v3400 = vpop.f32.mrb[0].mxu0
    %3401 = vmatprep.mubr.bf16.mxu0 0
    %3402 = vmatmul.mubr.bf16.gmra.mrb[0].mxu0 %v3062
    %v3403 = vpop.f32.mrb[0].mxu0
    %v3404 = vadd.f32 0.0, %v3403
    %v3405 = vpop.f32.mrb[0].mxu0
    %v3406 = vpop.f32.mrb[0].mxu0
    %v3407 = vadd.f32 0.0, %v3406
    %v3408 = vpop.f32.mrb[0].mxu0
    %3409 = vmatprep.mubr.bf16.mxu0 0
    %3410 = vmatmul.mubr.bf16.gmra.mrb[0].mxu0 %v3065
    %v3411 = vpop.f32.mrb[0].mxu0
    %v3412 = vadd.f32 0.0, %v3411
    %v3413 = vpop.f32.mrb[0].mxu0
    %v3414 = vpop.f32.mrb[0].mxu0
    %v3415 = vadd.f32 0.0, %v3414
    %v3416 = vpop.f32.mrb[0].mxu0
    %3417 = vmatprep.mubr.bf16.mxu0 0
    %3418 = vmatmul.mubr.bf16.gmra.mrb[0].mxu0 %v3068
    %v3419 = vpop.f32.mrb[0].mxu0
    %v3420 = vadd.f32 0.0, %v3419
    %v3421 = vpop.f32.mrb[0].mxu0
    %v3422 = vpop.f32.mrb[0].mxu0
    %v3423 = vadd.f32 0.0, %v3422
    %v3424 = vpop.f32.mrb[0].mxu0
    %3425 = vmatprep.mubr.bf16.mxu0 0
    %3426 = vmatmul.mubr.bf16.gmra.mrb[0].mxu0 %v3071
    %v3427 = vpop.f32.mrb[0].mxu0
    %v3428 = vadd.f32 0.0, %v3427
    %v3429 = vpop.f32.mrb[0].mxu0
    %v3430 = vpop.f32.mrb[0].mxu0
    %v3431 = vpop.f32.mrb[0].mxu0
    %3432 = vdwg.mxu0
    %v3433 = vadd.f32 %v2486, %v3108
    %v3434 = vadd.f32 %v2489, %v3111
    %v3435 = vadd.f32 %v2494, %v3116
    %v3436 = vadd.f32 %v2497, %v3119
    %v3437 = vadd.f32 %v2502, %v3124
    %v3438 = vadd.f32 %v2505, %v3127
    %v3439 = vadd.f32 %v2510, %v3132
    %v3440 = vadd.f32 %v2513, %v3135
    %v3441 = vadd.f32 %v2518, %v3140
    %v3442 = vadd.f32 %v2521, %v3143
    %v3443 = vadd.f32 %v2526, %v3148
    %v3444 = vadd.f32 %v2529, %v3151
    %v3445 = vadd.f32 %v2534, %v3156
    %v3446 = vadd.f32 %v2537, %v3159
    %v3447 = vadd.f32 %v2542, %v3164
    %v3448 = vadd.f32 %v2545, %v3167
    %v3449 = vadd.f32 %v2550, %v3172
    %v3450 = vadd.f32 %v2553, %v3175
    %v3451 = vadd.f32 %v2558, %v3180
    %v3452 = vadd.f32 %v2561, %v3183
    %v3453 = vadd.f32 %v2566, %v3188
    %v3454 = vadd.f32 %v2569, %v3191
    %v3455 = vadd.f32 %v2574, %v3196
    %v3456 = vadd.f32 %v2577, %v3199
    %v3457 = vadd.f32 %v2582, %v3204
    %v3458 = vadd.f32 %v2585, %v3207
    %v3459 = vadd.f32 %v2590, %v3212
    %v3460 = vadd.f32 %v2593, %v3215
    %v3461 = vadd.f32 %v2598, %v3220
    %v3462 = vadd.f32 %v2601, %v3223
    %v3463 = vadd.f32 %v2606, %v3228
    %v3464 = vadd.f32 %v2609, %v3231
    %v3465 = vadd.f32 %v2614, %v3236
    %v3466 = vadd.f32 %v2617, %v3239
    %v3467 = vadd.f32 %v2622, %v3244
    %v3468 = vadd.f32 %v2625, %v3247
    %v3469 = vadd.f32 %v2630, %v3252
    %v3470 = vadd.f32 %v2633, %v3255
    %v3471 = vadd.f32 %v2638, %v3260
    %v3472 = vadd.f32 %v2641, %v3263
    %v3473 = vadd.f32 %v2646, %v3268
    %v3474 = vadd.f32 %v2649, %v3271
    %v3475 = vadd.f32 %v2654, %v3276
    %v3476 = vadd.f32 %v2657, %v3279
    %v3477 = vadd.f32 %v2662, %v3284
    %v3478 = vadd.f32 %v2665, %v3287
    %v3479 = vadd.f32 %v2670, %v3292
    %v3480 = vadd.f32 %v2673, %v3295
    %v3481 = vadd.f32 %v2678, %v3300
    %v3482 = vadd.f32 %v2681, %v3303
    %v3483 = vadd.f32 %v2686, %v3308
    %v3484 = vadd.f32 %v2689, %v3311
    %v3485 = vadd.f32 %v2694, %v3316
    %v3486 = vadd.f32 %v2697, %v3319
    %v3487 = vadd.f32 %v2702, %v3324
    %v3488 = vadd.f32 %v2705, %v3327
    %v3489 = vadd.f32 %v2710, %v3332
    %v3490 = vadd.f32 %v2713, %v3335
    %v3491 = vadd.f32 %v2718, %v3340
    %v3492 = vadd.f32 %v2721, %v3343
    %v3493 = vadd.f32 %v2726, %v3348
    %v3494 = vadd.f32 %v2729, %v3351
    %v3495 = vadd.f32 %v2734, %v3356
    %v3496 = vadd.f32 %v2737, %v3359
    %v3497 = vadd.f32 %v2742, %v3364
    %v3498 = vadd.f32 %v2745, %v3367
    %v3499 = vadd.f32 %v2750, %v3372
    %v3500 = vadd.f32 %v2753, %v3375
    %v3501 = vadd.f32 %v2758, %v3380
    %v3502 = vadd.f32 %v2761, %v3383
    %v3503 = vadd.f32 %v2766, %v3388
    %v3504 = vadd.f32 %v2769, %v3391
    %v3505 = vadd.f32 %v2774, %v3396
    %v3506 = vadd.f32 %v2777, %v3399
    %v3507 = vadd.f32 %v2782, %v3404
    %v3508 = vadd.f32 %v2785, %v3407
    %v3509 = vadd.f32 %v2790, %v3412
    %v3510 = vadd.f32 %v2793, %v3415
    %v3511 = vadd.f32 %v2798, %v3420
    %v3512 = vadd.f32 %v2801, %v3423
    %v3513 = vadd.f32 %v2806, %v3428
    %v3514 = vld [vmem:[#allocation2 + $0x17] sm:$0xff]
    %v3515 = vld [vmem:[#allocation2 + $0x1f] sm:$0xff]
    %v3516 = vld [vmem:[#allocation2 + $0x27] sm:$0xff]
    %v3517 = vld [vmem:[#allocation2 + $0x2f] sm:$0xff]
    %v3518 = vld [vmem:[#allocation2 + $0x37] sm:$0xff]
    %v3519 = vld [vmem:[#allocation2 + $0x3f] sm:$0xff]
    %v3520 = vld [vmem:[#allocation2 + $0x47] sm:$0xff]
    %v3521 = vld [vmem:[#allocation2 + $0x4f] sm:$0xff]
    %v3522 = vld [vmem:[#allocation2 + $0x57] sm:$0xff]
    %v3523 = vld [vmem:[#allocation2 + $0x5f] sm:$0xff]
    %v3524 = vld [vmem:[#allocation2 + $0x67] sm:$0xff]
    %v3525 = vld [vmem:[#allocation2 + $0x6f] sm:$0xff]
    %v3526 = vld [vmem:[#allocation2 + $0x77] sm:$0xff]
    %v3527 = vld [vmem:[#allocation2 + $0x7f] sm:$0xff]
    %v3528 = vld [vmem:[#allocation2 + $0x87] sm:$0xff]
    %v3529 = vld [vmem:[#allocation2 + $0x8f] sm:$0xff]
    %v3530 = vld [vmem:[#allocation2 + $0x97] sm:$0xff]
    %v3531 = vld [vmem:[#allocation2 + $0x9f] sm:$0xff]
    %v3532 = vld [vmem:[#allocation2 + $0xa7] sm:$0xff]
    %v3533 = vld [vmem:[#allocation2 + $0xaf] sm:$0xff]
    %v3534 = vld [vmem:[#allocation2 + $0xb7] sm:$0xff]
    %v3535 = vld [vmem:[#allocation2 + $0xbf] sm:$0xff]
    %v3536 = vld [vmem:[#allocation2 + $0xc7] sm:$0xff]
    %v3537 = vld [vmem:[#allocation2 + $0xcf] sm:$0xff]
    %v3538 = vld [vmem:[#allocation2 + $0xd7] sm:$0xff]
    %v3539 = vld [vmem:[#allocation2 + $0xdf] sm:$0xff]
    %v3540 = vld [vmem:[#allocation2 + $0xe7] sm:$0xff]
    %v3541 = vld [vmem:[#allocation2 + $0xef] sm:$0xff]
    %v3542 = vld [vmem:[#allocation2 + $0xf7] sm:$0xff]
    %v3543 = vld [vmem:[#allocation2 + $0xff] sm:$0xff]
    %v3544 = vld [vmem:[#allocation2 + $0x107] sm:$0xff]
    %v3545 = vld [vmem:[#allocation2 + $0x10f] sm:$0xff]
    %v3546 = vld [vmem:[#allocation2 + $0x117] sm:$0xff]
    %v3547 = vld [vmem:[#allocation2 + $0x11f] sm:$0xff]
    %v3548 = vld [vmem:[#allocation2 + $0x127] sm:$0xff]
    %v3549 = vld [vmem:[#allocation2 + $0x12f] sm:$0xff]
    %v3550 = vld [vmem:[#allocation2 + $0x137] sm:$0xff]
    %v3551 = vld [vmem:[#allocation2 + $0x13f] sm:$0xff]
    %v3552 = vld [vmem:[#allocation2 + $0x147] sm:$0xff]
    %v3553 = vld [vmem:[#allocation2 + $0x14f] sm:$0xff]
    %v3554 = vld [vmem:[#allocation2 + $0x157] sm:$0xff]
    %v3555 = vld [vmem:[#allocation2 + $0x15f] sm:$0xff]
    %v3556 = vld [vmem:[#allocation2 + $0x167] sm:$0xff]
    %v3557 = vld [vmem:[#allocation2 + $0x16f] sm:$0xff]
    %v3558 = vld [vmem:[#allocation2 + $0x177] sm:$0xff]
    %v3559 = vld [vmem:[#allocation2 + $0x17f] sm:$0xff]
    %v3560 = vld [vmem:[#allocation2 + $0x187] sm:$0xff]
    %v3561 = vld [vmem:[#allocation2 + $0x18f] sm:$0xff]
    %v3562 = vld [vmem:[#allocation2 + $0x197] sm:$0xff]
    %v3563 = vld [vmem:[#allocation2 + $0x19f] sm:$0xff]
    %v3564 = vld [vmem:[#allocation2 + $0x1a7] sm:$0xff]
    %v3565 = vld [vmem:[#allocation2 + $0x1af] sm:$0xff]
    %v3566 = vld [vmem:[#allocation2 + $0x1b7] sm:$0xff]
    %v3567 = vld [vmem:[#allocation2 + $0x1bf] sm:$0xff]
    %v3568 = vld [vmem:[#allocation2 + $0x1c7] sm:$0xff]
    %v3569 = vld [vmem:[#allocation2 + $0x1cf] sm:$0xff]
    %v3570 = vld [vmem:[#allocation2 + $0x1d7] sm:$0xff]
    %v3571 = vld [vmem:[#allocation2 + $0x1df] sm:$0xff]
    %v3572 = vld [vmem:[#allocation2 + $0x1e7] sm:$0xff]
    %v3573 = vld [vmem:[#allocation2 + $0x1ef] sm:$0xff]
    %v3574 = vld [vmem:[#allocation2 + $0x1f7] sm:$0xff]
    %v3575 = vld [vmem:[#allocation2 + $0x1ff] sm:$0xff]
    %v3576 = vld [vmem:[#allocation2 + $0x207] sm:$0xff]
    %v3577 = vld [vmem:[#allocation2 + $0x20f] sm:$0xff]
    %v3578 = vld [vmem:[#allocation2 + $0x217] sm:$0xff]
    %v3579 = vld [vmem:[#allocation2 + $0x21f] sm:$0xff]
    %v3580 = vld [vmem:[#allocation2 + $0x227] sm:$0xff]
    %v3581 = vld [vmem:[#allocation2 + $0x22f] sm:$0xff]
    %v3582 = vld [vmem:[#allocation2 + $0x237] sm:$0xff]
    %v3583 = vld [vmem:[#allocation2 + $0x23f] sm:$0xff]
    %v3584 = vld [vmem:[#allocation2 + $0x247] sm:$0xff]
    %v3585 = vld [vmem:[#allocation2 + $0x24f] sm:$0xff]
    %v3586 = vld [vmem:[#allocation2 + $0x257] sm:$0xff]
    %v3587 = vld [vmem:[#allocation2 + $0x25f] sm:$0xff]
    %v3588 = vld [vmem:[#allocation2 + $0x267] sm:$0xff]
    %v3589 = vld [vmem:[#allocation2 + $0x26f] sm:$0xff]
    %v3590 = vld [vmem:[#allocation2 + $0x277] sm:$0xff]
    %v3591 = vld [vmem:[#allocation2 + $0x27f] sm:$0xff]
    %v3592 = vld [vmem:[#allocation2 + $0x287] sm:$0xff]
    %v3593 = vld [vmem:[#allocation2 + $0x28f] sm:$0xff]
    %v3594 = vld [vmem:[#allocation2 + $0x297] sm:$0xff]
    %v3595 = vpack.c.bf16 %v3515, %v3514
    %v3596 = vpack.c.bf16 %v3517, %v3516
    %v3597 = vpack.c.bf16 %v3519, %v3518
    %v3598 = vpack.c.bf16 %v3521, %v3520
    %v3599 = vpack.c.bf16 %v3523, %v3522
    %v3600 = vpack.c.bf16 %v3525, %v3524
    %v3601 = vpack.c.bf16 %v3527, %v3526
    %v3602 = vpack.c.bf16 %v3529, %v3528
    %v3603 = vpack.c.bf16 %v3531, %v3530
    %v3604 = vpack.c.bf16 %v3533, %v3532
    %v3605 = vpack.c.bf16 %v3535, %v3534
    %v3606 = vpack.c.bf16 %v3537, %v3536
    %v3607 = vpack.c.bf16 %v3539, %v3538
    %v3608 = vpack.c.bf16 %v3541, %v3540
    %v3609 = vpack.c.bf16 %v3543, %v3542
    %v3610 = vpack.c.bf16 %v3545, %v3544
    %v3611 = vpack.c.bf16 %v3547, %v3546
    %v3612 = vpack.c.bf16 %v3549, %v3548
    %v3613 = vpack.c.bf16 %v3551, %v3550
    %v3614 = vpack.c.bf16 %v3553, %v3552
    %v3615 = vpack.c.bf16 %v3555, %v3554
    %v3616 = vpack.c.bf16 %v3557, %v3556
    %v3617 = vpack.c.bf16 %v3559, %v3558
    %v3618 = vpack.c.bf16 %v3561, %v3560
    %v3619 = vpack.c.bf16 %v3563, %v3562
    %v3620 = vpack.c.bf16 %v3565, %v3564
    %v3621 = vpack.c.bf16 %v3567, %v3566
    %v3622 = vpack.c.bf16 %v3569, %v3568
    %v3623 = vpack.c.bf16 %v3571, %v3570
    %v3624 = vpack.c.bf16 %v3573, %v3572
    %v3625 = vpack.c.bf16 %v3575, %v3574
    %v3626 = vpack.c.bf16 %v3577, %v3576
    %v3627 = vpack.c.bf16 %v3579, %v3578
    %v3628 = vpack.c.bf16 %v3581, %v3580
    %v3629 = vpack.c.bf16 %v3583, %v3582
    %v3630 = vpack.c.bf16 %v3585, %v3584
    %v3631 = vpack.c.bf16 %v3587, %v3586
    %v3632 = vpack.c.bf16 %v3589, %v3588
    %v3633 = vpack.c.bf16 %v3591, %v3590
    %v3634 = vpack.c.bf16 %v3593, %v3592
    %v3635 = vpack.c.bf16 %v3594, %v3594
    %s3636 = scalar_lea.vmem %s2, 48
    %v3637 = vld [vmem:[%s3636] sm:$0xf]
    %v3638 = vld [vmem:[%s3636 + $0x4] sm:$0xf]
    %v3639 = vld [vmem:[%s3636 + $0x8] sm:$0xf]
    %v3640 = vld [vmem:[%s3636 + $0xc] sm:$0xf]
    %v3645 = vunpack.c.l.b16 %v3637
    %v3646 = vunpack.c.l.b16 %v3638
    %v3647 = vunpack.c.l.b16 %v3639
    %v3648 = vunpack.c.l.b16 %v3640
    %v3649 = vpack.c.b16 %v3646, %v3645
    %v3650 = vpack.c.b16 %v3648, %v3647
    %v3654 = vsel %vm1480, %v3595, 0
    %v3657 = vsel %vm1480, %v3596, 0
    %v3660 = vsel %vm1480, %v3597, 0
    %v3663 = vsel %vm1480, %v3598, 0
    %v3666 = vsel %vm1480, %v3599, 0
    %v3669 = vsel %vm1480, %v3600, 0
    %v3672 = vsel %vm1480, %v3601, 0
    %v3675 = vsel %vm1480, %v3602, 0
    %v3678 = vsel %vm1480, %v3603, 0
    %v3681 = vsel %vm1480, %v3604, 0
    %v3684 = vsel %vm1480, %v3605, 0
    %v3687 = vsel %vm1480, %v3606, 0
    %v3690 = vsel %vm1480, %v3607, 0
    %v3693 = vsel %vm1480, %v3608, 0
    %v3696 = vsel %vm1480, %v3609, 0
    %v3699 = vsel %vm1480, %v3610, 0
    %v3702 = vsel %vm1480, %v3611, 0
    %v3705 = vsel %vm1480, %v3612, 0
    %v3708 = vsel %vm1480, %v3613, 0
    %v3711 = vsel %vm1480, %v3614, 0
    %v3714 = vsel %vm1480, %v3615, 0
    %v3717 = vsel %vm1480, %v3616, 0
    %v3720 = vsel %vm1480, %v3617, 0
    %v3723 = vsel %vm1480, %v3618, 0
    %v3726 = vsel %vm1480, %v3619, 0
    %v3729 = vsel %vm1480, %v3620, 0
    %v3732 = vsel %vm1480, %v3621, 0
    %v3735 = vsel %vm1480, %v3622, 0
    %v3738 = vsel %vm1480, %v3623, 0
    %v3741 = vsel %vm1480, %v3624, 0
    %v3744 = vsel %vm1480, %v3625, 0
    %v3747 = vsel %vm1480, %v3626, 0
    %v3750 = vsel %vm1480, %v3627, 0
    %v3753 = vsel %vm1480, %v3628, 0
    %v3756 = vsel %vm1480, %v3629, 0
    %v3759 = vsel %vm1480, %v3630, 0
    %v3762 = vsel %vm1480, %v3631, 0
    %v3765 = vsel %vm1480, %v3632, 0
    %v3768 = vsel %vm1480, %v3633, 0
    %v3771 = vsel %vm1480, %v3634, 0
    %v3774 = vsel %vm1480, %v3635, 0
    %3776 = vmatprep.subr.bf16.mxu0 0
    %3777 = vmatpush1.bf16.msra.mxu0 %v3649
    %3778 = vmatprep.subr.bf16.mxu0 0
    %3779 = vmatpush1.bf16.msra.mxu0 %v3650
    %3780 = vmatprep.subr.bf16.mxu0 0
    %3781 = vmatpush1.bf16.msra.mxu0 0
    %3782 = vmatprep.subr.bf16.mxu0 0
    %3783 = vmatpush1.bf16.msra.mxu0 0
    %3784 = vmatprep.subr.bf16.mxu0 0
    %3785 = vmatpush1.bf16.msra.mxu0 0
    %3786 = vmatprep.subr.bf16.mxu0 0
    %3787 = vmatpush1.bf16.msra.mxu0 0
    %3788 = vmatprep.subr.bf16.mxu0 0
    %3789 = vmatpush1.bf16.msra.mxu0 0
    %3790 = vmatprep.subr.bf16.mxu0 0
    %3791 = vmatpush1.bf16.msra.mxu0 0
    %3792 = vmatprep.subr.bf16.mxu0 0
    %3793 = vmatpush1.bf16.msra.mxu0 0
    %3794 = vmatprep.subr.bf16.mxu0 0
    %3795 = vmatpush1.bf16.msra.mxu0 0
    %3796 = vmatprep.subr.bf16.mxu0 0
    %3797 = vmatpush1.bf16.msra.mxu0 0
    %3798 = vmatprep.subr.bf16.mxu0 0
    %3799 = vmatpush1.bf16.msra.mxu0 0
    %3800 = vmatprep.subr.bf16.mxu0 0
    %3801 = vmatpush1.bf16.msra.mxu0 0
    %3802 = vmatprep.subr.bf16.mxu0 0
    %3803 = vmatpush1.bf16.msra.mxu0 0
    %3804 = vmatprep.subr.bf16.mxu0 0
    %3805 = vmatpush1.bf16.msra.mxu0 0
    %3806 = vmatprep.subr.bf16.mxu0 0
    %3807 = vmatpush1.bf16.msra.mxu0 0
    %3808 = vmatprep.mubr.bf16.mxu0 0
    %3809 = vmatmul.mubr.bf16.gmra.mrb[0].mxu0 %v3654
    %v3810 = vpop.f32.mrb[0].mxu0
    %v3811 = vadd.f32 0.0, %v3810
    %v3812 = vpop.f32.mrb[0].mxu0
    %v3813 = vpop.f32.mrb[0].mxu0
    %v3814 = vadd.f32 0.0, %v3813
    %v3815 = vpop.f32.mrb[0].mxu0
    %3816 = vmatprep.mubr.bf16.mxu0 0
    %3817 = vmatmul.mubr.bf16.gmra.mrb[0].mxu0 %v3657
    %v3818 = vpop.f32.mrb[0].mxu0
    %v3819 = vadd.f32 0.0, %v3818
    %v3820 = vpop.f32.mrb[0].mxu0
    %v3821 = vpop.f32.mrb[0].mxu0
    %v3822 = vadd.f32 0.0, %v3821
    %v3823 = vpop.f32.mrb[0].mxu0
    %3824 = vmatprep.mubr.bf16.mxu0 0
    %3825 = vmatmul.mubr.bf16.gmra.mrb[0].mxu0 %v3660
    %v3826 = vpop.f32.mrb[0].mxu0
    %v3827 = vadd.f32 0.0, %v3826
    %v3828 = vpop.f32.mrb[0].mxu0
    %v3829 = vpop.f32.mrb[0].mxu0
    %v3830 = vadd.f32 0.0, %v3829
    %v3831 = vpop.f32.mrb[0].mxu0
    %3832 = vmatprep.mubr.bf16.mxu0 0
    %3833 = vmatmul.mubr.bf16.gmra.mrb[0].mxu0 %v3663
    %v3834 = vpop.f32.mrb[0].mxu0
    %v3835 = vadd.f32 0.0, %v3834
    %v3836 = vpop.f32.mrb[0].mxu0
    %v3837 = vpop.f32.mrb[0].mxu0
    %v3838 = vadd.f32 0.0, %v3837
    %v3839 = vpop.f32.mrb[0].mxu0
    %3840 = vmatprep.mubr.bf16.mxu0 0
    %3841 = vmatmul.mubr.bf16.gmra.mrb[0].mxu0 %v3666
    %v3842 = vpop.f32.mrb[0].mxu0
    %v3843 = vadd.f32 0.0, %v3842
    %v3844 = vpop.f32.mrb[0].mxu0
    %v3845 = vpop.f32.mrb[0].mxu0
    %v3846 = vadd.f32 0.0, %v3845
    %v3847 = vpop.f32.mrb[0].mxu0
    %3848 = vmatprep.mubr.bf16.mxu0 0
    %3849 = vmatmul.mubr.bf16.gmra.mrb[0].mxu0 %v3669
    %v3850 = vpop.f32.mrb[0].mxu0
    %v3851 = vadd.f32 0.0, %v3850
    %v3852 = vpop.f32.mrb[0].mxu0
    %v3853 = vpop.f32.mrb[0].mxu0
    %v3854 = vadd.f32 0.0, %v3853
    %v3855 = vpop.f32.mrb[0].mxu0
    %3856 = vmatprep.mubr.bf16.mxu0 0
    %3857 = vmatmul.mubr.bf16.gmra.mrb[0].mxu0 %v3672
    %v3858 = vpop.f32.mrb[0].mxu0
    %v3859 = vadd.f32 0.0, %v3858
    %v3860 = vpop.f32.mrb[0].mxu0
    %v3861 = vpop.f32.mrb[0].mxu0
    %v3862 = vadd.f32 0.0, %v3861
    %v3863 = vpop.f32.mrb[0].mxu0
    %3864 = vmatprep.mubr.bf16.mxu0 0
    %3865 = vmatmul.mubr.bf16.gmra.mrb[0].mxu0 %v3675
    %v3866 = vpop.f32.mrb[0].mxu0
    %v3867 = vadd.f32 0.0, %v3866
    %v3868 = vpop.f32.mrb[0].mxu0
    %v3869 = vpop.f32.mrb[0].mxu0
    %v3870 = vadd.f32 0.0, %v3869
    %v3871 = vpop.f32.mrb[0].mxu0
    %3872 = vmatprep.mubr.bf16.mxu0 0
    %3873 = vmatmul.mubr.bf16.gmra.mrb[0].mxu0 %v3678
    %v3874 = vpop.f32.mrb[0].mxu0
    %v3875 = vadd.f32 0.0, %v3874
    %v3876 = vpop.f32.mrb[0].mxu0
    %v3877 = vpop.f32.mrb[0].mxu0
    %v3878 = vadd.f32 0.0, %v3877
    %v3879 = vpop.f32.mrb[0].mxu0
    %3880 = vmatprep.mubr.bf16.mxu0 0
    %3881 = vmatmul.mubr.bf16.gmra.mrb[0].mxu0 %v3681
    %v3882 = vpop.f32.mrb[0].mxu0
    %v3883 = vadd.f32 0.0, %v3882
    %v3884 = vpop.f32.mrb[0].mxu0
    %v3885 = vpop.f32.mrb[0].mxu0
    %v3886 = vadd.f32 0.0, %v3885
    %v3887 = vpop.f32.mrb[0].mxu0
    %3888 = vmatprep.mubr.bf16.mxu0 0
    %3889 = vmatmul.mubr.bf16.gmra.mrb[0].mxu0 %v3684
    %v3890 = vpop.f32.mrb[0].mxu0
    %v3891 = vadd.f32 0.0, %v3890
    %v3892 = vpop.f32.mrb[0].mxu0
    %v3893 = vpop.f32.mrb[0].mxu0
    %v3894 = vadd.f32 0.0, %v3893
    %v3895 = vpop.f32.mrb[0].mxu0
    %3896 = vmatprep.mubr.bf16.mxu0 0
    %3897 = vmatmul.mubr.bf16.gmra.mrb[0].mxu0 %v3687
    %v3898 = vpop.f32.mrb[0].mxu0
    %v3899 = vadd.f32 0.0, %v3898
    %v3900 = vpop.f32.mrb[0].mxu0
    %v3901 = vpop.f32.mrb[0].mxu0
    %v3902 = vadd.f32 0.0, %v3901
    %v3903 = vpop.f32.mrb[0].mxu0
    %3904 = vmatprep.mubr.bf16.mxu0 0
    %3905 = vmatmul.mubr.bf16.gmra.mrb[0].mxu0 %v3690
    %v3906 = vpop.f32.mrb[0].mxu0
    %v3907 = vadd.f32 0.0, %v3906
    %v3908 = vpop.f32.mrb[0].mxu0
    %v3909 = vpop.f32.mrb[0].mxu0
    %v3910 = vadd.f32 0.0, %v3909
    %v3911 = vpop.f32.mrb[0].mxu0
    %3912 = vmatprep.mubr.bf16.mxu0 0
    %3913 = vmatmul.mubr.bf16.gmra.mrb[0].mxu0 %v3693
    %v3914 = vpop.f32.mrb[0].mxu0
    %v3915 = vadd.f32 0.0, %v3914
    %v3916 = vpop.f32.mrb[0].mxu0
    %v3917 = vpop.f32.mrb[0].mxu0
    %v3918 = vadd.f32 0.0, %v3917
    %v3919 = vpop.f32.mrb[0].mxu0
    %3920 = vmatprep.mubr.bf16.mxu0 0
    %3921 = vmatmul.mubr.bf16.gmra.mrb[0].mxu0 %v3696
    %v3922 = vpop.f32.mrb[0].mxu0
    %v3923 = vadd.f32 0.0, %v3922
    %v3924 = vpop.f32.mrb[0].mxu0
    %v3925 = vpop.f32.mrb[0].mxu0
    %v3926 = vadd.f32 0.0, %v3925
    %v3927 = vpop.f32.mrb[0].mxu0
    %3928 = vmatprep.mubr.bf16.mxu0 0
    %3929 = vmatmul.mubr.bf16.gmra.mrb[0].mxu0 %v3699
    %v3930 = vpop.f32.mrb[0].mxu0
    %v3931 = vadd.f32 0.0, %v3930
    %v3932 = vpop.f32.mrb[0].mxu0
    %v3933 = vpop.f32.mrb[0].mxu0
    %v3934 = vadd.f32 0.0, %v3933
    %v3935 = vpop.f32.mrb[0].mxu0
    %3936 = vmatprep.mubr.bf16.mxu0 0
    %3937 = vmatmul.mubr.bf16.gmra.mrb[0].mxu0 %v3702
    %v3938 = vpop.f32.mrb[0].mxu0
    %v3939 = vadd.f32 0.0, %v3938
    %v3940 = vpop.f32.mrb[0].mxu0
    %v3941 = vpop.f32.mrb[0].mxu0
    %v3942 = vadd.f32 0.0, %v3941
    %v3943 = vpop.f32.mrb[0].mxu0
    %3944 = vmatprep.mubr.bf16.mxu0 0
    %3945 = vmatmul.mubr.bf16.gmra.mrb[0].mxu0 %v3705
    %v3946 = vpop.f32.mrb[0].mxu0
    %v3947 = vadd.f32 0.0, %v3946
    %v3948 = vpop.f32.mrb[0].mxu0
    %v3949 = vpop.f32.mrb[0].mxu0
    %v3950 = vadd.f32 0.0, %v3949
    %v3951 = vpop.f32.mrb[0].mxu0
    %3952 = vmatprep.mubr.bf16.mxu0 0
    %3953 = vmatmul.mubr.bf16.gmra.mrb[0].mxu0 %v3708
    %v3954 = vpop.f32.mrb[0].mxu0
    %v3955 = vadd.f32 0.0, %v3954
    %v3956 = vpop.f32.mrb[0].mxu0
    %v3957 = vpop.f32.mrb[0].mxu0
    %v3958 = vadd.f32 0.0, %v3957
    %v3959 = vpop.f32.mrb[0].mxu0
    %3960 = vmatprep.mubr.bf16.mxu0 0
    %3961 = vmatmul.mubr.bf16.gmra.mrb[0].mxu0 %v3711
    %v3962 = vpop.f32.mrb[0].mxu0
    %v3963 = vadd.f32 0.0, %v3962
    %v3964 = vpop.f32.mrb[0].mxu0
    %v3965 = vpop.f32.mrb[0].mxu0
    %v3966 = vadd.f32 0.0, %v3965
    %v3967 = vpop.f32.mrb[0].mxu0
    %3968 = vmatprep.mubr.bf16.mxu0 0
    %3969 = vmatmul.mubr.bf16.gmra.mrb[0].mxu0 %v3714
    %v3970 = vpop.f32.mrb[0].mxu0
    %v3971 = vadd.f32 0.0, %v3970
    %v3972 = vpop.f32.mrb[0].mxu0
    %v3973 = vpop.f32.mrb[0].mxu0
    %v3974 = vadd.f32 0.0, %v3973
    %v3975 = vpop.f32.mrb[0].mxu0
    %3976 = vmatprep.mubr.bf16.mxu0 0
    %3977 = vmatmul.mubr.bf16.gmra.mrb[0].mxu0 %v3717
    %v3978 = vpop.f32.mrb[0].mxu0
    %v3979 = vadd.f32 0.0, %v3978
    %v3980 = vpop.f32.mrb[0].mxu0
    %v3981 = vpop.f32.mrb[0].mxu0
    %v3982 = vadd.f32 0.0, %v3981
    %v3983 = vpop.f32.mrb[0].mxu0
    %3984 = vmatprep.mubr.bf16.mxu0 0
    %3985 = vmatmul.mubr.bf16.gmra.mrb[0].mxu0 %v3720
    %v3986 = vpop.f32.mrb[0].mxu0
    %v3987 = vadd.f32 0.0, %v3986
    %v3988 = vpop.f32.mrb[0].mxu0
    %v3989 = vpop.f32.mrb[0].mxu0
    %v3990 = vadd.f32 0.0, %v3989
    %v3991 = vpop.f32.mrb[0].mxu0
    %3992 = vmatprep.mubr.bf16.mxu0 0
    %3993 = vmatmul.mubr.bf16.gmra.mrb[0].mxu0 %v3723
    %v3994 = vpop.f32.mrb[0].mxu0
    %v3995 = vadd.f32 0.0, %v3994
    %v3996 = vpop.f32.mrb[0].mxu0
    %v3997 = vpop.f32.mrb[0].mxu0
    %v3998 = vadd.f32 0.0, %v3997
    %v3999 = vpop.f32.mrb[0].mxu0
    %4000 = vmatprep.mubr.bf16.mxu0 0
    %4001 = vmatmul.mubr.bf16.gmra.mrb[0].mxu0 %v3726
    %v4002 = vpop.f32.mrb[0].mxu0
    %v4003 = vadd.f32 0.0, %v4002
    %v4004 = vpop.f32.mrb[0].mxu0
    %v4005 = vpop.f32.mrb[0].mxu0
    %v4006 = vadd.f32 0.0, %v4005
    %v4007 = vpop.f32.mrb[0].mxu0
    %4008 = vmatprep.mubr.bf16.mxu0 0
    %4009 = vmatmul.mubr.bf16.gmra.mrb[0].mxu0 %v3729
    %v4010 = vpop.f32.mrb[0].mxu0
    %v4011 = vadd.f32 0.0, %v4010
    %v4012 = vpop.f32.mrb[0].mxu0
    %v4013 = vpop.f32.mrb[0].mxu0
    %v4014 = vadd.f32 0.0, %v4013
    %v4015 = vpop.f32.mrb[0].mxu0
    %4016 = vmatprep.mubr.bf16.mxu0 0
    %4017 = vmatmul.mubr.bf16.gmra.mrb[0].mxu0 %v3732
    %v4018 = vpop.f32.mrb[0].mxu0
    %v4019 = vadd.f32 0.0, %v4018
    %v4020 = vpop.f32.mrb[0].mxu0
    %v4021 = vpop.f32.mrb[0].mxu0
    %v4022 = vadd.f32 0.0, %v4021
    %v4023 = vpop.f32.mrb[0].mxu0
    %4024 = vmatprep.mubr.bf16.mxu0 0
    %4025 = vmatmul.mubr.bf16.gmra.mrb[0].mxu0 %v3735
    %v4026 = vpop.f32.mrb[0].mxu0
    %v4027 = vadd.f32 0.0, %v4026
    %v4028 = vpop.f32.mrb[0].mxu0
    %v4029 = vpop.f32.mrb[0].mxu0
    %v4030 = vadd.f32 0.0, %v4029
    %v4031 = vpop.f32.mrb[0].mxu0
    %4032 = vmatprep.mubr.bf16.mxu0 0
    %4033 = vmatmul.mubr.bf16.gmra.mrb[0].mxu0 %v3738
    %v4034 = vpop.f32.mrb[0].mxu0
    %v4035 = vadd.f32 0.0, %v4034
    %v4036 = vpop.f32.mrb[0].mxu0
    %v4037 = vpop.f32.mrb[0].mxu0
    %v4038 = vadd.f32 0.0, %v4037
    %v4039 = vpop.f32.mrb[0].mxu0
    %4040 = vmatprep.mubr.bf16.mxu0 0
    %4041 = vmatmul.mubr.bf16.gmra.mrb[0].mxu0 %v3741
    %v4042 = vpop.f32.mrb[0].mxu0
    %v4043 = vadd.f32 0.0, %v4042
    %v4044 = vpop.f32.mrb[0].mxu0
    %v4045 = vpop.f32.mrb[0].mxu0
    %v4046 = vadd.f32 0.0, %v4045
    %v4047 = vpop.f32.mrb[0].mxu0
    %4048 = vmatprep.mubr.bf16.mxu0 0
    %4049 = vmatmul.mubr.bf16.gmra.mrb[0].mxu0 %v3744
    %v4050 = vpop.f32.mrb[0].mxu0
    %v4051 = vadd.f32 0.0, %v4050
    %v4052 = vpop.f32.mrb[0].mxu0
    %v4053 = vpop.f32.mrb[0].mxu0
    %v4054 = vadd.f32 0.0, %v4053
    %v4055 = vpop.f32.mrb[0].mxu0
    %4056 = vmatprep.mubr.bf16.mxu0 0
    %4057 = vmatmul.mubr.bf16.gmra.mrb[0].mxu0 %v3747
    %v4058 = vpop.f32.mrb[0].mxu0
    %v4059 = vadd.f32 0.0, %v4058
    %v4060 = vpop.f32.mrb[0].mxu0
    %v4061 = vpop.f32.mrb[0].mxu0
    %v4062 = vadd.f32 0.0, %v4061
    %v4063 = vpop.f32.mrb[0].mxu0
    %4064 = vmatprep.mubr.bf16.mxu0 0
    %4065 = vmatmul.mubr.bf16.gmra.mrb[0].mxu0 %v3750
    %v4066 = vpop.f32.mrb[0].mxu0
    %v4067 = vadd.f32 0.0, %v4066
    %v4068 = vpop.f32.mrb[0].mxu0
    %v4069 = vpop.f32.mrb[0].mxu0
    %v4070 = vadd.f32 0.0, %v4069
    %v4071 = vpop.f32.mrb[0].mxu0
    %4072 = vmatprep.mubr.bf16.mxu0 0
    %4073 = vmatmul.mubr.bf16.gmra.mrb[0].mxu0 %v3753
    %v4074 = vpop.f32.mrb[0].mxu0
    %v4075 = vadd.f32 0.0, %v4074
    %v4076 = vpop.f32.mrb[0].mxu0
    %v4077 = vpop.f32.mrb[0].mxu0
    %v4078 = vadd.f32 0.0, %v4077
    %v4079 = vpop.f32.mrb[0].mxu0
    %4080 = vmatprep.mubr.bf16.mxu0 0
    %4081 = vmatmul.mubr.bf16.gmra.mrb[0].mxu0 %v3756
    %v4082 = vpop.f32.mrb[0].mxu0
    %v4083 = vadd.f32 0.0, %v4082
    %v4084 = vpop.f32.mrb[0].mxu0
    %v4085 = vpop.f32.mrb[0].mxu0
    %v4086 = vadd.f32 0.0, %v4085
    %v4087 = vpop.f32.mrb[0].mxu0
    %4088 = vmatprep.mubr.bf16.mxu0 0
    %4089 = vmatmul.mubr.bf16.gmra.mrb[0].mxu0 %v3759
    %v4090 = vpop.f32.mrb[0].mxu0
    %v4091 = vadd.f32 0.0, %v4090
    %v4092 = vpop.f32.mrb[0].mxu0
    %v4093 = vpop.f32.mrb[0].mxu0
    %v4094 = vadd.f32 0.0, %v4093
    %v4095 = vpop.f32.mrb[0].mxu0
    %4096 = vmatprep.mubr.bf16.mxu0 0
    %4097 = vmatmul.mubr.bf16.gmra.mrb[0].mxu0 %v3762
    %v4098 = vpop.f32.mrb[0].mxu0
    %v4099 = vadd.f32 0.0, %v4098
    %v4100 = vpop.f32.mrb[0].mxu0
    %v4101 = vpop.f32.mrb[0].mxu0
    %v4102 = vadd.f32 0.0, %v4101
    %v4103 = vpop.f32.mrb[0].mxu0
    %4104 = vmatprep.mubr.bf16.mxu0 0
    %4105 = vmatmul.mubr.bf16.gmra.mrb[0].mxu0 %v3765
    %v4106 = vpop.f32.mrb[0].mxu0
    %v4107 = vadd.f32 0.0, %v4106
    %v4108 = vpop.f32.mrb[0].mxu0
    %v4109 = vpop.f32.mrb[0].mxu0
    %v4110 = vadd.f32 0.0, %v4109
    %v4111 = vpop.f32.mrb[0].mxu0
    %4112 = vmatprep.mubr.bf16.mxu0 0
    %4113 = vmatmul.mubr.bf16.gmra.mrb[0].mxu0 %v3768
    %v4114 = vpop.f32.mrb[0].mxu0
    %v4115 = vadd.f32 0.0, %v4114
    %v4116 = vpop.f32.mrb[0].mxu0
    %v4117 = vpop.f32.mrb[0].mxu0
    %v4118 = vadd.f32 0.0, %v4117
    %v4119 = vpop.f32.mrb[0].mxu0
    %4120 = vmatprep.mubr.bf16.mxu0 0
    %4121 = vmatmul.mubr.bf16.gmra.mrb[0].mxu0 %v3771
    %v4122 = vpop.f32.mrb[0].mxu0
    %v4123 = vadd.f32 0.0, %v4122
    %v4124 = vpop.f32.mrb[0].mxu0
    %v4125 = vpop.f32.mrb[0].mxu0
    %v4126 = vadd.f32 0.0, %v4125
    %v4127 = vpop.f32.mrb[0].mxu0
    %4128 = vmatprep.mubr.bf16.mxu0 0
    %4129 = vmatmul.mubr.bf16.gmra.mrb[0].mxu0 %v3774
    %v4130 = vpop.f32.mrb[0].mxu0
    %v4131 = vadd.f32 0.0, %v4130
    %v4132 = vpop.f32.mrb[0].mxu0
    %v4133 = vpop.f32.mrb[0].mxu0
    %v4134 = vpop.f32.mrb[0].mxu0
    %4135 = vdwg.mxu0
    %v4136 = vadd.f32 %v3433, %v3811
    %v4137 = vadd.f32 %v3434, %v3814
    %v4138 = vadd.f32 %v3435, %v3819
    %v4139 = vadd.f32 %v3436, %v3822
    %v4140 = vadd.f32 %v3437, %v3827
    %v4141 = vadd.f32 %v3438, %v3830
    %v4142 = vadd.f32 %v3439, %v3835
    %v4143 = vadd.f32 %v3440, %v3838
    %v4144 = vadd.f32 %v3441, %v3843
    %v4145 = vadd.f32 %v3442, %v3846
    %v4146 = vadd.f32 %v3443, %v3851
    %v4147 = vadd.f32 %v3444, %v3854
    %v4148 = vadd.f32 %v3445, %v3859
    %v4149 = vadd.f32 %v3446, %v3862
    %v4150 = vadd.f32 %v3447, %v3867
    %v4151 = vadd.f32 %v3448, %v3870
    %v4152 = vadd.f32 %v3449, %v3875
    %v4153 = vadd.f32 %v3450, %v3878
    %v4154 = vadd.f32 %v3451, %v3883
    %v4155 = vadd.f32 %v3452, %v3886
    %v4156 = vadd.f32 %v3453, %v3891
    %v4157 = vadd.f32 %v3454, %v3894
    %v4158 = vadd.f32 %v3455, %v3899
    %v4159 = vadd.f32 %v3456, %v3902
    %v4160 = vadd.f32 %v3457, %v3907
    %v4161 = vadd.f32 %v3458, %v3910
    %v4162 = vadd.f32 %v3459, %v3915
    %v4163 = vadd.f32 %v3460, %v3918
    %v4164 = vadd.f32 %v3461, %v3923
    %v4165 = vadd.f32 %v3462, %v3926
    %v4166 = vadd.f32 %v3463, %v3931
    %v4167 = vadd.f32 %v3464, %v3934
    %v4168 = vadd.f32 %v3465, %v3939
    %v4169 = vadd.f32 %v3466, %v3942
    %v4170 = vadd.f32 %v3467, %v3947
    %v4171 = vadd.f32 %v3468, %v3950
    %v4172 = vadd.f32 %v3469, %v3955
    %v4173 = vadd.f32 %v3470, %v3958
    %v4174 = vadd.f32 %v3471, %v3963
    %v4175 = vadd.f32 %v3472, %v3966
    %v4176 = vadd.f32 %v3473, %v3971
    %v4177 = vadd.f32 %v3474, %v3974
    %v4178 = vadd.f32 %v3475, %v3979
    %v4179 = vadd.f32 %v3476, %v3982
    %v4180 = vadd.f32 %v3477, %v3987
    %v4181 = vadd.f32 %v3478, %v3990
    %v4182 = vadd.f32 %v3479, %v3995
    %v4183 = vadd.f32 %v3480, %v3998
    %v4184 = vadd.f32 %v3481, %v4003
    %v4185 = vadd.f32 %v3482, %v4006
    %v4186 = vadd.f32 %v3483, %v4011
    %v4187 = vadd.f32 %v3484, %v4014
    %v4188 = vadd.f32 %v3485, %v4019
    %v4189 = vadd.f32 %v3486, %v4022
    %v4190 = vadd.f32 %v3487, %v4027
    %v4191 = vadd.f32 %v3488, %v4030
    %v4192 = vadd.f32 %v3489, %v4035
    %v4193 = vadd.f32 %v3490, %v4038
    %v4194 = vadd.f32 %v3491, %v4043
    %v4195 = vadd.f32 %v3492, %v4046
    %v4196 = vadd.f32 %v3493, %v4051
    %v4197 = vadd.f32 %v3494, %v4054
    %v4198 = vadd.f32 %v3495, %v4059
    %v4199 = vadd.f32 %v3496, %v4062
    %v4200 = vadd.f32 %v3497, %v4067
    %v4201 = vadd.f32 %v3498, %v4070
    %v4202 = vadd.f32 %v3499, %v4075
    %v4203 = vadd.f32 %v3500, %v4078
    %v4204 = vadd.f32 %v3501, %v4083
    %v4205 = vadd.f32 %v3502, %v4086
    %v4206 = vadd.f32 %v3503, %v4091
    %v4207 = vadd.f32 %v3504, %v4094
    %v4208 = vadd.f32 %v3505, %v4099
    %v4209 = vadd.f32 %v3506, %v4102
    %v4210 = vadd.f32 %v3507, %v4107
    %v4211 = vadd.f32 %v3508, %v4110
    %v4212 = vadd.f32 %v3509, %v4115
    %v4213 = vadd.f32 %v3510, %v4118
    %v4214 = vadd.f32 %v3511, %v4123
    %v4215 = vadd.f32 %v3512, %v4126
    %v4216 = vadd.f32 %v3513, %v4131
    %v4217 = vld [vmem:[#allocation2 + $0x18] sm:$0xff]
    %v4218 = vld [vmem:[#allocation2 + $0x20] sm:$0xff]
    %v4219 = vld [vmem:[#allocation2 + $0x28] sm:$0xff]
    %v4220 = vld [vmem:[#allocation2 + $0x30] sm:$0xff]
    %v4221 = vld [vmem:[#allocation2 + $0x38] sm:$0xff]
    %v4222 = vld [vmem:[#allocation2 + $0x40] sm:$0xff]
    %v4223 = vld [vmem:[#allocation2 + $0x48] sm:$0xff]
    %v4224 = vld [vmem:[#allocation2 + $0x50] sm:$0xff]
    %v4225 = vld [vmem:[#allocation2 + $0x58] sm:$0xff]
    %v4226 = vld [vmem:[#allocation2 + $0x60] sm:$0xff]
    %v4227 = vld [vmem:[#allocation2 + $0x68] sm:$0xff]
    %v4228 = vld [vmem:[#allocation2 + $0x70] sm:$0xff]
    %v4229 = vld [vmem:[#allocation2 + $0x78] sm:$0xff]
    %v4230 = vld [vmem:[#allocation2 + $0x80] sm:$0xff]
    %v4231 = vld [vmem:[#allocation2 + $0x88] sm:$0xff]
    %v4232 = vld [vmem:[#allocation2 + $0x90] sm:$0xff]
    %v4233 = vld [vmem:[#allocation2 + $0x98] sm:$0xff]
    %v4234 = vld [vmem:[#allocation2 + $0xa0] sm:$0xff]
    %v4235 = vld [vmem:[#allocation2 + $0xa8] sm:$0xff]
    %v4236 = vld [vmem:[#allocation2 + $0xb0] sm:$0xff]
    %v4237 = vld [vmem:[#allocation2 + $0xb8] sm:$0xff]
    %v4238 = vld [vmem:[#allocation2 + $0xc0] sm:$0xff]
    %v4239 = vld [vmem:[#allocation2 + $0xc8] sm:$0xff]
    %v4240 = vld [vmem:[#allocation2 + $0xd0] sm:$0xff]
    %v4241 = vld [vmem:[#allocation2 + $0xd8] sm:$0xff]
    %v4242 = vld [vmem:[#allocation2 + $0xe0] sm:$0xff]
    %v4243 = vld [vmem:[#allocation2 + $0xe8] sm:$0xff]
    %v4244 = vld [vmem:[#allocation2 + $0xf0] sm:$0xff]
    %v4245 = vld [vmem:[#allocation2 + $0xf8] sm:$0xff]
    %v4246 = vld [vmem:[#allocation2 + $0x100] sm:$0xff]
    %v4247 = vld [vmem:[#allocation2 + $0x108] sm:$0xff]
    %v4248 = vld [vmem:[#allocation2 + $0x110] sm:$0xff]
    %v4249 = vld [vmem:[#allocation2 + $0x118] sm:$0xff]
    %v4250 = vld [vmem:[#allocation2 + $0x120] sm:$0xff]
    %v4251 = vld [vmem:[#allocation2 + $0x128] sm:$0xff]
    %v4252 = vld [vmem:[#allocation2 + $0x130] sm:$0xff]
    %v4253 = vld [vmem:[#allocation2 + $0x138] sm:$0xff]
    %v4254 = vld [vmem:[#allocation2 + $0x140] sm:$0xff]
    %v4255 = vld [vmem:[#allocation2 + $0x148] sm:$0xff]
    %v4256 = vld [vmem:[#allocation2 + $0x150] sm:$0xff]
    %v4257 = vld [vmem:[#allocation2 + $0x158] sm:$0xff]
    %v4258 = vld [vmem:[#allocation2 + $0x160] sm:$0xff]
    %v4259 = vld [vmem:[#allocation2 + $0x168] sm:$0xff]
    %v4260 = vld [vmem:[#allocation2 + $0x170] sm:$0xff]
    %v4261 = vld [vmem:[#allocation2 + $0x178] sm:$0xff]
    %v4262 = vld [vmem:[#allocation2 + $0x180] sm:$0xff]
    %v4263 = vld [vmem:[#allocation2 + $0x188] sm:$0xff]
    %v4264 = vld [vmem:[#allocation2 + $0x190] sm:$0xff]
    %v4265 = vld [vmem:[#allocation2 + $0x198] sm:$0xff]
    %v4266 = vld [vmem:[#allocation2 + $0x1a0] sm:$0xff]
    %v4267 = vld [vmem:[#allocation2 + $0x1a8] sm:$0xff]
    %v4268 = vld [vmem:[#allocation2 + $0x1b0] sm:$0xff]
    %v4269 = vld [vmem:[#allocation2 + $0x1b8] sm:$0xff]
    %v4270 = vld [vmem:[#allocation2 + $0x1c0] sm:$0xff]
    %v4271 = vld [vmem:[#allocation2 + $0x1c8] sm:$0xff]
    %v4272 = vld [vmem:[#allocation2 + $0x1d0] sm:$0xff]
    %v4273 = vld [vmem:[#allocation2 + $0x1d8] sm:$0xff]
    %v4274 = vld [vmem:[#allocation2 + $0x1e0] sm:$0xff]
    %v4275 = vld [vmem:[#allocation2 + $0x1e8] sm:$0xff]
    %v4276 = vld [vmem:[#allocation2 + $0x1f0] sm:$0xff]
    %v4277 = vld [vmem:[#allocation2 + $0x1f8] sm:$0xff]
    %v4278 = vld [vmem:[#allocation2 + $0x200] sm:$0xff]
    %v4279 = vld [vmem:[#allocation2 + $0x208] sm:$0xff]
    %v4280 = vld [vmem:[#allocation2 + $0x210] sm:$0xff]
    %v4281 = vld [vmem:[#allocation2 + $0x218] sm:$0xff]
    %v4282 = vld [vmem:[#allocation2 + $0x220] sm:$0xff]
    %v4283 = vld [vmem:[#allocation2 + $0x228] sm:$0xff]
    %v4284 = vld [vmem:[#allocation2 + $0x230] sm:$0xff]
    %v4285 = vld [vmem:[#allocation2 + $0x238] sm:$0xff]
    %v4286 = vld [vmem:[#allocation2 + $0x240] sm:$0xff]
    %v4287 = vld [vmem:[#allocation2 + $0x248] sm:$0xff]
    %v4288 = vld [vmem:[#allocation2 + $0x250] sm:$0xff]
    %v4289 = vld [vmem:[#allocation2 + $0x258] sm:$0xff]
    %v4290 = vld [vmem:[#allocation2 + $0x260] sm:$0xff]
    %v4291 = vld [vmem:[#allocation2 + $0x268] sm:$0xff]
    %v4292 = vld [vmem:[#allocation2 + $0x270] sm:$0xff]
    %v4293 = vld [vmem:[#allocation2 + $0x278] sm:$0xff]
    %v4294 = vld [vmem:[#allocation2 + $0x280] sm:$0xff]
    %v4295 = vld [vmem:[#allocation2 + $0x288] sm:$0xff]
    %v4296 = vld [vmem:[#allocation2 + $0x290] sm:$0xff]
    %v4297 = vld [vmem:[#allocation2 + $0x298] sm:$0xff]
    %v4298 = vpack.c.bf16 %v4218, %v4217
    %v4299 = vpack.c.bf16 %v4220, %v4219
    %v4300 = vpack.c.bf16 %v4222, %v4221
    %v4301 = vpack.c.bf16 %v4224, %v4223
    %v4302 = vpack.c.bf16 %v4226, %v4225
    %v4303 = vpack.c.bf16 %v4228, %v4227
    %v4304 = vpack.c.bf16 %v4230, %v4229
    %v4305 = vpack.c.bf16 %v4232, %v4231
    %v4306 = vpack.c.bf16 %v4234, %v4233
    %v4307 = vpack.c.bf16 %v4236, %v4235
    %v4308 = vpack.c.bf16 %v4238, %v4237
    %v4309 = vpack.c.bf16 %v4240, %v4239
    %v4310 = vpack.c.bf16 %v4242, %v4241
    %v4311 = vpack.c.bf16 %v4244, %v4243
    %v4312 = vpack.c.bf16 %v4246, %v4245
    %v4313 = vpack.c.bf16 %v4248, %v4247
    %v4314 = vpack.c.bf16 %v4250, %v4249
    %v4315 = vpack.c.bf16 %v4252, %v4251
    %v4316 = vpack.c.bf16 %v4254, %v4253
    %v4317 = vpack.c.bf16 %v4256, %v4255
    %v4318 = vpack.c.bf16 %v4258, %v4257
    %v4319 = vpack.c.bf16 %v4260, %v4259
    %v4320 = vpack.c.bf16 %v4262, %v4261
    %v4321 = vpack.c.bf16 %v4264, %v4263
    %v4322 = vpack.c.bf16 %v4266, %v4265
    %v4323 = vpack.c.bf16 %v4268, %v4267
    %v4324 = vpack.c.bf16 %v4270, %v4269
    %v4325 = vpack.c.bf16 %v4272, %v4271
    %v4326 = vpack.c.bf16 %v4274, %v4273
    %v4327 = vpack.c.bf16 %v4276, %v4275
    %v4328 = vpack.c.bf16 %v4278, %v4277
    %v4329 = vpack.c.bf16 %v4280, %v4279
    %v4330 = vpack.c.bf16 %v4282, %v4281
    %v4331 = vpack.c.bf16 %v4284, %v4283
    %v4332 = vpack.c.bf16 %v4286, %v4285
    %v4333 = vpack.c.bf16 %v4288, %v4287
    %v4334 = vpack.c.bf16 %v4290, %v4289
    %v4335 = vpack.c.bf16 %v4292, %v4291
    %v4336 = vpack.c.bf16 %v4294, %v4293
    %v4337 = vpack.c.bf16 %v4296, %v4295
    %v4338 = vpack.c.bf16 %v4297, %v4297
    %s4339 = scalar_lea.vmem %s2, 64
    %v4340 = vld [vmem:[%s4339] sm:$0xf]
    %v4341 = vld [vmem:[%s4339 + $0x4] sm:$0xf]
    %v4342 = vld [vmem:[%s4339 + $0x8] sm:$0xf]
    %v4343 = vld [vmem:[%s4339 + $0xc] sm:$0xf]
    %v4348 = vunpack.c.l.b16 %v4340
    %v4349 = vunpack.c.l.b16 %v4341
    %v4350 = vunpack.c.l.b16 %v4342
    %v4351 = vunpack.c.l.b16 %v4343
    %v4352 = vpack.c.b16 %v4349, %v4348
    %v4353 = vpack.c.b16 %v4351, %v4350
    %v4357 = vsel %vm1480, %v4298, 0
    %v4360 = vsel %vm1480, %v4299, 0
    %v4363 = vsel %vm1480, %v4300, 0
    %v4366 = vsel %vm1480, %v4301, 0
    %v4369 = vsel %vm1480, %v4302, 0
    %v4372 = vsel %vm1480, %v4303, 0
    %v4375 = vsel %vm1480, %v4304, 0
    %v4378 = vsel %vm1480, %v4305, 0
    %v4381 = vsel %vm1480, %v4306, 0
    %v4384 = vsel %vm1480, %v4307, 0
    %v4387 = vsel %vm1480, %v4308, 0
    %v4390 = vsel %vm1480, %v4309, 0
    %v4393 = vsel %vm1480, %v4310, 0
    %v4396 = vsel %vm1480, %v4311, 0
    %v4399 = vsel %vm1480, %v4312, 0
    %v4402 = vsel %vm1480, %v4313, 0
    %v4405 = vsel %vm1480, %v4314, 0
    %v4408 = vsel %vm1480, %v4315, 0
    %v4411 = vsel %vm1480, %v4316, 0
    %v4414 = vsel %vm1480, %v4317, 0
    %v4417 = vsel %vm1480, %v4318, 0
    %v4420 = vsel %vm1480, %v4319, 0
    %v4423 = vsel %vm1480, %v4320, 0
    %v4426 = vsel %vm1480, %v4321, 0
    %v4429 = vsel %vm1480, %v4322, 0
    %v4432 = vsel %vm1480, %v4323, 0
    %v4435 = vsel %vm1480, %v4324, 0
    %v4438 = vsel %vm1480, %v4325, 0
    %v4441 = vsel %vm1480, %v4326, 0
    %v4444 = vsel %vm1480, %v4327, 0
    %v4447 = vsel %vm1480, %v4328, 0
    %v4450 = vsel %vm1480, %v4329, 0
    %v4453 = vsel %vm1480, %v4330, 0
    %v4456 = vsel %vm1480, %v4331, 0
    %v4459 = vsel %vm1480, %v4332, 0
    %v4462 = vsel %vm1480, %v4333, 0
    %v4465 = vsel %vm1480, %v4334, 0
    %v4468 = vsel %vm1480, %v4335, 0
    %v4471 = vsel %vm1480, %v4336, 0
    %v4474 = vsel %vm1480, %v4337, 0
    %v4477 = vsel %vm1480, %v4338, 0
    %4479 = vmatprep.subr.bf16.mxu0 0
    %4480 = vmatpush1.bf16.msra.mxu0 %v4352
    %4481 = vmatprep.subr.bf16.mxu0 0
    %4482 = vmatpush1.bf16.msra.mxu0 %v4353
    %4483 = vmatprep.subr.bf16.mxu0 0
    %4484 = vmatpush1.bf16.msra.mxu0 0
    %4485 = vmatprep.subr.bf16.mxu0 0
    %4486 = vmatpush1.bf16.msra.mxu0 0
    %4487 = vmatprep.subr.bf16.mxu0 0
    %4488 = vmatpush1.bf16.msra.mxu0 0
    %4489 = vmatprep.subr.bf16.mxu0 0
    %4490 = vmatpush1.bf16.msra.mxu0 0
    %4491 = vmatprep.subr.bf16.mxu0 0
    %4492 = vmatpush1.bf16.msra.mxu0 0
    %4493 = vmatprep.subr.bf16.mxu0 0
    %4494 = vmatpush1.bf16.msra.mxu0 0
    %4495 = vmatprep.subr.bf16.mxu0 0
    %4496 = vmatpush1.bf16.msra.mxu0 0
    %4497 = vmatprep.subr.bf16.mxu0 0
    %4498 = vmatpush1.bf16.msra.mxu0 0
    %4499 = vmatprep.subr.bf16.mxu0 0
    %4500 = vmatpush1.bf16.msra.mxu0 0
    %4501 = vmatprep.subr.bf16.mxu0 0
    %4502 = vmatpush1.bf16.msra.mxu0 0
    %4503 = vmatprep.subr.bf16.mxu0 0
    %4504 = vmatpush1.bf16.msra.mxu0 0
    %4505 = vmatprep.subr.bf16.mxu0 0
    %4506 = vmatpush1.bf16.msra.mxu0 0
    %4507 = vmatprep.subr.bf16.mxu0 0
    %4508 = vmatpush1.bf16.msra.mxu0 0
    %4509 = vmatprep.subr.bf16.mxu0 0
    %4510 = vmatpush1.bf16.msra.mxu0 0
    %4511 = vmatprep.mubr.bf16.mxu0 0
    %4512 = vmatmul.mubr.bf16.gmra.mrb[0].mxu0 %v4357
    %v4513 = vpop.f32.mrb[0].mxu0
    %v4514 = vadd.f32 0.0, %v4513
    %v4515 = vpop.f32.mrb[0].mxu0
    %v4516 = vpop.f32.mrb[0].mxu0
    %v4517 = vadd.f32 0.0, %v4516
    %v4518 = vpop.f32.mrb[0].mxu0
    %4519 = vmatprep.mubr.bf16.mxu0 0
    %4520 = vmatmul.mubr.bf16.gmra.mrb[0].mxu0 %v4360
    %v4521 = vpop.f32.mrb[0].mxu0
    %v4522 = vadd.f32 0.0, %v4521
    %v4523 = vpop.f32.mrb[0].mxu0
    %v4524 = vpop.f32.mrb[0].mxu0
    %v4525 = vadd.f32 0.0, %v4524
    %v4526 = vpop.f32.mrb[0].mxu0
    %4527 = vmatprep.mubr.bf16.mxu0 0
    %4528 = vmatmul.mubr.bf16.gmra.mrb[0].mxu0 %v4363
    %v4529 = vpop.f32.mrb[0].mxu0
    %v4530 = vadd.f32 0.0, %v4529
    %v4531 = vpop.f32.mrb[0].mxu0
    %v4532 = vpop.f32.mrb[0].mxu0
    %v4533 = vadd.f32 0.0, %v4532
    %v4534 = vpop.f32.mrb[0].mxu0
    %4535 = vmatprep.mubr.bf16.mxu0 0
    %4536 = vmatmul.mubr.bf16.gmra.mrb[0].mxu0 %v4366
    %v4537 = vpop.f32.mrb[0].mxu0
    %v4538 = vadd.f32 0.0, %v4537
    %v4539 = vpop.f32.mrb[0].mxu0
    %v4540 = vpop.f32.mrb[0].mxu0
    %v4541 = vadd.f32 0.0, %v4540
    %v4542 = vpop.f32.mrb[0].mxu0
    %4543 = vmatprep.mubr.bf16.mxu0 0
    %4544 = vmatmul.mubr.bf16.gmra.mrb[0].mxu0 %v4369
    %v4545 = vpop.f32.mrb[0].mxu0
    %v4546 = vadd.f32 0.0, %v4545
    %v4547 = vpop.f32.mrb[0].mxu0
    %v4548 = vpop.f32.mrb[0].mxu0
    %v4549 = vadd.f32 0.0, %v4548
    %v4550 = vpop.f32.mrb[0].mxu0
    %4551 = vmatprep.mubr.bf16.mxu0 0
    %4552 = vmatmul.mubr.bf16.gmra.mrb[0].mxu0 %v4372
    %v4553 = vpop.f32.mrb[0].mxu0
    %v4554 = vadd.f32 0.0, %v4553
    %v4555 = vpop.f32.mrb[0].mxu0
    %v4556 = vpop.f32.mrb[0].mxu0
    %v4557 = vadd.f32 0.0, %v4556
    %v4558 = vpop.f32.mrb[0].mxu0
    %4559 = vmatprep.mubr.bf16.mxu0 0
    %4560 = vmatmul.mubr.bf16.gmra.mrb[0].mxu0 %v4375
    %v4561 = vpop.f32.mrb[0].mxu0
    %v4562 = vadd.f32 0.0, %v4561
    %v4563 = vpop.f32.mrb[0].mxu0
    %v4564 = vpop.f32.mrb[0].mxu0
    %v4565 = vadd.f32 0.0, %v4564
    %v4566 = vpop.f32.mrb[0].mxu0
    %4567 = vmatprep.mubr.bf16.mxu0 0
    %4568 = vmatmul.mubr.bf16.gmra.mrb[0].mxu0 %v4378
    %v4569 = vpop.f32.mrb[0].mxu0
    %v4570 = vadd.f32 0.0, %v4569
    %v4571 = vpop.f32.mrb[0].mxu0
    %v4572 = vpop.f32.mrb[0].mxu0
    %v4573 = vadd.f32 0.0, %v4572
    %v4574 = vpop.f32.mrb[0].mxu0
    %4575 = vmatprep.mubr.bf16.mxu0 0
    %4576 = vmatmul.mubr.bf16.gmra.mrb[0].mxu0 %v4381
    %v4577 = vpop.f32.mrb[0].mxu0
    %v4578 = vadd.f32 0.0, %v4577
    %v4579 = vpop.f32.mrb[0].mxu0
    %v4580 = vpop.f32.mrb[0].mxu0
    %v4581 = vadd.f32 0.0, %v4580
    %v4582 = vpop.f32.mrb[0].mxu0
    %4583 = vmatprep.mubr.bf16.mxu0 0
    %4584 = vmatmul.mubr.bf16.gmra.mrb[0].mxu0 %v4384
    %v4585 = vpop.f32.mrb[0].mxu0
    %v4586 = vadd.f32 0.0, %v4585
    %v4587 = vpop.f32.mrb[0].mxu0
    %v4588 = vpop.f32.mrb[0].mxu0
    %v4589 = vadd.f32 0.0, %v4588
    %v4590 = vpop.f32.mrb[0].mxu0
    %4591 = vmatprep.mubr.bf16.mxu0 0
    %4592 = vmatmul.mubr.bf16.gmra.mrb[0].mxu0 %v4387
    %v4593 = vpop.f32.mrb[0].mxu0
    %v4594 = vadd.f32 0.0, %v4593
    %v4595 = vpop.f32.mrb[0].mxu0
    %v4596 = vpop.f32.mrb[0].mxu0
    %v4597 = vadd.f32 0.0, %v4596
    %v4598 = vpop.f32.mrb[0].mxu0
    %4599 = vmatprep.mubr.bf16.mxu0 0
    %4600 = vmatmul.mubr.bf16.gmra.mrb[0].mxu0 %v4390
    %v4601 = vpop.f32.mrb[0].mxu0
    %v4602 = vadd.f32 0.0, %v4601
    %v4603 = vpop.f32.mrb[0].mxu0
    %v4604 = vpop.f32.mrb[0].mxu0
    %v4605 = vadd.f32 0.0, %v4604
    %v4606 = vpop.f32.mrb[0].mxu0
    %4607 = vmatprep.mubr.bf16.mxu0 0
    %4608 = vmatmul.mubr.bf16.gmra.mrb[0].mxu0 %v4393
    %v4609 = vpop.f32.mrb[0].mxu0
    %v4610 = vadd.f32 0.0, %v4609
    %v4611 = vpop.f32.mrb[0].mxu0
    %v4612 = vpop.f32.mrb[0].mxu0
    %v4613 = vadd.f32 0.0, %v4612
    %v4614 = vpop.f32.mrb[0].mxu0
    %4615 = vmatprep.mubr.bf16.mxu0 0
    %4616 = vmatmul.mubr.bf16.gmra.mrb[0].mxu0 %v4396
    %v4617 = vpop.f32.mrb[0].mxu0
    %v4618 = vadd.f32 0.0, %v4617
    %v4619 = vpop.f32.mrb[0].mxu0
    %v4620 = vpop.f32.mrb[0].mxu0
    %v4621 = vadd.f32 0.0, %v4620
    %v4622 = vpop.f32.mrb[0].mxu0
    %4623 = vmatprep.mubr.bf16.mxu0 0
    %4624 = vmatmul.mubr.bf16.gmra.mrb[0].mxu0 %v4399
    %v4625 = vpop.f32.mrb[0].mxu0
    %v4626 = vadd.f32 0.0, %v4625
    %v4627 = vpop.f32.mrb[0].mxu0
    %v4628 = vpop.f32.mrb[0].mxu0
    %v4629 = vadd.f32 0.0, %v4628
    %v4630 = vpop.f32.mrb[0].mxu0
    %4631 = vmatprep.mubr.bf16.mxu0 0
    %4632 = vmatmul.mubr.bf16.gmra.mrb[0].mxu0 %v4402
    %v4633 = vpop.f32.mrb[0].mxu0
    %v4634 = vadd.f32 0.0, %v4633
    %v4635 = vpop.f32.mrb[0].mxu0
    %v4636 = vpop.f32.mrb[0].mxu0
    %v4637 = vadd.f32 0.0, %v4636
    %v4638 = vpop.f32.mrb[0].mxu0
    %4639 = vmatprep.mubr.bf16.mxu0 0
    %4640 = vmatmul.mubr.bf16.gmra.mrb[0].mxu0 %v4405
    %v4641 = vpop.f32.mrb[0].mxu0
    %v4642 = vadd.f32 0.0, %v4641
    %v4643 = vpop.f32.mrb[0].mxu0
    %v4644 = vpop.f32.mrb[0].mxu0
    %v4645 = vadd.f32 0.0, %v4644
    %v4646 = vpop.f32.mrb[0].mxu0
    %4647 = vmatprep.mubr.bf16.mxu0 0
    %4648 = vmatmul.mubr.bf16.gmra.mrb[0].mxu0 %v4408
    %v4649 = vpop.f32.mrb[0].mxu0
    %v4650 = vadd.f32 0.0, %v4649
    %v4651 = vpop.f32.mrb[0].mxu0
    %v4652 = vpop.f32.mrb[0].mxu0
    %v4653 = vadd.f32 0.0, %v4652
    %v4654 = vpop.f32.mrb[0].mxu0
    %4655 = vmatprep.mubr.bf16.mxu0 0
    %4656 = vmatmul.mubr.bf16.gmra.mrb[0].mxu0 %v4411
    %v4657 = vpop.f32.mrb[0].mxu0
    %v4658 = vadd.f32 0.0, %v4657
    %v4659 = vpop.f32.mrb[0].mxu0
    %v4660 = vpop.f32.mrb[0].mxu0
    %v4661 = vadd.f32 0.0, %v4660
    %v4662 = vpop.f32.mrb[0].mxu0
    %4663 = vmatprep.mubr.bf16.mxu0 0
    %4664 = vmatmul.mubr.bf16.gmra.mrb[0].mxu0 %v4414
    %v4665 = vpop.f32.mrb[0].mxu0
    %v4666 = vadd.f32 0.0, %v4665
    %v4667 = vpop.f32.mrb[0].mxu0
    %v4668 = vpop.f32.mrb[0].mxu0
    %v4669 = vadd.f32 0.0, %v4668
    %v4670 = vpop.f32.mrb[0].mxu0
    %4671 = vmatprep.mubr.bf16.mxu0 0
    %4672 = vmatmul.mubr.bf16.gmra.mrb[0].mxu0 %v4417
    %v4673 = vpop.f32.mrb[0].mxu0
    %v4674 = vadd.f32 0.0, %v4673
    %v4675 = vpop.f32.mrb[0].mxu0
    %v4676 = vpop.f32.mrb[0].mxu0
    %v4677 = vadd.f32 0.0, %v4676
    %v4678 = vpop.f32.mrb[0].mxu0
    %4679 = vmatprep.mubr.bf16.mxu0 0
    %4680 = vmatmul.mubr.bf16.gmra.mrb[0].mxu0 %v4420
    %v4681 = vpop.f32.mrb[0].mxu0
    %v4682 = vadd.f32 0.0, %v4681
    %v4683 = vpop.f32.mrb[0].mxu0
    %v4684 = vpop.f32.mrb[0].mxu0
    %v4685 = vadd.f32 0.0, %v4684
    %v4686 = vpop.f32.mrb[0].mxu0
    %4687 = vmatprep.mubr.bf16.mxu0 0
    %4688 = vmatmul.mubr.bf16.gmra.mrb[0].mxu0 %v4423
    %v4689 = vpop.f32.mrb[0].mxu0
    %v4690 = vadd.f32 0.0, %v4689
    %v4691 = vpop.f32.mrb[0].mxu0
    %v4692 = vpop.f32.mrb[0].mxu0
    %v4693 = vadd.f32 0.0, %v4692
    %v4694 = vpop.f32.mrb[0].mxu0
    %4695 = vmatprep.mubr.bf16.mxu0 0
    %4696 = vmatmul.mubr.bf16.gmra.mrb[0].mxu0 %v4426
    %v4697 = vpop.f32.mrb[0].mxu0
    %v4698 = vadd.f32 0.0, %v4697
    %v4699 = vpop.f32.mrb[0].mxu0
    %v4700 = vpop.f32.mrb[0].mxu0
    %v4701 = vadd.f32 0.0, %v4700
    %v4702 = vpop.f32.mrb[0].mxu0
    %4703 = vmatprep.mubr.bf16.mxu0 0
    %4704 = vmatmul.mubr.bf16.gmra.mrb[0].mxu0 %v4429
    %v4705 = vpop.f32.mrb[0].mxu0
    %v4706 = vadd.f32 0.0, %v4705
    %v4707 = vpop.f32.mrb[0].mxu0
    %v4708 = vpop.f32.mrb[0].mxu0
    %v4709 = vadd.f32 0.0, %v4708
    %v4710 = vpop.f32.mrb[0].mxu0
    %4711 = vmatprep.mubr.bf16.mxu0 0
    %4712 = vmatmul.mubr.bf16.gmra.mrb[0].mxu0 %v4432
    %v4713 = vpop.f32.mrb[0].mxu0
    %v4714 = vadd.f32 0.0, %v4713
    %v4715 = vpop.f32.mrb[0].mxu0
    %v4716 = vpop.f32.mrb[0].mxu0
    %v4717 = vadd.f32 0.0, %v4716
    %v4718 = vpop.f32.mrb[0].mxu0
    %4719 = vmatprep.mubr.bf16.mxu0 0
    %4720 = vmatmul.mubr.bf16.gmra.mrb[0].mxu0 %v4435
    %v4721 = vpop.f32.mrb[0].mxu0
    %v4722 = vadd.f32 0.0, %v4721
    %v4723 = vpop.f32.mrb[0].mxu0
    %v4724 = vpop.f32.mrb[0].mxu0
    %v4725 = vadd.f32 0.0, %v4724
    %v4726 = vpop.f32.mrb[0].mxu0
    %4727 = vmatprep.mubr.bf16.mxu0 0
    %4728 = vmatmul.mubr.bf16.gmra.mrb[0].mxu0 %v4438
    %v4729 = vpop.f32.mrb[0].mxu0
    %v4730 = vadd.f32 0.0, %v4729
    %v4731 = vpop.f32.mrb[0].mxu0
    %v4732 = vpop.f32.mrb[0].mxu0
    %v4733 = vadd.f32 0.0, %v4732
    %v4734 = vpop.f32.mrb[0].mxu0
    %4735 = vmatprep.mubr.bf16.mxu0 0
    %4736 = vmatmul.mubr.bf16.gmra.mrb[0].mxu0 %v4441
    %v4737 = vpop.f32.mrb[0].mxu0
    %v4738 = vadd.f32 0.0, %v4737
    %v4739 = vpop.f32.mrb[0].mxu0
    %v4740 = vpop.f32.mrb[0].mxu0
    %v4741 = vadd.f32 0.0, %v4740
    %v4742 = vpop.f32.mrb[0].mxu0
    %4743 = vmatprep.mubr.bf16.mxu0 0
    %4744 = vmatmul.mubr.bf16.gmra.mrb[0].mxu0 %v4444
    %v4745 = vpop.f32.mrb[0].mxu0
    %v4746 = vadd.f32 0.0, %v4745
    %v4747 = vpop.f32.mrb[0].mxu0
    %v4748 = vpop.f32.mrb[0].mxu0
    %v4749 = vadd.f32 0.0, %v4748
    %v4750 = vpop.f32.mrb[0].mxu0
    %4751 = vmatprep.mubr.bf16.mxu0 0
    %4752 = vmatmul.mubr.bf16.gmra.mrb[0].mxu0 %v4447
    %v4753 = vpop.f32.mrb[0].mxu0
    %v4754 = vadd.f32 0.0, %v4753
    %v4755 = vpop.f32.mrb[0].mxu0
    %v4756 = vpop.f32.mrb[0].mxu0
    %v4757 = vadd.f32 0.0, %v4756
    %v4758 = vpop.f32.mrb[0].mxu0
    %4759 = vmatprep.mubr.bf16.mxu0 0
    %4760 = vmatmul.mubr.bf16.gmra.mrb[0].mxu0 %v4450
    %v4761 = vpop.f32.mrb[0].mxu0
    %v4762 = vadd.f32 0.0, %v4761
    %v4763 = vpop.f32.mrb[0].mxu0
    %v4764 = vpop.f32.mrb[0].mxu0
    %v4765 = vadd.f32 0.0, %v4764
    %v4766 = vpop.f32.mrb[0].mxu0
    %4767 = vmatprep.mubr.bf16.mxu0 0
    %4768 = vmatmul.mubr.bf16.gmra.mrb[0].mxu0 %v4453
    %v4769 = vpop.f32.mrb[0].mxu0
    %v4770 = vadd.f32 0.0, %v4769
    %v4771 = vpop.f32.mrb[0].mxu0
    %v4772 = vpop.f32.mrb[0].mxu0
    %v4773 = vadd.f32 0.0, %v4772
    %v4774 = vpop.f32.mrb[0].mxu0
    %4775 = vmatprep.mubr.bf16.mxu0 0
    %4776 = vmatmul.mubr.bf16.gmra.mrb[0].mxu0 %v4456
    %v4777 = vpop.f32.mrb[0].mxu0
    %v4778 = vadd.f32 0.0, %v4777
    %v4779 = vpop.f32.mrb[0].mxu0
    %v4780 = vpop.f32.mrb[0].mxu0
    %v4781 = vadd.f32 0.0, %v4780
    %v4782 = vpop.f32.mrb[0].mxu0
    %4783 = vmatprep.mubr.bf16.mxu0 0
    %4784 = vmatmul.mubr.bf16.gmra.mrb[0].mxu0 %v4459
    %v4785 = vpop.f32.mrb[0].mxu0
    %v4786 = vadd.f32 0.0, %v4785
    %v4787 = vpop.f32.mrb[0].mxu0
    %v4788 = vpop.f32.mrb[0].mxu0
    %v4789 = vadd.f32 0.0, %v4788
    %v4790 = vpop.f32.mrb[0].mxu0
    %4791 = vmatprep.mubr.bf16.mxu0 0
    %4792 = vmatmul.mubr.bf16.gmra.mrb[0].mxu0 %v4462
    %v4793 = vpop.f32.mrb[0].mxu0
    %v4794 = vadd.f32 0.0, %v4793
    %v4795 = vpop.f32.mrb[0].mxu0
    %v4796 = vpop.f32.mrb[0].mxu0
    %v4797 = vadd.f32 0.0, %v4796
    %v4798 = vpop.f32.mrb[0].mxu0
    %4799 = vmatprep.mubr.bf16.mxu0 0
    %4800 = vmatmul.mubr.bf16.gmra.mrb[0].mxu0 %v4465
    %v4801 = vpop.f32.mrb[0].mxu0
    %v4802 = vadd.f32 0.0, %v4801
    %v4803 = vpop.f32.mrb[0].mxu0
    %v4804 = vpop.f32.mrb[0].mxu0
    %v4805 = vadd.f32 0.0, %v4804
    %v4806 = vpop.f32.mrb[0].mxu0
    %4807 = vmatprep.mubr.bf16.mxu0 0
    %4808 = vmatmul.mubr.bf16.gmra.mrb[0].mxu0 %v4468
    %v4809 = vpop.f32.mrb[0].mxu0
    %v4810 = vadd.f32 0.0, %v4809
    %v4811 = vpop.f32.mrb[0].mxu0
    %v4812 = vpop.f32.mrb[0].mxu0
    %v4813 = vadd.f32 0.0, %v4812
    %v4814 = vpop.f32.mrb[0].mxu0
    %4815 = vmatprep.mubr.bf16.mxu0 0
    %4816 = vmatmul.mubr.bf16.gmra.mrb[0].mxu0 %v4471
    %v4817 = vpop.f32.mrb[0].mxu0
    %v4818 = vadd.f32 0.0, %v4817
    %v4819 = vpop.f32.mrb[0].mxu0
    %v4820 = vpop.f32.mrb[0].mxu0
    %v4821 = vadd.f32 0.0, %v4820
    %v4822 = vpop.f32.mrb[0].mxu0
    %4823 = vmatprep.mubr.bf16.mxu0 0
    %4824 = vmatmul.mubr.bf16.gmra.mrb[0].mxu0 %v4474
    %v4825 = vpop.f32.mrb[0].mxu0
    %v4826 = vadd.f32 0.0, %v4825
    %v4827 = vpop.f32.mrb[0].mxu0
    %v4828 = vpop.f32.mrb[0].mxu0
    %v4829 = vadd.f32 0.0, %v4828
    %v4830 = vpop.f32.mrb[0].mxu0
    %4831 = vmatprep.mubr.bf16.mxu0 0
    %4832 = vmatmul.mubr.bf16.gmra.mrb[0].mxu0 %v4477
    %v4833 = vpop.f32.mrb[0].mxu0
    %v4834 = vadd.f32 0.0, %v4833
    %v4835 = vpop.f32.mrb[0].mxu0
    %v4836 = vpop.f32.mrb[0].mxu0
    %v4837 = vpop.f32.mrb[0].mxu0
    %4838 = vdwg.mxu0
    %v4839 = vadd.f32 %v4136, %v4514
    %v4840 = vadd.f32 %v4137, %v4517
    %v4841 = vadd.f32 %v4138, %v4522
    %v4842 = vadd.f32 %v4139, %v4525
    %v4843 = vadd.f32 %v4140, %v4530
    %v4844 = vadd.f32 %v4141, %v4533
    %v4845 = vadd.f32 %v4142, %v4538
    %v4846 = vadd.f32 %v4143, %v4541
    %v4847 = vadd.f32 %v4144, %v4546
    %v4848 = vadd.f32 %v4145, %v4549
    %v4849 = vadd.f32 %v4146, %v4554
    %v4850 = vadd.f32 %v4147, %v4557
    %v4851 = vadd.f32 %v4148, %v4562
    %v4852 = vadd.f32 %v4149, %v4565
    %v4853 = vadd.f32 %v4150, %v4570
    %v4854 = vadd.f32 %v4151, %v4573
    %v4855 = vadd.f32 %v4152, %v4578
    %v4856 = vadd.f32 %v4153, %v4581
    %v4857 = vadd.f32 %v4154, %v4586
    %v4858 = vadd.f32 %v4155, %v4589
    %v4859 = vadd.f32 %v4156, %v4594
    %v4860 = vadd.f32 %v4157, %v4597
    %v4861 = vadd.f32 %v4158, %v4602
    %v4862 = vadd.f32 %v4159, %v4605
    %v4863 = vadd.f32 %v4160, %v4610
    %v4864 = vadd.f32 %v4161, %v4613
    %v4865 = vadd.f32 %v4162, %v4618
    %v4866 = vadd.f32 %v4163, %v4621
    %v4867 = vadd.f32 %v4164, %v4626
    %v4868 = vadd.f32 %v4165, %v4629
    %v4869 = vadd.f32 %v4166, %v4634
    %v4870 = vadd.f32 %v4167, %v4637
    %v4871 = vadd.f32 %v4168, %v4642
    %v4872 = vadd.f32 %v4169, %v4645
    %v4873 = vadd.f32 %v4170, %v4650
    %v4874 = vadd.f32 %v4171, %v4653
    %v4875 = vadd.f32 %v4172, %v4658
    %v4876 = vadd.f32 %v4173, %v4661
    %v4877 = vadd.f32 %v4174, %v4666
    %v4878 = vadd.f32 %v4175, %v4669
    %v4879 = vadd.f32 %v4176, %v4674
    %v4880 = vadd.f32 %v4177, %v4677
    %v4881 = vadd.f32 %v4178, %v4682
    %v4882 = vadd.f32 %v4179, %v4685
    %v4883 = vadd.f32 %v4180, %v4690
    %v4884 = vadd.f32 %v4181, %v4693
    %v4885 = vadd.f32 %v4182, %v4698
    %v4886 = vadd.f32 %v4183, %v4701
    %v4887 = vadd.f32 %v4184, %v4706
    %v4888 = vadd.f32 %v4185, %v4709
    %v4889 = vadd.f32 %v4186, %v4714
    %v4890 = vadd.f32 %v4187, %v4717
    %v4891 = vadd.f32 %v4188, %v4722
    %v4892 = vadd.f32 %v4189, %v4725
    %v4893 = vadd.f32 %v4190, %v4730
    %v4894 = vadd.f32 %v4191, %v4733
    %v4895 = vadd.f32 %v4192, %v4738
    %v4896 = vadd.f32 %v4193, %v4741
    %v4897 = vadd.f32 %v4194, %v4746
    %v4898 = vadd.f32 %v4195, %v4749
    %v4899 = vadd.f32 %v4196, %v4754
    %v4900 = vadd.f32 %v4197, %v4757
    %v4901 = vadd.f32 %v4198, %v4762
    %v4902 = vadd.f32 %v4199, %v4765
    %v4903 = vadd.f32 %v4200, %v4770
    %v4904 = vadd.f32 %v4201, %v4773
    %v4905 = vadd.f32 %v4202, %v4778
    %v4906 = vadd.f32 %v4203, %v4781
    %v4907 = vadd.f32 %v4204, %v4786
    %v4908 = vadd.f32 %v4205, %v4789
    %v4909 = vadd.f32 %v4206, %v4794
    %v4910 = vadd.f32 %v4207, %v4797
    %v4911 = vadd.f32 %v4208, %v4802
    %v4912 = vadd.f32 %v4209, %v4805
    %v4913 = vadd.f32 %v4210, %v4810
    %v4914 = vadd.f32 %v4211, %v4813
    %v4915 = vadd.f32 %v4212, %v4818
    %v4916 = vadd.f32 %v4213, %v4821
    %v4917 = vadd.f32 %v4214, %v4826
    %v4918 = vadd.f32 %v4215, %v4829
    %v4919 = vadd.f32 %v4216, %v4834
    %v4920 = vld [vmem:[#allocation2 + $0x19] sm:$0xff]
    %v4921 = vld [vmem:[#allocation2 + $0x21] sm:$0xff]
    %v4922 = vld [vmem:[#allocation2 + $0x29] sm:$0xff]
    %v4923 = vld [vmem:[#allocation2 + $0x31] sm:$0xff]
    %v4924 = vld [vmem:[#allocation2 + $0x39] sm:$0xff]
    %v4925 = vld [vmem:[#allocation2 + $0x41] sm:$0xff]
    %v4926 = vld [vmem:[#allocation2 + $0x49] sm:$0xff]
    %v4927 = vld [vmem:[#allocation2 + $0x51] sm:$0xff]
    %v4928 = vld [vmem:[#allocation2 + $0x59] sm:$0xff]
    %v4929 = vld [vmem:[#allocation2 + $0x61] sm:$0xff]
    %v4930 = vld [vmem:[#allocation2 + $0x69] sm:$0xff]
    %v4931 = vld [vmem:[#allocation2 + $0x71] sm:$0xff]
    %v4932 = vld [vmem:[#allocation2 + $0x79] sm:$0xff]
    %v4933 = vld [vmem:[#allocation2 + $0x81] sm:$0xff]
    %v4934 = vld [vmem:[#allocation2 + $0x89] sm:$0xff]
    %v4935 = vld [vmem:[#allocation2 + $0x91] sm:$0xff]
    %v4936 = vld [vmem:[#allocation2 + $0x99] sm:$0xff]
    %v4937 = vld [vmem:[#allocation2 + $0xa1] sm:$0xff]
    %v4938 = vld [vmem:[#allocation2 + $0xa9] sm:$0xff]
    %v4939 = vld [vmem:[#allocation2 + $0xb1] sm:$0xff]
    %v4940 = vld [vmem:[#allocation2 + $0xb9] sm:$0xff]
    %v4941 = vld [vmem:[#allocation2 + $0xc1] sm:$0xff]
    %v4942 = vld [vmem:[#allocation2 + $0xc9] sm:$0xff]
    %v4943 = vld [vmem:[#allocation2 + $0xd1] sm:$0xff]
    %v4944 = vld [vmem:[#allocation2 + $0xd9] sm:$0xff]
    %v4945 = vld [vmem:[#allocation2 + $0xe1] sm:$0xff]
    %v4946 = vld [vmem:[#allocation2 + $0xe9] sm:$0xff]
    %v4947 = vld [vmem:[#allocation2 + $0xf1] sm:$0xff]
    %v4948 = vld [vmem:[#allocation2 + $0xf9] sm:$0xff]
    %v4949 = vld [vmem:[#allocation2 + $0x101] sm:$0xff]
    %v4950 = vld [vmem:[#allocation2 + $0x109] sm:$0xff]
    %v4951 = vld [vmem:[#allocation2 + $0x111] sm:$0xff]
    %v4952 = vld [vmem:[#allocation2 + $0x119] sm:$0xff]
    %v4953 = vld [vmem:[#allocation2 + $0x121] sm:$0xff]
    %v4954 = vld [vmem:[#allocation2 + $0x129] sm:$0xff]
    %v4955 = vld [vmem:[#allocation2 + $0x131] sm:$0xff]
    %v4956 = vld [vmem:[#allocation2 + $0x139] sm:$0xff]
    %v4957 = vld [vmem:[#allocation2 + $0x141] sm:$0xff]
    %v4958 = vld [vmem:[#allocation2 + $0x149] sm:$0xff]
    %v4959 = vld [vmem:[#allocation2 + $0x151] sm:$0xff]
    %v4960 = vld [vmem:[#allocation2 + $0x159] sm:$0xff]
    %v4961 = vld [vmem:[#allocation2 + $0x161] sm:$0xff]
    %v4962 = vld [vmem:[#allocation2 + $0x169] sm:$0xff]
    %v4963 = vld [vmem:[#allocation2 + $0x171] sm:$0xff]
    %v4964 = vld [vmem:[#allocation2 + $0x179] sm:$0xff]
    %v4965 = vld [vmem:[#allocation2 + $0x181] sm:$0xff]
    %v4966 = vld [vmem:[#allocation2 + $0x189] sm:$0xff]
    %v4967 = vld [vmem:[#allocation2 + $0x191] sm:$0xff]
    %v4968 = vld [vmem:[#allocation2 + $0x199] sm:$0xff]
    %v4969 = vld [vmem:[#allocation2 + $0x1a1] sm:$0xff]
    %v4970 = vld [vmem:[#allocation2 + $0x1a9] sm:$0xff]
    %v4971 = vld [vmem:[#allocation2 + $0x1b1] sm:$0xff]
    %v4972 = vld [vmem:[#allocation2 + $0x1b9] sm:$0xff]
    %v4973 = vld [vmem:[#allocation2 + $0x1c1] sm:$0xff]
    %v4974 = vld [vmem:[#allocation2 + $0x1c9] sm:$0xff]
    %v4975 = vld [vmem:[#allocation2 + $0x1d1] sm:$0xff]
    %v4976 = vld [vmem:[#allocation2 + $0x1d9] sm:$0xff]
    %v4977 = vld [vmem:[#allocation2 + $0x1e1] sm:$0xff]
    %v4978 = vld [vmem:[#allocation2 + $0x1e9] sm:$0xff]
    %v4979 = vld [vmem:[#allocation2 + $0x1f1] sm:$0xff]
    %v4980 = vld [vmem:[#allocation2 + $0x1f9] sm:$0xff]
    %v4981 = vld [vmem:[#allocation2 + $0x201] sm:$0xff]
    %v4982 = vld [vmem:[#allocation2 + $0x209] sm:$0xff]
    %v4983 = vld [vmem:[#allocation2 + $0x211] sm:$0xff]
    %v4984 = vld [vmem:[#allocation2 + $0x219] sm:$0xff]
    %v4985 = vld [vmem:[#allocation2 + $0x221] sm:$0xff]
    %v4986 = vld [vmem:[#allocation2 + $0x229] sm:$0xff]
    %v4987 = vld [vmem:[#allocation2 + $0x231] sm:$0xff]
    %v4988 = vld [vmem:[#allocation2 + $0x239] sm:$0xff]
    %v4989 = vld [vmem:[#allocation2 + $0x241] sm:$0xff]
    %v4990 = vld [vmem:[#allocation2 + $0x249] sm:$0xff]
    %v4991 = vld [vmem:[#allocation2 + $0x251] sm:$0xff]
    %v4992 = vld [vmem:[#allocation2 + $0x259] sm:$0xff]
    %v4993 = vld [vmem:[#allocation2 + $0x261] sm:$0xff]
    %v4994 = vld [vmem:[#allocation2 + $0x269] sm:$0xff]
    %v4995 = vld [vmem:[#allocation2 + $0x271] sm:$0xff]
    %v4996 = vld [vmem:[#allocation2 + $0x279] sm:$0xff]
    %v4997 = vld [vmem:[#allocation2 + $0x281] sm:$0xff]
    %v4998 = vld [vmem:[#allocation2 + $0x289] sm:$0xff]
    %v4999 = vld [vmem:[#allocation2 + $0x291] sm:$0xff]
    %v5000 = vld [vmem:[#allocation2 + $0x299] sm:$0xff]
    %v5001 = vpack.c.bf16 %v4921, %v4920
    %v5002 = vpack.c.bf16 %v4923, %v4922
    %v5003 = vpack.c.bf16 %v4925, %v4924
    %v5004 = vpack.c.bf16 %v4927, %v4926
    %v5005 = vpack.c.bf16 %v4929, %v4928
    %v5006 = vpack.c.bf16 %v4931, %v4930
    %v5007 = vpack.c.bf16 %v4933, %v4932
    %v5008 = vpack.c.bf16 %v4935, %v4934
    %v5009 = vpack.c.bf16 %v4937, %v4936
    %v5010 = vpack.c.bf16 %v4939, %v4938
    %v5011 = vpack.c.bf16 %v4941, %v4940
    %v5012 = vpack.c.bf16 %v4943, %v4942
    %v5013 = vpack.c.bf16 %v4945, %v4944
    %v5014 = vpack.c.bf16 %v4947, %v4946
    %v5015 = vpack.c.bf16 %v4949, %v4948
    %v5016 = vpack.c.bf16 %v4951, %v4950
    %v5017 = vpack.c.bf16 %v4953, %v4952
    %v5018 = vpack.c.bf16 %v4955, %v4954
    %v5019 = vpack.c.bf16 %v4957, %v4956
    %v5020 = vpack.c.bf16 %v4959, %v4958
    %v5021 = vpack.c.bf16 %v4961, %v4960
    %v5022 = vpack.c.bf16 %v4963, %v4962
    %v5023 = vpack.c.bf16 %v4965, %v4964
    %v5024 = vpack.c.bf16 %v4967, %v4966
    %v5025 = vpack.c.bf16 %v4969, %v4968
    %v5026 = vpack.c.bf16 %v4971, %v4970
    %v5027 = vpack.c.bf16 %v4973, %v4972
    %v5028 = vpack.c.bf16 %v4975, %v4974
    %v5029 = vpack.c.bf16 %v4977, %v4976
    %v5030 = vpack.c.bf16 %v4979, %v4978
    %v5031 = vpack.c.bf16 %v4981, %v4980
    %v5032 = vpack.c.bf16 %v4983, %v4982
    %v5033 = vpack.c.bf16 %v4985, %v4984
    %v5034 = vpack.c.bf16 %v4987, %v4986
    %v5035 = vpack.c.bf16 %v4989, %v4988
    %v5036 = vpack.c.bf16 %v4991, %v4990
    %v5037 = vpack.c.bf16 %v4993, %v4992
    %v5038 = vpack.c.bf16 %v4995, %v4994
    %v5039 = vpack.c.bf16 %v4997, %v4996
    %v5040 = vpack.c.bf16 %v4999, %v4998
    %v5041 = vpack.c.bf16 %v5000, %v5000
    %s5042 = scalar_lea.vmem %s2, 80
    %v5043 = vld [vmem:[%s5042] sm:$0xf]
    %v5044 = vld [vmem:[%s5042 + $0x4] sm:$0xf]
    %v5045 = vld [vmem:[%s5042 + $0x8] sm:$0xf]
    %v5046 = vld [vmem:[%s5042 + $0xc] sm:$0xf]
    %v5051 = vunpack.c.l.b16 %v5043
    %v5052 = vunpack.c.l.b16 %v5044
    %v5053 = vunpack.c.l.b16 %v5045
    %v5054 = vunpack.c.l.b16 %v5046
    %v5055 = vpack.c.b16 %v5052, %v5051
    %v5056 = vpack.c.b16 %v5054, %v5053
    %v5060 = vsel %vm1480, %v5001, 0
    %v5063 = vsel %vm1480, %v5002, 0
    %v5066 = vsel %vm1480, %v5003, 0
    %v5069 = vsel %vm1480, %v5004, 0
    %v5072 = vsel %vm1480, %v5005, 0
    %v5075 = vsel %vm1480, %v5006, 0
    %v5078 = vsel %vm1480, %v5007, 0
    %v5081 = vsel %vm1480, %v5008, 0
    %v5084 = vsel %vm1480, %v5009, 0
    %v5087 = vsel %vm1480, %v5010, 0
    %v5090 = vsel %vm1480, %v5011, 0
    %v5093 = vsel %vm1480, %v5012, 0
    %v5096 = vsel %vm1480, %v5013, 0
    %v5099 = vsel %vm1480, %v5014, 0
    %v5102 = vsel %vm1480, %v5015, 0
    %v5105 = vsel %vm1480, %v5016, 0
    %v5108 = vsel %vm1480, %v5017, 0
    %v5111 = vsel %vm1480, %v5018, 0
    %v5114 = vsel %vm1480, %v5019, 0
    %v5117 = vsel %vm1480, %v5020, 0
    %v5120 = vsel %vm1480, %v5021, 0
    %v5123 = vsel %vm1480, %v5022, 0
    %v5126 = vsel %vm1480, %v5023, 0
    %v5129 = vsel %vm1480, %v5024, 0
    %v5132 = vsel %vm1480, %v5025, 0
    %v5135 = vsel %vm1480, %v5026, 0
    %v5138 = vsel %vm1480, %v5027, 0
    %v5141 = vsel %vm1480, %v5028, 0
    %v5144 = vsel %vm1480, %v5029, 0
    %v5147 = vsel %vm1480, %v5030, 0
    %v5150 = vsel %vm1480, %v5031, 0
    %v5153 = vsel %vm1480, %v5032, 0
    %v5156 = vsel %vm1480, %v5033, 0
    %v5159 = vsel %vm1480, %v5034, 0
    %v5162 = vsel %vm1480, %v5035, 0
    %v5165 = vsel %vm1480, %v5036, 0
    %v5168 = vsel %vm1480, %v5037, 0
    %v5171 = vsel %vm1480, %v5038, 0
    %v5174 = vsel %vm1480, %v5039, 0
    %v5177 = vsel %vm1480, %v5040, 0
    %v5180 = vsel %vm1480, %v5041, 0
    %5182 = vmatprep.subr.bf16.mxu0 0
    %5183 = vmatpush1.bf16.msra.mxu0 %v5055
    %5184 = vmatprep.subr.bf16.mxu0 0
    %5185 = vmatpush1.bf16.msra.mxu0 %v5056
    %5186 = vmatprep.subr.bf16.mxu0 0
    %5187 = vmatpush1.bf16.msra.mxu0 0
    %5188 = vmatprep.subr.bf16.mxu0 0
    %5189 = vmatpush1.bf16.msra.mxu0 0
    %5190 = vmatprep.subr.bf16.mxu0 0
    %5191 = vmatpush1.bf16.msra.mxu0 0
    %5192 = vmatprep.subr.bf16.mxu0 0
    %5193 = vmatpush1.bf16.msra.mxu0 0
    %5194 = vmatprep.subr.bf16.mxu0 0
    %5195 = vmatpush1.bf16.msra.mxu0 0
    %5196 = vmatprep.subr.bf16.mxu0 0
    %5197 = vmatpush1.bf16.msra.mxu0 0
    %5198 = vmatprep.subr.bf16.mxu0 0
    %5199 = vmatpush1.bf16.msra.mxu0 0
    %5200 = vmatprep.subr.bf16.mxu0 0
    %5201 = vmatpush1.bf16.msra.mxu0 0
    %5202 = vmatprep.subr.bf16.mxu0 0
    %5203 = vmatpush1.bf16.msra.mxu0 0
    %5204 = vmatprep.subr.bf16.mxu0 0
    %5205 = vmatpush1.bf16.msra.mxu0 0
    %5206 = vmatprep.subr.bf16.mxu0 0
    %5207 = vmatpush1.bf16.msra.mxu0 0
    %5208 = vmatprep.subr.bf16.mxu0 0
    %5209 = vmatpush1.bf16.msra.mxu0 0
    %5210 = vmatprep.subr.bf16.mxu0 0
    %5211 = vmatpush1.bf16.msra.mxu0 0
    %5212 = vmatprep.subr.bf16.mxu0 0
    %5213 = vmatpush1.bf16.msra.mxu0 0
    %5214 = vmatprep.mubr.bf16.mxu0 0
    %5215 = vmatmul.mubr.bf16.gmra.mrb[0].mxu0 %v5060
    %v5216 = vpop.f32.mrb[0].mxu0
    %v5217 = vadd.f32 0.0, %v5216
    %v5218 = vpop.f32.mrb[0].mxu0
    %v5219 = vpop.f32.mrb[0].mxu0
    %v5220 = vadd.f32 0.0, %v5219
    %v5221 = vpop.f32.mrb[0].mxu0
    %5222 = vmatprep.mubr.bf16.mxu0 0
    %5223 = vmatmul.mubr.bf16.gmra.mrb[0].mxu0 %v5063
    %v5224 = vpop.f32.mrb[0].mxu0
    %v5225 = vadd.f32 0.0, %v5224
    %v5226 = vpop.f32.mrb[0].mxu0
    %v5227 = vpop.f32.mrb[0].mxu0
    %v5228 = vadd.f32 0.0, %v5227
    %v5229 = vpop.f32.mrb[0].mxu0
    %5230 = vmatprep.mubr.bf16.mxu0 0
    %5231 = vmatmul.mubr.bf16.gmra.mrb[0].mxu0 %v5066
    %v5232 = vpop.f32.mrb[0].mxu0
    %v5233 = vadd.f32 0.0, %v5232
    %v5234 = vpop.f32.mrb[0].mxu0
    %v5235 = vpop.f32.mrb[0].mxu0
    %v5236 = vadd.f32 0.0, %v5235
    %v5237 = vpop.f32.mrb[0].mxu0
    %5238 = vmatprep.mubr.bf16.mxu0 0
    %5239 = vmatmul.mubr.bf16.gmra.mrb[0].mxu0 %v5069
    %v5240 = vpop.f32.mrb[0].mxu0
    %v5241 = vadd.f32 0.0, %v5240
    %v5242 = vpop.f32.mrb[0].mxu0
    %v5243 = vpop.f32.mrb[0].mxu0
    %v5244 = vadd.f32 0.0, %v5243
    %v5245 = vpop.f32.mrb[0].mxu0
    %5246 = vmatprep.mubr.bf16.mxu0 0
    %5247 = vmatmul.mubr.bf16.gmra.mrb[0].mxu0 %v5072
    %v5248 = vpop.f32.mrb[0].mxu0
    %v5249 = vadd.f32 0.0, %v5248
    %v5250 = vpop.f32.mrb[0].mxu0
    %v5251 = vpop.f32.mrb[0].mxu0
    %v5252 = vadd.f32 0.0, %v5251
    %v5253 = vpop.f32.mrb[0].mxu0
    %5254 = vmatprep.mubr.bf16.mxu0 0
    %5255 = vmatmul.mubr.bf16.gmra.mrb[0].mxu0 %v5075
    %v5256 = vpop.f32.mrb[0].mxu0
    %v5257 = vadd.f32 0.0, %v5256
    %v5258 = vpop.f32.mrb[0].mxu0
    %v5259 = vpop.f32.mrb[0].mxu0
    %v5260 = vadd.f32 0.0, %v5259
    %v5261 = vpop.f32.mrb[0].mxu0
    %5262 = vmatprep.mubr.bf16.mxu0 0
    %5263 = vmatmul.mubr.bf16.gmra.mrb[0].mxu0 %v5078
    %v5264 = vpop.f32.mrb[0].mxu0
    %v5265 = vadd.f32 0.0, %v5264
    %v5266 = vpop.f32.mrb[0].mxu0
    %v5267 = vpop.f32.mrb[0].mxu0
    %v5268 = vadd.f32 0.0, %v5267
    %v5269 = vpop.f32.mrb[0].mxu0
    %5270 = vmatprep.mubr.bf16.mxu0 0
    %5271 = vmatmul.mubr.bf16.gmra.mrb[0].mxu0 %v5081
    %v5272 = vpop.f32.mrb[0].mxu0
    %v5273 = vadd.f32 0.0, %v5272
    %v5274 = vpop.f32.mrb[0].mxu0
    %v5275 = vpop.f32.mrb[0].mxu0
    %v5276 = vadd.f32 0.0, %v5275
    %v5277 = vpop.f32.mrb[0].mxu0
    %5278 = vmatprep.mubr.bf16.mxu0 0
    %5279 = vmatmul.mubr.bf16.gmra.mrb[0].mxu0 %v5084
    %v5280 = vpop.f32.mrb[0].mxu0
    %v5281 = vadd.f32 0.0, %v5280
    %v5282 = vpop.f32.mrb[0].mxu0
    %v5283 = vpop.f32.mrb[0].mxu0
    %v5284 = vadd.f32 0.0, %v5283
    %v5285 = vpop.f32.mrb[0].mxu0
    %5286 = vmatprep.mubr.bf16.mxu0 0
    %5287 = vmatmul.mubr.bf16.gmra.mrb[0].mxu0 %v5087
    %v5288 = vpop.f32.mrb[0].mxu0
    %v5289 = vadd.f32 0.0, %v5288
    %v5290 = vpop.f32.mrb[0].mxu0
    %v5291 = vpop.f32.mrb[0].mxu0
    %v5292 = vadd.f32 0.0, %v5291
    %v5293 = vpop.f32.mrb[0].mxu0
    %5294 = vmatprep.mubr.bf16.mxu0 0
    %5295 = vmatmul.mubr.bf16.gmra.mrb[0].mxu0 %v5090
    %v5296 = vpop.f32.mrb[0].mxu0
    %v5297 = vadd.f32 0.0, %v5296
    %v5298 = vpop.f32.mrb[0].mxu0
    %v5299 = vpop.f32.mrb[0].mxu0
    %v5300 = vadd.f32 0.0, %v5299
    %v5301 = vpop.f32.mrb[0].mxu0
    %5302 = vmatprep.mubr.bf16.mxu0 0
    %5303 = vmatmul.mubr.bf16.gmra.mrb[0].mxu0 %v5093
    %v5304 = vpop.f32.mrb[0].mxu0
    %v5305 = vadd.f32 0.0, %v5304
    %v5306 = vpop.f32.mrb[0].mxu0
    %v5307 = vpop.f32.mrb[0].mxu0
    %v5308 = vadd.f32 0.0, %v5307
    %v5309 = vpop.f32.mrb[0].mxu0
    %5310 = vmatprep.mubr.bf16.mxu0 0
    %5311 = vmatmul.mubr.bf16.gmra.mrb[0].mxu0 %v5096
    %v5312 = vpop.f32.mrb[0].mxu0
    %v5313 = vadd.f32 0.0, %v5312
    %v5314 = vpop.f32.mrb[0].mxu0
    %v5315 = vpop.f32.mrb[0].mxu0
    %v5316 = vadd.f32 0.0, %v5315
    %v5317 = vpop.f32.mrb[0].mxu0
    %5318 = vmatprep.mubr.bf16.mxu0 0
    %5319 = vmatmul.mubr.bf16.gmra.mrb[0].mxu0 %v5099
    %v5320 = vpop.f32.mrb[0].mxu0
    %v5321 = vadd.f32 0.0, %v5320
    %v5322 = vpop.f32.mrb[0].mxu0
    %v5323 = vpop.f32.mrb[0].mxu0
    %v5324 = vadd.f32 0.0, %v5323
    %v5325 = vpop.f32.mrb[0].mxu0
    %5326 = vmatprep.mubr.bf16.mxu0 0
    %5327 = vmatmul.mubr.bf16.gmra.mrb[0].mxu0 %v5102
    %v5328 = vpop.f32.mrb[0].mxu0
    %v5329 = vadd.f32 0.0, %v5328
    %v5330 = vpop.f32.mrb[0].mxu0
    %v5331 = vpop.f32.mrb[0].mxu0
    %v5332 = vadd.f32 0.0, %v5331
    %v5333 = vpop.f32.mrb[0].mxu0
    %5334 = vmatprep.mubr.bf16.mxu0 0
    %5335 = vmatmul.mubr.bf16.gmra.mrb[0].mxu0 %v5105
    %v5336 = vpop.f32.mrb[0].mxu0
    %v5337 = vadd.f32 0.0, %v5336
    %v5338 = vpop.f32.mrb[0].mxu0
    %v5339 = vpop.f32.mrb[0].mxu0
    %v5340 = vadd.f32 0.0, %v5339
    %v5341 = vpop.f32.mrb[0].mxu0
    %5342 = vmatprep.mubr.bf16.mxu0 0
    %5343 = vmatmul.mubr.bf16.gmra.mrb[0].mxu0 %v5108
    %v5344 = vpop.f32.mrb[0].mxu0
    %v5345 = vadd.f32 0.0, %v5344
    %v5346 = vpop.f32.mrb[0].mxu0
    %v5347 = vpop.f32.mrb[0].mxu0
    %v5348 = vadd.f32 0.0, %v5347
    %v5349 = vpop.f32.mrb[0].mxu0
    %5350 = vmatprep.mubr.bf16.mxu0 0
    %5351 = vmatmul.mubr.bf16.gmra.mrb[0].mxu0 %v5111
    %v5352 = vpop.f32.mrb[0].mxu0
    %v5353 = vadd.f32 0.0, %v5352
    %v5354 = vpop.f32.mrb[0].mxu0
    %v5355 = vpop.f32.mrb[0].mxu0
    %v5356 = vadd.f32 0.0, %v5355
    %v5357 = vpop.f32.mrb[0].mxu0
    %5358 = vmatprep.mubr.bf16.mxu0 0
    %5359 = vmatmul.mubr.bf16.gmra.mrb[0].mxu0 %v5114
    %v5360 = vpop.f32.mrb[0].mxu0
    %v5361 = vadd.f32 0.0, %v5360
    %v5362 = vpop.f32.mrb[0].mxu0
    %v5363 = vpop.f32.mrb[0].mxu0
    %v5364 = vadd.f32 0.0, %v5363
    %v5365 = vpop.f32.mrb[0].mxu0
    %5366 = vmatprep.mubr.bf16.mxu0 0
    %5367 = vmatmul.mubr.bf16.gmra.mrb[0].mxu0 %v5117
    %v5368 = vpop.f32.mrb[0].mxu0
    %v5369 = vadd.f32 0.0, %v5368
    %v5370 = vpop.f32.mrb[0].mxu0
    %v5371 = vpop.f32.mrb[0].mxu0
    %v5372 = vadd.f32 0.0, %v5371
    %v5373 = vpop.f32.mrb[0].mxu0
    %5374 = vmatprep.mubr.bf16.mxu0 0
    %5375 = vmatmul.mubr.bf16.gmra.mrb[0].mxu0 %v5120
    %v5376 = vpop.f32.mrb[0].mxu0
    %v5377 = vadd.f32 0.0, %v5376
    %v5378 = vpop.f32.mrb[0].mxu0
    %v5379 = vpop.f32.mrb[0].mxu0
    %v5380 = vadd.f32 0.0, %v5379
    %v5381 = vpop.f32.mrb[0].mxu0
    %5382 = vmatprep.mubr.bf16.mxu0 0
    %5383 = vmatmul.mubr.bf16.gmra.mrb[0].mxu0 %v5123
    %v5384 = vpop.f32.mrb[0].mxu0
    %v5385 = vadd.f32 0.0, %v5384
    %v5386 = vpop.f32.mrb[0].mxu0
    %v5387 = vpop.f32.mrb[0].mxu0
    %v5388 = vadd.f32 0.0, %v5387
    %v5389 = vpop.f32.mrb[0].mxu0
    %5390 = vmatprep.mubr.bf16.mxu0 0
    %5391 = vmatmul.mubr.bf16.gmra.mrb[0].mxu0 %v5126
    %v5392 = vpop.f32.mrb[0].mxu0
    %v5393 = vadd.f32 0.0, %v5392
    %v5394 = vpop.f32.mrb[0].mxu0
    %v5395 = vpop.f32.mrb[0].mxu0
    %v5396 = vadd.f32 0.0, %v5395
    %v5397 = vpop.f32.mrb[0].mxu0
    %5398 = vmatprep.mubr.bf16.mxu0 0
    %5399 = vmatmul.mubr.bf16.gmra.mrb[0].mxu0 %v5129
    %v5400 = vpop.f32.mrb[0].mxu0
    %v5401 = vadd.f32 0.0, %v5400
    %v5402 = vpop.f32.mrb[0].mxu0
    %v5403 = vpop.f32.mrb[0].mxu0
    %v5404 = vadd.f32 0.0, %v5403
    %v5405 = vpop.f32.mrb[0].mxu0
    %5406 = vmatprep.mubr.bf16.mxu0 0
    %5407 = vmatmul.mubr.bf16.gmra.mrb[0].mxu0 %v5132
    %v5408 = vpop.f32.mrb[0].mxu0
    %v5409 = vadd.f32 0.0, %v5408
    %v5410 = vpop.f32.mrb[0].mxu0
    %v5411 = vpop.f32.mrb[0].mxu0
    %v5412 = vadd.f32 0.0, %v5411
    %v5413 = vpop.f32.mrb[0].mxu0
    %5414 = vmatprep.mubr.bf16.mxu0 0
    %5415 = vmatmul.mubr.bf16.gmra.mrb[0].mxu0 %v5135
    %v5416 = vpop.f32.mrb[0].mxu0
    %v5417 = vadd.f32 0.0, %v5416
    %v5418 = vpop.f32.mrb[0].mxu0
    %v5419 = vpop.f32.mrb[0].mxu0
    %v5420 = vadd.f32 0.0, %v5419
    %v5421 = vpop.f32.mrb[0].mxu0
    %5422 = vmatprep.mubr.bf16.mxu0 0
    %5423 = vmatmul.mubr.bf16.gmra.mrb[0].mxu0 %v5138
    %v5424 = vpop.f32.mrb[0].mxu0
    %v5425 = vadd.f32 0.0, %v5424
    %v5426 = vpop.f32.mrb[0].mxu0
    %v5427 = vpop.f32.mrb[0].mxu0
    %v5428 = vadd.f32 0.0, %v5427
    %v5429 = vpop.f32.mrb[0].mxu0
    %5430 = vmatprep.mubr.bf16.mxu0 0
    %5431 = vmatmul.mubr.bf16.gmra.mrb[0].mxu0 %v5141
    %v5432 = vpop.f32.mrb[0].mxu0
    %v5433 = vadd.f32 0.0, %v5432
    %v5434 = vpop.f32.mrb[0].mxu0
    %v5435 = vpop.f32.mrb[0].mxu0
    %v5436 = vadd.f32 0.0, %v5435
    %v5437 = vpop.f32.mrb[0].mxu0
    %5438 = vmatprep.mubr.bf16.mxu0 0
    %5439 = vmatmul.mubr.bf16.gmra.mrb[0].mxu0 %v5144
    %v5440 = vpop.f32.mrb[0].mxu0
    %v5441 = vadd.f32 0.0, %v5440
    %v5442 = vpop.f32.mrb[0].mxu0
    %v5443 = vpop.f32.mrb[0].mxu0
    %v5444 = vadd.f32 0.0, %v5443
    %v5445 = vpop.f32.mrb[0].mxu0
    %5446 = vmatprep.mubr.bf16.mxu0 0
    %5447 = vmatmul.mubr.bf16.gmra.mrb[0].mxu0 %v5147
    %v5448 = vpop.f32.mrb[0].mxu0
    %v5449 = vadd.f32 0.0, %v5448
    %v5450 = vpop.f32.mrb[0].mxu0
    %v5451 = vpop.f32.mrb[0].mxu0
    %v5452 = vadd.f32 0.0, %v5451
    %v5453 = vpop.f32.mrb[0].mxu0
    %5454 = vmatprep.mubr.bf16.mxu0 0
    %5455 = vmatmul.mubr.bf16.gmra.mrb[0].mxu0 %v5150
    %v5456 = vpop.f32.mrb[0].mxu0
    %v5457 = vadd.f32 0.0, %v5456
    %v5458 = vpop.f32.mrb[0].mxu0
    %v5459 = vpop.f32.mrb[0].mxu0
    %v5460 = vadd.f32 0.0, %v5459
    %v5461 = vpop.f32.mrb[0].mxu0
    %5462 = vmatprep.mubr.bf16.mxu0 0
    %5463 = vmatmul.mubr.bf16.gmra.mrb[0].mxu0 %v5153
    %v5464 = vpop.f32.mrb[0].mxu0
    %v5465 = vadd.f32 0.0, %v5464
    %v5466 = vpop.f32.mrb[0].mxu0
    %v5467 = vpop.f32.mrb[0].mxu0
    %v5468 = vadd.f32 0.0, %v5467
    %v5469 = vpop.f32.mrb[0].mxu0
    %5470 = vmatprep.mubr.bf16.mxu0 0
    %5471 = vmatmul.mubr.bf16.gmra.mrb[0].mxu0 %v5156
    %v5472 = vpop.f32.mrb[0].mxu0
    %v5473 = vadd.f32 0.0, %v5472
    %v5474 = vpop.f32.mrb[0].mxu0
    %v5475 = vpop.f32.mrb[0].mxu0
    %v5476 = vadd.f32 0.0, %v5475
    %v5477 = vpop.f32.mrb[0].mxu0
    %5478 = vmatprep.mubr.bf16.mxu0 0
    %5479 = vmatmul.mubr.bf16.gmra.mrb[0].mxu0 %v5159
    %v5480 = vpop.f32.mrb[0].mxu0
    %v5481 = vadd.f32 0.0, %v5480
    %v5482 = vpop.f32.mrb[0].mxu0
    %v5483 = vpop.f32.mrb[0].mxu0
    %v5484 = vadd.f32 0.0, %v5483
    %v5485 = vpop.f32.mrb[0].mxu0
    %5486 = vmatprep.mubr.bf16.mxu0 0
    %5487 = vmatmul.mubr.bf16.gmra.mrb[0].mxu0 %v5162
    %v5488 = vpop.f32.mrb[0].mxu0
    %v5489 = vadd.f32 0.0, %v5488
    %v5490 = vpop.f32.mrb[0].mxu0
    %v5491 = vpop.f32.mrb[0].mxu0
    %v5492 = vadd.f32 0.0, %v5491
    %v5493 = vpop.f32.mrb[0].mxu0
    %5494 = vmatprep.mubr.bf16.mxu0 0
    %5495 = vmatmul.mubr.bf16.gmra.mrb[0].mxu0 %v5165
    %v5496 = vpop.f32.mrb[0].mxu0
    %v5497 = vadd.f32 0.0, %v5496
    %v5498 = vpop.f32.mrb[0].mxu0
    %v5499 = vpop.f32.mrb[0].mxu0
    %v5500 = vadd.f32 0.0, %v5499
    %v5501 = vpop.f32.mrb[0].mxu0
    %5502 = vmatprep.mubr.bf16.mxu0 0
    %5503 = vmatmul.mubr.bf16.gmra.mrb[0].mxu0 %v5168
    %v5504 = vpop.f32.mrb[0].mxu0
    %v5505 = vadd.f32 0.0, %v5504
    %v5506 = vpop.f32.mrb[0].mxu0
    %v5507 = vpop.f32.mrb[0].mxu0
    %v5508 = vadd.f32 0.0, %v5507
    %v5509 = vpop.f32.mrb[0].mxu0
    %5510 = vmatprep.mubr.bf16.mxu0 0
    %5511 = vmatmul.mubr.bf16.gmra.mrb[0].mxu0 %v5171
    %v5512 = vpop.f32.mrb[0].mxu0
    %v5513 = vadd.f32 0.0, %v5512
    %v5514 = vpop.f32.mrb[0].mxu0
    %v5515 = vpop.f32.mrb[0].mxu0
    %v5516 = vadd.f32 0.0, %v5515
    %v5517 = vpop.f32.mrb[0].mxu0
    %5518 = vmatprep.mubr.bf16.mxu0 0
    %5519 = vmatmul.mubr.bf16.gmra.mrb[0].mxu0 %v5174
    %v5520 = vpop.f32.mrb[0].mxu0
    %v5521 = vadd.f32 0.0, %v5520
    %v5522 = vpop.f32.mrb[0].mxu0
    %v5523 = vpop.f32.mrb[0].mxu0
    %v5524 = vadd.f32 0.0, %v5523
    %v5525 = vpop.f32.mrb[0].mxu0
    %5526 = vmatprep.mubr.bf16.mxu0 0
    %5527 = vmatmul.mubr.bf16.gmra.mrb[0].mxu0 %v5177
    %v5528 = vpop.f32.mrb[0].mxu0
    %v5529 = vadd.f32 0.0, %v5528
    %v5530 = vpop.f32.mrb[0].mxu0
    %v5531 = vpop.f32.mrb[0].mxu0
    %v5532 = vadd.f32 0.0, %v5531
    %v5533 = vpop.f32.mrb[0].mxu0
    %5534 = vmatprep.mubr.bf16.mxu0 0
    %5535 = vmatmul.mubr.bf16.gmra.mrb[0].mxu0 %v5180
    %v5536 = vpop.f32.mrb[0].mxu0
    %v5537 = vadd.f32 0.0, %v5536
    %v5538 = vpop.f32.mrb[0].mxu0
    %v5539 = vpop.f32.mrb[0].mxu0
    %v5540 = vpop.f32.mrb[0].mxu0
    %5541 = vdwg.mxu0
    %v5542 = vadd.f32 %v4839, %v5217
    %v5543 = vadd.f32 %v4840, %v5220
    %v5544 = vadd.f32 %v4841, %v5225
    %v5545 = vadd.f32 %v4842, %v5228
    %v5546 = vadd.f32 %v4843, %v5233
    %v5547 = vadd.f32 %v4844, %v5236
    %v5548 = vadd.f32 %v4845, %v5241
    %v5549 = vadd.f32 %v4846, %v5244
    %v5550 = vadd.f32 %v4847, %v5249
    %v5551 = vadd.f32 %v4848, %v5252
    %v5552 = vadd.f32 %v4849, %v5257
    %v5553 = vadd.f32 %v4850, %v5260
    %v5554 = vadd.f32 %v4851, %v5265
    %v5555 = vadd.f32 %v4852, %v5268
    %v5556 = vadd.f32 %v4853, %v5273
    %v5557 = vadd.f32 %v4854, %v5276
    %v5558 = vadd.f32 %v4855, %v5281
    %v5559 = vadd.f32 %v4856, %v5284
    %v5560 = vadd.f32 %v4857, %v5289
    %v5561 = vadd.f32 %v4858, %v5292
    %v5562 = vadd.f32 %v4859, %v5297
    %v5563 = vadd.f32 %v4860, %v5300
    %v5564 = vadd.f32 %v4861, %v5305
    %v5565 = vadd.f32 %v4862, %v5308
    %v5566 = vadd.f32 %v4863, %v5313
    %v5567 = vadd.f32 %v4864, %v5316
    %v5568 = vadd.f32 %v4865, %v5321
    %v5569 = vadd.f32 %v4866, %v5324
    %v5570 = vadd.f32 %v4867, %v5329
    %v5571 = vadd.f32 %v4868, %v5332
    %v5572 = vadd.f32 %v4869, %v5337
    %v5573 = vadd.f32 %v4870, %v5340
    %v5574 = vadd.f32 %v4871, %v5345
    %v5575 = vadd.f32 %v4872, %v5348
    %v5576 = vadd.f32 %v4873, %v5353
    %v5577 = vadd.f32 %v4874, %v5356
    %v5578 = vadd.f32 %v4875, %v5361
    %v5579 = vadd.f32 %v4876, %v5364
    %v5580 = vadd.f32 %v4877, %v5369
    %v5581 = vadd.f32 %v4878, %v5372
    %v5582 = vadd.f32 %v4879, %v5377
    %v5583 = vadd.f32 %v4880, %v5380
    %v5584 = vadd.f32 %v4881, %v5385
    %v5585 = vadd.f32 %v4882, %v5388
    %v5586 = vadd.f32 %v4883, %v5393
    %v5587 = vadd.f32 %v4884, %v5396
    %v5588 = vadd.f32 %v4885, %v5401
    %v5589 = vadd.f32 %v4886, %v5404
    %v5590 = vadd.f32 %v4887, %v5409
    %v5591 = vadd.f32 %v4888, %v5412
    %v5592 = vadd.f32 %v4889, %v5417
    %v5593 = vadd.f32 %v4890, %v5420
    %v5594 = vadd.f32 %v4891, %v5425
    %v5595 = vadd.f32 %v4892, %v5428
    %v5596 = vadd.f32 %v4893, %v5433
    %v5597 = vadd.f32 %v4894, %v5436
    %v5598 = vadd.f32 %v4895, %v5441
    %v5599 = vadd.f32 %v4896, %v5444
    %v5600 = vadd.f32 %v4897, %v5449
    %v5601 = vadd.f32 %v4898, %v5452
    %v5602 = vadd.f32 %v4899, %v5457
    %v5603 = vadd.f32 %v4900, %v5460
    %v5604 = vadd.f32 %v4901, %v5465
    %v5605 = vadd.f32 %v4902, %v5468
    %v5606 = vadd.f32 %v4903, %v5473
    %v5607 = vadd.f32 %v4904, %v5476
    %v5608 = vadd.f32 %v4905, %v5481
    %v5609 = vadd.f32 %v4906, %v5484
    %v5610 = vadd.f32 %v4907, %v5489
    %v5611 = vadd.f32 %v4908, %v5492
    %v5612 = vadd.f32 %v4909, %v5497
    %v5613 = vadd.f32 %v4910, %v5500
    %v5614 = vadd.f32 %v4911, %v5505
    %v5615 = vadd.f32 %v4912, %v5508
    %v5616 = vadd.f32 %v4913, %v5513
    %v5617 = vadd.f32 %v4914, %v5516
    %v5618 = vadd.f32 %v4915, %v5521
    %v5619 = vadd.f32 %v4916, %v5524
    %v5620 = vadd.f32 %v4917, %v5529
    %v5621 = vadd.f32 %v4918, %v5532
    %v5622 = vadd.f32 %v4919, %v5537
    %v5623 = vld [vmem:[#allocation2 + $0x29] sm:$0xff]
    %v5624 = vld [vmem:[#allocation2 + $0x31] sm:$0xff]
    %v5625 = vld [vmem:[#allocation2 + $0x39] sm:$0xff]
    %v5626 = vld [vmem:[#allocation2 + $0x41] sm:$0xff]
    %v5627 = vld [vmem:[#allocation2 + $0x49] sm:$0xff]
    %v5628 = vld [vmem:[#allocation2 + $0x51] sm:$0xff]
    %v5629 = vld [vmem:[#allocation2 + $0x59] sm:$0xff]
    %v5630 = vld [vmem:[#allocation2 + $0x61] sm:$0xff]
    %v5631 = vld [vmem:[#allocation2 + $0x69] sm:$0xff]
    %v5632 = vld [vmem:[#allocation2 + $0x71] sm:$0xff]
    %v5633 = vld [vmem:[#allocation2 + $0x79] sm:$0xff]
    %v5634 = vld [vmem:[#allocation2 + $0x81] sm:$0xff]
    %v5635 = vld [vmem:[#allocation2 + $0x89] sm:$0xff]
    %v5636 = vld [vmem:[#allocation2 + $0x91] sm:$0xff]
    %v5637 = vld [vmem:[#allocation2 + $0x99] sm:$0xff]
    %v5638 = vld [vmem:[#allocation2 + $0xa1] sm:$0xff]
    %v5639 = vld [vmem:[#allocation2 + $0xa9] sm:$0xff]
    %v5640 = vld [vmem:[#allocation2 + $0xb1] sm:$0xff]
    %v5641 = vld [vmem:[#allocation2 + $0xb9] sm:$0xff]
    %v5642 = vld [vmem:[#allocation2 + $0xc1] sm:$0xff]
    %v5643 = vld [vmem:[#allocation2 + $0xc9] sm:$0xff]
    %v5644 = vld [vmem:[#allocation2 + $0xd1] sm:$0xff]
    %v5645 = vld [vmem:[#allocation2 + $0xd9] sm:$0xff]
    %v5646 = vld [vmem:[#allocation2 + $0xe1] sm:$0xff]
    %v5647 = vld [vmem:[#allocation2 + $0xe9] sm:$0xff]
    %v5648 = vld [vmem:[#allocation2 + $0xf1] sm:$0xff]
    %v5649 = vld [vmem:[#allocation2 + $0xf9] sm:$0xff]
    %v5650 = vld [vmem:[#allocation2 + $0x101] sm:$0xff]
    %v5651 = vld [vmem:[#allocation2 + $0x109] sm:$0xff]
    %v5652 = vld [vmem:[#allocation2 + $0x111] sm:$0xff]
    %v5653 = vld [vmem:[#allocation2 + $0x119] sm:$0xff]
    %v5654 = vld [vmem:[#allocation2 + $0x121] sm:$0xff]
    %v5655 = vld [vmem:[#allocation2 + $0x129] sm:$0xff]
    %v5656 = vld [vmem:[#allocation2 + $0x131] sm:$0xff]
    %v5657 = vld [vmem:[#allocation2 + $0x139] sm:$0xff]
    %v5658 = vld [vmem:[#allocation2 + $0x141] sm:$0xff]
    %v5659 = vld [vmem:[#allocation2 + $0x149] sm:$0xff]
    %v5660 = vld [vmem:[#allocation2 + $0x151] sm:$0xff]
    %v5661 = vld [vmem:[#allocation2 + $0x159] sm:$0xff]
    %v5662 = vld [vmem:[#allocation2 + $0x161] sm:$0xff]
    %v5663 = vld [vmem:[#allocation2 + $0x169] sm:$0xff]
    %v5664 = vld [vmem:[#allocation2 + $0x171] sm:$0xff]
    %v5665 = vld [vmem:[#allocation2 + $0x179] sm:$0xff]
    %v5666 = vld [vmem:[#allocation2 + $0x181] sm:$0xff]
    %v5667 = vld [vmem:[#allocation2 + $0x189] sm:$0xff]
    %v5668 = vld [vmem:[#allocation2 + $0x191] sm:$0xff]
    %v5669 = vld [vmem:[#allocation2 + $0x199] sm:$0xff]
    %v5670 = vld [vmem:[#allocation2 + $0x1a1] sm:$0xff]
    %v5671 = vld [vmem:[#allocation2 + $0x1a9] sm:$0xff]
    %v5672 = vld [vmem:[#allocation2 + $0x1b1] sm:$0xff]
    %v5673 = vld [vmem:[#allocation2 + $0x1b9] sm:$0xff]
    %v5674 = vld [vmem:[#allocation2 + $0x1c1] sm:$0xff]
    %v5675 = vld [vmem:[#allocation2 + $0x1c9] sm:$0xff]
    %v5676 = vld [vmem:[#allocation2 + $0x1d1] sm:$0xff]
    %v5677 = vld [vmem:[#allocation2 + $0x1d9] sm:$0xff]
    %v5678 = vld [vmem:[#allocation2 + $0x1e1] sm:$0xff]
    %v5679 = vld [vmem:[#allocation2 + $0x1e9] sm:$0xff]
    %v5680 = vld [vmem:[#allocation2 + $0x1f1] sm:$0xff]
    %v5681 = vld [vmem:[#allocation2 + $0x1f9] sm:$0xff]
    %v5682 = vld [vmem:[#allocation2 + $0x201] sm:$0xff]
    %v5683 = vld [vmem:[#allocation2 + $0x209] sm:$0xff]
    %v5684 = vld [vmem:[#allocation2 + $0x211] sm:$0xff]
    %v5685 = vld [vmem:[#allocation2 + $0x219] sm:$0xff]
    %v5686 = vld [vmem:[#allocation2 + $0x221] sm:$0xff]
    %v5687 = vld [vmem:[#allocation2 + $0x229] sm:$0xff]
    %v5688 = vld [vmem:[#allocation2 + $0x231] sm:$0xff]
    %v5689 = vld [vmem:[#allocation2 + $0x239] sm:$0xff]
    %v5690 = vld [vmem:[#allocation2 + $0x241] sm:$0xff]
    %v5691 = vld [vmem:[#allocation2 + $0x249] sm:$0xff]
    %v5692 = vld [vmem:[#allocation2 + $0x251] sm:$0xff]
    %v5693 = vld [vmem:[#allocation2 + $0x259] sm:$0xff]
    %v5694 = vld [vmem:[#allocation2 + $0x261] sm:$0xff]
    %v5695 = vld [vmem:[#allocation2 + $0x269] sm:$0xff]
    %v5696 = vld [vmem:[#allocation2 + $0x271] sm:$0xff]
    %v5697 = vld [vmem:[#allocation2 + $0x279] sm:$0xff]
    %v5698 = vld [vmem:[#allocation2 + $0x281] sm:$0xff]
    %v5699 = vld [vmem:[#allocation2 + $0x289] sm:$0xff]
    %v5700 = vld [vmem:[#allocation2 + $0x291] sm:$0xff]
    %v5701 = vld [vmem:[#allocation2 + $0x299] sm:$0xff]
    %v5702 = vld [vmem:[#allocation2 + $0x2a1] sm:$0xff]
    %v5703 = vld [vmem:[#allocation2 + $0x2a9] sm:$0xff]
    %v5704 = vpack.c.bf16 %v5624, %v5623
    %v5705 = vpack.c.bf16 %v5626, %v5625
    %v5706 = vpack.c.bf16 %v5628, %v5627
    %v5707 = vpack.c.bf16 %v5630, %v5629
    %v5708 = vpack.c.bf16 %v5632, %v5631
    %v5709 = vpack.c.bf16 %v5634, %v5633
    %v5710 = vpack.c.bf16 %v5636, %v5635
    %v5711 = vpack.c.bf16 %v5638, %v5637
    %v5712 = vpack.c.bf16 %v5640, %v5639
    %v5713 = vpack.c.bf16 %v5642, %v5641
    %v5714 = vpack.c.bf16 %v5644, %v5643
    %v5715 = vpack.c.bf16 %v5646, %v5645
    %v5716 = vpack.c.bf16 %v5648, %v5647
    %v5717 = vpack.c.bf16 %v5650, %v5649
    %v5718 = vpack.c.bf16 %v5652, %v5651
    %v5719 = vpack.c.bf16 %v5654, %v5653
    %v5720 = vpack.c.bf16 %v5656, %v5655
    %v5721 = vpack.c.bf16 %v5658, %v5657
    %v5722 = vpack.c.bf16 %v5660, %v5659
    %v5723 = vpack.c.bf16 %v5662, %v5661
    %v5724 = vpack.c.bf16 %v5664, %v5663
    %v5725 = vpack.c.bf16 %v5666, %v5665
    %v5726 = vpack.c.bf16 %v5668, %v5667
    %v5727 = vpack.c.bf16 %v5670, %v5669
    %v5728 = vpack.c.bf16 %v5672, %v5671
    %v5729 = vpack.c.bf16 %v5674, %v5673
    %v5730 = vpack.c.bf16 %v5676, %v5675
    %v5731 = vpack.c.bf16 %v5678, %v5677
    %v5732 = vpack.c.bf16 %v5680, %v5679
    %v5733 = vpack.c.bf16 %v5682, %v5681
    %v5734 = vpack.c.bf16 %v5684, %v5683
    %v5735 = vpack.c.bf16 %v5686, %v5685
    %v5736 = vpack.c.bf16 %v5688, %v5687
    %v5737 = vpack.c.bf16 %v5690, %v5689
    %v5738 = vpack.c.bf16 %v5692, %v5691
    %v5739 = vpack.c.bf16 %v5694, %v5693
    %v5740 = vpack.c.bf16 %v5696, %v5695
    %v5741 = vpack.c.bf16 %v5698, %v5697
    %v5742 = vpack.c.bf16 %v5700, %v5699
    %v5743 = vpack.c.bf16 %v5702, %v5701
    %v5744 = vpack.c.bf16 %v5703, %v5703
    %s5745 = scalar_lea.vmem %s2, 96
    %v5746 = vld [vmem:[%s5745] sm:$0xf]
    %v5747 = vld [vmem:[%s5745 + $0x4] sm:$0xf]
    %v5748 = vld [vmem:[%s5745 + $0x8] sm:$0xf]
    %v5749 = vld [vmem:[%s5745 + $0xc] sm:$0xf]
    %v5754 = vunpack.c.l.b16 %v5746
    %v5755 = vunpack.c.l.b16 %v5747
    %v5756 = vunpack.c.l.b16 %v5748
    %v5757 = vunpack.c.l.b16 %v5749
    %v5758 = vpack.c.b16 %v5755, %v5754
    %v5759 = vpack.c.b16 %v5757, %v5756
    %v5763 = vsel %vm1480, %v5704, 0
    %v5766 = vsel %vm1480, %v5705, 0
    %v5769 = vsel %vm1480, %v5706, 0
    %v5772 = vsel %vm1480, %v5707, 0
    %v5775 = vsel %vm1480, %v5708, 0
    %v5778 = vsel %vm1480, %v5709, 0
    %v5781 = vsel %vm1480, %v5710, 0
    %v5784 = vsel %vm1480, %v5711, 0
    %v5787 = vsel %vm1480, %v5712, 0
    %v5790 = vsel %vm1480, %v5713, 0
    %v5793 = vsel %vm1480, %v5714, 0
    %v5796 = vsel %vm1480, %v5715, 0
    %v5799 = vsel %vm1480, %v5716, 0
    %v5802 = vsel %vm1480, %v5717, 0
    %v5805 = vsel %vm1480, %v5718, 0
    %v5808 = vsel %vm1480, %v5719, 0
    %v5811 = vsel %vm1480, %v5720, 0
    %v5814 = vsel %vm1480, %v5721, 0
    %v5817 = vsel %vm1480, %v5722, 0
    %v5820 = vsel %vm1480, %v5723, 0
    %v5823 = vsel %vm1480, %v5724, 0
    %v5826 = vsel %vm1480, %v5725, 0
    %v5829 = vsel %vm1480, %v5726, 0
    %v5832 = vsel %vm1480, %v5727, 0
    %v5835 = vsel %vm1480, %v5728, 0
    %v5838 = vsel %vm1480, %v5729, 0
    %v5841 = vsel %vm1480, %v5730, 0
    %v5844 = vsel %vm1480, %v5731, 0
    %v5847 = vsel %vm1480, %v5732, 0
    %v5850 = vsel %vm1480, %v5733, 0
    %v5853 = vsel %vm1480, %v5734, 0
    %v5856 = vsel %vm1480, %v5735, 0
    %v5859 = vsel %vm1480, %v5736, 0
    %v5862 = vsel %vm1480, %v5737, 0
    %v5865 = vsel %vm1480, %v5738, 0
    %v5868 = vsel %vm1480, %v5739, 0
    %v5871 = vsel %vm1480, %v5740, 0
    %v5874 = vsel %vm1480, %v5741, 0
    %v5877 = vsel %vm1480, %v5742, 0
    %v5880 = vsel %vm1480, %v5743, 0
    %v5883 = vsel %vm1480, %v5744, 0
    %5885 = vmatprep.subr.bf16.mxu0 0
    %5886 = vmatpush1.bf16.msra.mxu0 %v5758
    %5887 = vmatprep.subr.bf16.mxu0 0
    %5888 = vmatpush1.bf16.msra.mxu0 %v5759
    %5889 = vmatprep.subr.bf16.mxu0 0
    %5890 = vmatpush1.bf16.msra.mxu0 0
    %5891 = vmatprep.subr.bf16.mxu0 0
    %5892 = vmatpush1.bf16.msra.mxu0 0
    %5893 = vmatprep.subr.bf16.mxu0 0
    %5894 = vmatpush1.bf16.msra.mxu0 0
    %5895 = vmatprep.subr.bf16.mxu0 0
    %5896 = vmatpush1.bf16.msra.mxu0 0
    %5897 = vmatprep.subr.bf16.mxu0 0
    %5898 = vmatpush1.bf16.msra.mxu0 0
    %5899 = vmatprep.subr.bf16.mxu0 0
    %5900 = vmatpush1.bf16.msra.mxu0 0
    %5901 = vmatprep.subr.bf16.mxu0 0
    %5902 = vmatpush1.bf16.msra.mxu0 0
    %5903 = vmatprep.subr.bf16.mxu0 0
    %5904 = vmatpush1.bf16.msra.mxu0 0
    %5905 = vmatprep.subr.bf16.mxu0 0
    %5906 = vmatpush1.bf16.msra.mxu0 0
    %5907 = vmatprep.subr.bf16.mxu0 0
    %5908 = vmatpush1.bf16.msra.mxu0 0
    %5909 = vmatprep.subr.bf16.mxu0 0
    %5910 = vmatpush1.bf16.msra.mxu0 0
    %5911 = vmatprep.subr.bf16.mxu0 0
    %5912 = vmatpush1.bf16.msra.mxu0 0
    %5913 = vmatprep.subr.bf16.mxu0 0
    %5914 = vmatpush1.bf16.msra.mxu0 0
    %5915 = vmatprep.subr.bf16.mxu0 0
    %5916 = vmatpush1.bf16.msra.mxu0 0
    %5917 = vmatprep.mubr.bf16.mxu0 0
    %5918 = vmatmul.mubr.bf16.gmra.mrb[0].mxu0 %v5763
    %v5919 = vpop.f32.mrb[0].mxu0
    %v5920 = vadd.f32 0.0, %v5919
    %v5921 = vpop.f32.mrb[0].mxu0
    %v5922 = vpop.f32.mrb[0].mxu0
    %v5923 = vadd.f32 0.0, %v5922
    %v5924 = vpop.f32.mrb[0].mxu0
    %5925 = vmatprep.mubr.bf16.mxu0 0
    %5926 = vmatmul.mubr.bf16.gmra.mrb[0].mxu0 %v5766
    %v5927 = vpop.f32.mrb[0].mxu0
    %v5928 = vadd.f32 0.0, %v5927
    %v5929 = vpop.f32.mrb[0].mxu0
    %v5930 = vpop.f32.mrb[0].mxu0
    %v5931 = vadd.f32 0.0, %v5930
    %v5932 = vpop.f32.mrb[0].mxu0
    %5933 = vmatprep.mubr.bf16.mxu0 0
    %5934 = vmatmul.mubr.bf16.gmra.mrb[0].mxu0 %v5769
    %v5935 = vpop.f32.mrb[0].mxu0
    %v5936 = vadd.f32 0.0, %v5935
    %v5937 = vpop.f32.mrb[0].mxu0
    %v5938 = vpop.f32.mrb[0].mxu0
    %v5939 = vadd.f32 0.0, %v5938
    %v5940 = vpop.f32.mrb[0].mxu0
    %5941 = vmatprep.mubr.bf16.mxu0 0
    %5942 = vmatmul.mubr.bf16.gmra.mrb[0].mxu0 %v5772
    %v5943 = vpop.f32.mrb[0].mxu0
    %v5944 = vadd.f32 0.0, %v5943
    %v5945 = vpop.f32.mrb[0].mxu0
    %v5946 = vpop.f32.mrb[0].mxu0
    %v5947 = vadd.f32 0.0, %v5946
    %v5948 = vpop.f32.mrb[0].mxu0
    %5949 = vmatprep.mubr.bf16.mxu0 0
    %5950 = vmatmul.mubr.bf16.gmra.mrb[0].mxu0 %v5775
    %v5951 = vpop.f32.mrb[0].mxu0
    %v5952 = vadd.f32 0.0, %v5951
    %v5953 = vpop.f32.mrb[0].mxu0
    %v5954 = vpop.f32.mrb[0].mxu0
    %v5955 = vadd.f32 0.0, %v5954
    %v5956 = vpop.f32.mrb[0].mxu0
    %5957 = vmatprep.mubr.bf16.mxu0 0
    %5958 = vmatmul.mubr.bf16.gmra.mrb[0].mxu0 %v5778
    %v5959 = vpop.f32.mrb[0].mxu0
    %v5960 = vadd.f32 0.0, %v5959
    %v5961 = vpop.f32.mrb[0].mxu0
    %v5962 = vpop.f32.mrb[0].mxu0
    %v5963 = vadd.f32 0.0, %v5962
    %v5964 = vpop.f32.mrb[0].mxu0
    %5965 = vmatprep.mubr.bf16.mxu0 0
    %5966 = vmatmul.mubr.bf16.gmra.mrb[0].mxu0 %v5781
    %v5967 = vpop.f32.mrb[0].mxu0
    %v5968 = vadd.f32 0.0, %v5967
    %v5969 = vpop.f32.mrb[0].mxu0
    %v5970 = vpop.f32.mrb[0].mxu0
    %v5971 = vadd.f32 0.0, %v5970
    %v5972 = vpop.f32.mrb[0].mxu0
    %5973 = vmatprep.mubr.bf16.mxu0 0
    %5974 = vmatmul.mubr.bf16.gmra.mrb[0].mxu0 %v5784
    %v5975 = vpop.f32.mrb[0].mxu0
    %v5976 = vadd.f32 0.0, %v5975
    %v5977 = vpop.f32.mrb[0].mxu0
    %v5978 = vpop.f32.mrb[0].mxu0
    %v5979 = vadd.f32 0.0, %v5978
    %v5980 = vpop.f32.mrb[0].mxu0
    %5981 = vmatprep.mubr.bf16.mxu0 0
    %5982 = vmatmul.mubr.bf16.gmra.mrb[0].mxu0 %v5787
    %v5983 = vpop.f32.mrb[0].mxu0
    %v5984 = vadd.f32 0.0, %v5983
    %v5985 = vpop.f32.mrb[0].mxu0
    %v5986 = vpop.f32.mrb[0].mxu0
    %v5987 = vadd.f32 0.0, %v5986
    %v5988 = vpop.f32.mrb[0].mxu0
    %5989 = vmatprep.mubr.bf16.mxu0 0
    %5990 = vmatmul.mubr.bf16.gmra.mrb[0].mxu0 %v5790
    %v5991 = vpop.f32.mrb[0].mxu0
    %v5992 = vadd.f32 0.0, %v5991
    %v5993 = vpop.f32.mrb[0].mxu0
    %v5994 = vpop.f32.mrb[0].mxu0
    %v5995 = vadd.f32 0.0, %v5994
    %v5996 = vpop.f32.mrb[0].mxu0
    %5997 = vmatprep.mubr.bf16.mxu0 0
    %5998 = vmatmul.mubr.bf16.gmra.mrb[0].mxu0 %v5793
    %v5999 = vpop.f32.mrb[0].mxu0
    %v6000 = vadd.f32 0.0, %v5999
    %v6001 = vpop.f32.mrb[0].mxu0
    %v6002 = vpop.f32.mrb[0].mxu0
    %v6003 = vadd.f32 0.0, %v6002
    %v6004 = vpop.f32.mrb[0].mxu0
    %6005 = vmatprep.mubr.bf16.mxu0 0
    %6006 = vmatmul.mubr.bf16.gmra.mrb[0].mxu0 %v5796
    %v6007 = vpop.f32.mrb[0].mxu0
    %v6008 = vadd.f32 0.0, %v6007
    %v6009 = vpop.f32.mrb[0].mxu0
    %v6010 = vpop.f32.mrb[0].mxu0
    %v6011 = vadd.f32 0.0, %v6010
    %v6012 = vpop.f32.mrb[0].mxu0
    %6013 = vmatprep.mubr.bf16.mxu0 0
    %6014 = vmatmul.mubr.bf16.gmra.mrb[0].mxu0 %v5799
    %v6015 = vpop.f32.mrb[0].mxu0
    %v6016 = vadd.f32 0.0, %v6015
    %v6017 = vpop.f32.mrb[0].mxu0
    %v6018 = vpop.f32.mrb[0].mxu0
    %v6019 = vadd.f32 0.0, %v6018
    %v6020 = vpop.f32.mrb[0].mxu0
    %6021 = vmatprep.mubr.bf16.mxu0 0
    %6022 = vmatmul.mubr.bf16.gmra.mrb[0].mxu0 %v5802
    %v6023 = vpop.f32.mrb[0].mxu0
    %v6024 = vadd.f32 0.0, %v6023
    %v6025 = vpop.f32.mrb[0].mxu0
    %v6026 = vpop.f32.mrb[0].mxu0
    %v6027 = vadd.f32 0.0, %v6026
    %v6028 = vpop.f32.mrb[0].mxu0
    %6029 = vmatprep.mubr.bf16.mxu0 0
    %6030 = vmatmul.mubr.bf16.gmra.mrb[0].mxu0 %v5805
    %v6031 = vpop.f32.mrb[0].mxu0
    %v6032 = vadd.f32 0.0, %v6031
    %v6033 = vpop.f32.mrb[0].mxu0
    %v6034 = vpop.f32.mrb[0].mxu0
    %v6035 = vadd.f32 0.0, %v6034
    %v6036 = vpop.f32.mrb[0].mxu0
    %6037 = vmatprep.mubr.bf16.mxu0 0
    %6038 = vmatmul.mubr.bf16.gmra.mrb[0].mxu0 %v5808
    %v6039 = vpop.f32.mrb[0].mxu0
    %v6040 = vadd.f32 0.0, %v6039
    %v6041 = vpop.f32.mrb[0].mxu0
    %v6042 = vpop.f32.mrb[0].mxu0
    %v6043 = vadd.f32 0.0, %v6042
    %v6044 = vpop.f32.mrb[0].mxu0
    %6045 = vmatprep.mubr.bf16.mxu0 0
    %6046 = vmatmul.mubr.bf16.gmra.mrb[0].mxu0 %v5811
    %v6047 = vpop.f32.mrb[0].mxu0
    %v6048 = vadd.f32 0.0, %v6047
    %v6049 = vpop.f32.mrb[0].mxu0
    %v6050 = vpop.f32.mrb[0].mxu0
    %v6051 = vadd.f32 0.0, %v6050
    %v6052 = vpop.f32.mrb[0].mxu0
    %6053 = vmatprep.mubr.bf16.mxu0 0
    %6054 = vmatmul.mubr.bf16.gmra.mrb[0].mxu0 %v5814
    %v6055 = vpop.f32.mrb[0].mxu0
    %v6056 = vadd.f32 0.0, %v6055
    %v6057 = vpop.f32.mrb[0].mxu0
    %v6058 = vpop.f32.mrb[0].mxu0
    %v6059 = vadd.f32 0.0, %v6058
    %v6060 = vpop.f32.mrb[0].mxu0
    %6061 = vmatprep.mubr.bf16.mxu0 0
    %6062 = vmatmul.mubr.bf16.gmra.mrb[0].mxu0 %v5817
    %v6063 = vpop.f32.mrb[0].mxu0
    %v6064 = vadd.f32 0.0, %v6063
    %v6065 = vpop.f32.mrb[0].mxu0
    %v6066 = vpop.f32.mrb[0].mxu0
    %v6067 = vadd.f32 0.0, %v6066
    %v6068 = vpop.f32.mrb[0].mxu0
    %6069 = vmatprep.mubr.bf16.mxu0 0
    %6070 = vmatmul.mubr.bf16.gmra.mrb[0].mxu0 %v5820
    %v6071 = vpop.f32.mrb[0].mxu0
    %v6072 = vadd.f32 0.0, %v6071
    %v6073 = vpop.f32.mrb[0].mxu0
    %v6074 = vpop.f32.mrb[0].mxu0
    %v6075 = vadd.f32 0.0, %v6074
    %v6076 = vpop.f32.mrb[0].mxu0
    %6077 = vmatprep.mubr.bf16.mxu0 0
    %6078 = vmatmul.mubr.bf16.gmra.mrb[0].mxu0 %v5823
    %v6079 = vpop.f32.mrb[0].mxu0
    %v6080 = vadd.f32 0.0, %v6079
    %v6081 = vpop.f32.mrb[0].mxu0
    %v6082 = vpop.f32.mrb[0].mxu0
    %v6083 = vadd.f32 0.0, %v6082
    %v6084 = vpop.f32.mrb[0].mxu0
    %6085 = vmatprep.mubr.bf16.mxu0 0
    %6086 = vmatmul.mubr.bf16.gmra.mrb[0].mxu0 %v5826
    %v6087 = vpop.f32.mrb[0].mxu0
    %v6088 = vadd.f32 0.0, %v6087
    %v6089 = vpop.f32.mrb[0].mxu0
    %v6090 = vpop.f32.mrb[0].mxu0
    %v6091 = vadd.f32 0.0, %v6090
    %v6092 = vpop.f32.mrb[0].mxu0
    %6093 = vmatprep.mubr.bf16.mxu0 0
    %6094 = vmatmul.mubr.bf16.gmra.mrb[0].mxu0 %v5829
    %v6095 = vpop.f32.mrb[0].mxu0
    %v6096 = vadd.f32 0.0, %v6095
    %v6097 = vpop.f32.mrb[0].mxu0
    %v6098 = vpop.f32.mrb[0].mxu0
    %v6099 = vadd.f32 0.0, %v6098
    %v6100 = vpop.f32.mrb[0].mxu0
    %6101 = vmatprep.mubr.bf16.mxu0 0
    %6102 = vmatmul.mubr.bf16.gmra.mrb[0].mxu0 %v5832
    %v6103 = vpop.f32.mrb[0].mxu0
    %v6104 = vadd.f32 0.0, %v6103
    %v6105 = vpop.f32.mrb[0].mxu0
    %v6106 = vpop.f32.mrb[0].mxu0
    %v6107 = vadd.f32 0.0, %v6106
    %v6108 = vpop.f32.mrb[0].mxu0
    %6109 = vmatprep.mubr.bf16.mxu0 0
    %6110 = vmatmul.mubr.bf16.gmra.mrb[0].mxu0 %v5835
    %v6111 = vpop.f32.mrb[0].mxu0
    %v6112 = vadd.f32 0.0, %v6111
    %v6113 = vpop.f32.mrb[0].mxu0
    %v6114 = vpop.f32.mrb[0].mxu0
    %v6115 = vadd.f32 0.0, %v6114
    %v6116 = vpop.f32.mrb[0].mxu0
    %6117 = vmatprep.mubr.bf16.mxu0 0
    %6118 = vmatmul.mubr.bf16.gmra.mrb[0].mxu0 %v5838
    %v6119 = vpop.f32.mrb[0].mxu0
    %v6120 = vadd.f32 0.0, %v6119
    %v6121 = vpop.f32.mrb[0].mxu0
    %v6122 = vpop.f32.mrb[0].mxu0
    %v6123 = vadd.f32 0.0, %v6122
    %v6124 = vpop.f32.mrb[0].mxu0
    %6125 = vmatprep.mubr.bf16.mxu0 0
    %6126 = vmatmul.mubr.bf16.gmra.mrb[0].mxu0 %v5841
    %v6127 = vpop.f32.mrb[0].mxu0
    %v6128 = vadd.f32 0.0, %v6127
    %v6129 = vpop.f32.mrb[0].mxu0
    %v6130 = vpop.f32.mrb[0].mxu0
    %v6131 = vadd.f32 0.0, %v6130
    %v6132 = vpop.f32.mrb[0].mxu0
    %6133 = vmatprep.mubr.bf16.mxu0 0
    %6134 = vmatmul.mubr.bf16.gmra.mrb[0].mxu0 %v5844
    %v6135 = vpop.f32.mrb[0].mxu0
    %v6136 = vadd.f32 0.0, %v6135
    %v6137 = vpop.f32.mrb[0].mxu0
    %v6138 = vpop.f32.mrb[0].mxu0
    %v6139 = vadd.f32 0.0, %v6138
    %v6140 = vpop.f32.mrb[0].mxu0
    %6141 = vmatprep.mubr.bf16.mxu0 0
    %6142 = vmatmul.mubr.bf16.gmra.mrb[0].mxu0 %v5847
    %v6143 = vpop.f32.mrb[0].mxu0
    %v6144 = vadd.f32 0.0, %v6143
    %v6145 = vpop.f32.mrb[0].mxu0
    %v6146 = vpop.f32.mrb[0].mxu0
    %v6147 = vadd.f32 0.0, %v6146
    %v6148 = vpop.f32.mrb[0].mxu0
    %6149 = vmatprep.mubr.bf16.mxu0 0
    %6150 = vmatmul.mubr.bf16.gmra.mrb[0].mxu0 %v5850
    %v6151 = vpop.f32.mrb[0].mxu0
    %v6152 = vadd.f32 0.0, %v6151
    %v6153 = vpop.f32.mrb[0].mxu0
    %v6154 = vpop.f32.mrb[0].mxu0
    %v6155 = vadd.f32 0.0, %v6154
    %v6156 = vpop.f32.mrb[0].mxu0
    %6157 = vmatprep.mubr.bf16.mxu0 0
    %6158 = vmatmul.mubr.bf16.gmra.mrb[0].mxu0 %v5853
    %v6159 = vpop.f32.mrb[0].mxu0
    %v6160 = vadd.f32 0.0, %v6159
    %v6161 = vpop.f32.mrb[0].mxu0
    %v6162 = vpop.f32.mrb[0].mxu0
    %v6163 = vadd.f32 0.0, %v6162
    %v6164 = vpop.f32.mrb[0].mxu0
    %6165 = vmatprep.mubr.bf16.mxu0 0
    %6166 = vmatmul.mubr.bf16.gmra.mrb[0].mxu0 %v5856
    %v6167 = vpop.f32.mrb[0].mxu0
    %v6168 = vadd.f32 0.0, %v6167
    %v6169 = vpop.f32.mrb[0].mxu0
    %v6170 = vpop.f32.mrb[0].mxu0
    %v6171 = vadd.f32 0.0, %v6170
    %v6172 = vpop.f32.mrb[0].mxu0
    %6173 = vmatprep.mubr.bf16.mxu0 0
    %6174 = vmatmul.mubr.bf16.gmra.mrb[0].mxu0 %v5859
    %v6175 = vpop.f32.mrb[0].mxu0
    %v6176 = vadd.f32 0.0, %v6175
    %v6177 = vpop.f32.mrb[0].mxu0
    %v6178 = vpop.f32.mrb[0].mxu0
    %v6179 = vadd.f32 0.0, %v6178
    %v6180 = vpop.f32.mrb[0].mxu0
    %6181 = vmatprep.mubr.bf16.mxu0 0
    %6182 = vmatmul.mubr.bf16.gmra.mrb[0].mxu0 %v5862
    %v6183 = vpop.f32.mrb[0].mxu0
    %v6184 = vadd.f32 0.0, %v6183
    %v6185 = vpop.f32.mrb[0].mxu0
    %v6186 = vpop.f32.mrb[0].mxu0
    %v6187 = vadd.f32 0.0, %v6186
    %v6188 = vpop.f32.mrb[0].mxu0
    %6189 = vmatprep.mubr.bf16.mxu0 0
    %6190 = vmatmul.mubr.bf16.gmra.mrb[0].mxu0 %v5865
    %v6191 = vpop.f32.mrb[0].mxu0
    %v6192 = vadd.f32 0.0, %v6191
    %v6193 = vpop.f32.mrb[0].mxu0
    %v6194 = vpop.f32.mrb[0].mxu0
    %v6195 = vadd.f32 0.0, %v6194
    %v6196 = vpop.f32.mrb[0].mxu0
    %6197 = vmatprep.mubr.bf16.mxu0 0
    %6198 = vmatmul.mubr.bf16.gmra.mrb[0].mxu0 %v5868
    %v6199 = vpop.f32.mrb[0].mxu0
    %v6200 = vadd.f32 0.0, %v6199
    %v6201 = vpop.f32.mrb[0].mxu0
    %v6202 = vpop.f32.mrb[0].mxu0
    %v6203 = vadd.f32 0.0, %v6202
    %v6204 = vpop.f32.mrb[0].mxu0
    %6205 = vmatprep.mubr.bf16.mxu0 0
    %6206 = vmatmul.mubr.bf16.gmra.mrb[0].mxu0 %v5871
    %v6207 = vpop.f32.mrb[0].mxu0
    %v6208 = vadd.f32 0.0, %v6207
    %v6209 = vpop.f32.mrb[0].mxu0
    %v6210 = vpop.f32.mrb[0].mxu0
    %v6211 = vadd.f32 0.0, %v6210
    %v6212 = vpop.f32.mrb[0].mxu0
    %6213 = vmatprep.mubr.bf16.mxu0 0
    %6214 = vmatmul.mubr.bf16.gmra.mrb[0].mxu0 %v5874
    %v6215 = vpop.f32.mrb[0].mxu0
    %v6216 = vadd.f32 0.0, %v6215
    %v6217 = vpop.f32.mrb[0].mxu0
    %v6218 = vpop.f32.mrb[0].mxu0
    %v6219 = vadd.f32 0.0, %v6218
    %v6220 = vpop.f32.mrb[0].mxu0
    %6221 = vmatprep.mubr.bf16.mxu0 0
    %6222 = vmatmul.mubr.bf16.gmra.mrb[0].mxu0 %v5877
    %v6223 = vpop.f32.mrb[0].mxu0
    %v6224 = vadd.f32 0.0, %v6223
    %v6225 = vpop.f32.mrb[0].mxu0
    %v6226 = vpop.f32.mrb[0].mxu0
    %v6227 = vadd.f32 0.0, %v6226
    %v6228 = vpop.f32.mrb[0].mxu0
    %6229 = vmatprep.mubr.bf16.mxu0 0
    %6230 = vmatmul.mubr.bf16.gmra.mrb[0].mxu0 %v5880
    %v6231 = vpop.f32.mrb[0].mxu0
    %v6232 = vadd.f32 0.0, %v6231
    %v6233 = vpop.f32.mrb[0].mxu0
    %v6234 = vpop.f32.mrb[0].mxu0
    %v6235 = vadd.f32 0.0, %v6234
    %v6236 = vpop.f32.mrb[0].mxu0
    %6237 = vmatprep.mubr.bf16.mxu0 0
    %6238 = vmatmul.mubr.bf16.gmra.mrb[0].mxu0 %v5883
    %v6239 = vpop.f32.mrb[0].mxu0
    %v6240 = vadd.f32 0.0, %v6239
    %v6241 = vpop.f32.mrb[0].mxu0
    %v6242 = vpop.f32.mrb[0].mxu0
    %v6243 = vpop.f32.mrb[0].mxu0
    %6244 = vdwg.mxu0
    %v6245 = vadd.f32 %v5542, %v5920
    %v6246 = vadd.f32 %v5543, %v5923
    %v6247 = vadd.f32 %v5544, %v5928
    %v6248 = vadd.f32 %v5545, %v5931
    %v6249 = vadd.f32 %v5546, %v5936
    %v6250 = vadd.f32 %v5547, %v5939
    %v6251 = vadd.f32 %v5548, %v5944
    %v6252 = vadd.f32 %v5549, %v5947
    %v6253 = vadd.f32 %v5550, %v5952
    %v6254 = vadd.f32 %v5551, %v5955
    %v6255 = vadd.f32 %v5552, %v5960
    %v6256 = vadd.f32 %v5553, %v5963
    %v6257 = vadd.f32 %v5554, %v5968
    %v6258 = vadd.f32 %v5555, %v5971
    %v6259 = vadd.f32 %v5556, %v5976
    %v6260 = vadd.f32 %v5557, %v5979
    %v6261 = vadd.f32 %v5558, %v5984
    %v6262 = vadd.f32 %v5559, %v5987
    %v6263 = vadd.f32 %v5560, %v5992
    %v6264 = vadd.f32 %v5561, %v5995
    %v6265 = vadd.f32 %v5562, %v6000
    %v6266 = vadd.f32 %v5563, %v6003
    %v6267 = vadd.f32 %v5564, %v6008
    %v6268 = vadd.f32 %v5565, %v6011
    %v6269 = vadd.f32 %v5566, %v6016
    %v6270 = vadd.f32 %v5567, %v6019
    %v6271 = vadd.f32 %v5568, %v6024
    %v6272 = vadd.f32 %v5569, %v6027
    %v6273 = vadd.f32 %v5570, %v6032
    %v6274 = vadd.f32 %v5571, %v6035
    %v6275 = vadd.f32 %v5572, %v6040
    %v6276 = vadd.f32 %v5573, %v6043
    %v6277 = vadd.f32 %v5574, %v6048
    %v6278 = vadd.f32 %v5575, %v6051
    %v6279 = vadd.f32 %v5576, %v6056
    %v6280 = vadd.f32 %v5577, %v6059
    %v6281 = vadd.f32 %v5578, %v6064
    %v6282 = vadd.f32 %v5579, %v6067
    %v6283 = vadd.f32 %v5580, %v6072
    %v6284 = vadd.f32 %v5581, %v6075
    %v6285 = vadd.f32 %v5582, %v6080
    %v6286 = vadd.f32 %v5583, %v6083
    %v6287 = vadd.f32 %v5584, %v6088
    %v6288 = vadd.f32 %v5585, %v6091
    %v6289 = vadd.f32 %v5586, %v6096
    %v6290 = vadd.f32 %v5587, %v6099
    %v6291 = vadd.f32 %v5588, %v6104
    %v6292 = vadd.f32 %v5589, %v6107
    %v6293 = vadd.f32 %v5590, %v6112
    %v6294 = vadd.f32 %v5591, %v6115
    %v6295 = vadd.f32 %v5592, %v6120
    %v6296 = vadd.f32 %v5593, %v6123
    %v6297 = vadd.f32 %v5594, %v6128
    %v6298 = vadd.f32 %v5595, %v6131
    %v6299 = vadd.f32 %v5596, %v6136
    %v6300 = vadd.f32 %v5597, %v6139
    %v6301 = vadd.f32 %v5598, %v6144
    %v6302 = vadd.f32 %v5599, %v6147
    %v6303 = vadd.f32 %v5600, %v6152
    %v6304 = vadd.f32 %v5601, %v6155
    %v6305 = vadd.f32 %v5602, %v6160
    %v6306 = vadd.f32 %v5603, %v6163
    %v6307 = vadd.f32 %v5604, %v6168
    %v6308 = vadd.f32 %v5605, %v6171
    %v6309 = vadd.f32 %v5606, %v6176
    %v6310 = vadd.f32 %v5607, %v6179
    %v6311 = vadd.f32 %v5608, %v6184
    %v6312 = vadd.f32 %v5609, %v6187
    %v6313 = vadd.f32 %v5610, %v6192
    %v6314 = vadd.f32 %v5611, %v6195
    %v6315 = vadd.f32 %v5612, %v6200
    %v6316 = vadd.f32 %v5613, %v6203
    %v6317 = vadd.f32 %v5614, %v6208
    %v6318 = vadd.f32 %v5615, %v6211
    %v6319 = vadd.f32 %v5616, %v6216
    %v6320 = vadd.f32 %v5617, %v6219
    %v6321 = vadd.f32 %v5618, %v6224
    %v6322 = vadd.f32 %v5619, %v6227
    %v6323 = vadd.f32 %v5620, %v6232
    %v6324 = vadd.f32 %v5621, %v6235
    %v6325 = vadd.f32 %v5622, %v6240
    %v6326 = vld [vmem:[#allocation2 + $0x2a] sm:$0xff]
    %v6327 = vld [vmem:[#allocation2 + $0x32] sm:$0xff]
    %v6328 = vld [vmem:[#allocation2 + $0x3a] sm:$0xff]
    %v6329 = vld [vmem:[#allocation2 + $0x42] sm:$0xff]
    %v6330 = vld [vmem:[#allocation2 + $0x4a] sm:$0xff]
    %v6331 = vld [vmem:[#allocation2 + $0x52] sm:$0xff]
    %v6332 = vld [vmem:[#allocation2 + $0x5a] sm:$0xff]
    %v6333 = vld [vmem:[#allocation2 + $0x62] sm:$0xff]
    %v6334 = vld [vmem:[#allocation2 + $0x6a] sm:$0xff]
    %v6335 = vld [vmem:[#allocation2 + $0x72] sm:$0xff]
    %v6336 = vld [vmem:[#allocation2 + $0x7a] sm:$0xff]
    %v6337 = vld [vmem:[#allocation2 + $0x82] sm:$0xff]
    %v6338 = vld [vmem:[#allocation2 + $0x8a] sm:$0xff]
    %v6339 = vld [vmem:[#allocation2 + $0x92] sm:$0xff]
    %v6340 = vld [vmem:[#allocation2 + $0x9a] sm:$0xff]
    %v6341 = vld [vmem:[#allocation2 + $0xa2] sm:$0xff]
    %v6342 = vld [vmem:[#allocation2 + $0xaa] sm:$0xff]
    %v6343 = vld [vmem:[#allocation2 + $0xb2] sm:$0xff]
    %v6344 = vld [vmem:[#allocation2 + $0xba] sm:$0xff]
    %v6345 = vld [vmem:[#allocation2 + $0xc2] sm:$0xff]
    %v6346 = vld [vmem:[#allocation2 + $0xca] sm:$0xff]
    %v6347 = vld [vmem:[#allocation2 + $0xd2] sm:$0xff]
    %v6348 = vld [vmem:[#allocation2 + $0xda] sm:$0xff]
    %v6349 = vld [vmem:[#allocation2 + $0xe2] sm:$0xff]
    %v6350 = vld [vmem:[#allocation2 + $0xea] sm:$0xff]
    %v6351 = vld [vmem:[#allocation2 + $0xf2] sm:$0xff]
    %v6352 = vld [vmem:[#allocation2 + $0xfa] sm:$0xff]
    %v6353 = vld [vmem:[#allocation2 + $0x102] sm:$0xff]
    %v6354 = vld [vmem:[#allocation2 + $0x10a] sm:$0xff]
    %v6355 = vld [vmem:[#allocation2 + $0x112] sm:$0xff]
    %v6356 = vld [vmem:[#allocation2 + $0x11a] sm:$0xff]
    %v6357 = vld [vmem:[#allocation2 + $0x122] sm:$0xff]
    %v6358 = vld [vmem:[#allocation2 + $0x12a] sm:$0xff]
    %v6359 = vld [vmem:[#allocation2 + $0x132] sm:$0xff]
    %v6360 = vld [vmem:[#allocation2 + $0x13a] sm:$0xff]
    %v6361 = vld [vmem:[#allocation2 + $0x142] sm:$0xff]
    %v6362 = vld [vmem:[#allocation2 + $0x14a] sm:$0xff]
    %v6363 = vld [vmem:[#allocation2 + $0x152] sm:$0xff]
    %v6364 = vld [vmem:[#allocation2 + $0x15a] sm:$0xff]
    %v6365 = vld [vmem:[#allocation2 + $0x162] sm:$0xff]
    %v6366 = vld [vmem:[#allocation2 + $0x16a] sm:$0xff]
    %v6367 = vld [vmem:[#allocation2 + $0x172] sm:$0xff]
    %v6368 = vld [vmem:[#allocation2 + $0x17a] sm:$0xff]
    %v6369 = vld [vmem:[#allocation2 + $0x182] sm:$0xff]
    %v6370 = vld [vmem:[#allocation2 + $0x18a] sm:$0xff]
    %v6371 = vld [vmem:[#allocation2 + $0x192] sm:$0xff]
    %v6372 = vld [vmem:[#allocation2 + $0x19a] sm:$0xff]
    %v6373 = vld [vmem:[#allocation2 + $0x1a2] sm:$0xff]
    %v6374 = vld [vmem:[#allocation2 + $0x1aa] sm:$0xff]
    %v6375 = vld [vmem:[#allocation2 + $0x1b2] sm:$0xff]
    %v6376 = vld [vmem:[#allocation2 + $0x1ba] sm:$0xff]
    %v6377 = vld [vmem:[#allocation2 + $0x1c2] sm:$0xff]
    %v6378 = vld [vmem:[#allocation2 + $0x1ca] sm:$0xff]
    %v6379 = vld [vmem:[#allocation2 + $0x1d2] sm:$0xff]
    %v6380 = vld [vmem:[#allocation2 + $0x1da] sm:$0xff]
    %v6381 = vld [vmem:[#allocation2 + $0x1e2] sm:$0xff]
    %v6382 = vld [vmem:[#allocation2 + $0x1ea] sm:$0xff]
    %v6383 = vld [vmem:[#allocation2 + $0x1f2] sm:$0xff]
    %v6384 = vld [vmem:[#allocation2 + $0x1fa] sm:$0xff]
    %v6385 = vld [vmem:[#allocation2 + $0x202] sm:$0xff]
    %v6386 = vld [vmem:[#allocation2 + $0x20a] sm:$0xff]
    %v6387 = vld [vmem:[#allocation2 + $0x212] sm:$0xff]
    %v6388 = vld [vmem:[#allocation2 + $0x21a] sm:$0xff]
    %v6389 = vld [vmem:[#allocation2 + $0x222] sm:$0xff]
    %v6390 = vld [vmem:[#allocation2 + $0x22a] sm:$0xff]
    %v6391 = vld [vmem:[#allocation2 + $0x232] sm:$0xff]
    %v6392 = vld [vmem:[#allocation2 + $0x23a] sm:$0xff]
    %v6393 = vld [vmem:[#allocation2 + $0x242] sm:$0xff]
    %v6394 = vld [vmem:[#allocation2 + $0x24a] sm:$0xff]
    %v6395 = vld [vmem:[#allocation2 + $0x252] sm:$0xff]
    %v6396 = vld [vmem:[#allocation2 + $0x25a] sm:$0xff]
    %v6397 = vld [vmem:[#allocation2 + $0x262] sm:$0xff]
    %v6398 = vld [vmem:[#allocation2 + $0x26a] sm:$0xff]
    %v6399 = vld [vmem:[#allocation2 + $0x272] sm:$0xff]
    %v6400 = vld [vmem:[#allocation2 + $0x27a] sm:$0xff]
    %v6401 = vld [vmem:[#allocation2 + $0x282] sm:$0xff]
    %v6402 = vld [vmem:[#allocation2 + $0x28a] sm:$0xff]
    %v6403 = vld [vmem:[#allocation2 + $0x292] sm:$0xff]
    %v6404 = vld [vmem:[#allocation2 + $0x29a] sm:$0xff]
    %v6405 = vld [vmem:[#allocation2 + $0x2a2] sm:$0xff]
    %v6406 = vld [vmem:[#allocation2 + $0x2aa] sm:$0xff]
    %v6407 = vpack.c.bf16 %v6327, %v6326
    %v6408 = vpack.c.bf16 %v6329, %v6328
    %v6409 = vpack.c.bf16 %v6331, %v6330
    %v6410 = vpack.c.bf16 %v6333, %v6332
    %v6411 = vpack.c.bf16 %v6335, %v6334
    %v6412 = vpack.c.bf16 %v6337, %v6336
    %v6413 = vpack.c.bf16 %v6339, %v6338
    %v6414 = vpack.c.bf16 %v6341, %v6340
    %v6415 = vpack.c.bf16 %v6343, %v6342
    %v6416 = vpack.c.bf16 %v6345, %v6344
    %v6417 = vpack.c.bf16 %v6347, %v6346
    %v6418 = vpack.c.bf16 %v6349, %v6348
    %v6419 = vpack.c.bf16 %v6351, %v6350
    %v6420 = vpack.c.bf16 %v6353, %v6352
    %v6421 = vpack.c.bf16 %v6355, %v6354
    %v6422 = vpack.c.bf16 %v6357, %v6356
    %v6423 = vpack.c.bf16 %v6359, %v6358
    %v6424 = vpack.c.bf16 %v6361, %v6360
    %v6425 = vpack.c.bf16 %v6363, %v6362
    %v6426 = vpack.c.bf16 %v6365, %v6364
    %v6427 = vpack.c.bf16 %v6367, %v6366
    %v6428 = vpack.c.bf16 %v6369, %v6368
    %v6429 = vpack.c.bf16 %v6371, %v6370
    %v6430 = vpack.c.bf16 %v6373, %v6372
    %v6431 = vpack.c.bf16 %v6375, %v6374
    %v6432 = vpack.c.bf16 %v6377, %v6376
    %v6433 = vpack.c.bf16 %v6379, %v6378
    %v6434 = vpack.c.bf16 %v6381, %v6380
    %v6435 = vpack.c.bf16 %v6383, %v6382
    %v6436 = vpack.c.bf16 %v6385, %v6384
    %v6437 = vpack.c.bf16 %v6387, %v6386
    %v6438 = vpack.c.bf16 %v6389, %v6388
    %v6439 = vpack.c.bf16 %v6391, %v6390
    %v6440 = vpack.c.bf16 %v6393, %v6392
    %v6441 = vpack.c.bf16 %v6395, %v6394
    %v6442 = vpack.c.bf16 %v6397, %v6396
    %v6443 = vpack.c.bf16 %v6399, %v6398
    %v6444 = vpack.c.bf16 %v6401, %v6400
    %v6445 = vpack.c.bf16 %v6403, %v6402
    %v6446 = vpack.c.bf16 %v6405, %v6404
    %v6447 = vpack.c.bf16 %v6406, %v6406
    %s6448 = scalar_lea.vmem %s2, 112
    %v6449 = vld [vmem:[%s6448] sm:$0xf]
    %v6450 = vld [vmem:[%s6448 + $0x4] sm:$0xf]
    %v6451 = vld [vmem:[%s6448 + $0x8] sm:$0xf]
    %v6452 = vld [vmem:[%s6448 + $0xc] sm:$0xf]
    %v6457 = vunpack.c.l.b16 %v6449
    %v6458 = vunpack.c.l.b16 %v6450
    %v6459 = vunpack.c.l.b16 %v6451
    %v6460 = vunpack.c.l.b16 %v6452
    %v6461 = vpack.c.b16 %v6458, %v6457
    %v6462 = vpack.c.b16 %v6460, %v6459
    %v6466 = vsel %vm1480, %v6407, 0
    %v6469 = vsel %vm1480, %v6408, 0
    %v6472 = vsel %vm1480, %v6409, 0
    %v6475 = vsel %vm1480, %v6410, 0
    %v6478 = vsel %vm1480, %v6411, 0
    %v6481 = vsel %vm1480, %v6412, 0
    %v6484 = vsel %vm1480, %v6413, 0
    %v6487 = vsel %vm1480, %v6414, 0
    %v6490 = vsel %vm1480, %v6415, 0
    %v6493 = vsel %vm1480, %v6416, 0
    %v6496 = vsel %vm1480, %v6417, 0
    %v6499 = vsel %vm1480, %v6418, 0
    %v6502 = vsel %vm1480, %v6419, 0
    %v6505 = vsel %vm1480, %v6420, 0
    %v6508 = vsel %vm1480, %v6421, 0
    %v6511 = vsel %vm1480, %v6422, 0
    %v6514 = vsel %vm1480, %v6423, 0
    %v6517 = vsel %vm1480, %v6424, 0
    %v6520 = vsel %vm1480, %v6425, 0
    %v6523 = vsel %vm1480, %v6426, 0
    %v6526 = vsel %vm1480, %v6427, 0
    %v6529 = vsel %vm1480, %v6428, 0
    %v6532 = vsel %vm1480, %v6429, 0
    %v6535 = vsel %vm1480, %v6430, 0
    %v6538 = vsel %vm1480, %v6431, 0
    %v6541 = vsel %vm1480, %v6432, 0
    %v6544 = vsel %vm1480, %v6433, 0
    %v6547 = vsel %vm1480, %v6434, 0
    %v6550 = vsel %vm1480, %v6435, 0
    %v6553 = vsel %vm1480, %v6436, 0
    %v6556 = vsel %vm1480, %v6437, 0
    %v6559 = vsel %vm1480, %v6438, 0
    %v6562 = vsel %vm1480, %v6439, 0
    %v6565 = vsel %vm1480, %v6440, 0
    %v6568 = vsel %vm1480, %v6441, 0
    %v6571 = vsel %vm1480, %v6442, 0
    %v6574 = vsel %vm1480, %v6443, 0
    %v6577 = vsel %vm1480, %v6444, 0
    %v6580 = vsel %vm1480, %v6445, 0
    %v6583 = vsel %vm1480, %v6446, 0
    %v6586 = vsel %vm1480, %v6447, 0
    %6588 = vmatprep.subr.bf16.mxu0 0
    %6589 = vmatpush1.bf16.msra.mxu0 %v6461
    %6590 = vmatprep.subr.bf16.mxu0 0
    %6591 = vmatpush1.bf16.msra.mxu0 %v6462
    %6592 = vmatprep.subr.bf16.mxu0 0
    %6593 = vmatpush1.bf16.msra.mxu0 0
    %6594 = vmatprep.subr.bf16.mxu0 0
    %6595 = vmatpush1.bf16.msra.mxu0 0
    %6596 = vmatprep.subr.bf16.mxu0 0
    %6597 = vmatpush1.bf16.msra.mxu0 0
    %6598 = vmatprep.subr.bf16.mxu0 0
    %6599 = vmatpush1.bf16.msra.mxu0 0
    %6600 = vmatprep.subr.bf16.mxu0 0
    %6601 = vmatpush1.bf16.msra.mxu0 0
    %6602 = vmatprep.subr.bf16.mxu0 0
    %6603 = vmatpush1.bf16.msra.mxu0 0
    %6604 = vmatprep.subr.bf16.mxu0 0
    %6605 = vmatpush1.bf16.msra.mxu0 0
    %6606 = vmatprep.subr.bf16.mxu0 0
    %6607 = vmatpush1.bf16.msra.mxu0 0
    %6608 = vmatprep.subr.bf16.mxu0 0
    %6609 = vmatpush1.bf16.msra.mxu0 0
    %6610 = vmatprep.subr.bf16.mxu0 0
    %6611 = vmatpush1.bf16.msra.mxu0 0
    %6612 = vmatprep.subr.bf16.mxu0 0
    %6613 = vmatpush1.bf16.msra.mxu0 0
    %6614 = vmatprep.subr.bf16.mxu0 0
    %6615 = vmatpush1.bf16.msra.mxu0 0
    %6616 = vmatprep.subr.bf16.mxu0 0
    %6617 = vmatpush1.bf16.msra.mxu0 0
    %6618 = vmatprep.subr.bf16.mxu0 0
    %6619 = vmatpush1.bf16.msra.mxu0 0
    %6620 = vmatprep.mubr.bf16.mxu0 0
    %6621 = vmatmul.mubr.bf16.gmra.mrb[0].mxu0 %v6466
    %v6622 = vpop.f32.mrb[0].mxu0
    %v6623 = vadd.f32 0.0, %v6622
    %v6624 = vpop.f32.mrb[0].mxu0
    %v6625 = vpop.f32.mrb[0].mxu0
    %v6626 = vadd.f32 0.0, %v6625
    %v6627 = vpop.f32.mrb[0].mxu0
    %6628 = vmatprep.mubr.bf16.mxu0 0
    %6629 = vmatmul.mubr.bf16.gmra.mrb[0].mxu0 %v6469
    %v6630 = vpop.f32.mrb[0].mxu0
    %v6631 = vadd.f32 0.0, %v6630
    %v6632 = vpop.f32.mrb[0].mxu0
    %v6633 = vpop.f32.mrb[0].mxu0
    %v6634 = vadd.f32 0.0, %v6633
    %v6635 = vpop.f32.mrb[0].mxu0
    %6636 = vmatprep.mubr.bf16.mxu0 0
    %6637 = vmatmul.mubr.bf16.gmra.mrb[0].mxu0 %v6472
    %v6638 = vpop.f32.mrb[0].mxu0
    %v6639 = vadd.f32 0.0, %v6638
    %v6640 = vpop.f32.mrb[0].mxu0
    %v6641 = vpop.f32.mrb[0].mxu0
    %v6642 = vadd.f32 0.0, %v6641
    %v6643 = vpop.f32.mrb[0].mxu0
    %6644 = vmatprep.mubr.bf16.mxu0 0
    %6645 = vmatmul.mubr.bf16.gmra.mrb[0].mxu0 %v6475
    %v6646 = vpop.f32.mrb[0].mxu0
    %v6647 = vadd.f32 0.0, %v6646
    %v6648 = vpop.f32.mrb[0].mxu0
    %v6649 = vpop.f32.mrb[0].mxu0
    %v6650 = vadd.f32 0.0, %v6649
    %v6651 = vpop.f32.mrb[0].mxu0
    %6652 = vmatprep.mubr.bf16.mxu0 0
    %6653 = vmatmul.mubr.bf16.gmra.mrb[0].mxu0 %v6478
    %v6654 = vpop.f32.mrb[0].mxu0
    %v6655 = vadd.f32 0.0, %v6654
    %v6656 = vpop.f32.mrb[0].mxu0
    %v6657 = vpop.f32.mrb[0].mxu0
    %v6658 = vadd.f32 0.0, %v6657
    %v6659 = vpop.f32.mrb[0].mxu0
    %6660 = vmatprep.mubr.bf16.mxu0 0
    %6661 = vmatmul.mubr.bf16.gmra.mrb[0].mxu0 %v6481
    %v6662 = vpop.f32.mrb[0].mxu0
    %v6663 = vadd.f32 0.0, %v6662
    %v6664 = vpop.f32.mrb[0].mxu0
    %v6665 = vpop.f32.mrb[0].mxu0
    %v6666 = vadd.f32 0.0, %v6665
    %v6667 = vpop.f32.mrb[0].mxu0
    %6668 = vmatprep.mubr.bf16.mxu0 0
    %6669 = vmatmul.mubr.bf16.gmra.mrb[0].mxu0 %v6484
    %v6670 = vpop.f32.mrb[0].mxu0
    %v6671 = vadd.f32 0.0, %v6670
    %v6672 = vpop.f32.mrb[0].mxu0
    %v6673 = vpop.f32.mrb[0].mxu0
    %v6674 = vadd.f32 0.0, %v6673
    %v6675 = vpop.f32.mrb[0].mxu0
    %6676 = vmatprep.mubr.bf16.mxu0 0
    %6677 = vmatmul.mubr.bf16.gmra.mrb[0].mxu0 %v6487
    %v6678 = vpop.f32.mrb[0].mxu0
    %v6679 = vadd.f32 0.0, %v6678
    %v6680 = vpop.f32.mrb[0].mxu0
    %v6681 = vpop.f32.mrb[0].mxu0
    %v6682 = vadd.f32 0.0, %v6681
    %v6683 = vpop.f32.mrb[0].mxu0
    %6684 = vmatprep.mubr.bf16.mxu0 0
    %6685 = vmatmul.mubr.bf16.gmra.mrb[0].mxu0 %v6490
    %v6686 = vpop.f32.mrb[0].mxu0
    %v6687 = vadd.f32 0.0, %v6686
    %v6688 = vpop.f32.mrb[0].mxu0
    %v6689 = vpop.f32.mrb[0].mxu0
    %v6690 = vadd.f32 0.0, %v6689
    %v6691 = vpop.f32.mrb[0].mxu0
    %6692 = vmatprep.mubr.bf16.mxu0 0
    %6693 = vmatmul.mubr.bf16.gmra.mrb[0].mxu0 %v6493
    %v6694 = vpop.f32.mrb[0].mxu0
    %v6695 = vadd.f32 0.0, %v6694
    %v6696 = vpop.f32.mrb[0].mxu0
    %v6697 = vpop.f32.mrb[0].mxu0
    %v6698 = vadd.f32 0.0, %v6697
    %v6699 = vpop.f32.mrb[0].mxu0
    %6700 = vmatprep.mubr.bf16.mxu0 0
    %6701 = vmatmul.mubr.bf16.gmra.mrb[0].mxu0 %v6496
    %v6702 = vpop.f32.mrb[0].mxu0
    %v6703 = vadd.f32 0.0, %v6702
    %v6704 = vpop.f32.mrb[0].mxu0
    %v6705 = vpop.f32.mrb[0].mxu0
    %v6706 = vadd.f32 0.0, %v6705
    %v6707 = vpop.f32.mrb[0].mxu0
    %6708 = vmatprep.mubr.bf16.mxu0 0
    %6709 = vmatmul.mubr.bf16.gmra.mrb[0].mxu0 %v6499
    %v6710 = vpop.f32.mrb[0].mxu0
    %v6711 = vadd.f32 0.0, %v6710
    %v6712 = vpop.f32.mrb[0].mxu0
    %v6713 = vpop.f32.mrb[0].mxu0
    %v6714 = vadd.f32 0.0, %v6713
    %v6715 = vpop.f32.mrb[0].mxu0
    %6716 = vmatprep.mubr.bf16.mxu0 0
    %6717 = vmatmul.mubr.bf16.gmra.mrb[0].mxu0 %v6502
    %v6718 = vpop.f32.mrb[0].mxu0
    %v6719 = vadd.f32 0.0, %v6718
    %v6720 = vpop.f32.mrb[0].mxu0
    %v6721 = vpop.f32.mrb[0].mxu0
    %v6722 = vadd.f32 0.0, %v6721
    %v6723 = vpop.f32.mrb[0].mxu0
    %6724 = vmatprep.mubr.bf16.mxu0 0
    %6725 = vmatmul.mubr.bf16.gmra.mrb[0].mxu0 %v6505
    %v6726 = vpop.f32.mrb[0].mxu0
    %v6727 = vadd.f32 0.0, %v6726
    %v6728 = vpop.f32.mrb[0].mxu0
    %v6729 = vpop.f32.mrb[0].mxu0
    %v6730 = vadd.f32 0.0, %v6729
    %v6731 = vpop.f32.mrb[0].mxu0
    %6732 = vmatprep.mubr.bf16.mxu0 0
    %6733 = vmatmul.mubr.bf16.gmra.mrb[0].mxu0 %v6508
    %v6734 = vpop.f32.mrb[0].mxu0
    %v6735 = vadd.f32 0.0, %v6734
    %v6736 = vpop.f32.mrb[0].mxu0
    %v6737 = vpop.f32.mrb[0].mxu0
    %v6738 = vadd.f32 0.0, %v6737
    %v6739 = vpop.f32.mrb[0].mxu0
    %6740 = vmatprep.mubr.bf16.mxu0 0
    %6741 = vmatmul.mubr.bf16.gmra.mrb[0].mxu0 %v6511
    %v6742 = vpop.f32.mrb[0].mxu0
    %v6743 = vadd.f32 0.0, %v6742
    %v6744 = vpop.f32.mrb[0].mxu0
    %v6745 = vpop.f32.mrb[0].mxu0
    %v6746 = vadd.f32 0.0, %v6745
    %v6747 = vpop.f32.mrb[0].mxu0
    %6748 = vmatprep.mubr.bf16.mxu0 0
    %6749 = vmatmul.mubr.bf16.gmra.mrb[0].mxu0 %v6514
    %v6750 = vpop.f32.mrb[0].mxu0
    %v6751 = vadd.f32 0.0, %v6750
    %v6752 = vpop.f32.mrb[0].mxu0
    %v6753 = vpop.f32.mrb[0].mxu0
    %v6754 = vadd.f32 0.0, %v6753
    %v6755 = vpop.f32.mrb[0].mxu0
    %6756 = vmatprep.mubr.bf16.mxu0 0
    %6757 = vmatmul.mubr.bf16.gmra.mrb[0].mxu0 %v6517
    %v6758 = vpop.f32.mrb[0].mxu0
    %v6759 = vadd.f32 0.0, %v6758
    %v6760 = vpop.f32.mrb[0].mxu0
    %v6761 = vpop.f32.mrb[0].mxu0
    %v6762 = vadd.f32 0.0, %v6761
    %v6763 = vpop.f32.mrb[0].mxu0
    %6764 = vmatprep.mubr.bf16.mxu0 0
    %6765 = vmatmul.mubr.bf16.gmra.mrb[0].mxu0 %v6520
    %v6766 = vpop.f32.mrb[0].mxu0
    %v6767 = vadd.f32 0.0, %v6766
    %v6768 = vpop.f32.mrb[0].mxu0
    %v6769 = vpop.f32.mrb[0].mxu0
    %v6770 = vadd.f32 0.0, %v6769
    %v6771 = vpop.f32.mrb[0].mxu0
    %6772 = vmatprep.mubr.bf16.mxu0 0
    %6773 = vmatmul.mubr.bf16.gmra.mrb[0].mxu0 %v6523
    %v6774 = vpop.f32.mrb[0].mxu0
    %v6775 = vadd.f32 0.0, %v6774
    %v6776 = vpop.f32.mrb[0].mxu0
    %v6777 = vpop.f32.mrb[0].mxu0
    %v6778 = vadd.f32 0.0, %v6777
    %v6779 = vpop.f32.mrb[0].mxu0
    %6780 = vmatprep.mubr.bf16.mxu0 0
    %6781 = vmatmul.mubr.bf16.gmra.mrb[0].mxu0 %v6526
    %v6782 = vpop.f32.mrb[0].mxu0
    %v6783 = vadd.f32 0.0, %v6782
    %v6784 = vpop.f32.mrb[0].mxu0
    %v6785 = vpop.f32.mrb[0].mxu0
    %v6786 = vadd.f32 0.0, %v6785
    %v6787 = vpop.f32.mrb[0].mxu0
    %6788 = vmatprep.mubr.bf16.mxu0 0
    %6789 = vmatmul.mubr.bf16.gmra.mrb[0].mxu0 %v6529
    %v6790 = vpop.f32.mrb[0].mxu0
    %v6791 = vadd.f32 0.0, %v6790
    %v6792 = vpop.f32.mrb[0].mxu0
    %v6793 = vpop.f32.mrb[0].mxu0
    %v6794 = vadd.f32 0.0, %v6793
    %v6795 = vpop.f32.mrb[0].mxu0
    %6796 = vmatprep.mubr.bf16.mxu0 0
    %6797 = vmatmul.mubr.bf16.gmra.mrb[0].mxu0 %v6532
    %v6798 = vpop.f32.mrb[0].mxu0
    %v6799 = vadd.f32 0.0, %v6798
    %v6800 = vpop.f32.mrb[0].mxu0
    %v6801 = vpop.f32.mrb[0].mxu0
    %v6802 = vadd.f32 0.0, %v6801
    %v6803 = vpop.f32.mrb[0].mxu0
    %6804 = vmatprep.mubr.bf16.mxu0 0
    %6805 = vmatmul.mubr.bf16.gmra.mrb[0].mxu0 %v6535
    %v6806 = vpop.f32.mrb[0].mxu0
    %v6807 = vadd.f32 0.0, %v6806
    %v6808 = vpop.f32.mrb[0].mxu0
    %v6809 = vpop.f32.mrb[0].mxu0
    %v6810 = vadd.f32 0.0, %v6809
    %v6811 = vpop.f32.mrb[0].mxu0
    %6812 = vmatprep.mubr.bf16.mxu0 0
    %6813 = vmatmul.mubr.bf16.gmra.mrb[0].mxu0 %v6538
    %v6814 = vpop.f32.mrb[0].mxu0
    %v6815 = vadd.f32 0.0, %v6814
    %v6816 = vpop.f32.mrb[0].mxu0
    %v6817 = vpop.f32.mrb[0].mxu0
    %v6818 = vadd.f32 0.0, %v6817
    %v6819 = vpop.f32.mrb[0].mxu0
    %6820 = vmatprep.mubr.bf16.mxu0 0
    %6821 = vmatmul.mubr.bf16.gmra.mrb[0].mxu0 %v6541
    %v6822 = vpop.f32.mrb[0].mxu0
    %v6823 = vadd.f32 0.0, %v6822
    %v6824 = vpop.f32.mrb[0].mxu0
    %v6825 = vpop.f32.mrb[0].mxu0
    %v6826 = vadd.f32 0.0, %v6825
    %v6827 = vpop.f32.mrb[0].mxu0
    %6828 = vmatprep.mubr.bf16.mxu0 0
    %6829 = vmatmul.mubr.bf16.gmra.mrb[0].mxu0 %v6544
    %v6830 = vpop.f32.mrb[0].mxu0
    %v6831 = vadd.f32 0.0, %v6830
    %v6832 = vpop.f32.mrb[0].mxu0
    %v6833 = vpop.f32.mrb[0].mxu0
    %v6834 = vadd.f32 0.0, %v6833
    %v6835 = vpop.f32.mrb[0].mxu0
    %6836 = vmatprep.mubr.bf16.mxu0 0
    %6837 = vmatmul.mubr.bf16.gmra.mrb[0].mxu0 %v6547
    %v6838 = vpop.f32.mrb[0].mxu0
    %v6839 = vadd.f32 0.0, %v6838
    %v6840 = vpop.f32.mrb[0].mxu0
    %v6841 = vpop.f32.mrb[0].mxu0
    %v6842 = vadd.f32 0.0, %v6841
    %v6843 = vpop.f32.mrb[0].mxu0
    %6844 = vmatprep.mubr.bf16.mxu0 0
    %6845 = vmatmul.mubr.bf16.gmra.mrb[0].mxu0 %v6550
    %v6846 = vpop.f32.mrb[0].mxu0
    %v6847 = vadd.f32 0.0, %v6846
    %v6848 = vpop.f32.mrb[0].mxu0
    %v6849 = vpop.f32.mrb[0].mxu0
    %v6850 = vadd.f32 0.0, %v6849
    %v6851 = vpop.f32.mrb[0].mxu0
    %6852 = vmatprep.mubr.bf16.mxu0 0
    %6853 = vmatmul.mubr.bf16.gmra.mrb[0].mxu0 %v6553
    %v6854 = vpop.f32.mrb[0].mxu0
    %v6855 = vadd.f32 0.0, %v6854
    %v6856 = vpop.f32.mrb[0].mxu0
    %v6857 = vpop.f32.mrb[0].mxu0
    %v6858 = vadd.f32 0.0, %v6857
    %v6859 = vpop.f32.mrb[0].mxu0
    %6860 = vmatprep.mubr.bf16.mxu0 0
    %6861 = vmatmul.mubr.bf16.gmra.mrb[0].mxu0 %v6556
    %v6862 = vpop.f32.mrb[0].mxu0
    %v6863 = vadd.f32 0.0, %v6862
    %v6864 = vpop.f32.mrb[0].mxu0
    %v6865 = vpop.f32.mrb[0].mxu0
    %v6866 = vadd.f32 0.0, %v6865
    %v6867 = vpop.f32.mrb[0].mxu0
    %6868 = vmatprep.mubr.bf16.mxu0 0
    %6869 = vmatmul.mubr.bf16.gmra.mrb[0].mxu0 %v6559
    %v6870 = vpop.f32.mrb[0].mxu0
    %v6871 = vadd.f32 0.0, %v6870
    %v6872 = vpop.f32.mrb[0].mxu0
    %v6873 = vpop.f32.mrb[0].mxu0
    %v6874 = vadd.f32 0.0, %v6873
    %v6875 = vpop.f32.mrb[0].mxu0
    %6876 = vmatprep.mubr.bf16.mxu0 0
    %6877 = vmatmul.mubr.bf16.gmra.mrb[0].mxu0 %v6562
    %v6878 = vpop.f32.mrb[0].mxu0
    %v6879 = vadd.f32 0.0, %v6878
    %v6880 = vpop.f32.mrb[0].mxu0
    %v6881 = vpop.f32.mrb[0].mxu0
    %v6882 = vadd.f32 0.0, %v6881
    %v6883 = vpop.f32.mrb[0].mxu0
    %6884 = vmatprep.mubr.bf16.mxu0 0
    %6885 = vmatmul.mubr.bf16.gmra.mrb[0].mxu0 %v6565
    %v6886 = vpop.f32.mrb[0].mxu0
    %v6887 = vadd.f32 0.0, %v6886
    %v6888 = vpop.f32.mrb[0].mxu0
    %v6889 = vpop.f32.mrb[0].mxu0
    %v6890 = vadd.f32 0.0, %v6889
    %v6891 = vpop.f32.mrb[0].mxu0
    %6892 = vmatprep.mubr.bf16.mxu0 0
    %6893 = vmatmul.mubr.bf16.gmra.mrb[0].mxu0 %v6568
    %v6894 = vpop.f32.mrb[0].mxu0
    %v6895 = vadd.f32 0.0, %v6894
    %v6896 = vpop.f32.mrb[0].mxu0
    %v6897 = vpop.f32.mrb[0].mxu0
    %v6898 = vadd.f32 0.0, %v6897
    %v6899 = vpop.f32.mrb[0].mxu0
    %6900 = vmatprep.mubr.bf16.mxu0 0
    %6901 = vmatmul.mubr.bf16.gmra.mrb[0].mxu0 %v6571
    %v6902 = vpop.f32.mrb[0].mxu0
    %v6903 = vadd.f32 0.0, %v6902
    %v6904 = vpop.f32.mrb[0].mxu0
    %v6905 = vpop.f32.mrb[0].mxu0
    %v6906 = vadd.f32 0.0, %v6905
    %v6907 = vpop.f32.mrb[0].mxu0
    %6908 = vmatprep.mubr.bf16.mxu0 0
    %6909 = vmatmul.mubr.bf16.gmra.mrb[0].mxu0 %v6574
    %v6910 = vpop.f32.mrb[0].mxu0
    %v6911 = vadd.f32 0.0, %v6910
    %v6912 = vpop.f32.mrb[0].mxu0
    %v6913 = vpop.f32.mrb[0].mxu0
    %v6914 = vadd.f32 0.0, %v6913
    %v6915 = vpop.f32.mrb[0].mxu0
    %6916 = vmatprep.mubr.bf16.mxu0 0
    %6917 = vmatmul.mubr.bf16.gmra.mrb[0].mxu0 %v6577
    %v6918 = vpop.f32.mrb[0].mxu0
    %v6919 = vadd.f32 0.0, %v6918
    %v6920 = vpop.f32.mrb[0].mxu0
    %v6921 = vpop.f32.mrb[0].mxu0
    %v6922 = vadd.f32 0.0, %v6921
    %v6923 = vpop.f32.mrb[0].mxu0
    %6924 = vmatprep.mubr.bf16.mxu0 0
    %6925 = vmatmul.mubr.bf16.gmra.mrb[0].mxu0 %v6580
    %v6926 = vpop.f32.mrb[0].mxu0
    %v6927 = vadd.f32 0.0, %v6926
    %v6928 = vpop.f32.mrb[0].mxu0
    %v6929 = vpop.f32.mrb[0].mxu0
    %v6930 = vadd.f32 0.0, %v6929
    %v6931 = vpop.f32.mrb[0].mxu0
    %6932 = vmatprep.mubr.bf16.mxu0 0
    %6933 = vmatmul.mubr.bf16.gmra.mrb[0].mxu0 %v6583
    %v6934 = vpop.f32.mrb[0].mxu0
    %v6935 = vadd.f32 0.0, %v6934
    %v6936 = vpop.f32.mrb[0].mxu0
    %v6937 = vpop.f32.mrb[0].mxu0
    %v6938 = vadd.f32 0.0, %v6937
    %v6939 = vpop.f32.mrb[0].mxu0
    %6940 = vmatprep.mubr.bf16.mxu0 0
    %6941 = vmatmul.mubr.bf16.gmra.mrb[0].mxu0 %v6586
    %v6942 = vpop.f32.mrb[0].mxu0
    %v6943 = vadd.f32 0.0, %v6942
    %v6944 = vpop.f32.mrb[0].mxu0
    %v6945 = vpop.f32.mrb[0].mxu0
    %v6946 = vpop.f32.mrb[0].mxu0
    %6947 = vdwg.mxu0
    %v6948 = vadd.f32 %v6245, %v6623
    %v6949 = vadd.f32 %v6246, %v6626
    %v6950 = vadd.f32 %v6247, %v6631
    %v6951 = vadd.f32 %v6248, %v6634
    %v6952 = vadd.f32 %v6249, %v6639
    %v6953 = vadd.f32 %v6250, %v6642
    %v6954 = vadd.f32 %v6251, %v6647
    %v6955 = vadd.f32 %v6252, %v6650
    %v6956 = vadd.f32 %v6253, %v6655
    %v6957 = vadd.f32 %v6254, %v6658
    %v6958 = vadd.f32 %v6255, %v6663
    %v6959 = vadd.f32 %v6256, %v6666
    %v6960 = vadd.f32 %v6257, %v6671
    %v6961 = vadd.f32 %v6258, %v6674
    %v6962 = vadd.f32 %v6259, %v6679
    %v6963 = vadd.f32 %v6260, %v6682
    %v6964 = vadd.f32 %v6261, %v6687
    %v6965 = vadd.f32 %v6262, %v6690
    %v6966 = vadd.f32 %v6263, %v6695
    %v6967 = vadd.f32 %v6264, %v6698
    %v6968 = vadd.f32 %v6265, %v6703
    %v6969 = vadd.f32 %v6266, %v6706
    %v6970 = vadd.f32 %v6267, %v6711
    %v6971 = vadd.f32 %v6268, %v6714
    %v6972 = vadd.f32 %v6269, %v6719
    %v6973 = vadd.f32 %v6270, %v6722
    %v6974 = vadd.f32 %v6271, %v6727
    %v6975 = vadd.f32 %v6272, %v6730
    %v6976 = vadd.f32 %v6273, %v6735
    %v6977 = vadd.f32 %v6274, %v6738
    %v6978 = vadd.f32 %v6275, %v6743
    %v6979 = vadd.f32 %v6276, %v6746
    %v6980 = vadd.f32 %v6277, %v6751
    %v6981 = vadd.f32 %v6278, %v6754
    %v6982 = vadd.f32 %v6279, %v6759
    %v6983 = vadd.f32 %v6280, %v6762
    %v6984 = vadd.f32 %v6281, %v6767
    %v6985 = vadd.f32 %v6282, %v6770
    %v6986 = vadd.f32 %v6283, %v6775
    %v6987 = vadd.f32 %v6284, %v6778
    %v6988 = vadd.f32 %v6285, %v6783
    %v6989 = vadd.f32 %v6286, %v6786
    %v6990 = vadd.f32 %v6287, %v6791
    %v6991 = vadd.f32 %v6288, %v6794
    %v6992 = vadd.f32 %v6289, %v6799
    %v6993 = vadd.f32 %v6290, %v6802
    %v6994 = vadd.f32 %v6291, %v6807
    %v6995 = vadd.f32 %v6292, %v6810
    %v6996 = vadd.f32 %v6293, %v6815
    %v6997 = vadd.f32 %v6294, %v6818
    %v6998 = vadd.f32 %v6295, %v6823
    %v6999 = vadd.f32 %v6296, %v6826
    %v7000 = vadd.f32 %v6297, %v6831
    %v7001 = vadd.f32 %v6298, %v6834
    %v7002 = vadd.f32 %v6299, %v6839
    %v7003 = vadd.f32 %v6300, %v6842
    %v7004 = vadd.f32 %v6301, %v6847
    %v7005 = vadd.f32 %v6302, %v6850
    %v7006 = vadd.f32 %v6303, %v6855
    %v7007 = vadd.f32 %v6304, %v6858
    %v7008 = vadd.f32 %v6305, %v6863
    %v7009 = vadd.f32 %v6306, %v6866
    %v7010 = vadd.f32 %v6307, %v6871
    %v7011 = vadd.f32 %v6308, %v6874
    %v7012 = vadd.f32 %v6309, %v6879
    %v7013 = vadd.f32 %v6310, %v6882
    %v7014 = vadd.f32 %v6311, %v6887
    %v7015 = vadd.f32 %v6312, %v6890
    %v7016 = vadd.f32 %v6313, %v6895
    %v7017 = vadd.f32 %v6314, %v6898
    %v7018 = vadd.f32 %v6315, %v6903
    %v7019 = vadd.f32 %v6316, %v6906
    %v7020 = vadd.f32 %v6317, %v6911
    %v7021 = vadd.f32 %v6318, %v6914
    %v7022 = vadd.f32 %v6319, %v6919
    %v7023 = vadd.f32 %v6320, %v6922
    %v7024 = vadd.f32 %v6321, %v6927
    %v7025 = vadd.f32 %v6322, %v6930
    %v7026 = vadd.f32 %v6323, %v6935
    %v7027 = vadd.f32 %v6324, %v6938
    %v7028 = vadd.f32 %v6325, %v6943
    %v7029 = vld [vmem:[#allocation2 + $0x2b] sm:$0xff]
    %v7030 = vld [vmem:[#allocation2 + $0x33] sm:$0xff]
    %v7031 = vld [vmem:[#allocation2 + $0x3b] sm:$0xff]
    %v7032 = vld [vmem:[#allocation2 + $0x43] sm:$0xff]
    %v7033 = vld [vmem:[#allocation2 + $0x4b] sm:$0xff]
    %v7034 = vld [vmem:[#allocation2 + $0x53] sm:$0xff]
    %v7035 = vld [vmem:[#allocation2 + $0x5b] sm:$0xff]
    %v7036 = vld [vmem:[#allocation2 + $0x63] sm:$0xff]
    %v7037 = vld [vmem:[#allocation2 + $0x6b] sm:$0xff]
    %v7038 = vld [vmem:[#allocation2 + $0x73] sm:$0xff]
    %v7039 = vld [vmem:[#allocation2 + $0x7b] sm:$0xff]
    %v7040 = vld [vmem:[#allocation2 + $0x83] sm:$0xff]
    %v7041 = vld [vmem:[#allocation2 + $0x8b] sm:$0xff]
    %v7042 = vld [vmem:[#allocation2 + $0x93] sm:$0xff]
    %v7043 = vld [vmem:[#allocation2 + $0x9b] sm:$0xff]
    %v7044 = vld [vmem:[#allocation2 + $0xa3] sm:$0xff]
    %v7045 = vld [vmem:[#allocation2 + $0xab] sm:$0xff]
    %v7046 = vld [vmem:[#allocation2 + $0xb3] sm:$0xff]
    %v7047 = vld [vmem:[#allocation2 + $0xbb] sm:$0xff]
    %v7048 = vld [vmem:[#allocation2 + $0xc3] sm:$0xff]
    %v7049 = vld [vmem:[#allocation2 + $0xcb] sm:$0xff]
    %v7050 = vld [vmem:[#allocation2 + $0xd3] sm:$0xff]
    %v7051 = vld [vmem:[#allocation2 + $0xdb] sm:$0xff]
    %v7052 = vld [vmem:[#allocation2 + $0xe3] sm:$0xff]
    %v7053 = vld [vmem:[#allocation2 + $0xeb] sm:$0xff]
    %v7054 = vld [vmem:[#allocation2 + $0xf3] sm:$0xff]
    %v7055 = vld [vmem:[#allocation2 + $0xfb] sm:$0xff]
    %v7056 = vld [vmem:[#allocation2 + $0x103] sm:$0xff]
    %v7057 = vld [vmem:[#allocation2 + $0x10b] sm:$0xff]
    %v7058 = vld [vmem:[#allocation2 + $0x113] sm:$0xff]
    %v7059 = vld [vmem:[#allocation2 + $0x11b] sm:$0xff]
    %v7060 = vld [vmem:[#allocation2 + $0x123] sm:$0xff]
    %v7061 = vld [vmem:[#allocation2 + $0x12b] sm:$0xff]
    %v7062 = vld [vmem:[#allocation2 + $0x133] sm:$0xff]
    %v7063 = vld [vmem:[#allocation2 + $0x13b] sm:$0xff]
    %v7064 = vld [vmem:[#allocation2 + $0x143] sm:$0xff]
    %v7065 = vld [vmem:[#allocation2 + $0x14b] sm:$0xff]
    %v7066 = vld [vmem:[#allocation2 + $0x153] sm:$0xff]
    %v7067 = vld [vmem:[#allocation2 + $0x15b] sm:$0xff]
    %v7068 = vld [vmem:[#allocation2 + $0x163] sm:$0xff]
    %v7069 = vld [vmem:[#allocation2 + $0x16b] sm:$0xff]
    %v7070 = vld [vmem:[#allocation2 + $0x173] sm:$0xff]
    %v7071 = vld [vmem:[#allocation2 + $0x17b] sm:$0xff]
    %v7072 = vld [vmem:[#allocation2 + $0x183] sm:$0xff]
    %v7073 = vld [vmem:[#allocation2 + $0x18b] sm:$0xff]
    %v7074 = vld [vmem:[#allocation2 + $0x193] sm:$0xff]
    %v7075 = vld [vmem:[#allocation2 + $0x19b] sm:$0xff]
    %v7076 = vld [vmem:[#allocation2 + $0x1a3] sm:$0xff]
    %v7077 = vld [vmem:[#allocation2 + $0x1ab] sm:$0xff]
    %v7078 = vld [vmem:[#allocation2 + $0x1b3] sm:$0xff]
    %v7079 = vld [vmem:[#allocation2 + $0x1bb] sm:$0xff]
    %v7080 = vld [vmem:[#allocation2 + $0x1c3] sm:$0xff]
    %v7081 = vld [vmem:[#allocation2 + $0x1cb] sm:$0xff]
    %v7082 = vld [vmem:[#allocation2 + $0x1d3] sm:$0xff]
    %v7083 = vld [vmem:[#allocation2 + $0x1db] sm:$0xff]
    %v7084 = vld [vmem:[#allocation2 + $0x1e3] sm:$0xff]
    %v7085 = vld [vmem:[#allocation2 + $0x1eb] sm:$0xff]
    %v7086 = vld [vmem:[#allocation2 + $0x1f3] sm:$0xff]
    %v7087 = vld [vmem:[#allocation2 + $0x1fb] sm:$0xff]
    %v7088 = vld [vmem:[#allocation2 + $0x203] sm:$0xff]
    %v7089 = vld [vmem:[#allocation2 + $0x20b] sm:$0xff]
    %v7090 = vld [vmem:[#allocation2 + $0x213] sm:$0xff]
    %v7091 = vld [vmem:[#allocation2 + $0x21b] sm:$0xff]
    %v7092 = vld [vmem:[#allocation2 + $0x223] sm:$0xff]
    %v7093 = vld [vmem:[#allocation2 + $0x22b] sm:$0xff]
    %v7094 = vld [vmem:[#allocation2 + $0x233] sm:$0xff]
    %v7095 = vld [vmem:[#allocation2 + $0x23b] sm:$0xff]
    %v7096 = vld [vmem:[#allocation2 + $0x243] sm:$0xff]
    %v7097 = vld [vmem:[#allocation2 + $0x24b] sm:$0xff]
    %v7098 = vld [vmem:[#allocation2 + $0x253] sm:$0xff]
    %v7099 = vld [vmem:[#allocation2 + $0x25b] sm:$0xff]
    %v7100 = vld [vmem:[#allocation2 + $0x263] sm:$0xff]
    %v7101 = vld [vmem:[#allocation2 + $0x26b] sm:$0xff]
    %v7102 = vld [vmem:[#allocation2 + $0x273] sm:$0xff]
    %v7103 = vld [vmem:[#allocation2 + $0x27b] sm:$0xff]
    %v7104 = vld [vmem:[#allocation2 + $0x283] sm:$0xff]
    %v7105 = vld [vmem:[#allocation2 + $0x28b] sm:$0xff]
    %v7106 = vld [vmem:[#allocation2 + $0x293] sm:$0xff]
    %v7107 = vld [vmem:[#allocation2 + $0x29b] sm:$0xff]
    %v7108 = vld [vmem:[#allocation2 + $0x2a3] sm:$0xff]
    %v7109 = vld [vmem:[#allocation2 + $0x2ab] sm:$0xff]
    %v7110 = vpack.c.bf16 %v7030, %v7029
    %v7111 = vpack.c.bf16 %v7032, %v7031
    %v7112 = vpack.c.bf16 %v7034, %v7033
    %v7113 = vpack.c.bf16 %v7036, %v7035
    %v7114 = vpack.c.bf16 %v7038, %v7037
    %v7115 = vpack.c.bf16 %v7040, %v7039
    %v7116 = vpack.c.bf16 %v7042, %v7041
    %v7117 = vpack.c.bf16 %v7044, %v7043
    %v7118 = vpack.c.bf16 %v7046, %v7045
    %v7119 = vpack.c.bf16 %v7048, %v7047
    %v7120 = vpack.c.bf16 %v7050, %v7049
    %v7121 = vpack.c.bf16 %v7052, %v7051
    %v7122 = vpack.c.bf16 %v7054, %v7053
    %v7123 = vpack.c.bf16 %v7056, %v7055
    %v7124 = vpack.c.bf16 %v7058, %v7057
    %v7125 = vpack.c.bf16 %v7060, %v7059
    %v7126 = vpack.c.bf16 %v7062, %v7061
    %v7127 = vpack.c.bf16 %v7064, %v7063
    %v7128 = vpack.c.bf16 %v7066, %v7065
    %v7129 = vpack.c.bf16 %v7068, %v7067
    %v7130 = vpack.c.bf16 %v7070, %v7069
    %v7131 = vpack.c.bf16 %v7072, %v7071
    %v7132 = vpack.c.bf16 %v7074, %v7073
    %v7133 = vpack.c.bf16 %v7076, %v7075
    %v7134 = vpack.c.bf16 %v7078, %v7077
    %v7135 = vpack.c.bf16 %v7080, %v7079
    %v7136 = vpack.c.bf16 %v7082, %v7081
    %v7137 = vpack.c.bf16 %v7084, %v7083
    %v7138 = vpack.c.bf16 %v7086, %v7085
    %v7139 = vpack.c.bf16 %v7088, %v7087
    %v7140 = vpack.c.bf16 %v7090, %v7089
    %v7141 = vpack.c.bf16 %v7092, %v7091
    %v7142 = vpack.c.bf16 %v7094, %v7093
    %v7143 = vpack.c.bf16 %v7096, %v7095
    %v7144 = vpack.c.bf16 %v7098, %v7097
    %v7145 = vpack.c.bf16 %v7100, %v7099
    %v7146 = vpack.c.bf16 %v7102, %v7101
    %v7147 = vpack.c.bf16 %v7104, %v7103
    %v7148 = vpack.c.bf16 %v7106, %v7105
    %v7149 = vpack.c.bf16 %v7108, %v7107
    %v7150 = vpack.c.bf16 %v7109, %v7109
    %s7151 = scalar_lea.vmem %s2, 128
    %v7152 = vld [vmem:[%s7151] sm:$0xf]
    %v7153 = vld [vmem:[%s7151 + $0x4] sm:$0xf]
    %v7154 = vld [vmem:[%s7151 + $0x8] sm:$0xf]
    %v7155 = vld [vmem:[%s7151 + $0xc] sm:$0xf]
    %v7160 = vunpack.c.l.b16 %v7152
    %v7161 = vunpack.c.l.b16 %v7153
    %v7162 = vunpack.c.l.b16 %v7154
    %v7163 = vunpack.c.l.b16 %v7155
    %v7164 = vpack.c.b16 %v7161, %v7160
    %v7165 = vpack.c.b16 %v7163, %v7162
    %v7169 = vsel %vm1480, %v7110, 0
    %v7172 = vsel %vm1480, %v7111, 0
    %v7175 = vsel %vm1480, %v7112, 0
    %v7178 = vsel %vm1480, %v7113, 0
    %v7181 = vsel %vm1480, %v7114, 0
    %v7184 = vsel %vm1480, %v7115, 0
    %v7187 = vsel %vm1480, %v7116, 0
    %v7190 = vsel %vm1480, %v7117, 0
    %v7193 = vsel %vm1480, %v7118, 0
    %v7196 = vsel %vm1480, %v7119, 0
    %v7199 = vsel %vm1480, %v7120, 0
    %v7202 = vsel %vm1480, %v7121, 0
    %v7205 = vsel %vm1480, %v7122, 0
    %v7208 = vsel %vm1480, %v7123, 0
    %v7211 = vsel %vm1480, %v7124, 0
    %v7214 = vsel %vm1480, %v7125, 0
    %v7217 = vsel %vm1480, %v7126, 0
    %v7220 = vsel %vm1480, %v7127, 0
    %v7223 = vsel %vm1480, %v7128, 0
    %v7226 = vsel %vm1480, %v7129, 0
    %v7229 = vsel %vm1480, %v7130, 0
    %v7232 = vsel %vm1480, %v7131, 0
    %v7235 = vsel %vm1480, %v7132, 0
    %v7238 = vsel %vm1480, %v7133, 0
    %v7241 = vsel %vm1480, %v7134, 0
    %v7244 = vsel %vm1480, %v7135, 0
    %v7247 = vsel %vm1480, %v7136, 0
    %v7250 = vsel %vm1480, %v7137, 0
    %v7253 = vsel %vm1480, %v7138, 0
    %v7256 = vsel %vm1480, %v7139, 0
    %v7259 = vsel %vm1480, %v7140, 0
    %v7262 = vsel %vm1480, %v7141, 0
    %v7265 = vsel %vm1480, %v7142, 0
    %v7268 = vsel %vm1480, %v7143, 0
    %v7271 = vsel %vm1480, %v7144, 0
    %v7274 = vsel %vm1480, %v7145, 0
    %v7277 = vsel %vm1480, %v7146, 0
    %v7280 = vsel %vm1480, %v7147, 0
    %v7283 = vsel %vm1480, %v7148, 0
    %v7286 = vsel %vm1480, %v7149, 0
    %v7289 = vsel %vm1480, %v7150, 0
    %7291 = vmatprep.subr.bf16.mxu0 0
    %7292 = vmatpush1.bf16.msra.mxu0 %v7164
    %7293 = vmatprep.subr.bf16.mxu0 0
    %7294 = vmatpush1.bf16.msra.mxu0 %v7165
    %7295 = vmatprep.subr.bf16.mxu0 0
    %7296 = vmatpush1.bf16.msra.mxu0 0
    %7297 = vmatprep.subr.bf16.mxu0 0
    %7298 = vmatpush1.bf16.msra.mxu0 0
    %7299 = vmatprep.subr.bf16.mxu0 0
    %7300 = vmatpush1.bf16.msra.mxu0 0
    %7301 = vmatprep.subr.bf16.mxu0 0
    %7302 = vmatpush1.bf16.msra.mxu0 0
    %7303 = vmatprep.subr.bf16.mxu0 0
    %7304 = vmatpush1.bf16.msra.mxu0 0
    %7305 = vmatprep.subr.bf16.mxu0 0
    %7306 = vmatpush1.bf16.msra.mxu0 0
    %7307 = vmatprep.subr.bf16.mxu0 0
    %7308 = vmatpush1.bf16.msra.mxu0 0
    %7309 = vmatprep.subr.bf16.mxu0 0
    %7310 = vmatpush1.bf16.msra.mxu0 0
    %7311 = vmatprep.subr.bf16.mxu0 0
    %7312 = vmatpush1.bf16.msra.mxu0 0
    %7313 = vmatprep.subr.bf16.mxu0 0
    %7314 = vmatpush1.bf16.msra.mxu0 0
    %7315 = vmatprep.subr.bf16.mxu0 0
    %7316 = vmatpush1.bf16.msra.mxu0 0
    %7317 = vmatprep.subr.bf16.mxu0 0
    %7318 = vmatpush1.bf16.msra.mxu0 0
    %7319 = vmatprep.subr.bf16.mxu0 0
    %7320 = vmatpush1.bf16.msra.mxu0 0
    %7321 = vmatprep.subr.bf16.mxu0 0
    %7322 = vmatpush1.bf16.msra.mxu0 0
    %7323 = vmatprep.mubr.bf16.mxu0 0
    %7324 = vmatmul.mubr.bf16.gmra.mrb[0].mxu0 %v7169
    %v7325 = vpop.f32.mrb[0].mxu0
    %v7326 = vadd.f32 0.0, %v7325
    %v7327 = vpop.f32.mrb[0].mxu0
    %v7328 = vpop.f32.mrb[0].mxu0
    %v7329 = vadd.f32 0.0, %v7328
    %v7330 = vpop.f32.mrb[0].mxu0
    %7331 = vmatprep.mubr.bf16.mxu0 0
    %7332 = vmatmul.mubr.bf16.gmra.mrb[0].mxu0 %v7172
    %v7333 = vpop.f32.mrb[0].mxu0
    %v7334 = vadd.f32 0.0, %v7333
    %v7335 = vpop.f32.mrb[0].mxu0
    %v7336 = vpop.f32.mrb[0].mxu0
    %v7337 = vadd.f32 0.0, %v7336
    %v7338 = vpop.f32.mrb[0].mxu0
    %7339 = vmatprep.mubr.bf16.mxu0 0
    %7340 = vmatmul.mubr.bf16.gmra.mrb[0].mxu0 %v7175
    %v7341 = vpop.f32.mrb[0].mxu0
    %v7342 = vadd.f32 0.0, %v7341
    %v7343 = vpop.f32.mrb[0].mxu0
    %v7344 = vpop.f32.mrb[0].mxu0
    %v7345 = vadd.f32 0.0, %v7344
    %v7346 = vpop.f32.mrb[0].mxu0
    %7347 = vmatprep.mubr.bf16.mxu0 0
    %7348 = vmatmul.mubr.bf16.gmra.mrb[0].mxu0 %v7178
    %v7349 = vpop.f32.mrb[0].mxu0
    %v7350 = vadd.f32 0.0, %v7349
    %v7351 = vpop.f32.mrb[0].mxu0
    %v7352 = vpop.f32.mrb[0].mxu0
    %v7353 = vadd.f32 0.0, %v7352
    %v7354 = vpop.f32.mrb[0].mxu0
    %7355 = vmatprep.mubr.bf16.mxu0 0
    %7356 = vmatmul.mubr.bf16.gmra.mrb[0].mxu0 %v7181
    %v7357 = vpop.f32.mrb[0].mxu0
    %v7358 = vadd.f32 0.0, %v7357
    %v7359 = vpop.f32.mrb[0].mxu0
    %v7360 = vpop.f32.mrb[0].mxu0
    %v7361 = vadd.f32 0.0, %v7360
    %v7362 = vpop.f32.mrb[0].mxu0
    %7363 = vmatprep.mubr.bf16.mxu0 0
    %7364 = vmatmul.mubr.bf16.gmra.mrb[0].mxu0 %v7184
    %v7365 = vpop.f32.mrb[0].mxu0
    %v7366 = vadd.f32 0.0, %v7365
    %v7367 = vpop.f32.mrb[0].mxu0
    %v7368 = vpop.f32.mrb[0].mxu0
    %v7369 = vadd.f32 0.0, %v7368
    %v7370 = vpop.f32.mrb[0].mxu0
    %7371 = vmatprep.mubr.bf16.mxu0 0
    %7372 = vmatmul.mubr.bf16.gmra.mrb[0].mxu0 %v7187
    %v7373 = vpop.f32.mrb[0].mxu0
    %v7374 = vadd.f32 0.0, %v7373
    %v7375 = vpop.f32.mrb[0].mxu0
    %v7376 = vpop.f32.mrb[0].mxu0
    %v7377 = vadd.f32 0.0, %v7376
    %v7378 = vpop.f32.mrb[0].mxu0
    %7379 = vmatprep.mubr.bf16.mxu0 0
    %7380 = vmatmul.mubr.bf16.gmra.mrb[0].mxu0 %v7190
    %v7381 = vpop.f32.mrb[0].mxu0
    %v7382 = vadd.f32 0.0, %v7381
    %v7383 = vpop.f32.mrb[0].mxu0
    %v7384 = vpop.f32.mrb[0].mxu0
    %v7385 = vadd.f32 0.0, %v7384
    %v7386 = vpop.f32.mrb[0].mxu0
    %7387 = vmatprep.mubr.bf16.mxu0 0
    %7388 = vmatmul.mubr.bf16.gmra.mrb[0].mxu0 %v7193
    %v7389 = vpop.f32.mrb[0].mxu0
    %v7390 = vadd.f32 0.0, %v7389
    %v7391 = vpop.f32.mrb[0].mxu0
    %v7392 = vpop.f32.mrb[0].mxu0
    %v7393 = vadd.f32 0.0, %v7392
    %v7394 = vpop.f32.mrb[0].mxu0
    %7395 = vmatprep.mubr.bf16.mxu0 0
    %7396 = vmatmul.mubr.bf16.gmra.mrb[0].mxu0 %v7196
    %v7397 = vpop.f32.mrb[0].mxu0
    %v7398 = vadd.f32 0.0, %v7397
    %v7399 = vpop.f32.mrb[0].mxu0
    %v7400 = vpop.f32.mrb[0].mxu0
    %v7401 = vadd.f32 0.0, %v7400
    %v7402 = vpop.f32.mrb[0].mxu0
    %7403 = vmatprep.mubr.bf16.mxu0 0
    %7404 = vmatmul.mubr.bf16.gmra.mrb[0].mxu0 %v7199
    %v7405 = vpop.f32.mrb[0].mxu0
    %v7406 = vadd.f32 0.0, %v7405
    %v7407 = vpop.f32.mrb[0].mxu0
    %v7408 = vpop.f32.mrb[0].mxu0
    %v7409 = vadd.f32 0.0, %v7408
    %v7410 = vpop.f32.mrb[0].mxu0
    %7411 = vmatprep.mubr.bf16.mxu0 0
    %7412 = vmatmul.mubr.bf16.gmra.mrb[0].mxu0 %v7202
    %v7413 = vpop.f32.mrb[0].mxu0
    %v7414 = vadd.f32 0.0, %v7413
    %v7415 = vpop.f32.mrb[0].mxu0
    %v7416 = vpop.f32.mrb[0].mxu0
    %v7417 = vadd.f32 0.0, %v7416
    %v7418 = vpop.f32.mrb[0].mxu0
    %7419 = vmatprep.mubr.bf16.mxu0 0
    %7420 = vmatmul.mubr.bf16.gmra.mrb[0].mxu0 %v7205
    %v7421 = vpop.f32.mrb[0].mxu0
    %v7422 = vadd.f32 0.0, %v7421
    %v7423 = vpop.f32.mrb[0].mxu0
    %v7424 = vpop.f32.mrb[0].mxu0
    %v7425 = vadd.f32 0.0, %v7424
    %v7426 = vpop.f32.mrb[0].mxu0
    %7427 = vmatprep.mubr.bf16.mxu0 0
    %7428 = vmatmul.mubr.bf16.gmra.mrb[0].mxu0 %v7208
    %v7429 = vpop.f32.mrb[0].mxu0
    %v7430 = vadd.f32 0.0, %v7429
    %v7431 = vpop.f32.mrb[0].mxu0
    %v7432 = vpop.f32.mrb[0].mxu0
    %v7433 = vadd.f32 0.0, %v7432
    %v7434 = vpop.f32.mrb[0].mxu0
    %7435 = vmatprep.mubr.bf16.mxu0 0
    %7436 = vmatmul.mubr.bf16.gmra.mrb[0].mxu0 %v7211
    %v7437 = vpop.f32.mrb[0].mxu0
    %v7438 = vadd.f32 0.0, %v7437
    %v7439 = vpop.f32.mrb[0].mxu0
    %v7440 = vpop.f32.mrb[0].mxu0
    %v7441 = vadd.f32 0.0, %v7440
    %v7442 = vpop.f32.mrb[0].mxu0
    %7443 = vmatprep.mubr.bf16.mxu0 0
    %7444 = vmatmul.mubr.bf16.gmra.mrb[0].mxu0 %v7214
    %v7445 = vpop.f32.mrb[0].mxu0
    %v7446 = vadd.f32 0.0, %v7445
    %v7447 = vpop.f32.mrb[0].mxu0
    %v7448 = vpop.f32.mrb[0].mxu0
    %v7449 = vadd.f32 0.0, %v7448
    %v7450 = vpop.f32.mrb[0].mxu0
    %7451 = vmatprep.mubr.bf16.mxu0 0
    %7452 = vmatmul.mubr.bf16.gmra.mrb[0].mxu0 %v7217
    %v7453 = vpop.f32.mrb[0].mxu0
    %v7454 = vadd.f32 0.0, %v7453
    %v7455 = vpop.f32.mrb[0].mxu0
    %v7456 = vpop.f32.mrb[0].mxu0
    %v7457 = vadd.f32 0.0, %v7456
    %v7458 = vpop.f32.mrb[0].mxu0
    %7459 = vmatprep.mubr.bf16.mxu0 0
    %7460 = vmatmul.mubr.bf16.gmra.mrb[0].mxu0 %v7220
    %v7461 = vpop.f32.mrb[0].mxu0
    %v7462 = vadd.f32 0.0, %v7461
    %v7463 = vpop.f32.mrb[0].mxu0
    %v7464 = vpop.f32.mrb[0].mxu0
    %v7465 = vadd.f32 0.0, %v7464
    %v7466 = vpop.f32.mrb[0].mxu0
    %7467 = vmatprep.mubr.bf16.mxu0 0
    %7468 = vmatmul.mubr.bf16.gmra.mrb[0].mxu0 %v7223
    %v7469 = vpop.f32.mrb[0].mxu0
    %v7470 = vadd.f32 0.0, %v7469
    %v7471 = vpop.f32.mrb[0].mxu0
    %v7472 = vpop.f32.mrb[0].mxu0
    %v7473 = vadd.f32 0.0, %v7472
    %v7474 = vpop.f32.mrb[0].mxu0
    %7475 = vmatprep.mubr.bf16.mxu0 0
    %7476 = vmatmul.mubr.bf16.gmra.mrb[0].mxu0 %v7226
    %v7477 = vpop.f32.mrb[0].mxu0
    %v7478 = vadd.f32 0.0, %v7477
    %v7479 = vpop.f32.mrb[0].mxu0
    %v7480 = vpop.f32.mrb[0].mxu0
    %v7481 = vadd.f32 0.0, %v7480
    %v7482 = vpop.f32.mrb[0].mxu0
    %7483 = vmatprep.mubr.bf16.mxu0 0
    %7484 = vmatmul.mubr.bf16.gmra.mrb[0].mxu0 %v7229
    %v7485 = vpop.f32.mrb[0].mxu0
    %v7486 = vadd.f32 0.0, %v7485
    %v7487 = vpop.f32.mrb[0].mxu0
    %v7488 = vpop.f32.mrb[0].mxu0
    %v7489 = vadd.f32 0.0, %v7488
    %v7490 = vpop.f32.mrb[0].mxu0
    %7491 = vmatprep.mubr.bf16.mxu0 0
    %7492 = vmatmul.mubr.bf16.gmra.mrb[0].mxu0 %v7232
    %v7493 = vpop.f32.mrb[0].mxu0
    %v7494 = vadd.f32 0.0, %v7493
    %v7495 = vpop.f32.mrb[0].mxu0
    %v7496 = vpop.f32.mrb[0].mxu0
    %v7497 = vadd.f32 0.0, %v7496
    %v7498 = vpop.f32.mrb[0].mxu0
    %7499 = vmatprep.mubr.bf16.mxu0 0
    %7500 = vmatmul.mubr.bf16.gmra.mrb[0].mxu0 %v7235
    %v7501 = vpop.f32.mrb[0].mxu0
    %v7502 = vadd.f32 0.0, %v7501
    %v7503 = vpop.f32.mrb[0].mxu0
    %v7504 = vpop.f32.mrb[0].mxu0
    %v7505 = vadd.f32 0.0, %v7504
    %v7506 = vpop.f32.mrb[0].mxu0
    %7507 = vmatprep.mubr.bf16.mxu0 0
    %7508 = vmatmul.mubr.bf16.gmra.mrb[0].mxu0 %v7238
    %v7509 = vpop.f32.mrb[0].mxu0
    %v7510 = vadd.f32 0.0, %v7509
    %v7511 = vpop.f32.mrb[0].mxu0
    %v7512 = vpop.f32.mrb[0].mxu0
    %v7513 = vadd.f32 0.0, %v7512
    %v7514 = vpop.f32.mrb[0].mxu0
    %7515 = vmatprep.mubr.bf16.mxu0 0
    %7516 = vmatmul.mubr.bf16.gmra.mrb[0].mxu0 %v7241
    %v7517 = vpop.f32.mrb[0].mxu0
    %v7518 = vadd.f32 0.0, %v7517
    %v7519 = vpop.f32.mrb[0].mxu0
    %v7520 = vpop.f32.mrb[0].mxu0
    %v7521 = vadd.f32 0.0, %v7520
    %v7522 = vpop.f32.mrb[0].mxu0
    %7523 = vmatprep.mubr.bf16.mxu0 0
    %7524 = vmatmul.mubr.bf16.gmra.mrb[0].mxu0 %v7244
    %v7525 = vpop.f32.mrb[0].mxu0
    %v7526 = vadd.f32 0.0, %v7525
    %v7527 = vpop.f32.mrb[0].mxu0
    %v7528 = vpop.f32.mrb[0].mxu0
    %v7529 = vadd.f32 0.0, %v7528
    %v7530 = vpop.f32.mrb[0].mxu0
    %7531 = vmatprep.mubr.bf16.mxu0 0
    %7532 = vmatmul.mubr.bf16.gmra.mrb[0].mxu0 %v7247
    %v7533 = vpop.f32.mrb[0].mxu0
    %v7534 = vadd.f32 0.0, %v7533
    %v7535 = vpop.f32.mrb[0].mxu0
    %v7536 = vpop.f32.mrb[0].mxu0
    %v7537 = vadd.f32 0.0, %v7536
    %v7538 = vpop.f32.mrb[0].mxu0
    %7539 = vmatprep.mubr.bf16.mxu0 0
    %7540 = vmatmul.mubr.bf16.gmra.mrb[0].mxu0 %v7250
    %v7541 = vpop.f32.mrb[0].mxu0
    %v7542 = vadd.f32 0.0, %v7541
    %v7543 = vpop.f32.mrb[0].mxu0
    %v7544 = vpop.f32.mrb[0].mxu0
    %v7545 = vadd.f32 0.0, %v7544
    %v7546 = vpop.f32.mrb[0].mxu0
    %7547 = vmatprep.mubr.bf16.mxu0 0
    %7548 = vmatmul.mubr.bf16.gmra.mrb[0].mxu0 %v7253
    %v7549 = vpop.f32.mrb[0].mxu0
    %v7550 = vadd.f32 0.0, %v7549
    %v7551 = vpop.f32.mrb[0].mxu0
    %v7552 = vpop.f32.mrb[0].mxu0
    %v7553 = vadd.f32 0.0, %v7552
    %v7554 = vpop.f32.mrb[0].mxu0
    %7555 = vmatprep.mubr.bf16.mxu0 0
    %7556 = vmatmul.mubr.bf16.gmra.mrb[0].mxu0 %v7256
    %v7557 = vpop.f32.mrb[0].mxu0
    %v7558 = vadd.f32 0.0, %v7557
    %v7559 = vpop.f32.mrb[0].mxu0
    %v7560 = vpop.f32.mrb[0].mxu0
    %v7561 = vadd.f32 0.0, %v7560
    %v7562 = vpop.f32.mrb[0].mxu0
    %7563 = vmatprep.mubr.bf16.mxu0 0
    %7564 = vmatmul.mubr.bf16.gmra.mrb[0].mxu0 %v7259
    %v7565 = vpop.f32.mrb[0].mxu0
    %v7566 = vadd.f32 0.0, %v7565
    %v7567 = vpop.f32.mrb[0].mxu0
    %v7568 = vpop.f32.mrb[0].mxu0
    %v7569 = vadd.f32 0.0, %v7568
    %v7570 = vpop.f32.mrb[0].mxu0
    %7571 = vmatprep.mubr.bf16.mxu0 0
    %7572 = vmatmul.mubr.bf16.gmra.mrb[0].mxu0 %v7262
    %v7573 = vpop.f32.mrb[0].mxu0
    %v7574 = vadd.f32 0.0, %v7573
    %v7575 = vpop.f32.mrb[0].mxu0
    %v7576 = vpop.f32.mrb[0].mxu0
    %v7577 = vadd.f32 0.0, %v7576
    %v7578 = vpop.f32.mrb[0].mxu0
    %7579 = vmatprep.mubr.bf16.mxu0 0
    %7580 = vmatmul.mubr.bf16.gmra.mrb[0].mxu0 %v7265
    %v7581 = vpop.f32.mrb[0].mxu0
    %v7582 = vadd.f32 0.0, %v7581
    %v7583 = vpop.f32.mrb[0].mxu0
    %v7584 = vpop.f32.mrb[0].mxu0
    %v7585 = vadd.f32 0.0, %v7584
    %v7586 = vpop.f32.mrb[0].mxu0
    %7587 = vmatprep.mubr.bf16.mxu0 0
    %7588 = vmatmul.mubr.bf16.gmra.mrb[0].mxu0 %v7268
    %v7589 = vpop.f32.mrb[0].mxu0
    %v7590 = vadd.f32 0.0, %v7589
    %v7591 = vpop.f32.mrb[0].mxu0
    %v7592 = vpop.f32.mrb[0].mxu0
    %v7593 = vadd.f32 0.0, %v7592
    %v7594 = vpop.f32.mrb[0].mxu0
    %7595 = vmatprep.mubr.bf16.mxu0 0
    %7596 = vmatmul.mubr.bf16.gmra.mrb[0].mxu0 %v7271
    %v7597 = vpop.f32.mrb[0].mxu0
    %v7598 = vadd.f32 0.0, %v7597
    %v7599 = vpop.f32.mrb[0].mxu0
    %v7600 = vpop.f32.mrb[0].mxu0
    %v7601 = vadd.f32 0.0, %v7600
    %v7602 = vpop.f32.mrb[0].mxu0
    %7603 = vmatprep.mubr.bf16.mxu0 0
    %7604 = vmatmul.mubr.bf16.gmra.mrb[0].mxu0 %v7274
    %v7605 = vpop.f32.mrb[0].mxu0
    %v7606 = vadd.f32 0.0, %v7605
    %v7607 = vpop.f32.mrb[0].mxu0
    %v7608 = vpop.f32.mrb[0].mxu0
    %v7609 = vadd.f32 0.0, %v7608
    %v7610 = vpop.f32.mrb[0].mxu0
    %7611 = vmatprep.mubr.bf16.mxu0 0
    %7612 = vmatmul.mubr.bf16.gmra.mrb[0].mxu0 %v7277
    %v7613 = vpop.f32.mrb[0].mxu0
    %v7614 = vadd.f32 0.0, %v7613
    %v7615 = vpop.f32.mrb[0].mxu0
    %v7616 = vpop.f32.mrb[0].mxu0
    %v7617 = vadd.f32 0.0, %v7616
    %v7618 = vpop.f32.mrb[0].mxu0
    %7619 = vmatprep.mubr.bf16.mxu0 0
    %7620 = vmatmul.mubr.bf16.gmra.mrb[0].mxu0 %v7280
    %v7621 = vpop.f32.mrb[0].mxu0
    %v7622 = vadd.f32 0.0, %v7621
    %v7623 = vpop.f32.mrb[0].mxu0
    %v7624 = vpop.f32.mrb[0].mxu0
    %v7625 = vadd.f32 0.0, %v7624
    %v7626 = vpop.f32.mrb[0].mxu0
    %7627 = vmatprep.mubr.bf16.mxu0 0
    %7628 = vmatmul.mubr.bf16.gmra.mrb[0].mxu0 %v7283
    %v7629 = vpop.f32.mrb[0].mxu0
    %v7630 = vadd.f32 0.0, %v7629
    %v7631 = vpop.f32.mrb[0].mxu0
    %v7632 = vpop.f32.mrb[0].mxu0
    %v7633 = vadd.f32 0.0, %v7632
    %v7634 = vpop.f32.mrb[0].mxu0
    %7635 = vmatprep.mubr.bf16.mxu0 0
    %7636 = vmatmul.mubr.bf16.gmra.mrb[0].mxu0 %v7286
    %v7637 = vpop.f32.mrb[0].mxu0
    %v7638 = vadd.f32 0.0, %v7637
    %v7639 = vpop.f32.mrb[0].mxu0
    %v7640 = vpop.f32.mrb[0].mxu0
    %v7641 = vadd.f32 0.0, %v7640
    %v7642 = vpop.f32.mrb[0].mxu0
    %7643 = vmatprep.mubr.bf16.mxu0 0
    %7644 = vmatmul.mubr.bf16.gmra.mrb[0].mxu0 %v7289
    %v7645 = vpop.f32.mrb[0].mxu0
    %v7646 = vadd.f32 0.0, %v7645
    %v7647 = vpop.f32.mrb[0].mxu0
    %v7648 = vpop.f32.mrb[0].mxu0
    %v7649 = vpop.f32.mrb[0].mxu0
    %7650 = vdwg.mxu0
    %v7651 = vadd.f32 %v6948, %v7326
    %v7652 = vadd.f32 %v6949, %v7329
    %v7653 = vadd.f32 %v6950, %v7334
    %v7654 = vadd.f32 %v6951, %v7337
    %v7655 = vadd.f32 %v6952, %v7342
    %v7656 = vadd.f32 %v6953, %v7345
    %v7657 = vadd.f32 %v6954, %v7350
    %v7658 = vadd.f32 %v6955, %v7353
    %v7659 = vadd.f32 %v6956, %v7358
    %v7660 = vadd.f32 %v6957, %v7361
    %v7661 = vadd.f32 %v6958, %v7366
    %v7662 = vadd.f32 %v6959, %v7369
    %v7663 = vadd.f32 %v6960, %v7374
    %v7664 = vadd.f32 %v6961, %v7377
    %v7665 = vadd.f32 %v6962, %v7382
    %v7666 = vadd.f32 %v6963, %v7385
    %v7667 = vadd.f32 %v6964, %v7390
    %v7668 = vadd.f32 %v6965, %v7393
    %v7669 = vadd.f32 %v6966, %v7398
    %v7670 = vadd.f32 %v6967, %v7401
    %v7671 = vadd.f32 %v6968, %v7406
    %v7672 = vadd.f32 %v6969, %v7409
    %v7673 = vadd.f32 %v6970, %v7414
    %v7674 = vadd.f32 %v6971, %v7417
    %v7675 = vadd.f32 %v6972, %v7422
    %v7676 = vadd.f32 %v6973, %v7425
    %v7677 = vadd.f32 %v6974, %v7430
    %v7678 = vadd.f32 %v6975, %v7433
    %v7679 = vadd.f32 %v6976, %v7438
    %v7680 = vadd.f32 %v6977, %v7441
    %v7681 = vadd.f32 %v6978, %v7446
    %v7682 = vadd.f32 %v6979, %v7449
    %v7683 = vadd.f32 %v6980, %v7454
    %v7684 = vadd.f32 %v6981, %v7457
    %v7685 = vadd.f32 %v6982, %v7462
    %v7686 = vadd.f32 %v6983, %v7465
    %v7687 = vadd.f32 %v6984, %v7470
    %v7688 = vadd.f32 %v6985, %v7473
    %v7689 = vadd.f32 %v6986, %v7478
    %v7690 = vadd.f32 %v6987, %v7481
    %v7691 = vadd.f32 %v6988, %v7486
    %v7692 = vadd.f32 %v6989, %v7489
    %v7693 = vadd.f32 %v6990, %v7494
    %v7694 = vadd.f32 %v6991, %v7497
    %v7695 = vadd.f32 %v6992, %v7502
    %v7696 = vadd.f32 %v6993, %v7505
    %v7697 = vadd.f32 %v6994, %v7510
    %v7698 = vadd.f32 %v6995, %v7513
    %v7699 = vadd.f32 %v6996, %v7518
    %v7700 = vadd.f32 %v6997, %v7521
    %v7701 = vadd.f32 %v6998, %v7526
    %v7702 = vadd.f32 %v6999, %v7529
    %v7703 = vadd.f32 %v7000, %v7534
    %v7704 = vadd.f32 %v7001, %v7537
    %v7705 = vadd.f32 %v7002, %v7542
    %v7706 = vadd.f32 %v7003, %v7545
    %v7707 = vadd.f32 %v7004, %v7550
    %v7708 = vadd.f32 %v7005, %v7553
    %v7709 = vadd.f32 %v7006, %v7558
    %v7710 = vadd.f32 %v7007, %v7561
    %v7711 = vadd.f32 %v7008, %v7566
    %v7712 = vadd.f32 %v7009, %v7569
    %v7713 = vadd.f32 %v7010, %v7574
    %v7714 = vadd.f32 %v7011, %v7577
    %v7715 = vadd.f32 %v7012, %v7582
    %v7716 = vadd.f32 %v7013, %v7585
    %v7717 = vadd.f32 %v7014, %v7590
    %v7718 = vadd.f32 %v7015, %v7593
    %v7719 = vadd.f32 %v7016, %v7598
    %v7720 = vadd.f32 %v7017, %v7601
    %v7721 = vadd.f32 %v7018, %v7606
    %v7722 = vadd.f32 %v7019, %v7609
    %v7723 = vadd.f32 %v7020, %v7614
    %v7724 = vadd.f32 %v7021, %v7617
    %v7725 = vadd.f32 %v7022, %v7622
    %v7726 = vadd.f32 %v7023, %v7625
    %v7727 = vadd.f32 %v7024, %v7630
    %v7728 = vadd.f32 %v7025, %v7633
    %v7729 = vadd.f32 %v7026, %v7638
    %v7730 = vadd.f32 %v7027, %v7641
    %v7731 = vadd.f32 %v7028, %v7646
    %v7732 = vld [vmem:[%s4] sm:$0x1]
    %v7734 = vlaneseq
    %v7735 = vshrl.u32 %v7734, 7
    %v7736 = vsub.s32 0, %v7735
    %v7737 = vrot.slane %v7732, %v7736
    %v7739 = vadd.f32 %v7651, %v7737
    %v7740 = vadd.f32 %v7652, %v7737
    %v7741 = vadd.f32 %v7653, %v7737
    %v7742 = vadd.f32 %v7654, %v7737
    %v7743 = vadd.f32 %v7655, %v7737
    %v7744 = vadd.f32 %v7656, %v7737
    %v7745 = vadd.f32 %v7657, %v7737
    %v7746 = vadd.f32 %v7658, %v7737
    %v7747 = vadd.f32 %v7659, %v7737
    %v7748 = vadd.f32 %v7660, %v7737
    %v7749 = vadd.f32 %v7661, %v7737
    %v7750 = vadd.f32 %v7662, %v7737
    %v7751 = vadd.f32 %v7663, %v7737
    %v7752 = vadd.f32 %v7664, %v7737
    %v7753 = vadd.f32 %v7665, %v7737
    %v7754 = vadd.f32 %v7666, %v7737
    %v7755 = vadd.f32 %v7667, %v7737
    %v7756 = vadd.f32 %v7668, %v7737
    %v7757 = vadd.f32 %v7669, %v7737
    %v7758 = vadd.f32 %v7670, %v7737
    %v7759 = vadd.f32 %v7671, %v7737
    %v7760 = vadd.f32 %v7672, %v7737
    %v7761 = vadd.f32 %v7673, %v7737
    %v7762 = vadd.f32 %v7674, %v7737
    %v7763 = vadd.f32 %v7675, %v7737
    %v7764 = vadd.f32 %v7676, %v7737
    %v7765 = vadd.f32 %v7677, %v7737
    %v7766 = vadd.f32 %v7678, %v7737
    %v7767 = vadd.f32 %v7679, %v7737
    %v7768 = vadd.f32 %v7680, %v7737
    %v7769 = vadd.f32 %v7681, %v7737
    %v7770 = vadd.f32 %v7682, %v7737
    %v7771 = vadd.f32 %v7683, %v7737
    %v7772 = vadd.f32 %v7684, %v7737
    %v7773 = vadd.f32 %v7685, %v7737
    %v7774 = vadd.f32 %v7686, %v7737
    %v7775 = vadd.f32 %v7687, %v7737
    %v7776 = vadd.f32 %v7688, %v7737
    %v7777 = vadd.f32 %v7689, %v7737
    %v7778 = vadd.f32 %v7690, %v7737
    %v7779 = vadd.f32 %v7691, %v7737
    %v7780 = vadd.f32 %v7692, %v7737
    %v7781 = vadd.f32 %v7693, %v7737
    %v7782 = vadd.f32 %v7694, %v7737
    %v7783 = vadd.f32 %v7695, %v7737
    %v7784 = vadd.f32 %v7696, %v7737
    %v7785 = vadd.f32 %v7697, %v7737
    %v7786 = vadd.f32 %v7698, %v7737
    %v7787 = vadd.f32 %v7699, %v7737
    %v7788 = vadd.f32 %v7700, %v7737
    %v7789 = vadd.f32 %v7701, %v7737
    %v7790 = vadd.f32 %v7702, %v7737
    %v7791 = vadd.f32 %v7703, %v7737
    %v7792 = vadd.f32 %v7704, %v7737
    %v7793 = vadd.f32 %v7705, %v7737
    %v7794 = vadd.f32 %v7706, %v7737
    %v7795 = vadd.f32 %v7707, %v7737
    %v7796 = vadd.f32 %v7708, %v7737
    %v7797 = vadd.f32 %v7709, %v7737
    %v7798 = vadd.f32 %v7710, %v7737
    %v7799 = vadd.f32 %v7711, %v7737
    %v7800 = vadd.f32 %v7712, %v7737
    %v7801 = vadd.f32 %v7713, %v7737
    %v7802 = vadd.f32 %v7714, %v7737
    %v7803 = vadd.f32 %v7715, %v7737
    %v7804 = vadd.f32 %v7716, %v7737
    %v7805 = vadd.f32 %v7717, %v7737
    %v7806 = vadd.f32 %v7718, %v7737
    %v7807 = vadd.f32 %v7719, %v7737
    %v7808 = vadd.f32 %v7720, %v7737
    %v7809 = vadd.f32 %v7721, %v7737
    %v7810 = vadd.f32 %v7722, %v7737
    %v7811 = vadd.f32 %v7723, %v7737
    %v7812 = vadd.f32 %v7724, %v7737
    %v7813 = vadd.f32 %v7725, %v7737
    %v7814 = vadd.f32 %v7726, %v7737
    %v7815 = vadd.f32 %v7727, %v7737
    %v7816 = vadd.f32 %v7728, %v7737
    %v7817 = vadd.f32 %v7729, %v7737
    %v7818 = vadd.f32 %v7730, %v7737
    %v7819 = vadd.f32 %v7731, %v7737
    %v7820 = vmax.f32 %v7739, 0.0
    %v7821 = vmax.f32 %v7740, 0.0
    %v7822 = vmax.f32 %v7741, 0.0
    %v7823 = vmax.f32 %v7742, 0.0
    %v7824 = vmax.f32 %v7743, 0.0
    %v7825 = vmax.f32 %v7744, 0.0
    %v7826 = vmax.f32 %v7745, 0.0
    %v7827 = vmax.f32 %v7746, 0.0
    %v7828 = vmax.f32 %v7747, 0.0
    %v7829 = vmax.f32 %v7748, 0.0
    %v7830 = vmax.f32 %v7749, 0.0
    %v7831 = vmax.f32 %v7750, 0.0
    %v7832 = vmax.f32 %v7751, 0.0
    %v7833 = vmax.f32 %v7752, 0.0
    %v7834 = vmax.f32 %v7753, 0.0
    %v7835 = vmax.f32 %v7754, 0.0
    %v7836 = vmax.f32 %v7755, 0.0
    %v7837 = vmax.f32 %v7756, 0.0
    %v7838 = vmax.f32 %v7757, 0.0
    %v7839 = vmax.f32 %v7758, 0.0
    %v7840 = vmax.f32 %v7759, 0.0
    %v7841 = vmax.f32 %v7760, 0.0
    %v7842 = vmax.f32 %v7761, 0.0
    %v7843 = vmax.f32 %v7762, 0.0
    %v7844 = vmax.f32 %v7763, 0.0
    %v7845 = vmax.f32 %v7764, 0.0
    %v7846 = vmax.f32 %v7765, 0.0
    %v7847 = vmax.f32 %v7766, 0.0
    %v7848 = vmax.f32 %v7767, 0.0
    %v7849 = vmax.f32 %v7768, 0.0
    %v7850 = vmax.f32 %v7769, 0.0
    %v7851 = vmax.f32 %v7770, 0.0
    %v7852 = vmax.f32 %v7771, 0.0
    %v7853 = vmax.f32 %v7772, 0.0
    %v7854 = vmax.f32 %v7773, 0.0
    %v7855 = vmax.f32 %v7774, 0.0
    %v7856 = vmax.f32 %v7775, 0.0
    %v7857 = vmax.f32 %v7776, 0.0
    %v7858 = vmax.f32 %v7777, 0.0
    %v7859 = vmax.f32 %v7778, 0.0
    %v7860 = vmax.f32 %v7779, 0.0
    %v7861 = vmax.f32 %v7780, 0.0
    %v7862 = vmax.f32 %v7781, 0.0
    %v7863 = vmax.f32 %v7782, 0.0
    %v7864 = vmax.f32 %v7783, 0.0
    %v7865 = vmax.f32 %v7784, 0.0
    %v7866 = vmax.f32 %v7785, 0.0
    %v7867 = vmax.f32 %v7786, 0.0
    %v7868 = vmax.f32 %v7787, 0.0
    %v7869 = vmax.f32 %v7788, 0.0
    %v7870 = vmax.f32 %v7789, 0.0
    %v7871 = vmax.f32 %v7790, 0.0
    %v7872 = vmax.f32 %v7791, 0.0
    %v7873 = vmax.f32 %v7792, 0.0
    %v7874 = vmax.f32 %v7793, 0.0
    %v7875 = vmax.f32 %v7794, 0.0
    %v7876 = vmax.f32 %v7795, 0.0
    %v7877 = vmax.f32 %v7796, 0.0
    %v7878 = vmax.f32 %v7797, 0.0
    %v7879 = vmax.f32 %v7798, 0.0
    %v7880 = vmax.f32 %v7799, 0.0
    %v7881 = vmax.f32 %v7800, 0.0
    %v7882 = vmax.f32 %v7801, 0.0
    %v7883 = vmax.f32 %v7802, 0.0
    %v7884 = vmax.f32 %v7803, 0.0
    %v7885 = vmax.f32 %v7804, 0.0
    %v7886 = vmax.f32 %v7805, 0.0
    %v7887 = vmax.f32 %v7806, 0.0
    %v7888 = vmax.f32 %v7807, 0.0
    %v7889 = vmax.f32 %v7808, 0.0
    %v7890 = vmax.f32 %v7809, 0.0
    %v7891 = vmax.f32 %v7810, 0.0
    %v7892 = vmax.f32 %v7811, 0.0
    %v7893 = vmax.f32 %v7812, 0.0
    %v7894 = vmax.f32 %v7813, 0.0
    %v7895 = vmax.f32 %v7814, 0.0
    %v7896 = vmax.f32 %v7815, 0.0
    %v7897 = vmax.f32 %v7816, 0.0
    %v7898 = vmax.f32 %v7817, 0.0
    %v7899 = vmax.f32 %v7818, 0.0
    %v7900 = vmax.f32 %v7819, 0.0
    %v7901 = vmul.f32 %v7820, %v117
    %v7902 = vmul.f32 %v7821, %v122
    %v7903 = vmul.f32 %v7822, %v127
    %v7904 = vmul.f32 %v7823, %v132
    %v7905 = vmul.f32 %v7824, %v137
    %v7906 = vmul.f32 %v7825, %v142
    %v7907 = vmul.f32 %v7826, %v147
    %v7908 = vmul.f32 %v7827, %v152
    %v7909 = vmul.f32 %v7828, %v157
    %v7910 = vmul.f32 %v7829, %v162
    %v7911 = vmul.f32 %v7830, %v167
    %v7912 = vmul.f32 %v7831, %v172
    %v7913 = vmul.f32 %v7832, %v177
    %v7914 = vmul.f32 %v7833, %v182
    %v7915 = vmul.f32 %v7834, %v187
    %v7916 = vmul.f32 %v7835, %v192
    %v7917 = vmul.f32 %v7836, %v197
    %v7918 = vmul.f32 %v7837, %v202
    %v7919 = vmul.f32 %v7838, %v207
    %v7920 = vmul.f32 %v7839, %v212
    %v7921 = vmul.f32 %v7840, %v217
    %v7922 = vmul.f32 %v7841, %v222
    %v7923 = vmul.f32 %v7842, %v227
    %v7924 = vmul.f32 %v7843, %v232
    %v7925 = vmul.f32 %v7844, %v237
    %v7926 = vmul.f32 %v7845, %v242
    %v7927 = vmul.f32 %v7846, %v247
    %v7928 = vmul.f32 %v7847, %v252
    %v7929 = vmul.f32 %v7848, %v257
    %v7930 = vmul.f32 %v7849, %v262
    %v7931 = vmul.f32 %v7850, %v267
    %v7932 = vmul.f32 %v7851, %v272
    %v7933 = vmul.f32 %v7852, %v277
    %v7934 = vmul.f32 %v7853, %v282
    %v7935 = vmul.f32 %v7854, %v287
    %v7936 = vmul.f32 %v7855, %v292
    %v7937 = vmul.f32 %v7856, %v297
    %v7938 = vmul.f32 %v7857, %v302
    %v7939 = vmul.f32 %v7858, %v307
    %v7940 = vmul.f32 %v7859, %v312
    %v7941 = vmul.f32 %v7860, %v317
    %v7942 = vmul.f32 %v7861, %v322
    %v7943 = vmul.f32 %v7862, %v327
    %v7944 = vmul.f32 %v7863, %v332
    %v7945 = vmul.f32 %v7864, %v337
    %v7946 = vmul.f32 %v7865, %v342
    %v7947 = vmul.f32 %v7866, %v347
    %v7948 = vmul.f32 %v7867, %v352
    %v7949 = vmul.f32 %v7868, %v357
    %v7950 = vmul.f32 %v7869, %v362
    %v7951 = vmul.f32 %v7870, %v367
    %v7952 = vmul.f32 %v7871, %v372
    %v7953 = vmul.f32 %v7872, %v377
    %v7954 = vmul.f32 %v7873, %v382
    %v7955 = vmul.f32 %v7874, %v387
    %v7956 = vmul.f32 %v7875, %v392
    %v7957 = vmul.f32 %v7876, %v397
    %v7958 = vmul.f32 %v7877, %v402
    %v7959 = vmul.f32 %v7878, %v407
    %v7960 = vmul.f32 %v7879, %v412
    %v7961 = vmul.f32 %v7880, %v417
    %v7962 = vmul.f32 %v7881, %v422
    %v7963 = vmul.f32 %v7882, %v427
    %v7964 = vmul.f32 %v7883, %v432
    %v7965 = vmul.f32 %v7884, %v437
    %v7966 = vmul.f32 %v7885, %v442
    %v7967 = vmul.f32 %v7886, %v447
    %v7968 = vmul.f32 %v7887, %v452
    %v7969 = vmul.f32 %v7888, %v457
    %v7970 = vmul.f32 %v7889, %v462
    %v7971 = vmul.f32 %v7890, %v467
    %v7972 = vmul.f32 %v7891, %v472
    %v7973 = vmul.f32 %v7892, %v477
    %v7974 = vmul.f32 %v7893, %v482
    %v7975 = vmul.f32 %v7894, %v487
    %v7976 = vmul.f32 %v7895, %v492
    %v7977 = vmul.f32 %v7896, %v497
    %v7978 = vmul.f32 %v7897, %v502
    %v7979 = vmul.f32 %v7898, %v507
    %v7980 = vmul.f32 %v7899, %v512
    %v7981 = vmul.f32 %v7900, %v517
    %v7982 = vsel %vm1480, %v7901, 0.0
    %v7983 = vsel %vm1480, %v7902, 0.0
    %v7984 = vadd.f32 %v7982, %v7983
    %v7985 = vsel %vm1480, %v7903, 0.0
    %v7986 = vadd.f32 %v7984, %v7985
    %v7987 = vsel %vm1480, %v7904, 0.0
    %v7988 = vadd.f32 %v7986, %v7987
    %v7989 = vsel %vm1480, %v7905, 0.0
    %v7990 = vadd.f32 %v7988, %v7989
    %v7991 = vsel %vm1480, %v7906, 0.0
    %v7992 = vadd.f32 %v7990, %v7991
    %v7993 = vsel %vm1480, %v7907, 0.0
    %v7994 = vadd.f32 %v7992, %v7993
    %v7995 = vsel %vm1480, %v7908, 0.0
    %v7996 = vadd.f32 %v7994, %v7995
    %v7997 = vsel %vm1480, %v7909, 0.0
    %v7998 = vadd.f32 %v7996, %v7997
    %v7999 = vsel %vm1480, %v7910, 0.0
    %v8000 = vadd.f32 %v7998, %v7999
    %v8001 = vsel %vm1480, %v7911, 0.0
    %v8002 = vadd.f32 %v8000, %v8001
    %v8003 = vsel %vm1480, %v7912, 0.0
    %v8004 = vadd.f32 %v8002, %v8003
    %v8005 = vsel %vm1480, %v7913, 0.0
    %v8006 = vadd.f32 %v8004, %v8005
    %v8007 = vsel %vm1480, %v7914, 0.0
    %v8008 = vadd.f32 %v8006, %v8007
    %v8009 = vsel %vm1480, %v7915, 0.0
    %v8010 = vadd.f32 %v8008, %v8009
    %v8011 = vsel %vm1480, %v7916, 0.0
    %v8012 = vadd.f32 %v8010, %v8011
    %v8013 = vsel %vm1480, %v7917, 0.0
    %v8014 = vadd.f32 %v8012, %v8013
    %v8015 = vsel %vm1480, %v7918, 0.0
    %v8016 = vadd.f32 %v8014, %v8015
    %v8017 = vsel %vm1480, %v7919, 0.0
    %v8018 = vadd.f32 %v8016, %v8017
    %v8019 = vsel %vm1480, %v7920, 0.0
    %v8020 = vadd.f32 %v8018, %v8019
    %v8021 = vsel %vm1480, %v7921, 0.0
    %v8022 = vadd.f32 %v8020, %v8021
    %v8023 = vsel %vm1480, %v7922, 0.0
    %v8024 = vadd.f32 %v8022, %v8023
    %v8025 = vsel %vm1480, %v7923, 0.0
    %v8026 = vadd.f32 %v8024, %v8025
    %v8027 = vsel %vm1480, %v7924, 0.0
    %v8028 = vadd.f32 %v8026, %v8027
    %v8029 = vsel %vm1480, %v7925, 0.0
    %v8030 = vadd.f32 %v8028, %v8029
    %v8031 = vsel %vm1480, %v7926, 0.0
    %v8032 = vadd.f32 %v8030, %v8031
    %v8033 = vsel %vm1480, %v7927, 0.0
    %v8034 = vadd.f32 %v8032, %v8033
    %v8035 = vsel %vm1480, %v7928, 0.0
    %v8036 = vadd.f32 %v8034, %v8035
    %v8037 = vsel %vm1480, %v7929, 0.0
    %v8038 = vadd.f32 %v8036, %v8037
    %v8039 = vsel %vm1480, %v7930, 0.0
    %v8040 = vadd.f32 %v8038, %v8039
    %v8041 = vsel %vm1480, %v7931, 0.0
    %v8042 = vadd.f32 %v8040, %v8041
    %v8043 = vsel %vm1480, %v7932, 0.0
    %v8044 = vadd.f32 %v8042, %v8043
    %v8045 = vsel %vm1480, %v7933, 0.0
    %v8046 = vadd.f32 %v8044, %v8045
    %v8047 = vsel %vm1480, %v7934, 0.0
    %v8048 = vadd.f32 %v8046, %v8047
    %v8049 = vsel %vm1480, %v7935, 0.0
    %v8050 = vadd.f32 %v8048, %v8049
    %v8051 = vsel %vm1480, %v7936, 0.0
    %v8052 = vadd.f32 %v8050, %v8051
    %v8053 = vsel %vm1480, %v7937, 0.0
    %v8054 = vadd.f32 %v8052, %v8053
    %v8055 = vsel %vm1480, %v7938, 0.0
    %v8056 = vadd.f32 %v8054, %v8055
    %v8057 = vsel %vm1480, %v7939, 0.0
    %v8058 = vadd.f32 %v8056, %v8057
    %v8059 = vsel %vm1480, %v7940, 0.0
    %v8060 = vadd.f32 %v8058, %v8059
    %v8061 = vsel %vm1480, %v7941, 0.0
    %v8062 = vadd.f32 %v8060, %v8061
    %v8063 = vsel %vm1480, %v7942, 0.0
    %v8064 = vadd.f32 %v8062, %v8063
    %v8065 = vsel %vm1480, %v7943, 0.0
    %v8066 = vadd.f32 %v8064, %v8065
    %v8067 = vsel %vm1480, %v7944, 0.0
    %v8068 = vadd.f32 %v8066, %v8067
    %v8069 = vsel %vm1480, %v7945, 0.0
    %v8070 = vadd.f32 %v8068, %v8069
    %v8071 = vsel %vm1480, %v7946, 0.0
    %v8072 = vadd.f32 %v8070, %v8071
    %v8073 = vsel %vm1480, %v7947, 0.0
    %v8074 = vadd.f32 %v8072, %v8073
    %v8075 = vsel %vm1480, %v7948, 0.0
    %v8076 = vadd.f32 %v8074, %v8075
    %v8077 = vsel %vm1480, %v7949, 0.0
    %v8078 = vadd.f32 %v8076, %v8077
    %v8079 = vsel %vm1480, %v7950, 0.0
    %v8080 = vadd.f32 %v8078, %v8079
    %v8081 = vsel %vm1480, %v7951, 0.0
    %v8082 = vadd.f32 %v8080, %v8081
    %v8083 = vsel %vm1480, %v7952, 0.0
    %v8084 = vadd.f32 %v8082, %v8083
    %v8085 = vsel %vm1480, %v7953, 0.0
    %v8086 = vadd.f32 %v8084, %v8085
    %v8087 = vsel %vm1480, %v7954, 0.0
    %v8088 = vadd.f32 %v8086, %v8087
    %v8089 = vsel %vm1480, %v7955, 0.0
    %v8090 = vadd.f32 %v8088, %v8089
    %v8091 = vsel %vm1480, %v7956, 0.0
    %v8092 = vadd.f32 %v8090, %v8091
    %v8093 = vsel %vm1480, %v7957, 0.0
    %v8094 = vadd.f32 %v8092, %v8093
    %v8095 = vsel %vm1480, %v7958, 0.0
    %v8096 = vadd.f32 %v8094, %v8095
    %v8097 = vsel %vm1480, %v7959, 0.0
    %v8098 = vadd.f32 %v8096, %v8097
    %v8099 = vsel %vm1480, %v7960, 0.0
    %v8100 = vadd.f32 %v8098, %v8099
    %v8101 = vsel %vm1480, %v7961, 0.0
    %v8102 = vadd.f32 %v8100, %v8101
    %v8103 = vsel %vm1480, %v7962, 0.0
    %v8104 = vadd.f32 %v8102, %v8103
    %v8105 = vsel %vm1480, %v7963, 0.0
    %v8106 = vadd.f32 %v8104, %v8105
    %v8107 = vsel %vm1480, %v7964, 0.0
    %v8108 = vadd.f32 %v8106, %v8107
    %v8109 = vsel %vm1480, %v7965, 0.0
    %v8110 = vadd.f32 %v8108, %v8109
    %v8111 = vsel %vm1480, %v7966, 0.0
    %v8112 = vadd.f32 %v8110, %v8111
    %v8113 = vsel %vm1480, %v7967, 0.0
    %v8114 = vadd.f32 %v8112, %v8113
    %v8115 = vsel %vm1480, %v7968, 0.0
    %v8116 = vadd.f32 %v8114, %v8115
    %v8117 = vsel %vm1480, %v7969, 0.0
    %v8118 = vadd.f32 %v8116, %v8117
    %v8119 = vsel %vm1480, %v7970, 0.0
    %v8120 = vadd.f32 %v8118, %v8119
    %v8121 = vsel %vm1480, %v7971, 0.0
    %v8122 = vadd.f32 %v8120, %v8121
    %v8123 = vsel %vm1480, %v7972, 0.0
    %v8124 = vadd.f32 %v8122, %v8123
    %v8125 = vsel %vm1480, %v7973, 0.0
    %v8126 = vadd.f32 %v8124, %v8125
    %v8127 = vsel %vm1480, %v7974, 0.0
    %v8128 = vadd.f32 %v8126, %v8127
    %v8129 = vsel %vm1480, %v7975, 0.0
    %v8130 = vadd.f32 %v8128, %v8129
    %v8131 = vsel %vm1480, %v7976, 0.0
    %v8132 = vadd.f32 %v8130, %v8131
    %v8133 = vsel %vm1480, %v7977, 0.0
    %v8134 = vadd.f32 %v8132, %v8133
    %v8135 = vsel %vm1480, %v7978, 0.0
    %v8136 = vadd.f32 %v8134, %v8135
    %v8137 = vsel %vm1480, %v7979, 0.0
    %v8138 = vadd.f32 %v8136, %v8137
    %v8139 = vsel %vm1480, %v7980, 0.0
    %v8140 = vadd.f32 %v8138, %v8139
    %v8141 = vsel %vm1480, %v7981, 0.0
    %v8142 = vadd.f32 %v8140, %v8141
    %v8143 = vrot.slane %v8142, 4
    %v8144 = vadd.f32 %v8142, %v8143
    %v8145 = vrot.slane %v8144, 2
    %v8146 = vadd.f32 %v8144, %v8145
    %v8147 = vrot.slane %v8146, 1
    %v8148 = vadd.f32 %v8146, %v8147
    %v8149 = vmul.f32 %v7901, %v7820
    %v8150 = vmul.f32 %v7902, %v7821
    %v8151 = vmul.f32 %v7903, %v7822
    %v8152 = vmul.f32 %v7904, %v7823
    %v8153 = vmul.f32 %v7905, %v7824
    %v8154 = vmul.f32 %v7906, %v7825
    %v8155 = vmul.f32 %v7907, %v7826
    %v8156 = vmul.f32 %v7908, %v7827
    %v8157 = vmul.f32 %v7909, %v7828
    %v8158 = vmul.f32 %v7910, %v7829
    %v8159 = vmul.f32 %v7911, %v7830
    %v8160 = vmul.f32 %v7912, %v7831
    %v8161 = vmul.f32 %v7913, %v7832
    %v8162 = vmul.f32 %v7914, %v7833
    %v8163 = vmul.f32 %v7915, %v7834
    %v8164 = vmul.f32 %v7916, %v7835
    %v8165 = vmul.f32 %v7917, %v7836
    %v8166 = vmul.f32 %v7918, %v7837
    %v8167 = vmul.f32 %v7919, %v7838
    %v8168 = vmul.f32 %v7920, %v7839
    %v8169 = vmul.f32 %v7921, %v7840
    %v8170 = vmul.f32 %v7922, %v7841
    %v8171 = vmul.f32 %v7923, %v7842
    %v8172 = vmul.f32 %v7924, %v7843
    %v8173 = vmul.f32 %v7925, %v7844
    %v8174 = vmul.f32 %v7926, %v7845
    %v8175 = vmul.f32 %v7927, %v7846
    %v8176 = vmul.f32 %v7928, %v7847
    %v8177 = vmul.f32 %v7929, %v7848
    %v8178 = vmul.f32 %v7930, %v7849
    %v8179 = vmul.f32 %v7931, %v7850
    %v8180 = vmul.f32 %v7932, %v7851
    %v8181 = vmul.f32 %v7933, %v7852
    %v8182 = vmul.f32 %v7934, %v7853
    %v8183 = vmul.f32 %v7935, %v7854
    %v8184 = vmul.f32 %v7936, %v7855
    %v8185 = vmul.f32 %v7937, %v7856
    %v8186 = vmul.f32 %v7938, %v7857
    %v8187 = vmul.f32 %v7939, %v7858
    %v8188 = vmul.f32 %v7940, %v7859
    %v8189 = vmul.f32 %v7941, %v7860
    %v8190 = vmul.f32 %v7942, %v7861
    %v8191 = vmul.f32 %v7943, %v7862
    %v8192 = vmul.f32 %v7944, %v7863
    %v8193 = vmul.f32 %v7945, %v7864
    %v8194 = vmul.f32 %v7946, %v7865
    %v8195 = vmul.f32 %v7947, %v7866
    %v8196 = vmul.f32 %v7948, %v7867
    %v8197 = vmul.f32 %v7949, %v7868
    %v8198 = vmul.f32 %v7950, %v7869
    %v8199 = vmul.f32 %v7951, %v7870
    %v8200 = vmul.f32 %v7952, %v7871
    %v8201 = vmul.f32 %v7953, %v7872
    %v8202 = vmul.f32 %v7954, %v7873
    %v8203 = vmul.f32 %v7955, %v7874
    %v8204 = vmul.f32 %v7956, %v7875
    %v8205 = vmul.f32 %v7957, %v7876
    %v8206 = vmul.f32 %v7958, %v7877
    %v8207 = vmul.f32 %v7959, %v7878
    %v8208 = vmul.f32 %v7960, %v7879
    %v8209 = vmul.f32 %v7961, %v7880
    %v8210 = vmul.f32 %v7962, %v7881
    %v8211 = vmul.f32 %v7963, %v7882
    %v8212 = vmul.f32 %v7964, %v7883
    %v8213 = vmul.f32 %v7965, %v7884
    %v8214 = vmul.f32 %v7966, %v7885
    %v8215 = vmul.f32 %v7967, %v7886
    %v8216 = vmul.f32 %v7968, %v7887
    %v8217 = vmul.f32 %v7969, %v7888
    %v8218 = vmul.f32 %v7970, %v7889
    %v8219 = vmul.f32 %v7971, %v7890
    %v8220 = vmul.f32 %v7972, %v7891
    %v8221 = vmul.f32 %v7973, %v7892
    %v8222 = vmul.f32 %v7974, %v7893
    %v8223 = vmul.f32 %v7975, %v7894
    %v8224 = vmul.f32 %v7976, %v7895
    %v8225 = vmul.f32 %v7977, %v7896
    %v8226 = vmul.f32 %v7978, %v7897
    %v8227 = vmul.f32 %v7979, %v7898
    %v8228 = vmul.f32 %v7980, %v7899
    %v8229 = vmul.f32 %v7981, %v7900
    %v8230 = vsel %vm1480, %v8149, 0.0
    %v8231 = vsel %vm1480, %v8150, 0.0
    %v8232 = vadd.f32 %v8230, %v8231
    %v8233 = vsel %vm1480, %v8151, 0.0
    %v8234 = vadd.f32 %v8232, %v8233
    %v8235 = vsel %vm1480, %v8152, 0.0
    %v8236 = vadd.f32 %v8234, %v8235
    %v8237 = vsel %vm1480, %v8153, 0.0
    %v8238 = vadd.f32 %v8236, %v8237
    %v8239 = vsel %vm1480, %v8154, 0.0
    %v8240 = vadd.f32 %v8238, %v8239
    %v8241 = vsel %vm1480, %v8155, 0.0
    %v8242 = vadd.f32 %v8240, %v8241
    %v8243 = vsel %vm1480, %v8156, 0.0
    %v8244 = vadd.f32 %v8242, %v8243
    %v8245 = vsel %vm1480, %v8157, 0.0
    %v8246 = vadd.f32 %v8244, %v8245
    %v8247 = vsel %vm1480, %v8158, 0.0
    %v8248 = vadd.f32 %v8246, %v8247
    %v8249 = vsel %vm1480, %v8159, 0.0
    %v8250 = vadd.f32 %v8248, %v8249
    %v8251 = vsel %vm1480, %v8160, 0.0
    %v8252 = vadd.f32 %v8250, %v8251
    %v8253 = vsel %vm1480, %v8161, 0.0
    %v8254 = vadd.f32 %v8252, %v8253
    %v8255 = vsel %vm1480, %v8162, 0.0
    %v8256 = vadd.f32 %v8254, %v8255
    %v8257 = vsel %vm1480, %v8163, 0.0
    %v8258 = vadd.f32 %v8256, %v8257
    %v8259 = vsel %vm1480, %v8164, 0.0
    %v8260 = vadd.f32 %v8258, %v8259
    %v8261 = vsel %vm1480, %v8165, 0.0
    %v8262 = vadd.f32 %v8260, %v8261
    %v8263 = vsel %vm1480, %v8166, 0.0
    %v8264 = vadd.f32 %v8262, %v8263
    %v8265 = vsel %vm1480, %v8167, 0.0
    %v8266 = vadd.f32 %v8264, %v8265
    %v8267 = vsel %vm1480, %v8168, 0.0
    %v8268 = vadd.f32 %v8266, %v8267
    %v8269 = vsel %vm1480, %v8169, 0.0
    %v8270 = vadd.f32 %v8268, %v8269
    %v8271 = vsel %vm1480, %v8170, 0.0
    %v8272 = vadd.f32 %v8270, %v8271
    %v8273 = vsel %vm1480, %v8171, 0.0
    %v8274 = vadd.f32 %v8272, %v8273
    %v8275 = vsel %vm1480, %v8172, 0.0
    %v8276 = vadd.f32 %v8274, %v8275
    %v8277 = vsel %vm1480, %v8173, 0.0
    %v8278 = vadd.f32 %v8276, %v8277
    %v8279 = vsel %vm1480, %v8174, 0.0
    %v8280 = vadd.f32 %v8278, %v8279
    %v8281 = vsel %vm1480, %v8175, 0.0
    %v8282 = vadd.f32 %v8280, %v8281
    %v8283 = vsel %vm1480, %v8176, 0.0
    %v8284 = vadd.f32 %v8282, %v8283
    %v8285 = vsel %vm1480, %v8177, 0.0
    %v8286 = vadd.f32 %v8284, %v8285
    %v8287 = vsel %vm1480, %v8178, 0.0
    %v8288 = vadd.f32 %v8286, %v8287
    %v8289 = vsel %vm1480, %v8179, 0.0
    %v8290 = vadd.f32 %v8288, %v8289
    %v8291 = vsel %vm1480, %v8180, 0.0
    %v8292 = vadd.f32 %v8290, %v8291
    %v8293 = vsel %vm1480, %v8181, 0.0
    %v8294 = vadd.f32 %v8292, %v8293
    %v8295 = vsel %vm1480, %v8182, 0.0
    %v8296 = vadd.f32 %v8294, %v8295
    %v8297 = vsel %vm1480, %v8183, 0.0
    %v8298 = vadd.f32 %v8296, %v8297
    %v8299 = vsel %vm1480, %v8184, 0.0
    %v8300 = vadd.f32 %v8298, %v8299
    %v8301 = vsel %vm1480, %v8185, 0.0
    %v8302 = vadd.f32 %v8300, %v8301
    %v8303 = vsel %vm1480, %v8186, 0.0
    %v8304 = vadd.f32 %v8302, %v8303
    %v8305 = vsel %vm1480, %v8187, 0.0
    %v8306 = vadd.f32 %v8304, %v8305
    %v8307 = vsel %vm1480, %v8188, 0.0
    %v8308 = vadd.f32 %v8306, %v8307
    %v8309 = vsel %vm1480, %v8189, 0.0
    %v8310 = vadd.f32 %v8308, %v8309
    %v8311 = vsel %vm1480, %v8190, 0.0
    %v8312 = vadd.f32 %v8310, %v8311
    %v8313 = vsel %vm1480, %v8191, 0.0
    %v8314 = vadd.f32 %v8312, %v8313
    %v8315 = vsel %vm1480, %v8192, 0.0
    %v8316 = vadd.f32 %v8314, %v8315
    %v8317 = vsel %vm1480, %v8193, 0.0
    %v8318 = vadd.f32 %v8316, %v8317
    %v8319 = vsel %vm1480, %v8194, 0.0
    %v8320 = vadd.f32 %v8318, %v8319
    %v8321 = vsel %vm1480, %v8195, 0.0
    %v8322 = vadd.f32 %v8320, %v8321
    %v8323 = vsel %vm1480, %v8196, 0.0
    %v8324 = vadd.f32 %v8322, %v8323
    %v8325 = vsel %vm1480, %v8197, 0.0
    %v8326 = vadd.f32 %v8324, %v8325
    %v8327 = vsel %vm1480, %v8198, 0.0
    %v8328 = vadd.f32 %v8326, %v8327
    %v8329 = vsel %vm1480, %v8199, 0.0
    %v8330 = vadd.f32 %v8328, %v8329
    %v8331 = vsel %vm1480, %v8200, 0.0
    %v8332 = vadd.f32 %v8330, %v8331
    %v8333 = vsel %vm1480, %v8201, 0.0
    %v8334 = vadd.f32 %v8332, %v8333
    %v8335 = vsel %vm1480, %v8202, 0.0
    %v8336 = vadd.f32 %v8334, %v8335
    %v8337 = vsel %vm1480, %v8203, 0.0
    %v8338 = vadd.f32 %v8336, %v8337
    %v8339 = vsel %vm1480, %v8204, 0.0
    %v8340 = vadd.f32 %v8338, %v8339
    %v8341 = vsel %vm1480, %v8205, 0.0
    %v8342 = vadd.f32 %v8340, %v8341
    %v8343 = vsel %vm1480, %v8206, 0.0
    %v8344 = vadd.f32 %v8342, %v8343
    %v8345 = vsel %vm1480, %v8207, 0.0
    %v8346 = vadd.f32 %v8344, %v8345
    %v8347 = vsel %vm1480, %v8208, 0.0
    %v8348 = vadd.f32 %v8346, %v8347
    %v8349 = vsel %vm1480, %v8209, 0.0
    %v8350 = vadd.f32 %v8348, %v8349
    %v8351 = vsel %vm1480, %v8210, 0.0
    %v8352 = vadd.f32 %v8350, %v8351
    %v8353 = vsel %vm1480, %v8211, 0.0
    %v8354 = vadd.f32 %v8352, %v8353
    %v8355 = vsel %vm1480, %v8212, 0.0
    %v8356 = vadd.f32 %v8354, %v8355
    %v8357 = vsel %vm1480, %v8213, 0.0
    %v8358 = vadd.f32 %v8356, %v8357
    %v8359 = vsel %vm1480, %v8214, 0.0
    %v8360 = vadd.f32 %v8358, %v8359
    %v8361 = vsel %vm1480, %v8215, 0.0
    %v8362 = vadd.f32 %v8360, %v8361
    %v8363 = vsel %vm1480, %v8216, 0.0
    %v8364 = vadd.f32 %v8362, %v8363
    %v8365 = vsel %vm1480, %v8217, 0.0
    %v8366 = vadd.f32 %v8364, %v8365
    %v8367 = vsel %vm1480, %v8218, 0.0
    %v8368 = vadd.f32 %v8366, %v8367
    %v8369 = vsel %vm1480, %v8219, 0.0
    %v8370 = vadd.f32 %v8368, %v8369
    %v8371 = vsel %vm1480, %v8220, 0.0
    %v8372 = vadd.f32 %v8370, %v8371
    %v8373 = vsel %vm1480, %v8221, 0.0
    %v8374 = vadd.f32 %v8372, %v8373
    %v8375 = vsel %vm1480, %v8222, 0.0
    %v8376 = vadd.f32 %v8374, %v8375
    %v8377 = vsel %vm1480, %v8223, 0.0
    %v8378 = vadd.f32 %v8376, %v8377
    %v8379 = vsel %vm1480, %v8224, 0.0
    %v8380 = vadd.f32 %v8378, %v8379
    %v8381 = vsel %vm1480, %v8225, 0.0
    %v8382 = vadd.f32 %v8380, %v8381
    %v8383 = vsel %vm1480, %v8226, 0.0
    %v8384 = vadd.f32 %v8382, %v8383
    %v8385 = vsel %vm1480, %v8227, 0.0
    %v8386 = vadd.f32 %v8384, %v8385
    %v8387 = vsel %vm1480, %v8228, 0.0
    %v8388 = vadd.f32 %v8386, %v8387
    %v8389 = vsel %vm1480, %v8229, 0.0
    %v8390 = vadd.f32 %v8388, %v8389
    %v8391 = vrot.slane %v8390, 4
    %v8392 = vadd.f32 %v8390, %v8391
    %v8393 = vrot.slane %v8392, 2
    %v8394 = vadd.f32 %v8392, %v8393
    %v8395 = vrot.slane %v8394, 1
    %v8396 = vadd.f32 %v8394, %v8395
    %v8397 = vmul.f32 %v8148, 0.001953125
    %v8398 = vmul.f32 %v8396, 0.001953125
    %v8399 = vmul.f32 %v8397, %v8397
    %v8400 = vsub.f32 %v8398, %v8399
    %v8401 = vmax.f32 %v8400, 0.0
    %v8402 = vld [vmem:[%s5] sm:$0x1]
    %v8403 = vadd.f32 %v8401, 1e-05
    %v8404 = vrsqrt.pop %v8403
    %v8405 = vmul.f32 %v8402, %v8404
    %v8406 = vld [vmem:[%s6] sm:$0x1]
    %v8407 = vmul.f32 %v8397, %v8405
    %v8408 = vsub.f32 %v8406, %v8407
    %v8410 = vlaneseq
    %v8411 = vshrl.u32 %v8410, 7
    %v8412 = vsub.s32 0, %v8411
    %v8413 = vrot.slane %v8405, %v8412
    %v8415 = vmul.f32 %v7820, %v8413
    %v8416 = vmul.f32 %v7821, %v8413
    %v8417 = vmul.f32 %v7822, %v8413
    %v8418 = vmul.f32 %v7823, %v8413
    %v8419 = vmul.f32 %v7824, %v8413
    %v8420 = vmul.f32 %v7825, %v8413
    %v8421 = vmul.f32 %v7826, %v8413
    %v8422 = vmul.f32 %v7827, %v8413
    %v8423 = vmul.f32 %v7828, %v8413
    %v8424 = vmul.f32 %v7829, %v8413
    %v8425 = vmul.f32 %v7830, %v8413
    %v8426 = vmul.f32 %v7831, %v8413
    %v8427 = vmul.f32 %v7832, %v8413
    %v8428 = vmul.f32 %v7833, %v8413
    %v8429 = vmul.f32 %v7834, %v8413
    %v8430 = vmul.f32 %v7835, %v8413
    %v8431 = vmul.f32 %v7836, %v8413
    %v8432 = vmul.f32 %v7837, %v8413
    %v8433 = vmul.f32 %v7838, %v8413
    %v8434 = vmul.f32 %v7839, %v8413
    %v8435 = vmul.f32 %v7840, %v8413
    %v8436 = vmul.f32 %v7841, %v8413
    %v8437 = vmul.f32 %v7842, %v8413
    %v8438 = vmul.f32 %v7843, %v8413
    %v8439 = vmul.f32 %v7844, %v8413
    %v8440 = vmul.f32 %v7845, %v8413
    %v8441 = vmul.f32 %v7846, %v8413
    %v8442 = vmul.f32 %v7847, %v8413
    %v8443 = vmul.f32 %v7848, %v8413
    %v8444 = vmul.f32 %v7849, %v8413
    %v8445 = vmul.f32 %v7850, %v8413
    %v8446 = vmul.f32 %v7851, %v8413
    %v8447 = vmul.f32 %v7852, %v8413
    %v8448 = vmul.f32 %v7853, %v8413
    %v8449 = vmul.f32 %v7854, %v8413
    %v8450 = vmul.f32 %v7855, %v8413
    %v8451 = vmul.f32 %v7856, %v8413
    %v8452 = vmul.f32 %v7857, %v8413
    %v8453 = vmul.f32 %v7858, %v8413
    %v8454 = vmul.f32 %v7859, %v8413
    %v8455 = vmul.f32 %v7860, %v8413
    %v8456 = vmul.f32 %v7861, %v8413
    %v8457 = vmul.f32 %v7862, %v8413
    %v8458 = vmul.f32 %v7863, %v8413
    %v8459 = vmul.f32 %v7864, %v8413
    %v8460 = vmul.f32 %v7865, %v8413
    %v8461 = vmul.f32 %v7866, %v8413
    %v8462 = vmul.f32 %v7867, %v8413
    %v8463 = vmul.f32 %v7868, %v8413
    %v8464 = vmul.f32 %v7869, %v8413
    %v8465 = vmul.f32 %v7870, %v8413
    %v8466 = vmul.f32 %v7871, %v8413
    %v8467 = vmul.f32 %v7872, %v8413
    %v8468 = vmul.f32 %v7873, %v8413
    %v8469 = vmul.f32 %v7874, %v8413
    %v8470 = vmul.f32 %v7875, %v8413
    %v8471 = vmul.f32 %v7876, %v8413
    %v8472 = vmul.f32 %v7877, %v8413
    %v8473 = vmul.f32 %v7878, %v8413
    %v8474 = vmul.f32 %v7879, %v8413
    %v8475 = vmul.f32 %v7880, %v8413
    %v8476 = vmul.f32 %v7881, %v8413
    %v8477 = vmul.f32 %v7882, %v8413
    %v8478 = vmul.f32 %v7883, %v8413
    %v8479 = vmul.f32 %v7884, %v8413
    %v8480 = vmul.f32 %v7885, %v8413
    %v8481 = vmul.f32 %v7886, %v8413
    %v8482 = vmul.f32 %v7887, %v8413
    %v8483 = vmul.f32 %v7888, %v8413
    %v8484 = vmul.f32 %v7889, %v8413
    %v8485 = vmul.f32 %v7890, %v8413
    %v8486 = vmul.f32 %v7891, %v8413
    %v8487 = vmul.f32 %v7892, %v8413
    %v8488 = vmul.f32 %v7893, %v8413
    %v8489 = vmul.f32 %v7894, %v8413
    %v8490 = vmul.f32 %v7895, %v8413
    %v8491 = vmul.f32 %v7896, %v8413
    %v8492 = vmul.f32 %v7897, %v8413
    %v8493 = vmul.f32 %v7898, %v8413
    %v8494 = vmul.f32 %v7899, %v8413
    %v8495 = vmul.f32 %v7900, %v8413
    %v8497 = vlaneseq
    %v8498 = vshrl.u32 %v8497, 7
    %v8499 = vsub.s32 0, %v8498
    %v8500 = vrot.slane %v8408, %v8499
    %v8502 = vadd.f32 %v8415, %v8500
    %v8503 = vadd.f32 %v8416, %v8500
    %v8504 = vadd.f32 %v8417, %v8500
    %v8505 = vadd.f32 %v8418, %v8500
    %v8506 = vadd.f32 %v8419, %v8500
    %v8507 = vadd.f32 %v8420, %v8500
    %v8508 = vadd.f32 %v8421, %v8500
    %v8509 = vadd.f32 %v8422, %v8500
    %v8510 = vadd.f32 %v8423, %v8500
    %v8511 = vadd.f32 %v8424, %v8500
    %v8512 = vadd.f32 %v8425, %v8500
    %v8513 = vadd.f32 %v8426, %v8500
    %v8514 = vadd.f32 %v8427, %v8500
    %v8515 = vadd.f32 %v8428, %v8500
    %v8516 = vadd.f32 %v8429, %v8500
    %v8517 = vadd.f32 %v8430, %v8500
    %v8518 = vadd.f32 %v8431, %v8500
    %v8519 = vadd.f32 %v8432, %v8500
    %v8520 = vadd.f32 %v8433, %v8500
    %v8521 = vadd.f32 %v8434, %v8500
    %v8522 = vadd.f32 %v8435, %v8500
    %v8523 = vadd.f32 %v8436, %v8500
    %v8524 = vadd.f32 %v8437, %v8500
    %v8525 = vadd.f32 %v8438, %v8500
    %v8526 = vadd.f32 %v8439, %v8500
    %v8527 = vadd.f32 %v8440, %v8500
    %v8528 = vadd.f32 %v8441, %v8500
    %v8529 = vadd.f32 %v8442, %v8500
    %v8530 = vadd.f32 %v8443, %v8500
    %v8531 = vadd.f32 %v8444, %v8500
    %v8532 = vadd.f32 %v8445, %v8500
    %v8533 = vadd.f32 %v8446, %v8500
    %v8534 = vadd.f32 %v8447, %v8500
    %v8535 = vadd.f32 %v8448, %v8500
    %v8536 = vadd.f32 %v8449, %v8500
    %v8537 = vadd.f32 %v8450, %v8500
    %v8538 = vadd.f32 %v8451, %v8500
    %v8539 = vadd.f32 %v8452, %v8500
    %v8540 = vadd.f32 %v8453, %v8500
    %v8541 = vadd.f32 %v8454, %v8500
    %v8542 = vadd.f32 %v8455, %v8500
    %v8543 = vadd.f32 %v8456, %v8500
    %v8544 = vadd.f32 %v8457, %v8500
    %v8545 = vadd.f32 %v8458, %v8500
    %v8546 = vadd.f32 %v8459, %v8500
    %v8547 = vadd.f32 %v8460, %v8500
    %v8548 = vadd.f32 %v8461, %v8500
    %v8549 = vadd.f32 %v8462, %v8500
    %v8550 = vadd.f32 %v8463, %v8500
    %v8551 = vadd.f32 %v8464, %v8500
    %v8552 = vadd.f32 %v8465, %v8500
    %v8553 = vadd.f32 %v8466, %v8500
    %v8554 = vadd.f32 %v8467, %v8500
    %v8555 = vadd.f32 %v8468, %v8500
    %v8556 = vadd.f32 %v8469, %v8500
    %v8557 = vadd.f32 %v8470, %v8500
    %v8558 = vadd.f32 %v8471, %v8500
    %v8559 = vadd.f32 %v8472, %v8500
    %v8560 = vadd.f32 %v8473, %v8500
    %v8561 = vadd.f32 %v8474, %v8500
    %v8562 = vadd.f32 %v8475, %v8500
    %v8563 = vadd.f32 %v8476, %v8500
    %v8564 = vadd.f32 %v8477, %v8500
    %v8565 = vadd.f32 %v8478, %v8500
    %v8566 = vadd.f32 %v8479, %v8500
    %v8567 = vadd.f32 %v8480, %v8500
    %v8568 = vadd.f32 %v8481, %v8500
    %v8569 = vadd.f32 %v8482, %v8500
    %v8570 = vadd.f32 %v8483, %v8500
    %v8571 = vadd.f32 %v8484, %v8500
    %v8572 = vadd.f32 %v8485, %v8500
    %v8573 = vadd.f32 %v8486, %v8500
    %v8574 = vadd.f32 %v8487, %v8500
    %v8575 = vadd.f32 %v8488, %v8500
    %v8576 = vadd.f32 %v8489, %v8500
    %v8577 = vadd.f32 %v8490, %v8500
    %v8578 = vadd.f32 %v8491, %v8500
    %v8579 = vadd.f32 %v8492, %v8500
    %v8580 = vadd.f32 %v8493, %v8500
    %v8581 = vadd.f32 %v8494, %v8500
    %v8582 = vadd.f32 %v8495, %v8500
    %8583 = vst.msk [vmem:[%s8] sm:$0xff] %vm1480, %v8502
    %8584 = vst.msk [vmem:[%s8 + $0x8] sm:$0xff] %vm1480, %v8503
    %8585 = vst.msk [vmem:[%s8 + $0x10] sm:$0xff] %vm1480, %v8504
    %8586 = vst.msk [vmem:[%s8 + $0x18] sm:$0xff] %vm1480, %v8505
    %8587 = vst.msk [vmem:[%s8 + $0x20] sm:$0xff] %vm1480, %v8506
    %8588 = vst.msk [vmem:[%s8 + $0x28] sm:$0xff] %vm1480, %v8507
    %8589 = vst.msk [vmem:[%s8 + $0x30] sm:$0xff] %vm1480, %v8508
    %8590 = vst.msk [vmem:[%s8 + $0x38] sm:$0xff] %vm1480, %v8509
    %8591 = vst.msk [vmem:[%s8 + $0x40] sm:$0xff] %vm1480, %v8510
    %8592 = vst.msk [vmem:[%s8 + $0x48] sm:$0xff] %vm1480, %v8511
    %8593 = vst.msk [vmem:[%s8 + $0x50] sm:$0xff] %vm1480, %v8512
    %8594 = vst.msk [vmem:[%s8 + $0x58] sm:$0xff] %vm1480, %v8513
    %8595 = vst.msk [vmem:[%s8 + $0x60] sm:$0xff] %vm1480, %v8514
    %8596 = vst.msk [vmem:[%s8 + $0x68] sm:$0xff] %vm1480, %v8515
    %8597 = vst.msk [vmem:[%s8 + $0x70] sm:$0xff] %vm1480, %v8516
    %8598 = vst.msk [vmem:[%s8 + $0x78] sm:$0xff] %vm1480, %v8517
    %8599 = vst.msk [vmem:[%s8 + $0x80] sm:$0xff] %vm1480, %v8518
    %8600 = vst.msk [vmem:[%s8 + $0x88] sm:$0xff] %vm1480, %v8519
    %8601 = vst.msk [vmem:[%s8 + $0x90] sm:$0xff] %vm1480, %v8520
    %8602 = vst.msk [vmem:[%s8 + $0x98] sm:$0xff] %vm1480, %v8521
    %8603 = vst.msk [vmem:[%s8 + $0xa0] sm:$0xff] %vm1480, %v8522
    %8604 = vst.msk [vmem:[%s8 + $0xa8] sm:$0xff] %vm1480, %v8523
    %8605 = vst.msk [vmem:[%s8 + $0xb0] sm:$0xff] %vm1480, %v8524
    %8606 = vst.msk [vmem:[%s8 + $0xb8] sm:$0xff] %vm1480, %v8525
    %8607 = vst.msk [vmem:[%s8 + $0xc0] sm:$0xff] %vm1480, %v8526
    %8608 = vst.msk [vmem:[%s8 + $0xc8] sm:$0xff] %vm1480, %v8527
    %8609 = vst.msk [vmem:[%s8 + $0xd0] sm:$0xff] %vm1480, %v8528
    %8610 = vst.msk [vmem:[%s8 + $0xd8] sm:$0xff] %vm1480, %v8529
    %8611 = vst.msk [vmem:[%s8 + $0xe0] sm:$0xff] %vm1480, %v8530
    %8612 = vst.msk [vmem:[%s8 + $0xe8] sm:$0xff] %vm1480, %v8531
    %8613 = vst.msk [vmem:[%s8 + $0xf0] sm:$0xff] %vm1480, %v8532
    %8614 = vst.msk [vmem:[%s8 + $0xf8] sm:$0xff] %vm1480, %v8533
    %8615 = vst.msk [vmem:[%s8 + $0x100] sm:$0xff] %vm1480, %v8534
    %8616 = vst.msk [vmem:[%s8 + $0x108] sm:$0xff] %vm1480, %v8535
    %8617 = vst.msk [vmem:[%s8 + $0x110] sm:$0xff] %vm1480, %v8536
    %8618 = vst.msk [vmem:[%s8 + $0x118] sm:$0xff] %vm1480, %v8537
    %8619 = vst.msk [vmem:[%s8 + $0x120] sm:$0xff] %vm1480, %v8538
    %8620 = vst.msk [vmem:[%s8 + $0x128] sm:$0xff] %vm1480, %v8539
    %8621 = vst.msk [vmem:[%s8 + $0x130] sm:$0xff] %vm1480, %v8540
    %8622 = vst.msk [vmem:[%s8 + $0x138] sm:$0xff] %vm1480, %v8541
    %8623 = vst.msk [vmem:[%s8 + $0x140] sm:$0xff] %vm1480, %v8542
    %8624 = vst.msk [vmem:[%s8 + $0x148] sm:$0xff] %vm1480, %v8543
    %8625 = vst.msk [vmem:[%s8 + $0x150] sm:$0xff] %vm1480, %v8544
    %8626 = vst.msk [vmem:[%s8 + $0x158] sm:$0xff] %vm1480, %v8545
    %8627 = vst.msk [vmem:[%s8 + $0x160] sm:$0xff] %vm1480, %v8546
    %8628 = vst.msk [vmem:[%s8 + $0x168] sm:$0xff] %vm1480, %v8547
    %8629 = vst.msk [vmem:[%s8 + $0x170] sm:$0xff] %vm1480, %v8548
    %8630 = vst.msk [vmem:[%s8 + $0x178] sm:$0xff] %vm1480, %v8549
    %8631 = vst.msk [vmem:[%s8 + $0x180] sm:$0xff] %vm1480, %v8550
    %8632 = vst.msk [vmem:[%s8 + $0x188] sm:$0xff] %vm1480, %v8551
    %8633 = vst.msk [vmem:[%s8 + $0x190] sm:$0xff] %vm1480, %v8552
    %8634 = vst.msk [vmem:[%s8 + $0x198] sm:$0xff] %vm1480, %v8553
    %8635 = vst.msk [vmem:[%s8 + $0x1a0] sm:$0xff] %vm1480, %v8554
    %8636 = vst.msk [vmem:[%s8 + $0x1a8] sm:$0xff] %vm1480, %v8555
    %8637 = vst.msk [vmem:[%s8 + $0x1b0] sm:$0xff] %vm1480, %v8556
    %8638 = vst.msk [vmem:[%s8 + $0x1b8] sm:$0xff] %vm1480, %v8557
    %8639 = vst.msk [vmem:[%s8 + $0x1c0] sm:$0xff] %vm1480, %v8558
    %8640 = vst.msk [vmem:[%s8 + $0x1c8] sm:$0xff] %vm1480, %v8559
    %8641 = vst.msk [vmem:[%s8 + $0x1d0] sm:$0xff] %vm1480, %v8560
    %8642 = vst.msk [vmem:[%s8 + $0x1d8] sm:$0xff] %vm1480, %v8561
    %8643 = vst.msk [vmem:[%s8 + $0x1e0] sm:$0xff] %vm1480, %v8562
    %8644 = vst.msk [vmem:[%s8 + $0x1e8] sm:$0xff] %vm1480, %v8563
    %8645 = vst.msk [vmem:[%s8 + $0x1f0] sm:$0xff] %vm1480, %v8564
    %8646 = vst.msk [vmem:[%s8 + $0x1f8] sm:$0xff] %vm1480, %v8565
    %8647 = vst.msk [vmem:[%s8 + $0x200] sm:$0xff] %vm1480, %v8566
    %8648 = vst.msk [vmem:[%s8 + $0x208] sm:$0xff] %vm1480, %v8567
    %8649 = vst.msk [vmem:[%s8 + $0x210] sm:$0xff] %vm1480, %v8568
    %8650 = vst.msk [vmem:[%s8 + $0x218] sm:$0xff] %vm1480, %v8569
    %8651 = vst.msk [vmem:[%s8 + $0x220] sm:$0xff] %vm1480, %v8570
    %8652 = vst.msk [vmem:[%s8 + $0x228] sm:$0xff] %vm1480, %v8571
    %8653 = vst.msk [vmem:[%s8 + $0x230] sm:$0xff] %vm1480, %v8572
    %8654 = vst.msk [vmem:[%s8 + $0x238] sm:$0xff] %vm1480, %v8573
    %8655 = vst.msk [vmem:[%s8 + $0x240] sm:$0xff] %vm1480, %v8574
    %8656 = vst.msk [vmem:[%s8 + $0x248] sm:$0xff] %vm1480, %v8575
    %8657 = vst.msk [vmem:[%s8 + $0x250] sm:$0xff] %vm1480, %v8576
    %8658 = vst.msk [vmem:[%s8 + $0x258] sm:$0xff] %vm1480, %v8577
    %8659 = vst.msk [vmem:[%s8 + $0x260] sm:$0xff] %vm1480, %v8578
    %8660 = vst.msk [vmem:[%s8 + $0x268] sm:$0xff] %vm1480, %v8579
    %8661 = vst.msk [vmem:[%s8 + $0x270] sm:$0xff] %vm1480, %v8580
    %8662 = vst.msk [vmem:[%s8 + $0x278] sm:$0xff] %vm1480, %v8581
    %8663 = vst.msk [vmem:[%s8 + $0x280] sm:$0xff] %vm1480, %v8582
    %s8664 = scalar_lea.vmem %s8, 19
    %v8665 = vld [vmem:[%s8664] ss:$2 sm:$0xff]
    %s8666 = scalar_lea.vmem %s8, 20
    %v8667 = vld [vmem:[%s8666] ss:$2 sm:$0xff]
    %s8668 = scalar_lea.vmem %s8, 37
    %v8669 = vld [vmem:[%s8668] ss:$2 sm:$0xff]
    %s8670 = scalar_lea.vmem %s8, 38
    %v8671 = vld [vmem:[%s8670] ss:$2 sm:$0xff]
    %v8672 = vmax.f32 %v8665, %v8667
    %v8673 = vmax.f32 %v8669, %v8671
    %v8674 = vmax.f32 %v8672, %v8673
    %8675 = vst.msk [vmem:[#allocation3] sm:$0xff] %vm1480, %v8674
    %s8676 = scalar_lea.vmem %s8, 55
    %v8677 = vld [vmem:[%s8676] ss:$2 sm:$0xff]
    %s8678 = scalar_lea.vmem %s8, 56
    %v8679 = vld [vmem:[%s8678] ss:$2 sm:$0xff]
    %s8680 = scalar_lea.vmem %s8, 73
    %v8681 = vld [vmem:[%s8680] ss:$2 sm:$0xff]
    %s8682 = scalar_lea.vmem %s8, 74
    %v8683 = vld [vmem:[%s8682] ss:$2 sm:$0xff]
    %v8684 = vmax.f32 %v8677, %v8679
    %v8685 = vmax.f32 %v8681, %v8683
    %v8686 = vmax.f32 %v8684, %v8685
    %8687 = vst.msk [vmem:[#allocation3 + $0x8] sm:$0xff] %vm1480, %v8686
    %s8688 = scalar_lea.vmem %s8, 91
    %v8689 = vld [vmem:[%s8688] ss:$2 sm:$0xff]
    %s8690 = scalar_lea.vmem %s8, 92
    %v8691 = vld [vmem:[%s8690] ss:$2 sm:$0xff]
    %s8692 = scalar_lea.vmem %s8, 109
    %v8693 = vld [vmem:[%s8692] ss:$2 sm:$0xff]
    %s8694 = scalar_lea.vmem %s8, 110
    %v8695 = vld [vmem:[%s8694] ss:$2 sm:$0xff]
    %v8696 = vmax.f32 %v8689, %v8691
    %v8697 = vmax.f32 %v8693, %v8695
    %v8698 = vmax.f32 %v8696, %v8697
    %8699 = vst.msk [vmem:[#allocation3 + $0x10] sm:$0xff] %vm1480, %v8698
    %s8700 = scalar_lea.vmem %s8, 127
    %v8701 = vld [vmem:[%s8700] ss:$2 sm:$0xff]
    %s8702 = scalar_lea.vmem %s8, 128
    %v8703 = vld [vmem:[%s8702] ss:$2 sm:$0xff]
    %s8704 = scalar_lea.vmem %s8, 145
    %v8705 = vld [vmem:[%s8704] ss:$2 sm:$0xff]
    %s8706 = scalar_lea.vmem %s8, 146
    %v8707 = vld [vmem:[%s8706] ss:$2 sm:$0xff]
    %v8708 = vmax.f32 %v8701, %v8703
    %v8709 = vmax.f32 %v8705, %v8707
    %v8710 = vmax.f32 %v8708, %v8709
    %8711 = vst.msk [vmem:[#allocation3 + $0x18] sm:$0xff] %vm1480, %v8710
    %s8712 = scalar_lea.vmem %s8, 163
    %v8713 = vld [vmem:[%s8712] ss:$2 sm:$0xff]
    %s8714 = scalar_lea.vmem %s8, 164
    %v8715 = vld [vmem:[%s8714] ss:$2 sm:$0xff]
    %s8716 = scalar_lea.vmem %s8, 181
    %v8717 = vld [vmem:[%s8716] ss:$2 sm:$0xff]
    %s8718 = scalar_lea.vmem %s8, 182
    %v8719 = vld [vmem:[%s8718] ss:$2 sm:$0xff]
    %v8720 = vmax.f32 %v8713, %v8715
    %v8721 = vmax.f32 %v8717, %v8719
    %v8722 = vmax.f32 %v8720, %v8721
    %8723 = vst.msk [vmem:[#allocation3 + $0x20] sm:$0xff] %vm1480, %v8722
    %s8724 = scalar_lea.vmem %s8, 199
    %v8725 = vld [vmem:[%s8724] ss:$2 sm:$0xff]
    %s8726 = scalar_lea.vmem %s8, 200
    %v8727 = vld [vmem:[%s8726] ss:$2 sm:$0xff]
    %s8728 = scalar_lea.vmem %s8, 217
    %v8729 = vld [vmem:[%s8728] ss:$2 sm:$0xff]
    %s8730 = scalar_lea.vmem %s8, 218
    %v8731 = vld [vmem:[%s8730] ss:$2 sm:$0xff]
    %v8732 = vmax.f32 %v8725, %v8727
    %v8733 = vmax.f32 %v8729, %v8731
    %v8734 = vmax.f32 %v8732, %v8733
    %8735 = vst.msk [vmem:[#allocation3 + $0x28] sm:$0xff] %vm1480, %v8734
    %s8736 = scalar_lea.vmem %s8, 235
    %v8737 = vld [vmem:[%s8736] ss:$2 sm:$0xff]
    %s8738 = scalar_lea.vmem %s8, 236
    %v8739 = vld [vmem:[%s8738] ss:$2 sm:$0xff]
    %s8740 = scalar_lea.vmem %s8, 253
    %v8741 = vld [vmem:[%s8740] ss:$2 sm:$0xff]
    %s8742 = scalar_lea.vmem %s8, 254
    %v8743 = vld [vmem:[%s8742] ss:$2 sm:$0xff]
    %v8744 = vmax.f32 %v8737, %v8739
    %v8745 = vmax.f32 %v8741, %v8743
    %v8746 = vmax.f32 %v8744, %v8745
    %8747 = vst.msk [vmem:[#allocation3 + $0x30] sm:$0xff] %vm1480, %v8746
    %s8748 = scalar_lea.vmem %s8, 271
    %v8749 = vld [vmem:[%s8748] ss:$2 sm:$0xff]
    %s8750 = scalar_lea.vmem %s8, 272
    %v8751 = vld [vmem:[%s8750] ss:$2 sm:$0xff]
    %s8752 = scalar_lea.vmem %s8, 289
    %v8753 = vld [vmem:[%s8752] ss:$2 sm:$0xff]
    %s8754 = scalar_lea.vmem %s8, 290
    %v8755 = vld [vmem:[%s8754] ss:$2 sm:$0xff]
    %v8756 = vmax.f32 %v8749, %v8751
    %v8757 = vmax.f32 %v8753, %v8755
    %v8758 = vmax.f32 %v8756, %v8757
    %8759 = vst.msk [vmem:[#allocation3 + $0x38] sm:$0xff] %vm1480, %v8758
    %s8760 = scalar_lea.vmem %s8, 343
    %v8761 = vld [vmem:[%s8760] ss:$2 sm:$0xff]
    %s8762 = scalar_lea.vmem %s8, 344
    %v8763 = vld [vmem:[%s8762] ss:$2 sm:$0xff]
    %s8764 = scalar_lea.vmem %s8, 361
    %v8765 = vld [vmem:[%s8764] ss:$2 sm:$0xff]
    %s8766 = scalar_lea.vmem %s8, 362
    %v8767 = vld [vmem:[%s8766] ss:$2 sm:$0xff]
    %v8768 = vmax.f32 %v8761, %v8763
    %v8769 = vmax.f32 %v8765, %v8767
    %v8770 = vmax.f32 %v8768, %v8769
    %8771 = vst.msk [vmem:[#allocation3 + $0x40] sm:$0xff] %vm1480, %v8770
    %s8772 = scalar_lea.vmem %s8, 379
    %v8773 = vld [vmem:[%s8772] ss:$2 sm:$0xff]
    %s8774 = scalar_lea.vmem %s8, 380
    %v8775 = vld [vmem:[%s8774] ss:$2 sm:$0xff]
    %s8776 = scalar_lea.vmem %s8, 397
    %v8777 = vld [vmem:[%s8776] ss:$2 sm:$0xff]
    %s8778 = scalar_lea.vmem %s8, 398
    %v8779 = vld [vmem:[%s8778] ss:$2 sm:$0xff]
    %v8780 = vmax.f32 %v8773, %v8775
    %v8781 = vmax.f32 %v8777, %v8779
    %v8782 = vmax.f32 %v8780, %v8781
    %8783 = vst.msk [vmem:[#allocation3 + $0x48] sm:$0xff] %vm1480, %v8782
    %s8784 = scalar_lea.vmem %s8, 415
    %v8785 = vld [vmem:[%s8784] ss:$2 sm:$0xff]
    %s8786 = scalar_lea.vmem %s8, 416
    %v8787 = vld [vmem:[%s8786] ss:$2 sm:$0xff]
    %s8788 = scalar_lea.vmem %s8, 433
    %v8789 = vld [vmem:[%s8788] ss:$2 sm:$0xff]
    %s8790 = scalar_lea.vmem %s8, 434
    %v8791 = vld [vmem:[%s8790] ss:$2 sm:$0xff]
    %v8792 = vmax.f32 %v8785, %v8787
    %v8793 = vmax.f32 %v8789, %v8791
    %v8794 = vmax.f32 %v8792, %v8793
    %8795 = vst.msk [vmem:[#allocation3 + $0x50] sm:$0xff] %vm1480, %v8794
    %s8796 = scalar_lea.vmem %s8, 451
    %v8797 = vld [vmem:[%s8796] ss:$2 sm:$0xff]
    %s8798 = scalar_lea.vmem %s8, 452
    %v8799 = vld [vmem:[%s8798] ss:$2 sm:$0xff]
    %s8800 = scalar_lea.vmem %s8, 469
    %v8801 = vld [vmem:[%s8800] ss:$2 sm:$0xff]
    %s8802 = scalar_lea.vmem %s8, 470
    %v8803 = vld [vmem:[%s8802] ss:$2 sm:$0xff]
    %v8804 = vmax.f32 %v8797, %v8799
    %v8805 = vmax.f32 %v8801, %v8803
    %v8806 = vmax.f32 %v8804, %v8805
    %8807 = vst.msk [vmem:[#allocation3 + $0x58] sm:$0xff] %vm1480, %v8806
    %s8808 = scalar_lea.vmem %s8, 487
    %v8809 = vld [vmem:[%s8808] ss:$2 sm:$0xff]
    %s8810 = scalar_lea.vmem %s8, 488
    %v8811 = vld [vmem:[%s8810] ss:$2 sm:$0xff]
    %s8812 = scalar_lea.vmem %s8, 505
    %v8813 = vld [vmem:[%s8812] ss:$2 sm:$0xff]
    %s8814 = scalar_lea.vmem %s8, 506
    %v8815 = vld [vmem:[%s8814] ss:$2 sm:$0xff]
    %v8816 = vmax.f32 %v8809, %v8811
    %v8817 = vmax.f32 %v8813, %v8815
    %v8818 = vmax.f32 %v8816, %v8817
    %8819 = vst.msk [vmem:[#allocation3 + $0x60] sm:$0xff] %vm1480, %v8818
    %s8820 = scalar_lea.vmem %s8, 523
    %v8821 = vld [vmem:[%s8820] ss:$2 sm:$0xff]
    %s8822 = scalar_lea.vmem %s8, 524
    %v8823 = vld [vmem:[%s8822] ss:$2 sm:$0xff]
    %s8824 = scalar_lea.vmem %s8, 541
    %v8825 = vld [vmem:[%s8824] ss:$2 sm:$0xff]
    %s8826 = scalar_lea.vmem %s8, 542
    %v8827 = vld [vmem:[%s8826] ss:$2 sm:$0xff]
    %v8828 = vmax.f32 %v8821, %v8823
    %v8829 = vmax.f32 %v8825, %v8827
    %v8830 = vmax.f32 %v8828, %v8829
    %8831 = vst.msk [vmem:[#allocation3 + $0x68] sm:$0xff] %vm1480, %v8830
    %s8832 = scalar_lea.vmem %s8, 559
    %v8833 = vld [vmem:[%s8832] ss:$2 sm:$0xff]
    %s8834 = scalar_lea.vmem %s8, 560
    %v8835 = vld [vmem:[%s8834] ss:$2 sm:$0xff]
    %s8836 = scalar_lea.vmem %s8, 577
    %v8837 = vld [vmem:[%s8836] ss:$2 sm:$0xff]
    %s8838 = scalar_lea.vmem %s8, 578
    %v8839 = vld [vmem:[%s8838] ss:$2 sm:$0xff]
    %v8840 = vmax.f32 %v8833, %v8835
    %v8841 = vmax.f32 %v8837, %v8839
    %v8842 = vmax.f32 %v8840, %v8841
    %8843 = vst.msk [vmem:[#allocation3 + $0x70] sm:$0xff] %vm1480, %v8842
    %s8844 = scalar_lea.vmem %s8, 595
    %v8845 = vld [vmem:[%s8844] ss:$2 sm:$0xff]
    %s8846 = scalar_lea.vmem %s8, 596
    %v8847 = vld [vmem:[%s8846] ss:$2 sm:$0xff]
    %s8848 = scalar_lea.vmem %s8, 613
    %v8849 = vld [vmem:[%s8848] ss:$2 sm:$0xff]
    %s8850 = scalar_lea.vmem %s8, 614
    %v8851 = vld [vmem:[%s8850] ss:$2 sm:$0xff]
    %v8852 = vmax.f32 %v8845, %v8847
    %v8853 = vmax.f32 %v8849, %v8851
    %v8854 = vmax.f32 %v8852, %v8853
    %8855 = vst.msk [vmem:[#allocation3 + $0x78] sm:$0xff] %vm1480, %v8854
    // Predicated region
    $region34: #{encoder_forward.1} parent=1 // pred_check
      _
    $region35: #{encoder_forward.1} parent=1 // pred_check_branch
      %8857 = sbr.rel (0) target = $region37
    $region36: #{encoder_forward.1} parent=1 // pred_region
      _
    $region37: #{encoder_forward.1} parent=1 // pred_fallthru
      _
    // Predicated region
    $region38: #{encoder_forward.1} parent=1 // pred_check
      _
    $region39: #{encoder_forward.1} parent=1 // pred_check_branch
      %8859 = sbr.rel (0) target = $region41
    $region40: #{encoder_forward.1} parent=1 // pred_region
      %s8861 = ssub.s32 2048, 2048
      %8862 = vsyncadd [#allocation4], %s8861
      %s8863 = sshll.u32 [#allocation3], 4
      %s8864 = int_to_ptr.vmem [resolvable:$true] %s8863
      %8869 = dma.vmem_to_hbm [thread:$0]  %s8864, 2048, %s9, [#allocation4], 128, 128, 8
    $region41: #{encoder_forward.1} parent=1 // pred_fallthru
      _
    // Predicated region
    $region42: #{encoder_forward.1} parent=1 // pred_check
      _
    $region43: #{encoder_forward.1} parent=1 // pred_check_branch
      %8871 = sbr.rel (0) target = $region45
    $region44: #{encoder_forward.1} parent=1 // pred_region
      _
    $region45: #{encoder_forward.1} parent=1 // pred_fallthru
      _
    // Predicated region
    $region46: #{encoder_forward.1} parent=1 // pred_check
      _
    $region47: #{encoder_forward.1} parent=1 // pred_check_branch
      %8873 = sbr.rel (0) target = $region49
    $region48: #{encoder_forward.1} parent=1 // pred_region
      %8874 = dma.done [#allocation4], 2048
    $region49: #{encoder_forward.1} parent=1 // pred_fallthru
      _
    %8875 = vsyncpa [#allocation4], 1

</llo_original>
